<compile_context>
chip_gen: v6e
topology: v6e:2x2x1
jax: 0.10.0
libtpu: 0.0.40
codegen_flags: <defaults>
</compile_context>

<pallas_src>
import functools

import jax
import jax.numpy as jnp
from jax import lax
from jax.experimental import pallas as pl
from jax.experimental.pallas import tpu as pltpu

HEADS = 8
DIM_HEAD = 64
INNER = HEADS * DIM_HEAD
WINDOW = 7
LN_EPS = 1e-5
NEG_INF = -1e30


def _pick_tile(dim, candidates):
    for c in candidates:
        if dim % c == 0:
            return c
    return dim


# ----------------------------------------------------------------------------
# Fused tiled linear:  out = res + alpha * (act(LN(x) @ W + b) + peer)
# (every piece of the epilogue optional; W is bf16, accumulation in f32)
# ----------------------------------------------------------------------------

def _linear_kernel(*refs, act, has_ln, has_bias, has_peer, has_residual):
    idx = 0
    x_ref = refs[idx]; idx += 1
    if has_ln:
        g_ref, bln_ref = refs[idx], refs[idx + 1]; idx += 2
    w_ref = refs[idx]; idx += 1
    if has_bias:
        b_ref = refs[idx]; idx += 1
    if has_peer:
        peer_ref = refs[idx]; idx += 1
    if has_residual:
        res_ref, alpha_ref = refs[idx], refs[idx + 1]; idx += 2
    o_ref = refs[idx]

    x = x_ref[...]                                   # (tm, K)
    if has_ln:                                       # LayerNorm fused into the matmul
        x = x.astype(jnp.float32)
        mu = jnp.mean(x, axis=-1, keepdims=True)
        var = jnp.mean((x - mu) * (x - mu), axis=-1, keepdims=True)
        x = (x - mu) * lax.rsqrt(var + LN_EPS) * g_ref[...] + bln_ref[...]

    y = jnp.dot(x.astype(jnp.bfloat16), w_ref[...],
                preferred_element_type=jnp.float32)  # (tm, tn) f32 accumulate
    if has_bias:
        y = y + b_ref[...]
    if act == "gelu":
        # exact (erf) GELU, matching torch.nn.GELU() default
        y = 0.5 * y * (1.0 + lax.erf(y * 0.7071067811865475))
    if has_peer:
        y = y + peer_ref[...]
    if has_residual:
        y = res_ref[...] + alpha_ref[0] * y          # rezero residual epilogue
    o_ref[...] = y.astype(o_ref.dtype)


def pallas_linear(x, w, *, bias=None, ln=None, act=None, peer=None,
                  residual=None, alpha=None, out_dtype=jnp.float32):
    M, K = x.shape
    K2, N = w.shape
    assert K == K2
    tm = _pick_tile(M, (256, 128, 64, 32, 16, 8))
    tn = _pick_tile(N, (512, 256, 128))

    has_ln = ln is not None
    has_bias = bias is not None
    has_peer = peer is not None
    has_res = residual is not None

    inputs = [x]
    in_specs = [pl.BlockSpec((tm, K), lambda i, j: (i, 0))]
    if has_ln:
        g, b_ln = ln
        inputs += [g.reshape(1, K), b_ln.reshape(1, K)]
        in_specs += [pl.BlockSpec((1, K), lambda i, j: (0, 0))] * 2
    inputs.append(w.astype(jnp.bfloat16))            # bf16 weights -> MXU fast path
    in_specs.append(pl.BlockSpec((K, tn), lambda i, j: (0, j)))
    if has_bias:
        inputs.append(bias.reshape(1, N))
        in_specs.append(pl.BlockSpec((1, tn), lambda i, j: (0, j)))
    if has_peer:
        inputs.append(peer)
        in_specs.append(pl.BlockSpec((tm, tn), lambda i, j: (i, j)))
    if has_res:
        inputs.append(residual)
        in_specs.append(pl.BlockSpec((tm, tn), lambda i, j: (i, j)))
        inputs.append(jnp.asarray(alpha, jnp.float32).reshape((1,)))
        in_specs.append(pl.BlockSpec(memory_space=pltpu.MemorySpace.SMEM))

    kern = functools.partial(_linear_kernel, act=act, has_ln=has_ln,
                             has_bias=has_bias, has_peer=has_peer,
                             has_residual=has_res)
    return pl.pallas_call(
        kern,
        out_shape=jax.ShapeDtypeStruct((M, N), out_dtype),
        grid=(M // tm, N // tn),
        in_specs=in_specs,
        out_specs=pl.BlockSpec((tm, tn), lambda i, j: (i, j)),
        compiler_params=pltpu.CompilerParams(
            dimension_semantics=("parallel", "parallel")),
    )(*inputs)


# ----------------------------------------------------------------------------
# Fused local (causal windowed) attention
# qkv block: (1, S, 3*INNER) = [q | k | v], heads sliced in-kernel.
# ----------------------------------------------------------------------------

def _local_attn_kernel(qkv_ref, o_ref, *, heads, dim_head, seq_len, q_tile,
                       kv_tile, window, scale):
    inner = heads * dim_head
    qi = pl.program_id(1)
    q_start = qi * q_tile
    # KV slab covering [q_start - pad, q_start + q_tile), clamped to the sequence.
    kv_start = jnp.clip(q_start - (kv_tile - q_tile), 0, seq_len - kv_tile)
    kv_start = pl.multiple_of(kv_start, 8)           # always a multiple of 8

    # causal local-window mask from absolute positions (built in-kernel, no DMA)
    i_abs = q_start + lax.broadcasted_iota(jnp.int32, (q_tile, kv_tile), 0)
    j_abs = kv_start + lax.broadcasted_iota(jnp.int32, (q_tile, kv_tile), 1)
    allowed = (j_abs <= i_abs) & ((i_abs - j_abs) <= window)

    outs = []
    for h in range(heads):
        q_h = qkv_ref[0, pl.ds(q_start, q_tile), pl.ds(h * dim_head, dim_head)]
        k_h = qkv_ref[0, pl.ds(kv_start, kv_tile),
                      pl.ds(inner + h * dim_head, dim_head)]
        v_h = qkv_ref[0, pl.ds(kv_start, kv_tile),
                      pl.ds(2 * inner + h * dim_head, dim_head)]
        s = lax.dot_general(q_h.astype(jnp.bfloat16), k_h.astype(jnp.bfloat16),
                            (((1,), (1,)), ((), ())),
                            preferred_element_type=jnp.float32) * scale
        s = jnp.where(allowed, s, NEG_INF)           # mask applied to f32 logits
        s = s - jnp.max(s, axis=-1, keepdims=True)
        e = jnp.exp(s)
        p = e * pl.reciprocal(jnp.sum(e, axis=-1, keepdims=True), approx=True)
        outs.append(jnp.dot(p.astype(jnp.bfloat16), v_h.astype(jnp.bfloat16),
                            preferred_element_type=jnp.float32))
    # merged-head, lane-dense (q_tile, H*Dh) output
    o_ref[0] = jnp.concatenate(outs, axis=-1).astype(o_ref.dtype)


def pallas_local_attention(qkv, *, window=WINDOW, out_dtype=jnp.bfloat16):
    """qkv: [B, S, 6*INNER]; local projection occupies columns [0, 3*INNER)."""
    B, S, _ = qkv.shape
    q_tile = _pick_tile(S, (256, 128))
    w_pad = ((window + 7) // 8) * 8
    kv_tile = min(q_tile + w_pad, S)
    kern = functools.partial(_local_attn_kernel, heads=HEADS, dim_head=DIM_HEAD,
                             seq_len=S, q_tile=q_tile, kv_tile=kv_tile,
                             window=window, scale=DIM_HEAD ** -0.5)
    return pl.pallas_call(
        kern,
        out_shape=jax.ShapeDtypeStruct((B, S, INNER), out_dtype),
        grid=(B, S // q_tile),
        in_specs=[pl.BlockSpec((1, S, 3 * INNER), lambda b, qi: (b, 0, 0))],
        out_specs=pl.BlockSpec((1, q_tile, INNER), lambda b, qi: (b, qi, 0)),
        compiler_params=pltpu.CompilerParams(
            dimension_semantics=("parallel", "parallel")),
    )(qkv)


# ----------------------------------------------------------------------------
# Fused ReAttention: softmax -> learned (H,H) head mix -> LayerNorm over heads
#                    -> attn @ V, all in VMEM; merged-head output.
# ----------------------------------------------------------------------------

def _re_attn_kernel(qkv_ref, rw_ref, rg_ref, rb_ref, o_ref, *, heads, dim_head,
                    q_tile, scale):
    inner = heads * dim_head
    qi = pl.program_id(1)
    q_start = qi * q_tile

    probs, values = [], []
    for h in range(heads):
        q_h = qkv_ref[0, pl.ds(q_start, q_tile), pl.ds(h * dim_head, dim_head)]
        k_h = qkv_ref[0, :, pl.ds(inner + h * dim_head, dim_head)]
        v_h = qkv_ref[0, :, pl.ds(2 * inner + h * dim_head, dim_head)]
        s = lax.dot_general(q_h.astype(jnp.bfloat16), k_h.astype(jnp.bfloat16),
                            (((1,), (1,)), ((), ())),
                            preferred_element_type=jnp.float32) * scale
        s = s - jnp.max(s, axis=-1, keepdims=True)
        e = jnp.exp(s)
        probs.append(e * pl.reciprocal(jnp.sum(e, axis=-1, keepdims=True),
                                       approx=True))
        values.append(v_h)

    # head mixing: mixed[g] = sum_h probs[h] * W[h, g]  (scalars read from SMEM)
    mixed = []
    for g in range(heads):
        acc = probs[0] * rw_ref[0, g]
        for h in range(1, heads):
            acc = acc + probs[h] * rw_ref[h, g]
        mixed.append(acc)

    # LayerNorm over the head axis (per (query, key) element), eps = 1e-5
    mean = mixed[0]
    for g in range(1, heads):
        mean = mean + mixed[g]
    mean = mean * (1.0 / heads)
    var = (mixed[0] - mean) * (mixed[0] - mean)
    for g in range(1, heads):
        var = var + (mixed[g] - mean) * (mixed[g] - mean)
    var = var * (1.0 / heads)
    inv = lax.rsqrt(var + LN_EPS)

    outs = []
    for g in range(heads):
        a_g = (mixed[g] - mean) * inv * rg_ref[g] + rb_ref[g]
        outs.append(jnp.dot(a_g.astype(jnp.bfloat16),
                            values[g].astype(jnp.bfloat16),
                            preferred_element_type=jnp.float32))
    o_ref[0] = jnp.concatenate(outs, axis=-1).astype(o_ref.dtype)


def pallas_re_attention(qkv, reattn_w, ln_g, ln_b, *, out_dtype=jnp.bfloat16):
    """qkv: [B, S, 6*INNER]; re projection occupies columns [3*INNER, 6*INNER)."""
    B, S, _ = qkv.shape
    q_tile = _pick_tile(S, (256, 128))
    kern = functools.partial(_re_attn_kernel, heads=HEADS, dim_head=DIM_HEAD,
                             q_tile=q_tile, scale=DIM_HEAD ** -0.5)
    smem = pl.BlockSpec(memory_space=pltpu.MemorySpace.SMEM)
    return pl.pallas_call(
        kern,
        out_shape=jax.ShapeDtypeStruct((B, S, INNER), out_dtype),
        grid=(B, S // q_tile),
        in_specs=[pl.BlockSpec((1, S, 3 * INNER), lambda b, qi: (b, 0, 1)),
                  smem, smem, smem],
        out_specs=pl.BlockSpec((1, q_tile, INNER), lambda b, qi: (b, qi, 0)),
        compiler_params=pltpu.CompilerParams(
            dimension_semantics=("parallel", "parallel")),
    )(qkv, reattn_w, ln_g, ln_b)


# ----------------------------------------------------------------------------
# Model glue
# ----------------------------------------------------------------------------

def trans_block(x, p):
    """x: [B, S, F] -> [B, S, F]"""
    B, S, F = x.shape
    M = B * S
    x2 = x.reshape(M, F)

    # norm1 fused into a single concatenated QKV projection (local | re);
    # the fused weight is prebuilt at init (no per-forward concat).
    qkv = pallas_linear(x2, p["wqkv"], ln=(p["norm1_g"], p["norm1_b"]))
    qkv = qkv.reshape(B, S, 6 * INNER)

    # fused attention branches (merged-head, lane-dense, bf16 outputs that only
    # feed the following matmuls)
    loc_o = pallas_local_attention(qkv)                              # (B, S, INNER)
    re_o = pallas_re_attention(qkv, p["reattn_w"], p["re_ln_g"], p["re_ln_b"])

    l_att = pallas_linear(loc_o.reshape(M, INNER), p["loc_wout"])    # (M, F) f32
    # re out-projection with the rezero residual fused into its epilogue:
    #   y = x + alpha * (re_o @ Wout + b + l_att)
    y = pallas_linear(re_o.reshape(M, INNER), p["re_wout"], bias=p["re_bout"],
                      peer=l_att, residual=x2, alpha=p["re_alpha"])

    # norm2 + FFN (norm fused into FFN1, rezero residual fused into FFN2);
    # hidden activation carried in bf16 (it only feeds the FFN2 matmul)
    h = pallas_linear(y, p["ffn_w1"], bias=p["ffn_b1"],
                      ln=(p["norm2_g"], p["norm2_b"]), act="gelu",
                      out_dtype=jnp.bfloat16)
    y = pallas_linear(h, p["ffn_w2"], bias=p["ffn_b2"],
                      residual=y, alpha=p["re_alpha"])
    return y.reshape(B, S, F)


def transformer_encoder(x, params):
    """x: [seq, batch, features]"""
    y = jnp.transpose(x, (1, 0, 2))          # -> [batch, seq, features]
    for bp in params["blocks"]:
        y = trans_block(y, bp)
    return jnp.transpose(y, (1, 0, 2))       # -> [seq, batch, features]


# ----------------------------------------------------------------------------
# Deterministic parameter init (matmul weights stored bf16; LN / bias / scalar
# params stay f32)
# ----------------------------------------------------------------------------

def init_params(key, features, ffn_features, n_blocks):
    def nxt():
        nonlocal key
        key, sub = jax.random.split(key)
        return sub

    def w(shape, std=0.02, dtype=jnp.bfloat16):
        return (std * jax.random.normal(nxt(), shape)).astype(dtype)

    blocks = []
    for _ in range(n_blocks):
        loc_wqkv = w((features, 3 * INNER))
        re_wqkv = w((features, 3 * INNER))
        blocks.append(dict(
            norm1_g=jnp.ones((features,), jnp.float32),
            norm1_b=jnp.zeros((features,), jnp.float32),
            # fused (local | re) QKV projection weight, (F, 6*INNER) bf16
            wqkv=jnp.concatenate([loc_wqkv, re_wqkv], axis=1),
            loc_wout=w((INNER, features)),
            reattn_w=w((HEADS, HEADS), std=1.0, dtype=jnp.float32),
            re_ln_g=jnp.ones((HEADS,), jnp.float32),
            re_ln_b=jnp.zeros((HEADS,), jnp.float32),
            re_wout=w((INNER, features)),
            re_bout=jnp.zeros((features,), jnp.float32),
            norm2_g=jnp.ones((features,), jnp.float32),
            norm2_b=jnp.zeros((features,), jnp.float32),
            ffn_w1=w((features, ffn_features)),
            ffn_b1=jnp.zeros((ffn_features,), jnp.float32),
            ffn_w2=w((ffn_features, features)),
            ffn_b2=jnp.zeros((features,), jnp.float32),
            # nn.Parameter(torch.zeros((1,))); 0.1 here so kernels are exercised.
            re_alpha=jnp.full((1,), 0.1, jnp.float32),
        ))
    return {"blocks": blocks}


# ----------------------------------------------------------------------------

if __name__ == "__main__":
    SEQ, BATCH, FEATURES, FFN_FEATURES, N_BLOCKS = 8, 2, 32, 64, 2

    key = jax.random.PRNGKey(0)
    key_x, key_p = jax.random.split(key)
    x = jax.random.normal(key_x, (SEQ, BATCH, FEATURES), jnp.float32)
    params = init_params(key_p, FEATURES, FFN_FEATURES, N_BLOCKS)

    fwd = jax.jit(transformer_encoder)
    out = fwd(x, params)
    out = jax.block_until_ready(out)

    assert out.shape == (SEQ, BATCH, FEATURES)
    assert bool(jnp.all(jnp.isfinite(out)))
    print("KERNEL_OK")
</pallas_src>

<mosaic_0001>
module attributes {stable_mosaic.version = 11 : i64} {
  func.func @_local_attn_kernel(%arg0: i32, %arg1: i32, %arg2: memref<1x8x1536xf32, #tpu.memory_space<vmem>>, %arg3: memref<1x8x512xbf16, #tpu.memory_space<vmem>>) attributes {dimension_semantics = [#tpu.dimension_semantics<parallel>, #tpu.dimension_semantics<parallel>], iteration_bounds = array<i64: 2, 1>, scalar_prefetch = 0 : i64, scratch_operands = 0 : i64, tpu.core_type = #tpu.core_type<tc>, window_params = [{transform_indices = @transform_0, window_bounds = array<i64: 1, 8, 1536>}, {transform_indices = @transform_1, window_bounds = array<i64: 1, 8, 512>}]} {
    %c8_i32 = arith.constant 8 : i32
    %0 = arith.muli %arg1, %c8_i32 : i32
    %c0_i32 = arith.constant 0 : i32
    %1 = arith.subi %0, %c0_i32 : i32
    %c0_i32_0 = arith.constant 0 : i32
    %c0_i32_1 = arith.constant 0 : i32
    %2 = arith.maxsi %c0_i32_0, %1 : i32
    %3 = arith.minsi %c0_i32_1, %2 : i32
    %4 = tpu.assume_multiple %3, 8 : i32
    %5 = tpu.iota {dimensions = array<i32: 0>} : vector<8x8xi32>
    %6 = vector.broadcast %0 : i32 to vector<8x8xi32>
    %7 = arith.addi %6, %5 : vector<8x8xi32>
    %8 = tpu.iota {dimensions = array<i32: 1>} : vector<8x8xi32>
    %9 = vector.broadcast %4 : i32 to vector<8x8xi32>
    %10 = arith.addi %9, %8 : vector<8x8xi32>
    %11 = arith.cmpi sle, %10, %7 : vector<8x8xi32>
    %12 = arith.subi %7, %10 : vector<8x8xi32>
    %c7_i32 = arith.constant 7 : i32
    %13 = vector.broadcast %c7_i32 : i32 to vector<8x8xi32>
    %14 = arith.cmpi sle, %12, %13 : vector<8x8xi32>
    %15 = arith.andi %11, %14 : vector<8x8xi1>
    %c0 = arith.constant 0 : index
    %16 = arith.index_cast %0 : i32 to index
    %c0_2 = arith.constant 0 : index
    %17 = vector.load %arg2[%c0, %16, %c0_2] : memref<1x8x1536xf32, #tpu.memory_space<vmem>>, vector<1x8x64xf32>
    %18 = vector.shape_cast %17 : vector<1x8x64xf32> to vector<8x64xf32>
    %c0_3 = arith.constant 0 : index
    %19 = arith.index_cast %4 : i32 to index
    %c512 = arith.constant 512 : index
    %20 = vector.load %arg2[%c0_3, %19, %c512] : memref<1x8x1536xf32, #tpu.memory_space<vmem>>, vector<1x8x64xf32>
    %21 = vector.shape_cast %20 : vector<1x8x64xf32> to vector<8x64xf32>
    %c0_4 = arith.constant 0 : index
    %22 = arith.index_cast %4 : i32 to index
    %c1024 = arith.constant 1024 : index
    %23 = vector.load %arg2[%c0_4, %22, %c1024] : memref<1x8x1536xf32, #tpu.memory_space<vmem>>, vector<1x8x64xf32>
    %24 = vector.shape_cast %23 : vector<1x8x64xf32> to vector<8x64xf32>
    %25 = arith.truncf %18 : vector<8x64xf32> to vector<8x64xbf16>
    %26 = arith.truncf %21 : vector<8x64xf32> to vector<8x64xbf16>
    %cst = arith.constant dense<0.000000e+00> : vector<8x8xf32>
    %27 = tpu.matmul %25, %26, %cst {dimension_numbers = #tpu.dot_dimension_numbers<[1], [1], [0], [0], [0, 0, 1, 0], [], []>} : vector<8x64xbf16>, vector<8x64xbf16>, vector<8x8xf32> -> vector<8x8xf32>
    %cst_5 = arith.constant 1.250000e-01 : f32
    %28 = vector.broadcast %cst_5 : f32 to vector<8x8xf32>
    %29 = arith.mulf %27, %28 : vector<8x8xf32>
    %cst_6 = arith.constant -1.000000e+30 : f32
    %30 = vector.broadcast %cst_6 : f32 to vector<8x8xf32>
    %31 = arith.select %15, %29, %30 : vector<8x8xi1>, vector<8x8xf32>
    %cst_7 = arith.constant dense<0xFF800000> : vector<8xf32>
    %32 = vector.multi_reduction <maximumf>, %31, %cst_7 [1] : vector<8x8xf32> to vector<8xf32>
    %33 = vector.shape_cast %32 : vector<8xf32> to vector<8x1xf32>
    %34 = vector.broadcast %33 : vector<8x1xf32> to vector<8x8xf32>
    %35 = arith.subf %31, %34 : vector<8x8xf32>
    %36 = math.exp %35 : vector<8x8xf32>
    %cst_8 = arith.constant dense<0.000000e+00> : vector<8xf32>
    %37 = vector.multi_reduction <add>, %36, %cst_8 [1] : vector<8x8xf32> to vector<8xf32>
    %38 = vector.shape_cast %37 : vector<8xf32> to vector<8x1xf32>
    %39 = tpu.reciprocal %38 {approx = true} : vector<8x1xf32> -> vector<8x1xf32>
    %40 = vector.broadcast %39 : vector<8x1xf32> to vector<8x8xf32>
    %41 = arith.mulf %36, %40 : vector<8x8xf32>
    %42 = arith.truncf %41 : vector<8x8xf32> to vector<8x8xbf16>
    %43 = arith.truncf %24 : vector<8x64xf32> to vector<8x64xbf16>
    %cst_9 = arith.constant dense<0.000000e+00> : vector<8x64xf32>
    %44 = tpu.matmul %42, %43, %cst_9 {dimension_numbers = #tpu.dot_dimension_numbers<[1], [0], [0], [1], [0, 0, 1, 1], [], []>} : vector<8x8xbf16>, vector<8x64xbf16>, vector<8x64xf32> -> vector<8x64xf32>
    %c0_10 = arith.constant 0 : index
    %45 = arith.index_cast %0 : i32 to index
    %c64 = arith.constant 64 : index
    %46 = vector.load %arg2[%c0_10, %45, %c64] : memref<1x8x1536xf32, #tpu.memory_space<vmem>>, vector<1x8x64xf32>
    %47 = vector.shape_cast %46 : vector<1x8x64xf32> to vector<8x64xf32>
    %c0_11 = arith.constant 0 : index
    %48 = arith.index_cast %4 : i32 to index
    %c576 = arith.constant 576 : index
    %49 = vector.load %arg2[%c0_11, %48, %c576] : memref<1x8x1536xf32, #tpu.memory_space<vmem>>, vector<1x8x64xf32>
    %50 = vector.shape_cast %49 : vector<1x8x64xf32> to vector<8x64xf32>
    %c0_12 = arith.constant 0 : index
    %51 = arith.index_cast %4 : i32 to index
    %c1088 = arith.constant 1088 : index
    %52 = vector.load %arg2[%c0_12, %51, %c1088] : memref<1x8x1536xf32, #tpu.memory_space<vmem>>, vector<1x8x64xf32>
    %53 = vector.shape_cast %52 : vector<1x8x64xf32> to vector<8x64xf32>
    %54 = arith.truncf %47 : vector<8x64xf32> to vector<8x64xbf16>
    %55 = arith.truncf %50 : vector<8x64xf32> to vector<8x64xbf16>
    %cst_13 = arith.constant dense<0.000000e+00> : vector<8x8xf32>
    %56 = tpu.matmul %54, %55, %cst_13 {dimension_numbers = #tpu.dot_dimension_numbers<[1], [1], [0], [0], [0, 0, 1, 0], [], []>} : vector<8x64xbf16>, vector<8x64xbf16>, vector<8x8xf32> -> vector<8x8xf32>
    %cst_14 = arith.constant 1.250000e-01 : f32
    %57 = vector.broadcast %cst_14 : f32 to vector<8x8xf32>
    %58 = arith.mulf %56, %57 : vector<8x8xf32>
    %cst_15 = arith.constant -1.000000e+30 : f32
    %59 = vector.broadcast %cst_15 : f32 to vector<8x8xf32>
    %60 = arith.select %15, %58, %59 : vector<8x8xi1>, vector<8x8xf32>
    %cst_16 = arith.constant dense<0xFF800000> : vector<8xf32>
    %61 = vector.multi_reduction <maximumf>, %60, %cst_16 [1] : vector<8x8xf32> to vector<8xf32>
    %62 = vector.shape_cast %61 : vector<8xf32> to vector<8x1xf32>
    %63 = vector.broadcast %62 : vector<8x1xf32> to vector<8x8xf32>
    %64 = arith.subf %60, %63 : vector<8x8xf32>
    %65 = math.exp %64 : vector<8x8xf32>
    %cst_17 = arith.constant dense<0.000000e+00> : vector<8xf32>
    %66 = vector.multi_reduction <add>, %65, %cst_17 [1] : vector<8x8xf32> to vector<8xf32>
    %67 = vector.shape_cast %66 : vector<8xf32> to vector<8x1xf32>
    %68 = tpu.reciprocal %67 {approx = true} : vector<8x1xf32> -> vector<8x1xf32>
    %69 = vector.broadcast %68 : vector<8x1xf32> to vector<8x8xf32>
    %70 = arith.mulf %65, %69 : vector<8x8xf32>
    %71 = arith.truncf %70 : vector<8x8xf32> to vector<8x8xbf16>
    %72 = arith.truncf %53 : vector<8x64xf32> to vector<8x64xbf16>
    %cst_18 = arith.constant dense<0.000000e+00> : vector<8x64xf32>
    %73 = tpu.matmul %71, %72, %cst_18 {dimension_numbers = #tpu.dot_dimension_numbers<[1], [0], [0], [1], [0, 0, 1, 1], [], []>} : vector<8x8xbf16>, vector<8x64xbf16>, vector<8x64xf32> -> vector<8x64xf32>
    %c0_19 = arith.constant 0 : index
    %74 = arith.index_cast %0 : i32 to index
    %c128 = arith.constant 128 : index
    %75 = vector.load %arg2[%c0_19, %74, %c128] : memref<1x8x1536xf32, #tpu.memory_space<vmem>>, vector<1x8x64xf32>
    %76 = vector.shape_cast %75 : vector<1x8x64xf32> to vector<8x64xf32>
    %c0_20 = arith.constant 0 : index
    %77 = arith.index_cast %4 : i32 to index
    %c640 = arith.constant 640 : index
    %78 = vector.load %arg2[%c0_20, %77, %c640] : memref<1x8x1536xf32, #tpu.memory_space<vmem>>, vector<1x8x64xf32>
    %79 = vector.shape_cast %78 : vector<1x8x64xf32> to vector<8x64xf32>
    %c0_21 = arith.constant 0 : index
    %80 = arith.index_cast %4 : i32 to index
    %c1152 = arith.constant 1152 : index
    %81 = vector.load %arg2[%c0_21, %80, %c1152] : memref<1x8x1536xf32, #tpu.memory_space<vmem>>, vector<1x8x64xf32>
    %82 = vector.shape_cast %81 : vector<1x8x64xf32> to vector<8x64xf32>
    %83 = arith.truncf %76 : vector<8x64xf32> to vector<8x64xbf16>
    %84 = arith.truncf %79 : vector<8x64xf32> to vector<8x64xbf16>
    %cst_22 = arith.constant dense<0.000000e+00> : vector<8x8xf32>
    %85 = tpu.matmul %83, %84, %cst_22 {dimension_numbers = #tpu.dot_dimension_numbers<[1], [1], [0], [0], [0, 0, 1, 0], [], []>} : vector<8x64xbf16>, vector<8x64xbf16>, vector<8x8xf32> -> vector<8x8xf32>
    %cst_23 = arith.constant 1.250000e-01 : f32
    %86 = vector.broadcast %cst_23 : f32 to vector<8x8xf32>
    %87 = arith.mulf %85, %86 : vector<8x8xf32>
    %cst_24 = arith.constant -1.000000e+30 : f32
    %88 = vector.broadcast %cst_24 : f32 to vector<8x8xf32>
    %89 = arith.select %15, %87, %88 : vector<8x8xi1>, vector<8x8xf32>
    %cst_25 = arith.constant dense<0xFF800000> : vector<8xf32>
    %90 = vector.multi_reduction <maximumf>, %89, %cst_25 [1] : vector<8x8xf32> to vector<8xf32>
    %91 = vector.shape_cast %90 : vector<8xf32> to vector<8x1xf32>
    %92 = vector.broadcast %91 : vector<8x1xf32> to vector<8x8xf32>
    %93 = arith.subf %89, %92 : vector<8x8xf32>
    %94 = math.exp %93 : vector<8x8xf32>
    %cst_26 = arith.constant dense<0.000000e+00> : vector<8xf32>
    %95 = vector.multi_reduction <add>, %94, %cst_26 [1] : vector<8x8xf32> to vector<8xf32>
    %96 = vector.shape_cast %95 : vector<8xf32> to vector<8x1xf32>
    %97 = tpu.reciprocal %96 {approx = true} : vector<8x1xf32> -> vector<8x1xf32>
    %98 = vector.broadcast %97 : vector<8x1xf32> to vector<8x8xf32>
    %99 = arith.mulf %94, %98 : vector<8x8xf32>
    %100 = arith.truncf %99 : vector<8x8xf32> to vector<8x8xbf16>
    %101 = arith.truncf %82 : vector<8x64xf32> to vector<8x64xbf16>
    %cst_27 = arith.constant dense<0.000000e+00> : vector<8x64xf32>
    %102 = tpu.matmul %100, %101, %cst_27 {dimension_numbers = #tpu.dot_dimension_numbers<[1], [0], [0], [1], [0, 0, 1, 1], [], []>} : vector<8x8xbf16>, vector<8x64xbf16>, vector<8x64xf32> -> vector<8x64xf32>
    %c0_28 = arith.constant 0 : index
    %103 = arith.index_cast %0 : i32 to index
    %c192 = arith.constant 192 : index
    %104 = vector.load %arg2[%c0_28, %103, %c192] : memref<1x8x1536xf32, #tpu.memory_space<vmem>>, vector<1x8x64xf32>
    %105 = vector.shape_cast %104 : vector<1x8x64xf32> to vector<8x64xf32>
    %c0_29 = arith.constant 0 : index
    %106 = arith.index_cast %4 : i32 to index
    %c704 = arith.constant 704 : index
    %107 = vector.load %arg2[%c0_29, %106, %c704] : memref<1x8x1536xf32, #tpu.memory_space<vmem>>, vector<1x8x64xf32>
    %108 = vector.shape_cast %107 : vector<1x8x64xf32> to vector<8x64xf32>
    %c0_30 = arith.constant 0 : index
    %109 = arith.index_cast %4 : i32 to index
    %c1216 = arith.constant 1216 : index
    %110 = vector.load %arg2[%c0_30, %109, %c1216] : memref<1x8x1536xf32, #tpu.memory_space<vmem>>, vector<1x8x64xf32>
    %111 = vector.shape_cast %110 : vector<1x8x64xf32> to vector<8x64xf32>
    %112 = arith.truncf %105 : vector<8x64xf32> to vector<8x64xbf16>
    %113 = arith.truncf %108 : vector<8x64xf32> to vector<8x64xbf16>
    %cst_31 = arith.constant dense<0.000000e+00> : vector<8x8xf32>
    %114 = tpu.matmul %112, %113, %cst_31 {dimension_numbers = #tpu.dot_dimension_numbers<[1], [1], [0], [0], [0, 0, 1, 0], [], []>} : vector<8x64xbf16>, vector<8x64xbf16>, vector<8x8xf32> -> vector<8x8xf32>
    %cst_32 = arith.constant 1.250000e-01 : f32
    %115 = vector.broadcast %cst_32 : f32 to vector<8x8xf32>
    %116 = arith.mulf %114, %115 : vector<8x8xf32>
    %cst_33 = arith.constant -1.000000e+30 : f32
    %117 = vector.broadcast %cst_33 : f32 to vector<8x8xf32>
    %118 = arith.select %15, %116, %117 : vector<8x8xi1>, vector<8x8xf32>
    %cst_34 = arith.constant dense<0xFF800000> : vector<8xf32>
    %119 = vector.multi_reduction <maximumf>, %118, %cst_34 [1] : vector<8x8xf32> to vector<8xf32>
    %120 = vector.shape_cast %119 : vector<8xf32> to vector<8x1xf32>
    %121 = vector.broadcast %120 : vector<8x1xf32> to vector<8x8xf32>
    %122 = arith.subf %118, %121 : vector<8x8xf32>
    %123 = math.exp %122 : vector<8x8xf32>
    %cst_35 = arith.constant dense<0.000000e+00> : vector<8xf32>
    %124 = vector.multi_reduction <add>, %123, %cst_35 [1] : vector<8x8xf32> to vector<8xf32>
    %125 = vector.shape_cast %124 : vector<8xf32> to vector<8x1xf32>
    %126 = tpu.reciprocal %125 {approx = true} : vector<8x1xf32> -> vector<8x1xf32>
    %127 = vector.broadcast %126 : vector<8x1xf32> to vector<8x8xf32>
    %128 = arith.mulf %123, %127 : vector<8x8xf32>
    %129 = arith.truncf %128 : vector<8x8xf32> to vector<8x8xbf16>
    %130 = arith.truncf %111 : vector<8x64xf32> to vector<8x64xbf16>
    %cst_36 = arith.constant dense<0.000000e+00> : vector<8x64xf32>
    %131 = tpu.matmul %129, %130, %cst_36 {dimension_numbers = #tpu.dot_dimension_numbers<[1], [0], [0], [1], [0, 0, 1, 1], [], []>} : vector<8x8xbf16>, vector<8x64xbf16>, vector<8x64xf32> -> vector<8x64xf32>
    %c0_37 = arith.constant 0 : index
    %132 = arith.index_cast %0 : i32 to index
    %c256 = arith.constant 256 : index
    %133 = vector.load %arg2[%c0_37, %132, %c256] : memref<1x8x1536xf32, #tpu.memory_space<vmem>>, vector<1x8x64xf32>
    %134 = vector.shape_cast %133 : vector<1x8x64xf32> to vector<8x64xf32>
    %c0_38 = arith.constant 0 : index
    %135 = arith.index_cast %4 : i32 to index
    %c768 = arith.constant 768 : index
    %136 = vector.load %arg2[%c0_38, %135, %c768] : memref<1x8x1536xf32, #tpu.memory_space<vmem>>, vector<1x8x64xf32>
    %137 = vector.shape_cast %136 : vector<1x8x64xf32> to vector<8x64xf32>
    %c0_39 = arith.constant 0 : index
    %138 = arith.index_cast %4 : i32 to index
    %c1280 = arith.constant 1280 : index
    %139 = vector.load %arg2[%c0_39, %138, %c1280] : memref<1x8x1536xf32, #tpu.memory_space<vmem>>, vector<1x8x64xf32>
    %140 = vector.shape_cast %139 : vector<1x8x64xf32> to vector<8x64xf32>
    %141 = arith.truncf %134 : vector<8x64xf32> to vector<8x64xbf16>
    %142 = arith.truncf %137 : vector<8x64xf32> to vector<8x64xbf16>
    %cst_40 = arith.constant dense<0.000000e+00> : vector<8x8xf32>
    %143 = tpu.matmul %141, %142, %cst_40 {dimension_numbers = #tpu.dot_dimension_numbers<[1], [1], [0], [0], [0, 0, 1, 0], [], []>} : vector<8x64xbf16>, vector<8x64xbf16>, vector<8x8xf32> -> vector<8x8xf32>
    %cst_41 = arith.constant 1.250000e-01 : f32
    %144 = vector.broadcast %cst_41 : f32 to vector<8x8xf32>
    %145 = arith.mulf %143, %144 : vector<8x8xf32>
    %cst_42 = arith.constant -1.000000e+30 : f32
    %146 = vector.broadcast %cst_42 : f32 to vector<8x8xf32>
    %147 = arith.select %15, %145, %146 : vector<8x8xi1>, vector<8x8xf32>
    %cst_43 = arith.constant dense<0xFF800000> : vector<8xf32>
    %148 = vector.multi_reduction <maximumf>, %147, %cst_43 [1] : vector<8x8xf32> to vector<8xf32>
    %149 = vector.shape_cast %148 : vector<8xf32> to vector<8x1xf32>
    %150 = vector.broadcast %149 : vector<8x1xf32> to vector<8x8xf32>
    %151 = arith.subf %147, %150 : vector<8x8xf32>
    %152 = math.exp %151 : vector<8x8xf32>
    %cst_44 = arith.constant dense<0.000000e+00> : vector<8xf32>
    %153 = vector.multi_reduction <add>, %152, %cst_44 [1] : vector<8x8xf32> to vector<8xf32>
    %154 = vector.shape_cast %153 : vector<8xf32> to vector<8x1xf32>
    %155 = tpu.reciprocal %154 {approx = true} : vector<8x1xf32> -> vector<8x1xf32>
    %156 = vector.broadcast %155 : vector<8x1xf32> to vector<8x8xf32>
    %157 = arith.mulf %152, %156 : vector<8x8xf32>
    %158 = arith.truncf %157 : vector<8x8xf32> to vector<8x8xbf16>
    %159 = arith.truncf %140 : vector<8x64xf32> to vector<8x64xbf16>
    %cst_45 = arith.constant dense<0.000000e+00> : vector<8x64xf32>
    %160 = tpu.matmul %158, %159, %cst_45 {dimension_numbers = #tpu.dot_dimension_numbers<[1], [0], [0], [1], [0, 0, 1, 1], [], []>} : vector<8x8xbf16>, vector<8x64xbf16>, vector<8x64xf32> -> vector<8x64xf32>
    %c0_46 = arith.constant 0 : index
    %161 = arith.index_cast %0 : i32 to index
    %c320 = arith.constant 320 : index
    %162 = vector.load %arg2[%c0_46, %161, %c320] : memref<1x8x1536xf32, #tpu.memory_space<vmem>>, vector<1x8x64xf32>
    %163 = vector.shape_cast %162 : vector<1x8x64xf32> to vector<8x64xf32>
    %c0_47 = arith.constant 0 : index
    %164 = arith.index_cast %4 : i32 to index
    %c832 = arith.constant 832 : index
    %165 = vector.load %arg2[%c0_47, %164, %c832] : memref<1x8x1536xf32, #tpu.memory_space<vmem>>, vector<1x8x64xf32>
    %166 = vector.shape_cast %165 : vector<1x8x64xf32> to vector<8x64xf32>
    %c0_48 = arith.constant 0 : index
    %167 = arith.index_cast %4 : i32 to index
    %c1344 = arith.constant 1344 : index
    %168 = vector.load %arg2[%c0_48, %167, %c1344] : memref<1x8x1536xf32, #tpu.memory_space<vmem>>, vector<1x8x64xf32>
    %169 = vector.shape_cast %168 : vector<1x8x64xf32> to vector<8x64xf32>
    %170 = arith.truncf %163 : vector<8x64xf32> to vector<8x64xbf16>
    %171 = arith.truncf %166 : vector<8x64xf32> to vector<8x64xbf16>
    %cst_49 = arith.constant dense<0.000000e+00> : vector<8x8xf32>
    %172 = tpu.matmul %170, %171, %cst_49 {dimension_numbers = #tpu.dot_dimension_numbers<[1], [1], [0], [0], [0, 0, 1, 0], [], []>} : vector<8x64xbf16>, vector<8x64xbf16>, vector<8x8xf32> -> vector<8x8xf32>
    %cst_50 = arith.constant 1.250000e-01 : f32
    %173 = vector.broadcast %cst_50 : f32 to vector<8x8xf32>
    %174 = arith.mulf %172, %173 : vector<8x8xf32>
    %cst_51 = arith.constant -1.000000e+30 : f32
    %175 = vector.broadcast %cst_51 : f32 to vector<8x8xf32>
    %176 = arith.select %15, %174, %175 : vector<8x8xi1>, vector<8x8xf32>
    %cst_52 = arith.constant dense<0xFF800000> : vector<8xf32>
    %177 = vector.multi_reduction <maximumf>, %176, %cst_52 [1] : vector<8x8xf32> to vector<8xf32>
    %178 = vector.shape_cast %177 : vector<8xf32> to vector<8x1xf32>
    %179 = vector.broadcast %178 : vector<8x1xf32> to vector<8x8xf32>
    %180 = arith.subf %176, %179 : vector<8x8xf32>
    %181 = math.exp %180 : vector<8x8xf32>
    %cst_53 = arith.constant dense<0.000000e+00> : vector<8xf32>
    %182 = vector.multi_reduction <add>, %181, %cst_53 [1] : vector<8x8xf32> to vector<8xf32>
    %183 = vector.shape_cast %182 : vector<8xf32> to vector<8x1xf32>
    %184 = tpu.reciprocal %183 {approx = true} : vector<8x1xf32> -> vector<8x1xf32>
    %185 = vector.broadcast %184 : vector<8x1xf32> to vector<8x8xf32>
    %186 = arith.mulf %181, %185 : vector<8x8xf32>
    %187 = arith.truncf %186 : vector<8x8xf32> to vector<8x8xbf16>
    %188 = arith.truncf %169 : vector<8x64xf32> to vector<8x64xbf16>
    %cst_54 = arith.constant dense<0.000000e+00> : vector<8x64xf32>
    %189 = tpu.matmul %187, %188, %cst_54 {dimension_numbers = #tpu.dot_dimension_numbers<[1], [0], [0], [1], [0, 0, 1, 1], [], []>} : vector<8x8xbf16>, vector<8x64xbf16>, vector<8x64xf32> -> vector<8x64xf32>
    %c0_55 = arith.constant 0 : index
    %190 = arith.index_cast %0 : i32 to index
    %c384 = arith.constant 384 : index
    %191 = vector.load %arg2[%c0_55, %190, %c384] : memref<1x8x1536xf32, #tpu.memory_space<vmem>>, vector<1x8x64xf32>
    %192 = vector.shape_cast %191 : vector<1x8x64xf32> to vector<8x64xf32>
    %c0_56 = arith.constant 0 : index
    %193 = arith.index_cast %4 : i32 to index
    %c896 = arith.constant 896 : index
    %194 = vector.load %arg2[%c0_56, %193, %c896] : memref<1x8x1536xf32, #tpu.memory_space<vmem>>, vector<1x8x64xf32>
    %195 = vector.shape_cast %194 : vector<1x8x64xf32> to vector<8x64xf32>
    %c0_57 = arith.constant 0 : index
    %196 = arith.index_cast %4 : i32 to index
    %c1408 = arith.constant 1408 : index
    %197 = vector.load %arg2[%c0_57, %196, %c1408] : memref<1x8x1536xf32, #tpu.memory_space<vmem>>, vector<1x8x64xf32>
    %198 = vector.shape_cast %197 : vector<1x8x64xf32> to vector<8x64xf32>
    %199 = arith.truncf %192 : vector<8x64xf32> to vector<8x64xbf16>
    %200 = arith.truncf %195 : vector<8x64xf32> to vector<8x64xbf16>
    %cst_58 = arith.constant dense<0.000000e+00> : vector<8x8xf32>
    %201 = tpu.matmul %199, %200, %cst_58 {dimension_numbers = #tpu.dot_dimension_numbers<[1], [1], [0], [0], [0, 0, 1, 0], [], []>} : vector<8x64xbf16>, vector<8x64xbf16>, vector<8x8xf32> -> vector<8x8xf32>
    %cst_59 = arith.constant 1.250000e-01 : f32
    %202 = vector.broadcast %cst_59 : f32 to vector<8x8xf32>
    %203 = arith.mulf %201, %202 : vector<8x8xf32>
    %cst_60 = arith.constant -1.000000e+30 : f32
    %204 = vector.broadcast %cst_60 : f32 to vector<8x8xf32>
    %205 = arith.select %15, %203, %204 : vector<8x8xi1>, vector<8x8xf32>
    %cst_61 = arith.constant dense<0xFF800000> : vector<8xf32>
    %206 = vector.multi_reduction <maximumf>, %205, %cst_61 [1] : vector<8x8xf32> to vector<8xf32>
    %207 = vector.shape_cast %206 : vector<8xf32> to vector<8x1xf32>
    %208 = vector.broadcast %207 : vector<8x1xf32> to vector<8x8xf32>
    %209 = arith.subf %205, %208 : vector<8x8xf32>
    %210 = math.exp %209 : vector<8x8xf32>
    %cst_62 = arith.constant dense<0.000000e+00> : vector<8xf32>
    %211 = vector.multi_reduction <add>, %210, %cst_62 [1] : vector<8x8xf32> to vector<8xf32>
    %212 = vector.shape_cast %211 : vector<8xf32> to vector<8x1xf32>
    %213 = tpu.reciprocal %212 {approx = true} : vector<8x1xf32> -> vector<8x1xf32>
    %214 = vector.broadcast %213 : vector<8x1xf32> to vector<8x8xf32>
    %215 = arith.mulf %210, %214 : vector<8x8xf32>
    %216 = arith.truncf %215 : vector<8x8xf32> to vector<8x8xbf16>
    %217 = arith.truncf %198 : vector<8x64xf32> to vector<8x64xbf16>
    %cst_63 = arith.constant dense<0.000000e+00> : vector<8x64xf32>
    %218 = tpu.matmul %216, %217, %cst_63 {dimension_numbers = #tpu.dot_dimension_numbers<[1], [0], [0], [1], [0, 0, 1, 1], [], []>} : vector<8x8xbf16>, vector<8x64xbf16>, vector<8x64xf32> -> vector<8x64xf32>
    %c0_64 = arith.constant 0 : index
    %219 = arith.index_cast %0 : i32 to index
    %c448 = arith.constant 448 : index
    %220 = vector.load %arg2[%c0_64, %219, %c448] : memref<1x8x1536xf32, #tpu.memory_space<vmem>>, vector<1x8x64xf32>
    %221 = vector.shape_cast %220 : vector<1x8x64xf32> to vector<8x64xf32>
    %c0_65 = arith.constant 0 : index
    %222 = arith.index_cast %4 : i32 to index
    %c960 = arith.constant 960 : index
    %223 = vector.load %arg2[%c0_65, %222, %c960] : memref<1x8x1536xf32, #tpu.memory_space<vmem>>, vector<1x8x64xf32>
    %224 = vector.shape_cast %223 : vector<1x8x64xf32> to vector<8x64xf32>
    %c0_66 = arith.constant 0 : index
    %225 = arith.index_cast %4 : i32 to index
    %c1472 = arith.constant 1472 : index
    %226 = vector.load %arg2[%c0_66, %225, %c1472] : memref<1x8x1536xf32, #tpu.memory_space<vmem>>, vector<1x8x64xf32>
    %227 = vector.shape_cast %226 : vector<1x8x64xf32> to vector<8x64xf32>
    %228 = arith.truncf %221 : vector<8x64xf32> to vector<8x64xbf16>
    %229 = arith.truncf %224 : vector<8x64xf32> to vector<8x64xbf16>
    %cst_67 = arith.constant dense<0.000000e+00> : vector<8x8xf32>
    %230 = tpu.matmul %228, %229, %cst_67 {dimension_numbers = #tpu.dot_dimension_numbers<[1], [1], [0], [0], [0, 0, 1, 0], [], []>} : vector<8x64xbf16>, vector<8x64xbf16>, vector<8x8xf32> -> vector<8x8xf32>
    %cst_68 = arith.constant 1.250000e-01 : f32
    %231 = vector.broadcast %cst_68 : f32 to vector<8x8xf32>
    %232 = arith.mulf %230, %231 : vector<8x8xf32>
    %cst_69 = arith.constant -1.000000e+30 : f32
    %233 = vector.broadcast %cst_69 : f32 to vector<8x8xf32>
    %234 = arith.select %15, %232, %233 : vector<8x8xi1>, vector<8x8xf32>
    %cst_70 = arith.constant dense<0xFF800000> : vector<8xf32>
    %235 = vector.multi_reduction <maximumf>, %234, %cst_70 [1] : vector<8x8xf32> to vector<8xf32>
    %236 = vector.shape_cast %235 : vector<8xf32> to vector<8x1xf32>
    %237 = vector.broadcast %236 : vector<8x1xf32> to vector<8x8xf32>
    %238 = arith.subf %234, %237 : vector<8x8xf32>
    %239 = math.exp %238 : vector<8x8xf32>
    %cst_71 = arith.constant dense<0.000000e+00> : vector<8xf32>
    %240 = vector.multi_reduction <add>, %239, %cst_71 [1] : vector<8x8xf32> to vector<8xf32>
    %241 = vector.shape_cast %240 : vector<8xf32> to vector<8x1xf32>
    %242 = tpu.reciprocal %241 {approx = true} : vector<8x1xf32> -> vector<8x1xf32>
    %243 = vector.broadcast %242 : vector<8x1xf32> to vector<8x8xf32>
    %244 = arith.mulf %239, %243 : vector<8x8xf32>
    %245 = arith.truncf %244 : vector<8x8xf32> to vector<8x8xbf16>
    %246 = arith.truncf %227 : vector<8x64xf32> to vector<8x64xbf16>
    %cst_72 = arith.constant dense<0.000000e+00> : vector<8x64xf32>
    %247 = tpu.matmul %245, %246, %cst_72 {dimension_numbers = #tpu.dot_dimension_numbers<[1], [0], [0], [1], [0, 0, 1, 1], [], []>} : vector<8x8xbf16>, vector<8x64xbf16>, vector<8x64xf32> -> vector<8x64xf32>
    %248 = tpu.concatenate %44, %73, %102, %131, %160, %189, %218, %247 in 1 : vector<8x64xf32>, vector<8x64xf32>, vector<8x64xf32>, vector<8x64xf32>, vector<8x64xf32>, vector<8x64xf32>, vector<8x64xf32>, vector<8x64xf32> -> vector<8x512xf32>
    %249 = arith.truncf %248 : vector<8x512xf32> to vector<8x512xbf16>
    %c0_73 = arith.constant 0 : index
    %c0_74 = arith.constant 0 : index
    %c0_75 = arith.constant 0 : index
    %250 = vector.load %arg3[%c0_73, %c0_74, %c0_75] : memref<1x8x512xbf16, #tpu.memory_space<vmem>>, vector<1x8x512xbf16>
    %251 = vector.shape_cast %250 : vector<1x8x512xbf16> to vector<8x512xbf16>
    %252 = vector.shape_cast %249 : vector<8x512xbf16> to vector<1x8x512xbf16>
    tpu.vector_store %arg3[%c0_73, %c0_74, %c0_75], %252 {strides = array<i32>} : memref<1x8x512xbf16, #tpu.memory_space<vmem>>, vector<1x8x512xbf16>,
    return
  }
  func.func @transform_0(%arg0: i32, %arg1: i32) -> (i32, i32, i32) {
    %c0_i32 = arith.constant 0 : i32
    %c0_i32_0 = arith.constant 0 : i32
    %c0_i32_1 = arith.constant 0 : i32
    return %arg0, %c0_i32, %c0_i32_0 : i32, i32, i32
  }
  func.func @transform_1(%arg0: i32, %arg1: i32) -> (i32, i32, i32) {
    %c0_i32 = arith.constant 0 : i32
    %c0_i32_0 = arith.constant 0 : i32
    return %arg0, %arg1, %c0_i32 : i32, i32, i32
  }
}

module attributes {stable_mosaic.version = 11 : i64} {
  func.func @_linear_kernel(%arg0: i32, %arg1: i32, %arg2: memref<16x32xf32, #tpu.memory_space<vmem>>, %arg3: memref<1x32xf32, #tpu.memory_space<vmem>>, %arg4: memref<1x32xf32, #tpu.memory_space<vmem>>, %arg5: memref<32x512xbf16, #tpu.memory_space<vmem>>, %arg6: memref<16x512xf32, #tpu.memory_space<vmem>>) attributes {dimension_semantics = [#tpu.dimension_semantics<parallel>, #tpu.dimension_semantics<parallel>], iteration_bounds = array<i64: 1, 6>, scalar_prefetch = 0 : i64, scratch_operands = 0 : i64, tpu.core_type = #tpu.core_type<tc>, window_params = [{transform_indices = @transform_0, window_bounds = array<i64: 16, 32>}, {pipeline_mode = #tpu.pipeline_mode<synchronous>, transform_indices = @transform_1, window_bounds = array<i64: 1, 32>}, {pipeline_mode = #tpu.pipeline_mode<synchronous>, transform_indices = @transform_2, window_bounds = array<i64: 1, 32>}, {transform_indices = @transform_3, window_bounds = array<i64: 32, 512>}, {transform_indices = @transform_4, window_bounds = array<i64: 16, 512>}]} {
    %c0 = arith.constant 0 : index
    %c0_0 = arith.constant 0 : index
    %0 = vector.load %arg2[%c0, %c0_0] : memref<16x32xf32, #tpu.memory_space<vmem>>, vector<16x32xf32>
    %cst = arith.constant dense<0.000000e+00> : vector<16xf32>
    %1 = vector.multi_reduction <add>, %0, %cst [1] : vector<16x32xf32> to vector<16xf32>
    %2 = vector.shape_cast %1 : vector<16xf32> to vector<16x1xf32>
    %cst_1 = arith.constant 3.200000e+01 : f32
    %3 = vector.broadcast %cst_1 : f32 to vector<16x1xf32>
    %4 = arith.divf %2, %3 : vector<16x1xf32>
    %5 = vector.broadcast %4 : vector<16x1xf32> to vector<16x32xf32>
    %6 = arith.subf %0, %5 : vector<16x32xf32>
    %7 = vector.broadcast %4 : vector<16x1xf32> to vector<16x32xf32>
    %8 = arith.subf %0, %7 : vector<16x32xf32>
    %9 = arith.mulf %6, %8 : vector<16x32xf32>
    %cst_2 = arith.constant dense<0.000000e+00> : vector<16xf32>
    %10 = vector.multi_reduction <add>, %9, %cst_2 [1] : vector<16x32xf32> to vector<16xf32>
    %11 = vector.shape_cast %10 : vector<16xf32> to vector<16x1xf32>
    %cst_3 = arith.constant 3.200000e+01 : f32
    %12 = vector.broadcast %cst_3 : f32 to vector<16x1xf32>
    %13 = arith.divf %11, %12 : vector<16x1xf32>
    %14 = vector.broadcast %4 : vector<16x1xf32> to vector<16x32xf32>
    %15 = arith.subf %0, %14 : vector<16x32xf32>
    %cst_4 = arith.constant 9.99999974E-6 : f32
    %16 = vector.broadcast %cst_4 : f32 to vector<16x1xf32>
    %17 = arith.addf %13, %16 : vector<16x1xf32>
    %18 = math.rsqrt %17 : vector<16x1xf32>
    %19 = vector.broadcast %18 : vector<16x1xf32> to vector<16x32xf32>
    %20 = arith.mulf %15, %19 : vector<16x32xf32>
    %c0_5 = arith.constant 0 : index
    %c0_6 = arith.constant 0 : index
    %21 = vector.load %arg3[%c0_5, %c0_6] : memref<1x32xf32, #tpu.memory_space<vmem>>, vector<1x32xf32>
    %22 = vector.broadcast %21 : vector<1x32xf32> to vector<16x32xf32>
    %23 = arith.mulf %20, %22 : vector<16x32xf32>
    %c0_7 = arith.constant 0 : index
    %c0_8 = arith.constant 0 : index
    %24 = vector.load %arg4[%c0_7, %c0_8] : memref<1x32xf32, #tpu.memory_space<vmem>>, vector<1x32xf32>
    %25 = vector.broadcast %24 : vector<1x32xf32> to vector<16x32xf32>
    %26 = arith.addf %23, %25 : vector<16x32xf32>
    %27 = arith.truncf %26 : vector<16x32xf32> to vector<16x32xbf16>
    %c0_9 = arith.constant 0 : index
    %c0_10 = arith.constant 0 : index
    %28 = vector.load %arg5[%c0_9, %c0_10] : memref<32x512xbf16, #tpu.memory_space<vmem>>, vector<32x512xbf16>
    %cst_11 = arith.constant dense<0.000000e+00> : vector<16x512xf32>
    %29 = tpu.matmul %27, %28, %cst_11 {dimension_numbers = #tpu.dot_dimension_numbers<[1], [0], [0], [1], [0, 0, 1, 1], [], []>} : vector<16x32xbf16>, vector<32x512xbf16>, vector<16x512xf32> -> vector<16x512xf32>
    %c0_12 = arith.constant 0 : index
    %c0_13 = arith.constant 0 : index
    %30 = vector.load %arg6[%c0_12, %c0_13] : memref<16x512xf32, #tpu.memory_space<vmem>>, vector<16x512xf32>
    tpu.vector_store %arg6[%c0_12, %c0_13], %29 {strides = array<i32>} : memref<16x512xf32, #tpu.memory_space<vmem>>, vector<16x512xf32>,
    return
  }
  func.func @transform_0(%arg0: i32, %arg1: i32) -> (i32, i32) {
    %c0_i32 = arith.constant 0 : i32
    %c0_i32_0 = arith.constant 0 : i32
    return %arg0, %c0_i32 : i32, i32
  }
  func.func @transform_1(%arg0: i32, %arg1: i32) -> (i32, i32) {
    %c0_i32 = arith.constant 0 : i32
    %c0_i32_0 = arith.constant 0 : i32
    %c0_i32_1 = arith.constant 0 : i32
    return %c0_i32, %c0_i32_0 : i32, i32
  }
  func.func @transform_2(%arg0: i32, %arg1: i32) -> (i32, i32) {
    %c0_i32 = arith.constant 0 : i32
    %c0_i32_0 = arith.constant 0 : i32
    %c0_i32_1 = arith.constant 0 : i32
    return %c0_i32, %c0_i32_0 : i32, i32
  }
  func.func @transform_3(%arg0: i32, %arg1: i32) -> (i32, i32) {
    %c0_i32 = arith.constant 0 : i32
    %c0_i32_0 = arith.constant 0 : i32
    return %c0_i32, %arg1 : i32, i32
  }
  func.func @transform_4(%arg0: i32, %arg1: i32) -> (i32, i32) {
    %c0_i32 = arith.constant 0 : i32
    return %arg0, %arg1 : i32, i32
  }
}

module attributes {stable_mosaic.version = 11 : i64} {
  func.func @_linear_kernel(%arg0: i32, %arg1: i32, %arg2: memref<16x512xbf16, #tpu.memory_space<vmem>>, %arg3: memref<512x32xbf16, #tpu.memory_space<vmem>>, %arg4: memref<16x32xf32, #tpu.memory_space<vmem>>) attributes {dimension_semantics = [#tpu.dimension_semantics<parallel>, #tpu.dimension_semantics<parallel>], iteration_bounds = array<i64: 1, 1>, scalar_prefetch = 0 : i64, scratch_operands = 0 : i64, tpu.core_type = #tpu.core_type<tc>, window_params = [{transform_indices = @transform_0, window_bounds = array<i64: 16, 512>}, {transform_indices = @transform_1, window_bounds = array<i64: 512, 32>}, {transform_indices = @transform_2, window_bounds = array<i64: 16, 32>}]} {
    %c0 = arith.constant 0 : index
    %c0_0 = arith.constant 0 : index
    %0 = vector.load %arg2[%c0, %c0_0] : memref<16x512xbf16, #tpu.memory_space<vmem>>, vector<16x512xbf16>
    %c0_1 = arith.constant 0 : index
    %c0_2 = arith.constant 0 : index
    %1 = vector.load %arg3[%c0_1, %c0_2] : memref<512x32xbf16, #tpu.memory_space<vmem>>, vector<512x32xbf16>
    %cst = arith.constant dense<0.000000e+00> : vector<16x32xf32>
    %2 = tpu.matmul %0, %1, %cst {dimension_numbers = #tpu.dot_dimension_numbers<[1], [0], [0], [1], [0, 0, 1, 1], [], []>} : vector<16x512xbf16>, vector<512x32xbf16>, vector<16x32xf32> -> vector<16x32xf32>
    %c0_3 = arith.constant 0 : index
    %c0_4 = arith.constant 0 : index
    %3 = vector.load %arg4[%c0_3, %c0_4] : memref<16x32xf32, #tpu.memory_space<vmem>>, vector<16x32xf32>
    tpu.vector_store %arg4[%c0_3, %c0_4], %2 {strides = array<i32>} : memref<16x32xf32, #tpu.memory_space<vmem>>, vector<16x32xf32>,
    return
  }
  func.func @transform_0(%arg0: i32, %arg1: i32) -> (i32, i32) {
    %c0_i32 = arith.constant 0 : i32
    %c0_i32_0 = arith.constant 0 : i32
    return %arg0, %c0_i32 : i32, i32
  }
  func.func @transform_1(%arg0: i32, %arg1: i32) -> (i32, i32) {
    %c0_i32 = arith.constant 0 : i32
    %c0_i32_0 = arith.constant 0 : i32
    return %c0_i32, %arg1 : i32, i32
  }
  func.func @transform_2(%arg0: i32, %arg1: i32) -> (i32, i32) {
    %c0_i32 = arith.constant 0 : i32
    return %arg0, %arg1 : i32, i32
  }
}

module attributes {stable_mosaic.version = 11 : i64} {
  func.func @_re_attn_kernel(%arg0: i32, %arg1: i32, %arg2: memref<1x8x1536xf32, #tpu.memory_space<vmem>>, %arg3: memref<8x8xf32, #tpu.memory_space<smem>>, %arg4: memref<8xf32, #tpu.memory_space<smem>>, %arg5: memref<8xf32, #tpu.memory_space<smem>>, %arg6: memref<1x8x512xbf16, #tpu.memory_space<vmem>>) attributes {dimension_semantics = [#tpu.dimension_semantics<parallel>, #tpu.dimension_semantics<parallel>], iteration_bounds = array<i64: 2, 1>, scalar_prefetch = 0 : i64, scratch_operands = 0 : i64, tpu.core_type = #tpu.core_type<tc>, window_params = [{transform_indices = @transform_0, window_bounds = array<i64: 1, 8, 1536>}, {transform_indices = @transform_1, window_bounds = array<i64: 8, 8>}, {transform_indices = @transform_2, window_bounds = array<i64: 8>}, {transform_indices = @transform_3, window_bounds = array<i64: 8>}, {transform_indices = @transform_4, window_bounds = array<i64: 1, 8, 512>}]} {
    %c8_i32 = arith.constant 8 : i32
    %0 = arith.muli %arg1, %c8_i32 : i32
    %c0 = arith.constant 0 : index
    %1 = arith.index_cast %0 : i32 to index
    %c0_0 = arith.constant 0 : index
    %2 = vector.load %arg2[%c0, %1, %c0_0] : memref<1x8x1536xf32, #tpu.memory_space<vmem>>, vector<1x8x64xf32>
    %3 = vector.shape_cast %2 : vector<1x8x64xf32> to vector<8x64xf32>
    %c0_1 = arith.constant 0 : index
    %c0_2 = arith.constant 0 : index
    %c512 = arith.constant 512 : index
    %4 = vector.load %arg2[%c0_1, %c0_2, %c512] : memref<1x8x1536xf32, #tpu.memory_space<vmem>>, vector<1x8x64xf32>
    %5 = vector.shape_cast %4 : vector<1x8x64xf32> to vector<8x64xf32>
    %c0_3 = arith.constant 0 : index
    %c0_4 = arith.constant 0 : index
    %c1024 = arith.constant 1024 : index
    %6 = vector.load %arg2[%c0_3, %c0_4, %c1024] : memref<1x8x1536xf32, #tpu.memory_space<vmem>>, vector<1x8x64xf32>
    %7 = vector.shape_cast %6 : vector<1x8x64xf32> to vector<8x64xf32>
    %8 = arith.truncf %3 : vector<8x64xf32> to vector<8x64xbf16>
    %9 = arith.truncf %5 : vector<8x64xf32> to vector<8x64xbf16>
    %cst = arith.constant dense<0.000000e+00> : vector<8x8xf32>
    %10 = tpu.matmul %8, %9, %cst {dimension_numbers = #tpu.dot_dimension_numbers<[1], [1], [0], [0], [0, 0, 1, 0], [], []>} : vector<8x64xbf16>, vector<8x64xbf16>, vector<8x8xf32> -> vector<8x8xf32>
    %cst_5 = arith.constant 1.250000e-01 : f32
    %11 = vector.broadcast %cst_5 : f32 to vector<8x8xf32>
    %12 = arith.mulf %10, %11 : vector<8x8xf32>
    %cst_6 = arith.constant dense<0xFF800000> : vector<8xf32>
    %13 = vector.multi_reduction <maximumf>, %12, %cst_6 [1] : vector<8x8xf32> to vector<8xf32>
    %14 = vector.shape_cast %13 : vector<8xf32> to vector<8x1xf32>
    %15 = vector.broadcast %14 : vector<8x1xf32> to vector<8x8xf32>
    %16 = arith.subf %12, %15 : vector<8x8xf32>
    %17 = math.exp %16 : vector<8x8xf32>
    %cst_7 = arith.constant dense<0.000000e+00> : vector<8xf32>
    %18 = vector.multi_reduction <add>, %17, %cst_7 [1] : vector<8x8xf32> to vector<8xf32>
    %19 = vector.shape_cast %18 : vector<8xf32> to vector<8x1xf32>
    %20 = tpu.reciprocal %19 {approx = true} : vector<8x1xf32> -> vector<8x1xf32>
    %21 = vector.broadcast %20 : vector<8x1xf32> to vector<8x8xf32>
    %22 = arith.mulf %17, %21 : vector<8x8xf32>
    %c0_8 = arith.constant 0 : index
    %23 = arith.index_cast %0 : i32 to index
    %c64 = arith.constant 64 : index
    %24 = vector.load %arg2[%c0_8, %23, %c64] : memref<1x8x1536xf32, #tpu.memory_space<vmem>>, vector<1x8x64xf32>
    %25 = vector.shape_cast %24 : vector<1x8x64xf32> to vector<8x64xf32>
    %c0_9 = arith.constant 0 : index
    %c0_10 = arith.constant 0 : index
    %c576 = arith.constant 576 : index
    %26 = vector.load %arg2[%c0_9, %c0_10, %c576] : memref<1x8x1536xf32, #tpu.memory_space<vmem>>, vector<1x8x64xf32>
    %27 = vector.shape_cast %26 : vector<1x8x64xf32> to vector<8x64xf32>
    %c0_11 = arith.constant 0 : index
    %c0_12 = arith.constant 0 : index
    %c1088 = arith.constant 1088 : index
    %28 = vector.load %arg2[%c0_11, %c0_12, %c1088] : memref<1x8x1536xf32, #tpu.memory_space<vmem>>, vector<1x8x64xf32>
    %29 = vector.shape_cast %28 : vector<1x8x64xf32> to vector<8x64xf32>
    %30 = arith.truncf %25 : vector<8x64xf32> to vector<8x64xbf16>
    %31 = arith.truncf %27 : vector<8x64xf32> to vector<8x64xbf16>
    %cst_13 = arith.constant dense<0.000000e+00> : vector<8x8xf32>
    %32 = tpu.matmul %30, %31, %cst_13 {dimension_numbers = #tpu.dot_dimension_numbers<[1], [1], [0], [0], [0, 0, 1, 0], [], []>} : vector<8x64xbf16>, vector<8x64xbf16>, vector<8x8xf32> -> vector<8x8xf32>
    %cst_14 = arith.constant 1.250000e-01 : f32
    %33 = vector.broadcast %cst_14 : f32 to vector<8x8xf32>
    %34 = arith.mulf %32, %33 : vector<8x8xf32>
    %cst_15 = arith.constant dense<0xFF800000> : vector<8xf32>
    %35 = vector.multi_reduction <maximumf>, %34, %cst_15 [1] : vector<8x8xf32> to vector<8xf32>
    %36 = vector.shape_cast %35 : vector<8xf32> to vector<8x1xf32>
    %37 = vector.broadcast %36 : vector<8x1xf32> to vector<8x8xf32>
    %38 = arith.subf %34, %37 : vector<8x8xf32>
    %39 = math.exp %38 : vector<8x8xf32>
    %cst_16 = arith.constant dense<0.000000e+00> : vector<8xf32>
    %40 = vector.multi_reduction <add>, %39, %cst_16 [1] : vector<8x8xf32> to vector<8xf32>
    %41 = vector.shape_cast %40 : vector<8xf32> to vector<8x1xf32>
    %42 = tpu.reciprocal %41 {approx = true} : vector<8x1xf32> -> vector<8x1xf32>
    %43 = vector.broadcast %42 : vector<8x1xf32> to vector<8x8xf32>
    %44 = arith.mulf %39, %43 : vector<8x8xf32>
    %c0_17 = arith.constant 0 : index
    %45 = arith.index_cast %0 : i32 to index
    %c128 = arith.constant 128 : index
    %46 = vector.load %arg2[%c0_17, %45, %c128] : memref<1x8x1536xf32, #tpu.memory_space<vmem>>, vector<1x8x64xf32>
    %47 = vector.shape_cast %46 : vector<1x8x64xf32> to vector<8x64xf32>
    %c0_18 = arith.constant 0 : index
    %c0_19 = arith.constant 0 : index
    %c640 = arith.constant 640 : index
    %48 = vector.load %arg2[%c0_18, %c0_19, %c640] : memref<1x8x1536xf32, #tpu.memory_space<vmem>>, vector<1x8x64xf32>
    %49 = vector.shape_cast %48 : vector<1x8x64xf32> to vector<8x64xf32>
    %c0_20 = arith.constant 0 : index
    %c0_21 = arith.constant 0 : index
    %c1152 = arith.constant 1152 : index
    %50 = vector.load %arg2[%c0_20, %c0_21, %c1152] : memref<1x8x1536xf32, #tpu.memory_space<vmem>>, vector<1x8x64xf32>
    %51 = vector.shape_cast %50 : vector<1x8x64xf32> to vector<8x64xf32>
    %52 = arith.truncf %47 : vector<8x64xf32> to vector<8x64xbf16>
    %53 = arith.truncf %49 : vector<8x64xf32> to vector<8x64xbf16>
    %cst_22 = arith.constant dense<0.000000e+00> : vector<8x8xf32>
    %54 = tpu.matmul %52, %53, %cst_22 {dimension_numbers = #tpu.dot_dimension_numbers<[1], [1], [0], [0], [0, 0, 1, 0], [], []>} : vector<8x64xbf16>, vector<8x64xbf16>, vector<8x8xf32> -> vector<8x8xf32>
    %cst_23 = arith.constant 1.250000e-01 : f32
    %55 = vector.broadcast %cst_23 : f32 to vector<8x8xf32>
    %56 = arith.mulf %54, %55 : vector<8x8xf32>
    %cst_24 = arith.constant dense<0xFF800000> : vector<8xf32>
    %57 = vector.multi_reduction <maximumf>, %56, %cst_24 [1] : vector<8x8xf32> to vector<8xf32>
    %58 = vector.shape_cast %57 : vector<8xf32> to vector<8x1xf32>
    %59 = vector.broadcast %58 : vector<8x1xf32> to vector<8x8xf32>
    %60 = arith.subf %56, %59 : vector<8x8xf32>
    %61 = math.exp %60 : vector<8x8xf32>
    %cst_25 = arith.constant dense<0.000000e+00> : vector<8xf32>
    %62 = vector.multi_reduction <add>, %61, %cst_25 [1] : vector<8x8xf32> to vector<8xf32>
    %63 = vector.shape_cast %62 : vector<8xf32> to vector<8x1xf32>
    %64 = tpu.reciprocal %63 {approx = true} : vector<8x1xf32> -> vector<8x1xf32>
    %65 = vector.broadcast %64 : vector<8x1xf32> to vector<8x8xf32>
    %66 = arith.mulf %61, %65 : vector<8x8xf32>
    %c0_26 = arith.constant 0 : index
    %67 = arith.index_cast %0 : i32 to index
    %c192 = arith.constant 192 : index
    %68 = vector.load %arg2[%c0_26, %67, %c192] : memref<1x8x1536xf32, #tpu.memory_space<vmem>>, vector<1x8x64xf32>
    %69 = vector.shape_cast %68 : vector<1x8x64xf32> to vector<8x64xf32>
    %c0_27 = arith.constant 0 : index
    %c0_28 = arith.constant 0 : index
    %c704 = arith.constant 704 : index
    %70 = vector.load %arg2[%c0_27, %c0_28, %c704] : memref<1x8x1536xf32, #tpu.memory_space<vmem>>, vector<1x8x64xf32>
    %71 = vector.shape_cast %70 : vector<1x8x64xf32> to vector<8x64xf32>
    %c0_29 = arith.constant 0 : index
    %c0_30 = arith.constant 0 : index
    %c1216 = arith.constant 1216 : index
    %72 = vector.load %arg2[%c0_29, %c0_30, %c1216] : memref<1x8x1536xf32, #tpu.memory_space<vmem>>, vector<1x8x64xf32>
    %73 = vector.shape_cast %72 : vector<1x8x64xf32> to vector<8x64xf32>
    %74 = arith.truncf %69 : vector<8x64xf32> to vector<8x64xbf16>
    %75 = arith.truncf %71 : vector<8x64xf32> to vector<8x64xbf16>
    %cst_31 = arith.constant dense<0.000000e+00> : vector<8x8xf32>
    %76 = tpu.matmul %74, %75, %cst_31 {dimension_numbers = #tpu.dot_dimension_numbers<[1], [1], [0], [0], [0, 0, 1, 0], [], []>} : vector<8x64xbf16>, vector<8x64xbf16>, vector<8x8xf32> -> vector<8x8xf32>
    %cst_32 = arith.constant 1.250000e-01 : f32
    %77 = vector.broadcast %cst_32 : f32 to vector<8x8xf32>
    %78 = arith.mulf %76, %77 : vector<8x8xf32>
    %cst_33 = arith.constant dense<0xFF800000> : vector<8xf32>
    %79 = vector.multi_reduction <maximumf>, %78, %cst_33 [1] : vector<8x8xf32> to vector<8xf32>
    %80 = vector.shape_cast %79 : vector<8xf32> to vector<8x1xf32>
    %81 = vector.broadcast %80 : vector<8x1xf32> to vector<8x8xf32>
    %82 = arith.subf %78, %81 : vector<8x8xf32>
    %83 = math.exp %82 : vector<8x8xf32>
    %cst_34 = arith.constant dense<0.000000e+00> : vector<8xf32>
    %84 = vector.multi_reduction <add>, %83, %cst_34 [1] : vector<8x8xf32> to vector<8xf32>
    %85 = vector.shape_cast %84 : vector<8xf32> to vector<8x1xf32>
    %86 = tpu.reciprocal %85 {approx = true} : vector<8x1xf32> -> vector<8x1xf32>
    %87 = vector.broadcast %86 : vector<8x1xf32> to vector<8x8xf32>
    %88 = arith.mulf %83, %87 : vector<8x8xf32>
    %c0_35 = arith.constant 0 : index
    %89 = arith.index_cast %0 : i32 to index
    %c256 = arith.constant 256 : index
    %90 = vector.load %arg2[%c0_35, %89, %c256] : memref<1x8x1536xf32, #tpu.memory_space<vmem>>, vector<1x8x64xf32>
    %91 = vector.shape_cast %90 : vector<1x8x64xf32> to vector<8x64xf32>
    %c0_36 = arith.constant 0 : index
    %c0_37 = arith.constant 0 : index
    %c768 = arith.constant 768 : index
    %92 = vector.load %arg2[%c0_36, %c0_37, %c768] : memref<1x8x1536xf32, #tpu.memory_space<vmem>>, vector<1x8x64xf32>
    %93 = vector.shape_cast %92 : vector<1x8x64xf32> to vector<8x64xf32>
    %c0_38 = arith.constant 0 : index
    %c0_39 = arith.constant 0 : index
    %c1280 = arith.constant 1280 : index
    %94 = vector.load %arg2[%c0_38, %c0_39, %c1280] : memref<1x8x1536xf32, #tpu.memory_space<vmem>>, vector<1x8x64xf32>
    %95 = vector.shape_cast %94 : vector<1x8x64xf32> to vector<8x64xf32>
    %96 = arith.truncf %91 : vector<8x64xf32> to vector<8x64xbf16>
    %97 = arith.truncf %93 : vector<8x64xf32> to vector<8x64xbf16>
    %cst_40 = arith.constant dense<0.000000e+00> : vector<8x8xf32>
    %98 = tpu.matmul %96, %97, %cst_40 {dimension_numbers = #tpu.dot_dimension_numbers<[1], [1], [0], [0], [0, 0, 1, 0], [], []>} : vector<8x64xbf16>, vector<8x64xbf16>, vector<8x8xf32> -> vector<8x8xf32>
    %cst_41 = arith.constant 1.250000e-01 : f32
    %99 = vector.broadcast %cst_41 : f32 to vector<8x8xf32>
    %100 = arith.mulf %98, %99 : vector<8x8xf32>
    %cst_42 = arith.constant dense<0xFF800000> : vector<8xf32>
    %101 = vector.multi_reduction <maximumf>, %100, %cst_42 [1] : vector<8x8xf32> to vector<8xf32>
    %102 = vector.shape_cast %101 : vector<8xf32> to vector<8x1xf32>
    %103 = vector.broadcast %102 : vector<8x1xf32> to vector<8x8xf32>
    %104 = arith.subf %100, %103 : vector<8x8xf32>
    %105 = math.exp %104 : vector<8x8xf32>
    %cst_43 = arith.constant dense<0.000000e+00> : vector<8xf32>
    %106 = vector.multi_reduction <add>, %105, %cst_43 [1] : vector<8x8xf32> to vector<8xf32>
    %107 = vector.shape_cast %106 : vector<8xf32> to vector<8x1xf32>
    %108 = tpu.reciprocal %107 {approx = true} : vector<8x1xf32> -> vector<8x1xf32>
    %109 = vector.broadcast %108 : vector<8x1xf32> to vector<8x8xf32>
    %110 = arith.mulf %105, %109 : vector<8x8xf32>
    %c0_44 = arith.constant 0 : index
    %111 = arith.index_cast %0 : i32 to index
    %c320 = arith.constant 320 : index
    %112 = vector.load %arg2[%c0_44, %111, %c320] : memref<1x8x1536xf32, #tpu.memory_space<vmem>>, vector<1x8x64xf32>
    %113 = vector.shape_cast %112 : vector<1x8x64xf32> to vector<8x64xf32>
    %c0_45 = arith.constant 0 : index
    %c0_46 = arith.constant 0 : index
    %c832 = arith.constant 832 : index
    %114 = vector.load %arg2[%c0_45, %c0_46, %c832] : memref<1x8x1536xf32, #tpu.memory_space<vmem>>, vector<1x8x64xf32>
    %115 = vector.shape_cast %114 : vector<1x8x64xf32> to vector<8x64xf32>
    %c0_47 = arith.constant 0 : index
    %c0_48 = arith.constant 0 : index
    %c1344 = arith.constant 1344 : index
    %116 = vector.load %arg2[%c0_47, %c0_48, %c1344] : memref<1x8x1536xf32, #tpu.memory_space<vmem>>, vector<1x8x64xf32>
    %117 = vector.shape_cast %116 : vector<1x8x64xf32> to vector<8x64xf32>
    %118 = arith.truncf %113 : vector<8x64xf32> to vector<8x64xbf16>
    %119 = arith.truncf %115 : vector<8x64xf32> to vector<8x64xbf16>
    %cst_49 = arith.constant dense<0.000000e+00> : vector<8x8xf32>
    %120 = tpu.matmul %118, %119, %cst_49 {dimension_numbers = #tpu.dot_dimension_numbers<[1], [1], [0], [0], [0, 0, 1, 0], [], []>} : vector<8x64xbf16>, vector<8x64xbf16>, vector<8x8xf32> -> vector<8x8xf32>
    %cst_50 = arith.constant 1.250000e-01 : f32
    %121 = vector.broadcast %cst_50 : f32 to vector<8x8xf32>
    %122 = arith.mulf %120, %121 : vector<8x8xf32>
    %cst_51 = arith.constant dense<0xFF800000> : vector<8xf32>
    %123 = vector.multi_reduction <maximumf>, %122, %cst_51 [1] : vector<8x8xf32> to vector<8xf32>
    %124 = vector.shape_cast %123 : vector<8xf32> to vector<8x1xf32>
    %125 = vector.broadcast %124 : vector<8x1xf32> to vector<8x8xf32>
    %126 = arith.subf %122, %125 : vector<8x8xf32>
    %127 = math.exp %126 : vector<8x8xf32>
    %cst_52 = arith.constant dense<0.000000e+00> : vector<8xf32>
    %128 = vector.multi_reduction <add>, %127, %cst_52 [1] : vector<8x8xf32> to vector<8xf32>
    %129 = vector.shape_cast %128 : vector<8xf32> to vector<8x1xf32>
    %130 = tpu.reciprocal %129 {approx = true} : vector<8x1xf32> -> vector<8x1xf32>
    %131 = vector.broadcast %130 : vector<8x1xf32> to vector<8x8xf32>
    %132 = arith.mulf %127, %131 : vector<8x8xf32>
    %c0_53 = arith.constant 0 : index
    %133 = arith.index_cast %0 : i32 to index
    %c384 = arith.constant 384 : index
    %134 = vector.load %arg2[%c0_53, %133, %c384] : memref<1x8x1536xf32, #tpu.memory_space<vmem>>, vector<1x8x64xf32>
    %135 = vector.shape_cast %134 : vector<1x8x64xf32> to vector<8x64xf32>
    %c0_54 = arith.constant 0 : index
    %c0_55 = arith.constant 0 : index
    %c896 = arith.constant 896 : index
    %136 = vector.load %arg2[%c0_54, %c0_55, %c896] : memref<1x8x1536xf32, #tpu.memory_space<vmem>>, vector<1x8x64xf32>
    %137 = vector.shape_cast %136 : vector<1x8x64xf32> to vector<8x64xf32>
    %c0_56 = arith.constant 0 : index
    %c0_57 = arith.constant 0 : index
    %c1408 = arith.constant 1408 : index
    %138 = vector.load %arg2[%c0_56, %c0_57, %c1408] : memref<1x8x1536xf32, #tpu.memory_space<vmem>>, vector<1x8x64xf32>
    %139 = vector.shape_cast %138 : vector<1x8x64xf32> to vector<8x64xf32>
    %140 = arith.truncf %135 : vector<8x64xf32> to vector<8x64xbf16>
    %141 = arith.truncf %137 : vector<8x64xf32> to vector<8x64xbf16>
    %cst_58 = arith.constant dense<0.000000e+00> : vector<8x8xf32>
    %142 = tpu.matmul %140, %141, %cst_58 {dimension_numbers = #tpu.dot_dimension_numbers<[1], [1], [0], [0], [0, 0, 1, 0], [], []>} : vector<8x64xbf16>, vector<8x64xbf16>, vector<8x8xf32> -> vector<8x8xf32>
    %cst_59 = arith.constant 1.250000e-01 : f32
    %143 = vector.broadcast %cst_59 : f32 to vector<8x8xf32>
    %144 = arith.mulf %142, %143 : vector<8x8xf32>
    %cst_60 = arith.constant dense<0xFF800000> : vector<8xf32>
    %145 = vector.multi_reduction <maximumf>, %144, %cst_60 [1] : vector<8x8xf32> to vector<8xf32>
    %146 = vector.shape_cast %145 : vector<8xf32> to vector<8x1xf32>
    %147 = vector.broadcast %146 : vector<8x1xf32> to vector<8x8xf32>
    %148 = arith.subf %144, %147 : vector<8x8xf32>
    %149 = math.exp %148 : vector<8x8xf32>
    %cst_61 = arith.constant dense<0.000000e+00> : vector<8xf32>
    %150 = vector.multi_reduction <add>, %149, %cst_61 [1] : vector<8x8xf32> to vector<8xf32>
    %151 = vector.shape_cast %150 : vector<8xf32> to vector<8x1xf32>
    %152 = tpu.reciprocal %151 {approx = true} : vector<8x1xf32> -> vector<8x1xf32>
    %153 = vector.broadcast %152 : vector<8x1xf32> to vector<8x8xf32>
    %154 = arith.mulf %149, %153 : vector<8x8xf32>
    %c0_62 = arith.constant 0 : index
    %155 = arith.index_cast %0 : i32 to index
    %c448 = arith.constant 448 : index
    %156 = vector.load %arg2[%c0_62, %155, %c448] : memref<1x8x1536xf32, #tpu.memory_space<vmem>>, vector<1x8x64xf32>
    %157 = vector.shape_cast %156 : vector<1x8x64xf32> to vector<8x64xf32>
    %c0_63 = arith.constant 0 : index
    %c0_64 = arith.constant 0 : index
    %c960 = arith.constant 960 : index
    %158 = vector.load %arg2[%c0_63, %c0_64, %c960] : memref<1x8x1536xf32, #tpu.memory_space<vmem>>, vector<1x8x64xf32>
    %159 = vector.shape_cast %158 : vector<1x8x64xf32> to vector<8x64xf32>
    %c0_65 = arith.constant 0 : index
    %c0_66 = arith.constant 0 : index
    %c1472 = arith.constant 1472 : index
    %160 = vector.load %arg2[%c0_65, %c0_66, %c1472] : memref<1x8x1536xf32, #tpu.memory_space<vmem>>, vector<1x8x64xf32>
    %161 = vector.shape_cast %160 : vector<1x8x64xf32> to vector<8x64xf32>
    %162 = arith.truncf %157 : vector<8x64xf32> to vector<8x64xbf16>
    %163 = arith.truncf %159 : vector<8x64xf32> to vector<8x64xbf16>
    %cst_67 = arith.constant dense<0.000000e+00> : vector<8x8xf32>
    %164 = tpu.matmul %162, %163, %cst_67 {dimension_numbers = #tpu.dot_dimension_numbers<[1], [1], [0], [0], [0, 0, 1, 0], [], []>} : vector<8x64xbf16>, vector<8x64xbf16>, vector<8x8xf32> -> vector<8x8xf32>
    %cst_68 = arith.constant 1.250000e-01 : f32
    %165 = vector.broadcast %cst_68 : f32 to vector<8x8xf32>
    %166 = arith.mulf %164, %165 : vector<8x8xf32>
    %cst_69 = arith.constant dense<0xFF800000> : vector<8xf32>
    %167 = vector.multi_reduction <maximumf>, %166, %cst_69 [1] : vector<8x8xf32> to vector<8xf32>
    %168 = vector.shape_cast %167 : vector<8xf32> to vector<8x1xf32>
    %169 = vector.broadcast %168 : vector<8x1xf32> to vector<8x8xf32>
    %170 = arith.subf %166, %169 : vector<8x8xf32>
    %171 = math.exp %170 : vector<8x8xf32>
    %cst_70 = arith.constant dense<0.000000e+00> : vector<8xf32>
    %172 = vector.multi_reduction <add>, %171, %cst_70 [1] : vector<8x8xf32> to vector<8xf32>
    %173 = vector.shape_cast %172 : vector<8xf32> to vector<8x1xf32>
    %174 = tpu.reciprocal %173 {approx = true} : vector<8x1xf32> -> vector<8x1xf32>
    %175 = vector.broadcast %174 : vector<8x1xf32> to vector<8x8xf32>
    %176 = arith.mulf %171, %175 : vector<8x8xf32>
    %c0_71 = arith.constant 0 : index
    %c0_72 = arith.constant 0 : index
    %177 = memref.load %arg3[%c0_71, %c0_72] : memref<8x8xf32, #tpu.memory_space<smem>>
    %178 = vector.broadcast %177 : f32 to vector<8x8xf32>
    %179 = arith.mulf %22, %178 : vector<8x8xf32>
    %c1 = arith.constant 1 : index
    %c0_73 = arith.constant 0 : index
    %180 = memref.load %arg3[%c1, %c0_73] : memref<8x8xf32, #tpu.memory_space<smem>>
    %181 = vector.broadcast %180 : f32 to vector<8x8xf32>
    %182 = arith.mulf %44, %181 : vector<8x8xf32>
    %183 = arith.addf %179, %182 : vector<8x8xf32>
    %c2 = arith.constant 2 : index
    %c0_74 = arith.constant 0 : index
    %184 = memref.load %arg3[%c2, %c0_74] : memref<8x8xf32, #tpu.memory_space<smem>>
    %185 = vector.broadcast %184 : f32 to vector<8x8xf32>
    %186 = arith.mulf %66, %185 : vector<8x8xf32>
    %187 = arith.addf %183, %186 : vector<8x8xf32>
    %c3 = arith.constant 3 : index
    %c0_75 = arith.constant 0 : index
    %188 = memref.load %arg3[%c3, %c0_75] : memref<8x8xf32, #tpu.memory_space<smem>>
    %189 = vector.broadcast %188 : f32 to vector<8x8xf32>
    %190 = arith.mulf %88, %189 : vector<8x8xf32>
    %191 = arith.addf %187, %190 : vector<8x8xf32>
    %c4 = arith.constant 4 : index
    %c0_76 = arith.constant 0 : index
    %192 = memref.load %arg3[%c4, %c0_76] : memref<8x8xf32, #tpu.memory_space<smem>>
    %193 = vector.broadcast %192 : f32 to vector<8x8xf32>
    %194 = arith.mulf %110, %193 : vector<8x8xf32>
    %195 = arith.addf %191, %194 : vector<8x8xf32>
    %c5 = arith.constant 5 : index
    %c0_77 = arith.constant 0 : index
    %196 = memref.load %arg3[%c5, %c0_77] : memref<8x8xf32, #tpu.memory_space<smem>>
    %197 = vector.broadcast %196 : f32 to vector<8x8xf32>
    %198 = arith.mulf %132, %197 : vector<8x8xf32>
    %199 = arith.addf %195, %198 : vector<8x8xf32>
    %c6 = arith.constant 6 : index
    %c0_78 = arith.constant 0 : index
    %200 = memref.load %arg3[%c6, %c0_78] : memref<8x8xf32, #tpu.memory_space<smem>>
    %201 = vector.broadcast %200 : f32 to vector<8x8xf32>
    %202 = arith.mulf %154, %201 : vector<8x8xf32>
    %203 = arith.addf %199, %202 : vector<8x8xf32>
    %c7 = arith.constant 7 : index
    %c0_79 = arith.constant 0 : index
    %204 = memref.load %arg3[%c7, %c0_79] : memref<8x8xf32, #tpu.memory_space<smem>>
    %205 = vector.broadcast %204 : f32 to vector<8x8xf32>
    %206 = arith.mulf %176, %205 : vector<8x8xf32>
    %207 = arith.addf %203, %206 : vector<8x8xf32>
    %c0_80 = arith.constant 0 : index
    %c1_81 = arith.constant 1 : index
    %208 = memref.load %arg3[%c0_80, %c1_81] : memref<8x8xf32, #tpu.memory_space<smem>>
    %209 = vector.broadcast %208 : f32 to vector<8x8xf32>
    %210 = arith.mulf %22, %209 : vector<8x8xf32>
    %c1_82 = arith.constant 1 : index
    %c1_83 = arith.constant 1 : index
    %211 = memref.load %arg3[%c1_82, %c1_83] : memref<8x8xf32, #tpu.memory_space<smem>>
    %212 = vector.broadcast %211 : f32 to vector<8x8xf32>
    %213 = arith.mulf %44, %212 : vector<8x8xf32>
    %214 = arith.addf %210, %213 : vector<8x8xf32>
    %c2_84 = arith.constant 2 : index
    %c1_85 = arith.constant 1 : index
    %215 = memref.load %arg3[%c2_84, %c1_85] : memref<8x8xf32, #tpu.memory_space<smem>>
    %216 = vector.broadcast %215 : f32 to vector<8x8xf32>
    %217 = arith.mulf %66, %216 : vector<8x8xf32>
    %218 = arith.addf %214, %217 : vector<8x8xf32>
    %c3_86 = arith.constant 3 : index
    %c1_87 = arith.constant 1 : index
    %219 = memref.load %arg3[%c3_86, %c1_87] : memref<8x8xf32, #tpu.memory_space<smem>>
    %220 = vector.broadcast %219 : f32 to vector<8x8xf32>
    %221 = arith.mulf %88, %220 : vector<8x8xf32>
    %222 = arith.addf %218, %221 : vector<8x8xf32>
    %c4_88 = arith.constant 4 : index
    %c1_89 = arith.constant 1 : index
    %223 = memref.load %arg3[%c4_88, %c1_89] : memref<8x8xf32, #tpu.memory_space<smem>>
    %224 = vector.broadcast %223 : f32 to vector<8x8xf32>
    %225 = arith.mulf %110, %224 : vector<8x8xf32>
    %226 = arith.addf %222, %225 : vector<8x8xf32>
    %c5_90 = arith.constant 5 : index
    %c1_91 = arith.constant 1 : index
    %227 = memref.load %arg3[%c5_90, %c1_91] : memref<8x8xf32, #tpu.memory_space<smem>>
    %228 = vector.broadcast %227 : f32 to vector<8x8xf32>
    %229 = arith.mulf %132, %228 : vector<8x8xf32>
    %230 = arith.addf %226, %229 : vector<8x8xf32>
    %c6_92 = arith.constant 6 : index
    %c1_93 = arith.constant 1 : index
    %231 = memref.load %arg3[%c6_92, %c1_93] : memref<8x8xf32, #tpu.memory_space<smem>>
    %232 = vector.broadcast %231 : f32 to vector<8x8xf32>
    %233 = arith.mulf %154, %232 : vector<8x8xf32>
    %234 = arith.addf %230, %233 : vector<8x8xf32>
    %c7_94 = arith.constant 7 : index
    %c1_95 = arith.constant 1 : index
    %235 = memref.load %arg3[%c7_94, %c1_95] : memref<8x8xf32, #tpu.memory_space<smem>>
    %236 = vector.broadcast %235 : f32 to vector<8x8xf32>
    %237 = arith.mulf %176, %236 : vector<8x8xf32>
    %238 = arith.addf %234, %237 : vector<8x8xf32>
    %c0_96 = arith.constant 0 : index
    %c2_97 = arith.constant 2 : index
    %239 = memref.load %arg3[%c0_96, %c2_97] : memref<8x8xf32, #tpu.memory_space<smem>>
    %240 = vector.broadcast %239 : f32 to vector<8x8xf32>
    %241 = arith.mulf %22, %240 : vector<8x8xf32>
    %c1_98 = arith.constant 1 : index
    %c2_99 = arith.constant 2 : index
    %242 = memref.load %arg3[%c1_98, %c2_99] : memref<8x8xf32, #tpu.memory_space<smem>>
    %243 = vector.broadcast %242 : f32 to vector<8x8xf32>
    %244 = arith.mulf %44, %243 : vector<8x8xf32>
    %245 = arith.addf %241, %244 : vector<8x8xf32>
    %c2_100 = arith.constant 2 : index
    %c2_101 = arith.constant 2 : index
    %246 = memref.load %arg3[%c2_100, %c2_101] : memref<8x8xf32, #tpu.memory_space<smem>>
    %247 = vector.broadcast %246 : f32 to vector<8x8xf32>
    %248 = arith.mulf %66, %247 : vector<8x8xf32>
    %249 = arith.addf %245, %248 : vector<8x8xf32>
    %c3_102 = arith.constant 3 : index
    %c2_103 = arith.constant 2 : index
    %250 = memref.load %arg3[%c3_102, %c2_103] : memref<8x8xf32, #tpu.memory_space<smem>>
    %251 = vector.broadcast %250 : f32 to vector<8x8xf32>
    %252 = arith.mulf %88, %251 : vector<8x8xf32>
    %253 = arith.addf %249, %252 : vector<8x8xf32>
    %c4_104 = arith.constant 4 : index
    %c2_105 = arith.constant 2 : index
    %254 = memref.load %arg3[%c4_104, %c2_105] : memref<8x8xf32, #tpu.memory_space<smem>>
    %255 = vector.broadcast %254 : f32 to vector<8x8xf32>
    %256 = arith.mulf %110, %255 : vector<8x8xf32>
    %257 = arith.addf %253, %256 : vector<8x8xf32>
    %c5_106 = arith.constant 5 : index
    %c2_107 = arith.constant 2 : index
    %258 = memref.load %arg3[%c5_106, %c2_107] : memref<8x8xf32, #tpu.memory_space<smem>>
    %259 = vector.broadcast %258 : f32 to vector<8x8xf32>
    %260 = arith.mulf %132, %259 : vector<8x8xf32>
    %261 = arith.addf %257, %260 : vector<8x8xf32>
    %c6_108 = arith.constant 6 : index
    %c2_109 = arith.constant 2 : index
    %262 = memref.load %arg3[%c6_108, %c2_109] : memref<8x8xf32, #tpu.memory_space<smem>>
    %263 = vector.broadcast %262 : f32 to vector<8x8xf32>
    %264 = arith.mulf %154, %263 : vector<8x8xf32>
    %265 = arith.addf %261, %264 : vector<8x8xf32>
    %c7_110 = arith.constant 7 : index
    %c2_111 = arith.constant 2 : index
    %266 = memref.load %arg3[%c7_110, %c2_111] : memref<8x8xf32, #tpu.memory_space<smem>>
    %267 = vector.broadcast %266 : f32 to vector<8x8xf32>
    %268 = arith.mulf %176, %267 : vector<8x8xf32>
    %269 = arith.addf %265, %268 : vector<8x8xf32>
    %c0_112 = arith.constant 0 : index
    %c3_113 = arith.constant 3 : index
    %270 = memref.load %arg3[%c0_112, %c3_113] : memref<8x8xf32, #tpu.memory_space<smem>>
    %271 = vector.broadcast %270 : f32 to vector<8x8xf32>
    %272 = arith.mulf %22, %271 : vector<8x8xf32>
    %c1_114 = arith.constant 1 : index
    %c3_115 = arith.constant 3 : index
    %273 = memref.load %arg3[%c1_114, %c3_115] : memref<8x8xf32, #tpu.memory_space<smem>>
    %274 = vector.broadcast %273 : f32 to vector<8x8xf32>
    %275 = arith.mulf %44, %274 : vector<8x8xf32>
    %276 = arith.addf %272, %275 : vector<8x8xf32>
    %c2_116 = arith.constant 2 : index
    %c3_117 = arith.constant 3 : index
    %277 = memref.load %arg3[%c2_116, %c3_117] : memref<8x8xf32, #tpu.memory_space<smem>>
    %278 = vector.broadcast %277 : f32 to vector<8x8xf32>
    %279 = arith.mulf %66, %278 : vector<8x8xf32>
    %280 = arith.addf %276, %279 : vector<8x8xf32>
    %c3_118 = arith.constant 3 : index
    %c3_119 = arith.constant 3 : index
    %281 = memref.load %arg3[%c3_118, %c3_119] : memref<8x8xf32, #tpu.memory_space<smem>>
    %282 = vector.broadcast %281 : f32 to vector<8x8xf32>
    %283 = arith.mulf %88, %282 : vector<8x8xf32>
    %284 = arith.addf %280, %283 : vector<8x8xf32>
    %c4_120 = arith.constant 4 : index
    %c3_121 = arith.constant 3 : index
    %285 = memref.load %arg3[%c4_120, %c3_121] : memref<8x8xf32, #tpu.memory_space<smem>>
    %286 = vector.broadcast %285 : f32 to vector<8x8xf32>
    %287 = arith.mulf %110, %286 : vector<8x8xf32>
    %288 = arith.addf %284, %287 : vector<8x8xf32>
    %c5_122 = arith.constant 5 : index
    %c3_123 = arith.constant 3 : index
    %289 = memref.load %arg3[%c5_122, %c3_123] : memref<8x8xf32, #tpu.memory_space<smem>>
    %290 = vector.broadcast %289 : f32 to vector<8x8xf32>
    %291 = arith.mulf %132, %290 : vector<8x8xf32>
    %292 = arith.addf %288, %291 : vector<8x8xf32>
    %c6_124 = arith.constant 6 : index
    %c3_125 = arith.constant 3 : index
    %293 = memref.load %arg3[%c6_124, %c3_125] : memref<8x8xf32, #tpu.memory_space<smem>>
    %294 = vector.broadcast %293 : f32 to vector<8x8xf32>
    %295 = arith.mulf %154, %294 : vector<8x8xf32>
    %296 = arith.addf %292, %295 : vector<8x8xf32>
    %c7_126 = arith.constant 7 : index
    %c3_127 = arith.constant 3 : index
    %297 = memref.load %arg3[%c7_126, %c3_127] : memref<8x8xf32, #tpu.memory_space<smem>>
    %298 = vector.broadcast %297 : f32 to vector<8x8xf32>
    %299 = arith.mulf %176, %298 : vector<8x8xf32>
    %300 = arith.addf %296, %299 : vector<8x8xf32>
    %c0_128 = arith.constant 0 : index
    %c4_129 = arith.constant 4 : index
    %301 = memref.load %arg3[%c0_128, %c4_129] : memref<8x8xf32, #tpu.memory_space<smem>>
    %302 = vector.broadcast %301 : f32 to vector<8x8xf32>
    %303 = arith.mulf %22, %302 : vector<8x8xf32>
    %c1_130 = arith.constant 1 : index
    %c4_131 = arith.constant 4 : index
    %304 = memref.load %arg3[%c1_130, %c4_131] : memref<8x8xf32, #tpu.memory_space<smem>>
    %305 = vector.broadcast %304 : f32 to vector<8x8xf32>
    %306 = arith.mulf %44, %305 : vector<8x8xf32>
    %307 = arith.addf %303, %306 : vector<8x8xf32>
    %c2_132 = arith.constant 2 : index
    %c4_133 = arith.constant 4 : index
    %308 = memref.load %arg3[%c2_132, %c4_133] : memref<8x8xf32, #tpu.memory_space<smem>>
    %309 = vector.broadcast %308 : f32 to vector<8x8xf32>
    %310 = arith.mulf %66, %309 : vector<8x8xf32>
    %311 = arith.addf %307, %310 : vector<8x8xf32>
    %c3_134 = arith.constant 3 : index
    %c4_135 = arith.constant 4 : index
    %312 = memref.load %arg3[%c3_134, %c4_135] : memref<8x8xf32, #tpu.memory_space<smem>>
    %313 = vector.broadcast %312 : f32 to vector<8x8xf32>
    %314 = arith.mulf %88, %313 : vector<8x8xf32>
    %315 = arith.addf %311, %314 : vector<8x8xf32>
    %c4_136 = arith.constant 4 : index
    %c4_137 = arith.constant 4 : index
    %316 = memref.load %arg3[%c4_136, %c4_137] : memref<8x8xf32, #tpu.memory_space<smem>>
    %317 = vector.broadcast %316 : f32 to vector<8x8xf32>
    %318 = arith.mulf %110, %317 : vector<8x8xf32>
    %319 = arith.addf %315, %318 : vector<8x8xf32>
    %c5_138 = arith.constant 5 : index
    %c4_139 = arith.constant 4 : index
    %320 = memref.load %arg3[%c5_138, %c4_139] : memref<8x8xf32, #tpu.memory_space<smem>>
    %321 = vector.broadcast %320 : f32 to vector<8x8xf32>
    %322 = arith.mulf %132, %321 : vector<8x8xf32>
    %323 = arith.addf %319, %322 : vector<8x8xf32>
    %c6_140 = arith.constant 6 : index
    %c4_141 = arith.constant 4 : index
    %324 = memref.load %arg3[%c6_140, %c4_141] : memref<8x8xf32, #tpu.memory_space<smem>>
    %325 = vector.broadcast %324 : f32 to vector<8x8xf32>
    %326 = arith.mulf %154, %325 : vector<8x8xf32>
    %327 = arith.addf %323, %326 : vector<8x8xf32>
    %c7_142 = arith.constant 7 : index
    %c4_143 = arith.constant 4 : index
    %328 = memref.load %arg3[%c7_142, %c4_143] : memref<8x8xf32, #tpu.memory_space<smem>>
    %329 = vector.broadcast %328 : f32 to vector<8x8xf32>
    %330 = arith.mulf %176, %329 : vector<8x8xf32>
    %331 = arith.addf %327, %330 : vector<8x8xf32>
    %c0_144 = arith.constant 0 : index
    %c5_145 = arith.constant 5 : index
    %332 = memref.load %arg3[%c0_144, %c5_145] : memref<8x8xf32, #tpu.memory_space<smem>>
    %333 = vector.broadcast %332 : f32 to vector<8x8xf32>
    %334 = arith.mulf %22, %333 : vector<8x8xf32>
    %c1_146 = arith.constant 1 : index
    %c5_147 = arith.constant 5 : index
    %335 = memref.load %arg3[%c1_146, %c5_147] : memref<8x8xf32, #tpu.memory_space<smem>>
    %336 = vector.broadcast %335 : f32 to vector<8x8xf32>
    %337 = arith.mulf %44, %336 : vector<8x8xf32>
    %338 = arith.addf %334, %337 : vector<8x8xf32>
    %c2_148 = arith.constant 2 : index
    %c5_149 = arith.constant 5 : index
    %339 = memref.load %arg3[%c2_148, %c5_149] : memref<8x8xf32, #tpu.memory_space<smem>>
    %340 = vector.broadcast %339 : f32 to vector<8x8xf32>
    %341 = arith.mulf %66, %340 : vector<8x8xf32>
    %342 = arith.addf %338, %341 : vector<8x8xf32>
    %c3_150 = arith.constant 3 : index
    %c5_151 = arith.constant 5 : index
    %343 = memref.load %arg3[%c3_150, %c5_151] : memref<8x8xf32, #tpu.memory_space<smem>>
    %344 = vector.broadcast %343 : f32 to vector<8x8xf32>
    %345 = arith.mulf %88, %344 : vector<8x8xf32>
    %346 = arith.addf %342, %345 : vector<8x8xf32>
    %c4_152 = arith.constant 4 : index
    %c5_153 = arith.constant 5 : index
    %347 = memref.load %arg3[%c4_152, %c5_153] : memref<8x8xf32, #tpu.memory_space<smem>>
    %348 = vector.broadcast %347 : f32 to vector<8x8xf32>
    %349 = arith.mulf %110, %348 : vector<8x8xf32>
    %350 = arith.addf %346, %349 : vector<8x8xf32>
    %c5_154 = arith.constant 5 : index
    %c5_155 = arith.constant 5 : index
    %351 = memref.load %arg3[%c5_154, %c5_155] : memref<8x8xf32, #tpu.memory_space<smem>>
    %352 = vector.broadcast %351 : f32 to vector<8x8xf32>
    %353 = arith.mulf %132, %352 : vector<8x8xf32>
    %354 = arith.addf %350, %353 : vector<8x8xf32>
    %c6_156 = arith.constant 6 : index
    %c5_157 = arith.constant 5 : index
    %355 = memref.load %arg3[%c6_156, %c5_157] : memref<8x8xf32, #tpu.memory_space<smem>>
    %356 = vector.broadcast %355 : f32 to vector<8x8xf32>
    %357 = arith.mulf %154, %356 : vector<8x8xf32>
    %358 = arith.addf %354, %357 : vector<8x8xf32>
    %c7_158 = arith.constant 7 : index
    %c5_159 = arith.constant 5 : index
    %359 = memref.load %arg3[%c7_158, %c5_159] : memref<8x8xf32, #tpu.memory_space<smem>>
    %360 = vector.broadcast %359 : f32 to vector<8x8xf32>
    %361 = arith.mulf %176, %360 : vector<8x8xf32>
    %362 = arith.addf %358, %361 : vector<8x8xf32>
    %c0_160 = arith.constant 0 : index
    %c6_161 = arith.constant 6 : index
    %363 = memref.load %arg3[%c0_160, %c6_161] : memref<8x8xf32, #tpu.memory_space<smem>>
    %364 = vector.broadcast %363 : f32 to vector<8x8xf32>
    %365 = arith.mulf %22, %364 : vector<8x8xf32>
    %c1_162 = arith.constant 1 : index
    %c6_163 = arith.constant 6 : index
    %366 = memref.load %arg3[%c1_162, %c6_163] : memref<8x8xf32, #tpu.memory_space<smem>>
    %367 = vector.broadcast %366 : f32 to vector<8x8xf32>
    %368 = arith.mulf %44, %367 : vector<8x8xf32>
    %369 = arith.addf %365, %368 : vector<8x8xf32>
    %c2_164 = arith.constant 2 : index
    %c6_165 = arith.constant 6 : index
    %370 = memref.load %arg3[%c2_164, %c6_165] : memref<8x8xf32, #tpu.memory_space<smem>>
    %371 = vector.broadcast %370 : f32 to vector<8x8xf32>
    %372 = arith.mulf %66, %371 : vector<8x8xf32>
    %373 = arith.addf %369, %372 : vector<8x8xf32>
    %c3_166 = arith.constant 3 : index
    %c6_167 = arith.constant 6 : index
    %374 = memref.load %arg3[%c3_166, %c6_167] : memref<8x8xf32, #tpu.memory_space<smem>>
    %375 = vector.broadcast %374 : f32 to vector<8x8xf32>
    %376 = arith.mulf %88, %375 : vector<8x8xf32>
    %377 = arith.addf %373, %376 : vector<8x8xf32>
    %c4_168 = arith.constant 4 : index
    %c6_169 = arith.constant 6 : index
    %378 = memref.load %arg3[%c4_168, %c6_169] : memref<8x8xf32, #tpu.memory_space<smem>>
    %379 = vector.broadcast %378 : f32 to vector<8x8xf32>
    %380 = arith.mulf %110, %379 : vector<8x8xf32>
    %381 = arith.addf %377, %380 : vector<8x8xf32>
    %c5_170 = arith.constant 5 : index
    %c6_171 = arith.constant 6 : index
    %382 = memref.load %arg3[%c5_170, %c6_171] : memref<8x8xf32, #tpu.memory_space<smem>>
    %383 = vector.broadcast %382 : f32 to vector<8x8xf32>
    %384 = arith.mulf %132, %383 : vector<8x8xf32>
    %385 = arith.addf %381, %384 : vector<8x8xf32>
    %c6_172 = arith.constant 6 : index
    %c6_173 = arith.constant 6 : index
    %386 = memref.load %arg3[%c6_172, %c6_173] : memref<8x8xf32, #tpu.memory_space<smem>>
    %387 = vector.broadcast %386 : f32 to vector<8x8xf32>
    %388 = arith.mulf %154, %387 : vector<8x8xf32>
    %389 = arith.addf %385, %388 : vector<8x8xf32>
    %c7_174 = arith.constant 7 : index
    %c6_175 = arith.constant 6 : index
    %390 = memref.load %arg3[%c7_174, %c6_175] : memref<8x8xf32, #tpu.memory_space<smem>>
    %391 = vector.broadcast %390 : f32 to vector<8x8xf32>
    %392 = arith.mulf %176, %391 : vector<8x8xf32>
    %393 = arith.addf %389, %392 : vector<8x8xf32>
    %c0_176 = arith.constant 0 : index
    %c7_177 = arith.constant 7 : index
    %394 = memref.load %arg3[%c0_176, %c7_177] : memref<8x8xf32, #tpu.memory_space<smem>>
    %395 = vector.broadcast %394 : f32 to vector<8x8xf32>
    %396 = arith.mulf %22, %395 : vector<8x8xf32>
    %c1_178 = arith.constant 1 : index
    %c7_179 = arith.constant 7 : index
    %397 = memref.load %arg3[%c1_178, %c7_179] : memref<8x8xf32, #tpu.memory_space<smem>>
    %398 = vector.broadcast %397 : f32 to vector<8x8xf32>
    %399 = arith.mulf %44, %398 : vector<8x8xf32>
    %400 = arith.addf %396, %399 : vector<8x8xf32>
    %c2_180 = arith.constant 2 : index
    %c7_181 = arith.constant 7 : index
    %401 = memref.load %arg3[%c2_180, %c7_181] : memref<8x8xf32, #tpu.memory_space<smem>>
    %402 = vector.broadcast %401 : f32 to vector<8x8xf32>
    %403 = arith.mulf %66, %402 : vector<8x8xf32>
    %404 = arith.addf %400, %403 : vector<8x8xf32>
    %c3_182 = arith.constant 3 : index
    %c7_183 = arith.constant 7 : index
    %405 = memref.load %arg3[%c3_182, %c7_183] : memref<8x8xf32, #tpu.memory_space<smem>>
    %406 = vector.broadcast %405 : f32 to vector<8x8xf32>
    %407 = arith.mulf %88, %406 : vector<8x8xf32>
    %408 = arith.addf %404, %407 : vector<8x8xf32>
    %c4_184 = arith.constant 4 : index
    %c7_185 = arith.constant 7 : index
    %409 = memref.load %arg3[%c4_184, %c7_185] : memref<8x8xf32, #tpu.memory_space<smem>>
    %410 = vector.broadcast %409 : f32 to vector<8x8xf32>
    %411 = arith.mulf %110, %410 : vector<8x8xf32>
    %412 = arith.addf %408, %411 : vector<8x8xf32>
    %c5_186 = arith.constant 5 : index
    %c7_187 = arith.constant 7 : index
    %413 = memref.load %arg3[%c5_186, %c7_187] : memref<8x8xf32, #tpu.memory_space<smem>>
    %414 = vector.broadcast %413 : f32 to vector<8x8xf32>
    %415 = arith.mulf %132, %414 : vector<8x8xf32>
    %416 = arith.addf %412, %415 : vector<8x8xf32>
    %c6_188 = arith.constant 6 : index
    %c7_189 = arith.constant 7 : index
    %417 = memref.load %arg3[%c6_188, %c7_189] : memref<8x8xf32, #tpu.memory_space<smem>>
    %418 = vector.broadcast %417 : f32 to vector<8x8xf32>
    %419 = arith.mulf %154, %418 : vector<8x8xf32>
    %420 = arith.addf %416, %419 : vector<8x8xf32>
    %c7_190 = arith.constant 7 : index
    %c7_191 = arith.constant 7 : index
    %421 = memref.load %arg3[%c7_190, %c7_191] : memref<8x8xf32, #tpu.memory_space<smem>>
    %422 = vector.broadcast %421 : f32 to vector<8x8xf32>
    %423 = arith.mulf %176, %422 : vector<8x8xf32>
    %424 = arith.addf %420, %423 : vector<8x8xf32>
    %425 = arith.addf %207, %238 : vector<8x8xf32>
    %426 = arith.addf %425, %269 : vector<8x8xf32>
    %427 = arith.addf %426, %300 : vector<8x8xf32>
    %428 = arith.addf %427, %331 : vector<8x8xf32>
    %429 = arith.addf %428, %362 : vector<8x8xf32>
    %430 = arith.addf %429, %393 : vector<8x8xf32>
    %431 = arith.addf %430, %424 : vector<8x8xf32>
    %cst_192 = arith.constant 1.250000e-01 : f32
    %432 = vector.broadcast %cst_192 : f32 to vector<8x8xf32>
    %433 = arith.mulf %431, %432 : vector<8x8xf32>
    %434 = arith.subf %207, %433 : vector<8x8xf32>
    %435 = arith.subf %207, %433 : vector<8x8xf32>
    %436 = arith.mulf %434, %435 : vector<8x8xf32>
    %437 = arith.subf %238, %433 : vector<8x8xf32>
    %438 = arith.subf %238, %433 : vector<8x8xf32>
    %439 = arith.mulf %437, %438 : vector<8x8xf32>
    %440 = arith.addf %436, %439 : vector<8x8xf32>
    %441 = arith.subf %269, %433 : vector<8x8xf32>
    %442 = arith.subf %269, %433 : vector<8x8xf32>
    %443 = arith.mulf %441, %442 : vector<8x8xf32>
    %444 = arith.addf %440, %443 : vector<8x8xf32>
    %445 = arith.subf %300, %433 : vector<8x8xf32>
    %446 = arith.subf %300, %433 : vector<8x8xf32>
    %447 = arith.mulf %445, %446 : vector<8x8xf32>
    %448 = arith.addf %444, %447 : vector<8x8xf32>
    %449 = arith.subf %331, %433 : vector<8x8xf32>
    %450 = arith.subf %331, %433 : vector<8x8xf32>
    %451 = arith.mulf %449, %450 : vector<8x8xf32>
    %452 = arith.addf %448, %451 : vector<8x8xf32>
    %453 = arith.subf %362, %433 : vector<8x8xf32>
    %454 = arith.subf %362, %433 : vector<8x8xf32>
    %455 = arith.mulf %453, %454 : vector<8x8xf32>
    %456 = arith.addf %452, %455 : vector<8x8xf32>
    %457 = arith.subf %393, %433 : vector<8x8xf32>
    %458 = arith.subf %393, %433 : vector<8x8xf32>
    %459 = arith.mulf %457, %458 : vector<8x8xf32>
    %460 = arith.addf %456, %459 : vector<8x8xf32>
    %461 = arith.subf %424, %433 : vector<8x8xf32>
    %462 = arith.subf %424, %433 : vector<8x8xf32>
    %463 = arith.mulf %461, %462 : vector<8x8xf32>
    %464 = arith.addf %460, %463 : vector<8x8xf32>
    %cst_193 = arith.constant 1.250000e-01 : f32
    %465 = vector.broadcast %cst_193 : f32 to vector<8x8xf32>
    %466 = arith.mulf %464, %465 : vector<8x8xf32>
    %cst_194 = arith.constant 9.99999974E-6 : f32
    %467 = vector.broadcast %cst_194 : f32 to vector<8x8xf32>
    %468 = arith.addf %466, %467 : vector<8x8xf32>
    %469 = math.rsqrt %468 : vector<8x8xf32>
    %470 = arith.subf %207, %433 : vector<8x8xf32>
    %471 = arith.mulf %470, %469 : vector<8x8xf32>
    %c0_195 = arith.constant 0 : index
    %472 = memref.load %arg4[%c0_195] : memref<8xf32, #tpu.memory_space<smem>>
    %473 = vector.broadcast %472 : f32 to vector<8x8xf32>
    %474 = arith.mulf %471, %473 : vector<8x8xf32>
    %c0_196 = arith.constant 0 : index
    %475 = memref.load %arg5[%c0_196] : memref<8xf32, #tpu.memory_space<smem>>
    %476 = vector.broadcast %475 : f32 to vector<8x8xf32>
    %477 = arith.addf %474, %476 : vector<8x8xf32>
    %478 = arith.truncf %477 : vector<8x8xf32> to vector<8x8xbf16>
    %479 = arith.truncf %7 : vector<8x64xf32> to vector<8x64xbf16>
    %cst_197 = arith.constant dense<0.000000e+00> : vector<8x64xf32>
    %480 = tpu.matmul %478, %479, %cst_197 {dimension_numbers = #tpu.dot_dimension_numbers<[1], [0], [0], [1], [0, 0, 1, 1], [], []>} : vector<8x8xbf16>, vector<8x64xbf16>, vector<8x64xf32> -> vector<8x64xf32>
    %481 = arith.subf %238, %433 : vector<8x8xf32>
    %482 = arith.mulf %481, %469 : vector<8x8xf32>
    %c1_198 = arith.constant 1 : index
    %483 = memref.load %arg4[%c1_198] : memref<8xf32, #tpu.memory_space<smem>>
    %484 = vector.broadcast %483 : f32 to vector<8x8xf32>
    %485 = arith.mulf %482, %484 : vector<8x8xf32>
    %c1_199 = arith.constant 1 : index
    %486 = memref.load %arg5[%c1_199] : memref<8xf32, #tpu.memory_space<smem>>
    %487 = vector.broadcast %486 : f32 to vector<8x8xf32>
    %488 = arith.addf %485, %487 : vector<8x8xf32>
    %489 = arith.truncf %488 : vector<8x8xf32> to vector<8x8xbf16>
    %490 = arith.truncf %29 : vector<8x64xf32> to vector<8x64xbf16>
    %cst_200 = arith.constant dense<0.000000e+00> : vector<8x64xf32>
    %491 = tpu.matmul %489, %490, %cst_200 {dimension_numbers = #tpu.dot_dimension_numbers<[1], [0], [0], [1], [0, 0, 1, 1], [], []>} : vector<8x8xbf16>, vector<8x64xbf16>, vector<8x64xf32> -> vector<8x64xf32>
    %492 = arith.subf %269, %433 : vector<8x8xf32>
    %493 = arith.mulf %492, %469 : vector<8x8xf32>
    %c2_201 = arith.constant 2 : index
    %494 = memref.load %arg4[%c2_201] : memref<8xf32, #tpu.memory_space<smem>>
    %495 = vector.broadcast %494 : f32 to vector<8x8xf32>
    %496 = arith.mulf %493, %495 : vector<8x8xf32>
    %c2_202 = arith.constant 2 : index
    %497 = memref.load %arg5[%c2_202] : memref<8xf32, #tpu.memory_space<smem>>
    %498 = vector.broadcast %497 : f32 to vector<8x8xf32>
    %499 = arith.addf %496, %498 : vector<8x8xf32>
    %500 = arith.truncf %499 : vector<8x8xf32> to vector<8x8xbf16>
    %501 = arith.truncf %51 : vector<8x64xf32> to vector<8x64xbf16>
    %cst_203 = arith.constant dense<0.000000e+00> : vector<8x64xf32>
    %502 = tpu.matmul %500, %501, %cst_203 {dimension_numbers = #tpu.dot_dimension_numbers<[1], [0], [0], [1], [0, 0, 1, 1], [], []>} : vector<8x8xbf16>, vector<8x64xbf16>, vector<8x64xf32> -> vector<8x64xf32>
    %503 = arith.subf %300, %433 : vector<8x8xf32>
    %504 = arith.mulf %503, %469 : vector<8x8xf32>
    %c3_204 = arith.constant 3 : index
    %505 = memref.load %arg4[%c3_204] : memref<8xf32, #tpu.memory_space<smem>>
    %506 = vector.broadcast %505 : f32 to vector<8x8xf32>
    %507 = arith.mulf %504, %506 : vector<8x8xf32>
    %c3_205 = arith.constant 3 : index
    %508 = memref.load %arg5[%c3_205] : memref<8xf32, #tpu.memory_space<smem>>
    %509 = vector.broadcast %508 : f32 to vector<8x8xf32>
    %510 = arith.addf %507, %509 : vector<8x8xf32>
    %511 = arith.truncf %510 : vector<8x8xf32> to vector<8x8xbf16>
    %512 = arith.truncf %73 : vector<8x64xf32> to vector<8x64xbf16>
    %cst_206 = arith.constant dense<0.000000e+00> : vector<8x64xf32>
    %513 = tpu.matmul %511, %512, %cst_206 {dimension_numbers = #tpu.dot_dimension_numbers<[1], [0], [0], [1], [0, 0, 1, 1], [], []>} : vector<8x8xbf16>, vector<8x64xbf16>, vector<8x64xf32> -> vector<8x64xf32>
    %514 = arith.subf %331, %433 : vector<8x8xf32>
    %515 = arith.mulf %514, %469 : vector<8x8xf32>
    %c4_207 = arith.constant 4 : index
    %516 = memref.load %arg4[%c4_207] : memref<8xf32, #tpu.memory_space<smem>>
    %517 = vector.broadcast %516 : f32 to vector<8x8xf32>
    %518 = arith.mulf %515, %517 : vector<8x8xf32>
    %c4_208 = arith.constant 4 : index
    %519 = memref.load %arg5[%c4_208] : memref<8xf32, #tpu.memory_space<smem>>
    %520 = vector.broadcast %519 : f32 to vector<8x8xf32>
    %521 = arith.addf %518, %520 : vector<8x8xf32>
    %522 = arith.truncf %521 : vector<8x8xf32> to vector<8x8xbf16>
    %523 = arith.truncf %95 : vector<8x64xf32> to vector<8x64xbf16>
    %cst_209 = arith.constant dense<0.000000e+00> : vector<8x64xf32>
    %524 = tpu.matmul %522, %523, %cst_209 {dimension_numbers = #tpu.dot_dimension_numbers<[1], [0], [0], [1], [0, 0, 1, 1], [], []>} : vector<8x8xbf16>, vector<8x64xbf16>, vector<8x64xf32> -> vector<8x64xf32>
    %525 = arith.subf %362, %433 : vector<8x8xf32>
    %526 = arith.mulf %525, %469 : vector<8x8xf32>
    %c5_210 = arith.constant 5 : index
    %527 = memref.load %arg4[%c5_210] : memref<8xf32, #tpu.memory_space<smem>>
    %528 = vector.broadcast %527 : f32 to vector<8x8xf32>
    %529 = arith.mulf %526, %528 : vector<8x8xf32>
    %c5_211 = arith.constant 5 : index
    %530 = memref.load %arg5[%c5_211] : memref<8xf32, #tpu.memory_space<smem>>
    %531 = vector.broadcast %530 : f32 to vector<8x8xf32>
    %532 = arith.addf %529, %531 : vector<8x8xf32>
    %533 = arith.truncf %532 : vector<8x8xf32> to vector<8x8xbf16>
    %534 = arith.truncf %117 : vector<8x64xf32> to vector<8x64xbf16>
    %cst_212 = arith.constant dense<0.000000e+00> : vector<8x64xf32>
    %535 = tpu.matmul %533, %534, %cst_212 {dimension_numbers = #tpu.dot_dimension_numbers<[1], [0], [0], [1], [0, 0, 1, 1], [], []>} : vector<8x8xbf16>, vector<8x64xbf16>, vector<8x64xf32> -> vector<8x64xf32>
    %536 = arith.subf %393, %433 : vector<8x8xf32>
    %537 = arith.mulf %536, %469 : vector<8x8xf32>
    %c6_213 = arith.constant 6 : index
    %538 = memref.load %arg4[%c6_213] : memref<8xf32, #tpu.memory_space<smem>>
    %539 = vector.broadcast %538 : f32 to vector<8x8xf32>
    %540 = arith.mulf %537, %539 : vector<8x8xf32>
    %c6_214 = arith.constant 6 : index
    %541 = memref.load %arg5[%c6_214] : memref<8xf32, #tpu.memory_space<smem>>
    %542 = vector.broadcast %541 : f32 to vector<8x8xf32>
    %543 = arith.addf %540, %542 : vector<8x8xf32>
    %544 = arith.truncf %543 : vector<8x8xf32> to vector<8x8xbf16>
    %545 = arith.truncf %139 : vector<8x64xf32> to vector<8x64xbf16>
    %cst_215 = arith.constant dense<0.000000e+00> : vector<8x64xf32>
    %546 = tpu.matmul %544, %545, %cst_215 {dimension_numbers = #tpu.dot_dimension_numbers<[1], [0], [0], [1], [0, 0, 1, 1], [], []>} : vector<8x8xbf16>, vector<8x64xbf16>, vector<8x64xf32> -> vector<8x64xf32>
    %547 = arith.subf %424, %433 : vector<8x8xf32>
    %548 = arith.mulf %547, %469 : vector<8x8xf32>
    %c7_216 = arith.constant 7 : index
    %549 = memref.load %arg4[%c7_216] : memref<8xf32, #tpu.memory_space<smem>>
    %550 = vector.broadcast %549 : f32 to vector<8x8xf32>
    %551 = arith.mulf %548, %550 : vector<8x8xf32>
    %c7_217 = arith.constant 7 : index
    %552 = memref.load %arg5[%c7_217] : memref<8xf32, #tpu.memory_space<smem>>
    %553 = vector.broadcast %552 : f32 to vector<8x8xf32>
    %554 = arith.addf %551, %553 : vector<8x8xf32>
    %555 = arith.truncf %554 : vector<8x8xf32> to vector<8x8xbf16>
    %556 = arith.truncf %161 : vector<8x64xf32> to vector<8x64xbf16>
    %cst_218 = arith.constant dense<0.000000e+00> : vector<8x64xf32>
    %557 = tpu.matmul %555, %556, %cst_218 {dimension_numbers = #tpu.dot_dimension_numbers<[1], [0], [0], [1], [0, 0, 1, 1], [], []>} : vector<8x8xbf16>, vector<8x64xbf16>, vector<8x64xf32> -> vector<8x64xf32>
    %558 = tpu.concatenate %480, %491, %502, %513, %524, %535, %546, %557 in 1 : vector<8x64xf32>, vector<8x64xf32>, vector<8x64xf32>, vector<8x64xf32>, vector<8x64xf32>, vector<8x64xf32>, vector<8x64xf32>, vector<8x64xf32> -> vector<8x512xf32>
    %559 = arith.truncf %558 : vector<8x512xf32> to vector<8x512xbf16>
    %c0_219 = arith.constant 0 : index
    %c0_220 = arith.constant 0 : index
    %c0_221 = arith.constant 0 : index
    %560 = vector.load %arg6[%c0_219, %c0_220, %c0_221] : memref<1x8x512xbf16, #tpu.memory_space<vmem>>, vector<1x8x512xbf16>
    %561 = vector.shape_cast %560 : vector<1x8x512xbf16> to vector<8x512xbf16>
    %562 = vector.shape_cast %559 : vector<8x512xbf16> to vector<1x8x512xbf16>
    tpu.vector_store %arg6[%c0_219, %c0_220, %c0_221], %562 {strides = array<i32>} : memref<1x8x512xbf16, #tpu.memory_space<vmem>>, vector<1x8x512xbf16>,
    return
  }
  func.func @transform_0(%arg0: i32, %arg1: i32) -> (i32, i32, i32) {
    %c0_i32 = arith.constant 0 : i32
    %c1_i32 = arith.constant 1 : i32
    %c0_i32_0 = arith.constant 0 : i32
    return %arg0, %c0_i32, %c1_i32 : i32, i32, i32
  }
  func.func @transform_1(%arg0: i32, %arg1: i32) -> (i32, i32) {
    %c0_i32 = arith.constant 0 : i32
    %c0_i32_0 = arith.constant 0 : i32
    %c0_i32_1 = arith.constant 0 : i32
    return %c0_i32, %c0_i32_0 : i32, i32
  }
  func.func @transform_2(%arg0: i32, %arg1: i32) -> i32 {
    %c0_i32 = arith.constant 0 : i32
    %c0_i32_0 = arith.constant 0 : i32
    return %c0_i32 : i32
  }
  func.func @transform_3(%arg0: i32, %arg1: i32) -> i32 {
    %c0_i32 = arith.constant 0 : i32
    %c0_i32_0 = arith.constant 0 : i32
    return %c0_i32 : i32
  }
  func.func @transform_4(%arg0: i32, %arg1: i32) -> (i32, i32, i32) {
    %c0_i32 = arith.constant 0 : i32
    %c0_i32_0 = arith.constant 0 : i32
    return %arg0, %arg1, %c0_i32 : i32, i32, i32
  }
}

module attributes {stable_mosaic.version = 11 : i64} {
  func.func @_linear_kernel(%arg0: i32, %arg1: i32, %arg2: memref<16x512xbf16, #tpu.memory_space<vmem>>, %arg3: memref<512x32xbf16, #tpu.memory_space<vmem>>, %arg4: memref<1x32xf32, #tpu.memory_space<vmem>>, %arg5: memref<16x32xf32, #tpu.memory_space<vmem>>, %arg6: memref<16x32xf32, #tpu.memory_space<vmem>>, %arg7: memref<1xf32, #tpu.memory_space<smem>>, %arg8: memref<16x32xf32, #tpu.memory_space<vmem>>) attributes {dimension_semantics = [#tpu.dimension_semantics<parallel>, #tpu.dimension_semantics<parallel>], iteration_bounds = array<i64: 1, 1>, scalar_prefetch = 0 : i64, scratch_operands = 0 : i64, tpu.core_type = #tpu.core_type<tc>, window_params = [{transform_indices = @transform_0, window_bounds = array<i64: 16, 512>}, {transform_indices = @transform_1, window_bounds = array<i64: 512, 32>}, {transform_indices = @transform_2, window_bounds = array<i64: 1, 32>}, {transform_indices = @transform_3, window_bounds = array<i64: 16, 32>}, {transform_indices = @transform_4, window_bounds = array<i64: 16, 32>}, {transform_indices = @transform_5, window_bounds = array<i64: 1>}, {transform_indices = @transform_6, window_bounds = array<i64: 16, 32>}]} {
    %c0 = arith.constant 0 : index
    %c0_0 = arith.constant 0 : index
    %0 = vector.load %arg2[%c0, %c0_0] : memref<16x512xbf16, #tpu.memory_space<vmem>>, vector<16x512xbf16>
    %c0_1 = arith.constant 0 : index
    %c0_2 = arith.constant 0 : index
    %1 = vector.load %arg3[%c0_1, %c0_2] : memref<512x32xbf16, #tpu.memory_space<vmem>>, vector<512x32xbf16>
    %cst = arith.constant dense<0.000000e+00> : vector<16x32xf32>
    %2 = tpu.matmul %0, %1, %cst {dimension_numbers = #tpu.dot_dimension_numbers<[1], [0], [0], [1], [0, 0, 1, 1], [], []>} : vector<16x512xbf16>, vector<512x32xbf16>, vector<16x32xf32> -> vector<16x32xf32>
    %c0_3 = arith.constant 0 : index
    %c0_4 = arith.constant 0 : index
    %3 = vector.load %arg4[%c0_3, %c0_4] : memref<1x32xf32, #tpu.memory_space<vmem>>, vector<1x32xf32>
    %4 = vector.broadcast %3 : vector<1x32xf32> to vector<16x32xf32>
    %5 = arith.addf %2, %4 : vector<16x32xf32>
    %c0_5 = arith.constant 0 : index
    %c0_6 = arith.constant 0 : index
    %6 = vector.load %arg5[%c0_5, %c0_6] : memref<16x32xf32, #tpu.memory_space<vmem>>, vector<16x32xf32>
    %7 = arith.addf %5, %6 : vector<16x32xf32>
    %c0_7 = arith.constant 0 : index
    %c0_8 = arith.constant 0 : index
    %8 = vector.load %arg6[%c0_7, %c0_8] : memref<16x32xf32, #tpu.memory_space<vmem>>, vector<16x32xf32>
    %c0_9 = arith.constant 0 : index
    %9 = memref.load %arg7[%c0_9] : memref<1xf32, #tpu.memory_space<smem>>
    %10 = vector.broadcast %9 : f32 to vector<16x32xf32>
    %11 = arith.mulf %10, %7 : vector<16x32xf32>
    %12 = arith.addf %8, %11 : vector<16x32xf32>
    %c0_10 = arith.constant 0 : index
    %c0_11 = arith.constant 0 : index
    %13 = vector.load %arg8[%c0_10, %c0_11] : memref<16x32xf32, #tpu.memory_space<vmem>>, vector<16x32xf32>
    tpu.vector_store %arg8[%c0_10, %c0_11], %12 {strides = array<i32>} : memref<16x32xf32, #tpu.memory_space<vmem>>, vector<16x32xf32>,
    return
  }
  func.func @transform_0(%arg0: i32, %arg1: i32) -> (i32, i32) {
    %c0_i32 = arith.constant 0 : i32
    %c0_i32_0 = arith.constant 0 : i32
    return %arg0, %c0_i32 : i32, i32
  }
  func.func @transform_1(%arg0: i32, %arg1: i32) -> (i32, i32) {
    %c0_i32 = arith.constant 0 : i32
    %c0_i32_0 = arith.constant 0 : i32
    return %c0_i32, %arg1 : i32, i32
  }
  func.func @transform_2(%arg0: i32, %arg1: i32) -> (i32, i32) {
    %c0_i32 = arith.constant 0 : i32
    %c0_i32_0 = arith.constant 0 : i32
    return %c0_i32, %arg1 : i32, i32
  }
  func.func @transform_3(%arg0: i32, %arg1: i32) -> (i32, i32) {
    %c0_i32 = arith.constant 0 : i32
    return %arg0, %arg1 : i32, i32
  }
  func.func @transform_4(%arg0: i32, %arg1: i32) -> (i32, i32) {
    %c0_i32 = arith.constant 0 : i32
    return %arg0, %arg1 : i32, i32
  }
  func.func @transform_5(%arg0: i32, %arg1: i32) -> i32 {
    %c0_i32 = arith.constant 0 : i32
    %c0_i32_0 = arith.constant 0 : i32
    return %c0_i32 : i32
  }
  func.func @transform_6(%arg0: i32, %arg1: i32) -> (i32, i32) {
    %c0_i32 = arith.constant 0 : i32
    return %arg0, %arg1 : i32, i32
  }
}

module attributes {stable_mosaic.version = 11 : i64} {
  func.func @_linear_kernel(%arg0: i32, %arg1: i32, %arg2: memref<16x64xbf16, #tpu.memory_space<vmem>>, %arg3: memref<64x32xbf16, #tpu.memory_space<vmem>>, %arg4: memref<1x32xf32, #tpu.memory_space<vmem>>, %arg5: memref<16x32xf32, #tpu.memory_space<vmem>>, %arg6: memref<1xf32, #tpu.memory_space<smem>>, %arg7: memref<16x32xf32, #tpu.memory_space<vmem>>) attributes {dimension_semantics = [#tpu.dimension_semantics<parallel>, #tpu.dimension_semantics<parallel>], iteration_bounds = array<i64: 1, 1>, scalar_prefetch = 0 : i64, scratch_operands = 0 : i64, tpu.core_type = #tpu.core_type<tc>, window_params = [{transform_indices = @transform_0, window_bounds = array<i64: 16, 64>}, {transform_indices = @transform_1, window_bounds = array<i64: 64, 32>}, {transform_indices = @transform_2, window_bounds = array<i64: 1, 32>}, {transform_indices = @transform_3, window_bounds = array<i64: 16, 32>}, {transform_indices = @transform_4, window_bounds = array<i64: 1>}, {transform_indices = @transform_5, window_bounds = array<i64: 16, 32>}]} {
    %c0 = arith.constant 0 : index
    %c0_0 = arith.constant 0 : index
    %0 = vector.load %arg2[%c0, %c0_0] : memref<16x64xbf16, #tpu.memory_space<vmem>>, vector<16x64xbf16>
    %c0_1 = arith.constant 0 : index
    %c0_2 = arith.constant 0 : index
    %1 = vector.load %arg3[%c0_1, %c0_2] : memref<64x32xbf16, #tpu.memory_space<vmem>>, vector<64x32xbf16>
    %cst = arith.constant dense<0.000000e+00> : vector<16x32xf32>
    %2 = tpu.matmul %0, %1, %cst {dimension_numbers = #tpu.dot_dimension_numbers<[1], [0], [0], [1], [0, 0, 1, 1], [], []>} : vector<16x64xbf16>, vector<64x32xbf16>, vector<16x32xf32> -> vector<16x32xf32>
    %c0_3 = arith.constant 0 : index
    %c0_4 = arith.constant 0 : index
    %3 = vector.load %arg4[%c0_3, %c0_4] : memref<1x32xf32, #tpu.memory_space<vmem>>, vector<1x32xf32>
    %4 = vector.broadcast %3 : vector<1x32xf32> to vector<16x32xf32>
    %5 = arith.addf %2, %4 : vector<16x32xf32>
    %c0_5 = arith.constant 0 : index
    %c0_6 = arith.constant 0 : index
    %6 = vector.load %arg5[%c0_5, %c0_6] : memref<16x32xf32, #tpu.memory_space<vmem>>, vector<16x32xf32>
    %c0_7 = arith.constant 0 : index
    %7 = memref.load %arg6[%c0_7] : memref<1xf32, #tpu.memory_space<smem>>
    %8 = vector.broadcast %7 : f32 to vector<16x32xf32>
    %9 = arith.mulf %8, %5 : vector<16x32xf32>
    %10 = arith.addf %6, %9 : vector<16x32xf32>
    %c0_8 = arith.constant 0 : index
    %c0_9 = arith.constant 0 : index
    %11 = vector.load %arg7[%c0_8, %c0_9] : memref<16x32xf32, #tpu.memory_space<vmem>>, vector<16x32xf32>
    tpu.vector_store %arg7[%c0_8, %c0_9], %10 {strides = array<i32>} : memref<16x32xf32, #tpu.memory_space<vmem>>, vector<16x32xf32>,
    return
  }
  func.func @transform_0(%arg0: i32, %arg1: i32) -> (i32, i32) {
    %c0_i32 = arith.constant 0 : i32
    %c0_i32_0 = arith.constant 0 : i32
    return %arg0, %c0_i32 : i32, i32
  }
  func.func @transform_1(%arg0: i32, %arg1: i32) -> (i32, i32) {
    %c0_i32 = arith.constant 0 : i32
    %c0_i32_0 = arith.constant 0 : i32
    return %c0_i32, %arg1 : i32, i32
  }
  func.func @transform_2(%arg0: i32, %arg1: i32) -> (i32, i32) {
    %c0_i32 = arith.constant 0 : i32
    %c0_i32_0 = arith.constant 0 : i32
    return %c0_i32, %arg1 : i32, i32
  }
  func.func @transform_3(%arg0: i32, %arg1: i32) -> (i32, i32) {
    %c0_i32 = arith.constant 0 : i32
    return %arg0, %arg1 : i32, i32
  }
  func.func @transform_4(%arg0: i32, %arg1: i32) -> i32 {
    %c0_i32 = arith.constant 0 : i32
    %c0_i32_0 = arith.constant 0 : i32
    return %c0_i32 : i32
  }
  func.func @transform_5(%arg0: i32, %arg1: i32) -> (i32, i32) {
    %c0_i32 = arith.constant 0 : i32
    return %arg0, %arg1 : i32, i32
  }
}

module attributes {stable_mosaic.version = 11 : i64} {
  func.func @_linear_kernel(%arg0: i32, %arg1: i32, %arg2: memref<16x32xf32, #tpu.memory_space<vmem>>, %arg3: memref<1x32xf32, #tpu.memory_space<vmem>>, %arg4: memref<1x32xf32, #tpu.memory_space<vmem>>, %arg5: memref<32x64xbf16, #tpu.memory_space<vmem>>, %arg6: memref<1x64xf32, #tpu.memory_space<vmem>>, %arg7: memref<16x64xbf16, #tpu.memory_space<vmem>>) attributes {dimension_semantics = [#tpu.dimension_semantics<parallel>, #tpu.dimension_semantics<parallel>], iteration_bounds = array<i64: 1, 1>, scalar_prefetch = 0 : i64, scratch_operands = 0 : i64, tpu.core_type = #tpu.core_type<tc>, window_params = [{transform_indices = @transform_0, window_bounds = array<i64: 16, 32>}, {pipeline_mode = #tpu.pipeline_mode<synchronous>, transform_indices = @transform_1, window_bounds = array<i64: 1, 32>}, {pipeline_mode = #tpu.pipeline_mode<synchronous>, transform_indices = @transform_2, window_bounds = array<i64: 1, 32>}, {transform_indices = @transform_3, window_bounds = array<i64: 32, 64>}, {transform_indices = @transform_4, window_bounds = array<i64: 1, 64>}, {transform_indices = @transform_5, window_bounds = array<i64: 16, 64>}]} {
    %c0 = arith.constant 0 : index
    %c0_0 = arith.constant 0 : index
    %0 = vector.load %arg2[%c0, %c0_0] : memref<16x32xf32, #tpu.memory_space<vmem>>, vector<16x32xf32>
    %cst = arith.constant dense<0.000000e+00> : vector<16xf32>
    %1 = vector.multi_reduction <add>, %0, %cst [1] : vector<16x32xf32> to vector<16xf32>
    %2 = vector.shape_cast %1 : vector<16xf32> to vector<16x1xf32>
    %cst_1 = arith.constant 3.200000e+01 : f32
    %3 = vector.broadcast %cst_1 : f32 to vector<16x1xf32>
    %4 = arith.divf %2, %3 : vector<16x1xf32>
    %5 = vector.broadcast %4 : vector<16x1xf32> to vector<16x32xf32>
    %6 = arith.subf %0, %5 : vector<16x32xf32>
    %7 = vector.broadcast %4 : vector<16x1xf32> to vector<16x32xf32>
    %8 = arith.subf %0, %7 : vector<16x32xf32>
    %9 = arith.mulf %6, %8 : vector<16x32xf32>
    %cst_2 = arith.constant dense<0.000000e+00> : vector<16xf32>
    %10 = vector.multi_reduction <add>, %9, %cst_2 [1] : vector<16x32xf32> to vector<16xf32>
    %11 = vector.shape_cast %10 : vector<16xf32> to vector<16x1xf32>
    %cst_3 = arith.constant 3.200000e+01 : f32
    %12 = vector.broadcast %cst_3 : f32 to vector<16x1xf32>
    %13 = arith.divf %11, %12 : vector<16x1xf32>
    %14 = vector.broadcast %4 : vector<16x1xf32> to vector<16x32xf32>
    %15 = arith.subf %0, %14 : vector<16x32xf32>
    %cst_4 = arith.constant 9.99999974E-6 : f32
    %16 = vector.broadcast %cst_4 : f32 to vector<16x1xf32>
    %17 = arith.addf %13, %16 : vector<16x1xf32>
    %18 = math.rsqrt %17 : vector<16x1xf32>
    %19 = vector.broadcast %18 : vector<16x1xf32> to vector<16x32xf32>
    %20 = arith.mulf %15, %19 : vector<16x32xf32>
    %c0_5 = arith.constant 0 : index
    %c0_6 = arith.constant 0 : index
    %21 = vector.load %arg3[%c0_5, %c0_6] : memref<1x32xf32, #tpu.memory_space<vmem>>, vector<1x32xf32>
    %22 = vector.broadcast %21 : vector<1x32xf32> to vector<16x32xf32>
    %23 = arith.mulf %20, %22 : vector<16x32xf32>
    %c0_7 = arith.constant 0 : index
    %c0_8 = arith.constant 0 : index
    %24 = vector.load %arg4[%c0_7, %c0_8] : memref<1x32xf32, #tpu.memory_space<vmem>>, vector<1x32xf32>
    %25 = vector.broadcast %24 : vector<1x32xf32> to vector<16x32xf32>
    %26 = arith.addf %23, %25 : vector<16x32xf32>
    %27 = arith.truncf %26 : vector<16x32xf32> to vector<16x32xbf16>
    %c0_9 = arith.constant 0 : index
    %c0_10 = arith.constant 0 : index
    %28 = vector.load %arg5[%c0_9, %c0_10] : memref<32x64xbf16, #tpu.memory_space<vmem>>, vector<32x64xbf16>
    %cst_11 = arith.constant dense<0.000000e+00> : vector<16x64xf32>
    %29 = tpu.matmul %27, %28, %cst_11 {dimension_numbers = #tpu.dot_dimension_numbers<[1], [0], [0], [1], [0, 0, 1, 1], [], []>} : vector<16x32xbf16>, vector<32x64xbf16>, vector<16x64xf32> -> vector<16x64xf32>
    %c0_12 = arith.constant 0 : index
    %c0_13 = arith.constant 0 : index
    %30 = vector.load %arg6[%c0_12, %c0_13] : memref<1x64xf32, #tpu.memory_space<vmem>>, vector<1x64xf32>
    %31 = vector.broadcast %30 : vector<1x64xf32> to vector<16x64xf32>
    %32 = arith.addf %29, %31 : vector<16x64xf32>
    %cst_14 = arith.constant 5.000000e-01 : f32
    %33 = vector.broadcast %cst_14 : f32 to vector<16x64xf32>
    %34 = arith.mulf %33, %32 : vector<16x64xf32>
    %cst_15 = arith.constant 0.707106769 : f32
    %35 = vector.broadcast %cst_15 : f32 to vector<16x64xf32>
    %36 = arith.mulf %32, %35 : vector<16x64xf32>
    %37 = math.erf %36 : vector<16x64xf32>
    %cst_16 = arith.constant 1.000000e+00 : f32
    %38 = vector.broadcast %cst_16 : f32 to vector<16x64xf32>
    %39 = arith.addf %38, %37 : vector<16x64xf32>
    %40 = arith.mulf %34, %39 : vector<16x64xf32>
    %41 = arith.truncf %40 : vector<16x64xf32> to vector<16x64xbf16>
    %c0_17 = arith.constant 0 : index
    %c0_18 = arith.constant 0 : index
    %42 = vector.load %arg7[%c0_17, %c0_18] : memref<16x64xbf16, #tpu.memory_space<vmem>>, vector<16x64xbf16>
    tpu.vector_store %arg7[%c0_17, %c0_18], %41 {strides = array<i32>} : memref<16x64xbf16, #tpu.memory_space<vmem>>, vector<16x64xbf16>,
    return
  }
  func.func @transform_0(%arg0: i32, %arg1: i32) -> (i32, i32) {
    %c0_i32 = arith.constant 0 : i32
    %c0_i32_0 = arith.constant 0 : i32
    return %arg0, %c0_i32 : i32, i32
  }
  func.func @transform_1(%arg0: i32, %arg1: i32) -> (i32, i32) {
    %c0_i32 = arith.constant 0 : i32
    %c0_i32_0 = arith.constant 0 : i32
    %c0_i32_1 = arith.constant 0 : i32
    return %c0_i32, %c0_i32_0 : i32, i32
  }
  func.func @transform_2(%arg0: i32, %arg1: i32) -> (i32, i32) {
    %c0_i32 = arith.constant 0 : i32
    %c0_i32_0 = arith.constant 0 : i32
    %c0_i32_1 = arith.constant 0 : i32
    return %c0_i32, %c0_i32_0 : i32, i32
  }
  func.func @transform_3(%arg0: i32, %arg1: i32) -> (i32, i32) {
    %c0_i32 = arith.constant 0 : i32
    %c0_i32_0 = arith.constant 0 : i32
    return %c0_i32, %arg1 : i32, i32
  }
  func.func @transform_4(%arg0: i32, %arg1: i32) -> (i32, i32) {
    %c0_i32 = arith.constant 0 : i32
    %c0_i32_0 = arith.constant 0 : i32
    return %c0_i32, %arg1 : i32, i32
  }
  func.func @transform_5(%arg0: i32, %arg1: i32) -> (i32, i32) {
    %c0_i32 = arith.constant 0 : i32
    return %arg0, %arg1 : i32, i32
  }
}

module attributes {stable_mosaic.version = 11 : i64} {
  func.func @_linear_kernel(%arg0: i32, %arg1: i32, %arg2: memref<16x32xf32, #tpu.memory_space<vmem>>, %arg3: memref<1x32xf32, #tpu.memory_space<vmem>>, %arg4: memref<1x32xf32, #tpu.memory_space<vmem>>, %arg5: memref<32x512xbf16, #tpu.memory_space<vmem>>, %arg6: memref<16x512xf32, #tpu.memory_space<vmem>>) attributes {dimension_semantics = [#tpu.dimension_semantics<parallel>, #tpu.dimension_semantics<parallel>], iteration_bounds = array<i64: 1, 6>, scalar_prefetch = 0 : i64, scratch_operands = 0 : i64, tpu.core_type = #tpu.core_type<tc>, window_params = [{transform_indices = @transform_0, window_bounds = array<i64: 16, 32>}, {pipeline_mode = #tpu.pipeline_mode<synchronous>, transform_indices = @transform_1, window_bounds = array<i64: 1, 32>}, {pipeline_mode = #tpu.pipeline_mode<synchronous>, transform_indices = @transform_2, window_bounds = array<i64: 1, 32>}, {transform_indices = @transform_3, window_bounds = array<i64: 32, 512>}, {transform_indices = @transform_4, window_bounds = array<i64: 16, 512>}]} {
    %c0 = arith.constant 0 : index
    %c0_0 = arith.constant 0 : index
    %0 = vector.load %arg2[%c0, %c0_0] : memref<16x32xf32, #tpu.memory_space<vmem>>, vector<16x32xf32>
    %cst = arith.constant dense<0.000000e+00> : vector<16xf32>
    %1 = vector.multi_reduction <add>, %0, %cst [1] : vector<16x32xf32> to vector<16xf32>
    %2 = vector.shape_cast %1 : vector<16xf32> to vector<16x1xf32>
    %cst_1 = arith.constant 3.200000e+01 : f32
    %3 = vector.broadcast %cst_1 : f32 to vector<16x1xf32>
    %4 = arith.divf %2, %3 : vector<16x1xf32>
    %5 = vector.broadcast %4 : vector<16x1xf32> to vector<16x32xf32>
    %6 = arith.subf %0, %5 : vector<16x32xf32>
    %7 = vector.broadcast %4 : vector<16x1xf32> to vector<16x32xf32>
    %8 = arith.subf %0, %7 : vector<16x32xf32>
    %9 = arith.mulf %6, %8 : vector<16x32xf32>
    %cst_2 = arith.constant dense<0.000000e+00> : vector<16xf32>
    %10 = vector.multi_reduction <add>, %9, %cst_2 [1] : vector<16x32xf32> to vector<16xf32>
    %11 = vector.shape_cast %10 : vector<16xf32> to vector<16x1xf32>
    %cst_3 = arith.constant 3.200000e+01 : f32
    %12 = vector.broadcast %cst_3 : f32 to vector<16x1xf32>
    %13 = arith.divf %11, %12 : vector<16x1xf32>
    %14 = vector.broadcast %4 : vector<16x1xf32> to vector<16x32xf32>
    %15 = arith.subf %0, %14 : vector<16x32xf32>
    %cst_4 = arith.constant 9.99999974E-6 : f32
    %16 = vector.broadcast %cst_4 : f32 to vector<16x1xf32>
    %17 = arith.addf %13, %16 : vector<16x1xf32>
    %18 = math.rsqrt %17 : vector<16x1xf32>
    %19 = vector.broadcast %18 : vector<16x1xf32> to vector<16x32xf32>
    %20 = arith.mulf %15, %19 : vector<16x32xf32>
    %c0_5 = arith.constant 0 : index
    %c0_6 = arith.constant 0 : index
    %21 = vector.load %arg3[%c0_5, %c0_6] : memref<1x32xf32, #tpu.memory_space<vmem>>, vector<1x32xf32>
    %22 = vector.broadcast %21 : vector<1x32xf32> to vector<16x32xf32>
    %23 = arith.mulf %20, %22 : vector<16x32xf32>
    %c0_7 = arith.constant 0 : index
    %c0_8 = arith.constant 0 : index
    %24 = vector.load %arg4[%c0_7, %c0_8] : memref<1x32xf32, #tpu.memory_space<vmem>>, vector<1x32xf32>
    %25 = vector.broadcast %24 : vector<1x32xf32> to vector<16x32xf32>
    %26 = arith.addf %23, %25 : vector<16x32xf32>
    %27 = arith.truncf %26 : vector<16x32xf32> to vector<16x32xbf16>
    %c0_9 = arith.constant 0 : index
    %c0_10 = arith.constant 0 : index
    %28 = vector.load %arg5[%c0_9, %c0_10] : memref<32x512xbf16, #tpu.memory_space<vmem>>, vector<32x512xbf16>
    %cst_11 = arith.constant dense<0.000000e+00> : vector<16x512xf32>
    %29 = tpu.matmul %27, %28, %cst_11 {dimension_numbers = #tpu.dot_dimension_numbers<[1], [0], [0], [1], [0, 0, 1, 1], [], []>} : vector<16x32xbf16>, vector<32x512xbf16>, vector<16x512xf32> -> vector<16x512xf32>
    %c0_12 = arith.constant 0 : index
    %c0_13 = arith.constant 0 : index
    %30 = vector.load %arg6[%c0_12, %c0_13] : memref<16x512xf32, #tpu.memory_space<vmem>>, vector<16x512xf32>
    tpu.vector_store %arg6[%c0_12, %c0_13], %29 {strides = array<i32>} : memref<16x512xf32, #tpu.memory_space<vmem>>, vector<16x512xf32>,
    return
  }
  func.func @transform_0(%arg0: i32, %arg1: i32) -> (i32, i32) {
    %c0_i32 = arith.constant 0 : i32
    %c0_i32_0 = arith.constant 0 : i32
    return %arg0, %c0_i32 : i32, i32
  }
  func.func @transform_1(%arg0: i32, %arg1: i32) -> (i32, i32) {
    %c0_i32 = arith.constant 0 : i32
    %c0_i32_0 = arith.constant 0 : i32
    %c0_i32_1 = arith.constant 0 : i32
    return %c0_i32, %c0_i32_0 : i32, i32
  }
  func.func @transform_2(%arg0: i32, %arg1: i32) -> (i32, i32) {
    %c0_i32 = arith.constant 0 : i32
    %c0_i32_0 = arith.constant 0 : i32
    %c0_i32_1 = arith.constant 0 : i32
    return %c0_i32, %c0_i32_0 : i32, i32
  }
  func.func @transform_3(%arg0: i32, %arg1: i32) -> (i32, i32) {
    %c0_i32 = arith.constant 0 : i32
    %c0_i32_0 = arith.constant 0 : i32
    return %c0_i32, %arg1 : i32, i32
  }
  func.func @transform_4(%arg0: i32, %arg1: i32) -> (i32, i32) {
    %c0_i32 = arith.constant 0 : i32
    return %arg0, %arg1 : i32, i32
  }
}

</mosaic_0001>

<llo_original>
// kernel: transformer_encoder.14
$region0: #{transformer_encoder.14}
  #allocation0 [shape = 'u32[]', space=smem, size = 0x4, offset = 0x4, fixed_abs, tag = 'smem constant byte address 0x4 - core index']
  #allocation1 [shape = 'u32[144,128]{1,0:T(1,128)}', space=vmem, size = 0x12000, scoped, tag = 'internal scratch']
  %s0 = inlined_call_operand.vmem [shape: f32[16,32], index: 0, kind: input, shape index: {}]
  %s1 = inlined_call_operand.vmem [shape: f32[1,32], index: 1, kind: input, shape index: {}]
  %s2 = inlined_call_operand.vmem [shape: f32[1,32], index: 2, kind: input, shape index: {}]
  %s3 = inlined_call_operand.hbm [shape: bf16[32,3072], index: 3, kind: input, shape index: {}]
  %s4 = inlined_call_operand.vmem [shape: f32[16,3072], index: 4, kind: output, shape index: {}]
  %s5 = sld [smem:[#allocation0]]
  $region72: #{transformer_encoder.14} parent=0
    _
  %s7 = ssub.s32 1, %s5
  %s8 = scalar_select 0, %s7, %s5
  $region1: #{transformer_encoder.14} parent=0
    #allocation2 [shape = 'u8[65536]{0}', space=vmem, size = 0x10000, scoped, tag = 'input window, operand 3']
    #allocation3 [shape = 's32[2]{0}', space=sflag, size = 0x8, scoped, tag = 'scoped memory for transformer_encoder.14']
    #allocation4 [shape = 'u8[65536]{0}', space=vmem, size = 0x10000, scoped, tag = 'output window, operand 0']
    %9 = vsyncpa [#allocation3], 0
    %s10 = scalar_lea.sflag [#allocation3], 1
    %11 = vsyncpa %s10, 0
    loop: start=0, step=1, limit=8
    $region2: #{transformer_encoder.14} parent=1 // loop_pre_header
      _
    $region3: #{transformer_encoder.14} parent=1 // loop_header
      %s13 = sphi 0, %s17
      %p14 = scmp.ge.s32.totalorder %s13, 8
      %s20 = sphi 0, %s32
      %s21 = sphi 0, %s28
      %s22 = sphi 0, %s20
      %s23 = sphi 0, %s21
      %s24 = sphi 0, %s22
      %s25 = sphi 0, %s23
      %s35 = sphi 0, %s37
      %s38 = sphi 0, %s35
      %s39 = sphi 0, %s38
      %s55 = sphi 0, %s39
      %s59 = sphi 0, %s59
      %s61 = sphi 0, %s59
      %s62 = sphi 0, %s61
      %s76 = sphi 0, %s62
      %s80 = sphi 0, %s80
      %s82 = sphi 0, %s80
      %s83 = sphi 0, %s82
      %s97 = sphi 0, %s83
      %s103 = sphi 0, %s105
      %s106 = sphi 0, %s103
      %s107 = sphi 0, %s106
      %s123 = sphi 0, %s107
      %s131 = sphi 0, %s133
      %s134 = sphi 0, %s131
      %s135 = sphi 0, %s134
      %s151 = sphi 0, %s135
    $region4: #{transformer_encoder.14} parent=1 // loop_header_branch
      %16 = sbr.rel (%p14) target = $region8
    $region5: #{transformer_encoder.14} parent=1 // loop_body
      %s18 = ssub.s32 %s13, 1
      %s19 = ssub.s32 %s13, 2
      %s26 = sadd.s32 1, %s21
      %p27 = scmp.ge.s32.totalorder %s26, 6
      %s28 = scalar_select %p27, 0, %s26
      %s29 = sadd.s32 1, %s20
      %s30 = scalar_select %p27, %s29, %s20
      %p31 = scmp.ge.s32.totalorder %s30, 1
      %s32 = scalar_select %p31, 0, %s30
      %s33 = ssub.s32 %s20, %s32
      %p34 = scmp.eq.s32.totalorder %s33, 0
      %s36 = sadd.s32 %s35, 1
      %s37 = scalar_select %p34, %s35, %s36
      %p40 = pneg %p34
      %p41 = scmp.eq.s32.totalorder %s13, 5
      %p42 = por %p40, %p41
      %p43 = scmp.ne.s32.totalorder %s35, %s38
      %p44 = scmp.eq.s32.totalorder %s13, 0
      %p45 = por %p43, %p44
      %p46 = scmp.ne.s32.totalorder %s35, %s38
      %p47 = scmp.eq.s32.totalorder %s18, 5
      %p48 = por %p46, %p47
      %p49 = scmp.ne.s32.totalorder %s38, %s39
      %p50 = scmp.eq.s32.totalorder %s18, 0
      %p51 = por %p49, %p50
      %p52 = scmp.ne.s32.totalorder %s38, %s39
      %p53 = scmp.eq.s32.totalorder %s19, 5
      %p54 = por %p52, %p53
      %p56 = scmp.ne.s32.totalorder %s39, %s55
      %p57 = scmp.eq.s32.totalorder %s19, 0
      %p58 = por %p56, %p57
      %s60 = sadd.s32 %s59, 1
      %p63 = scmp.eq.s32.totalorder %s13, 5
      %p64 = scmp.ne.s32.totalorder %s59, %s61
      %p65 = scmp.eq.s32.totalorder %s13, 0
      %p66 = por %p64, %p65
      %p67 = scmp.ne.s32.totalorder %s59, %s61
      %p68 = scmp.eq.s32.totalorder %s18, 5
      %p69 = por %p67, %p68
      %p70 = scmp.ne.s32.totalorder %s61, %s62
      %p71 = scmp.eq.s32.totalorder %s18, 0
      %p72 = por %p70, %p71
      %p73 = scmp.ne.s32.totalorder %s61, %s62
      %p74 = scmp.eq.s32.totalorder %s19, 5
      %p75 = por %p73, %p74
      %p77 = scmp.ne.s32.totalorder %s62, %s76
      %p78 = scmp.eq.s32.totalorder %s19, 0
      %p79 = por %p77, %p78
      %s81 = sadd.s32 %s80, 1
      %p84 = scmp.eq.s32.totalorder %s13, 5
      %p85 = scmp.ne.s32.totalorder %s80, %s82
      %p86 = scmp.eq.s32.totalorder %s13, 0
      %p87 = por %p85, %p86
      %p88 = scmp.ne.s32.totalorder %s80, %s82
      %p89 = scmp.eq.s32.totalorder %s18, 5
      %p90 = por %p88, %p89
      %p91 = scmp.ne.s32.totalorder %s82, %s83
      %p92 = scmp.eq.s32.totalorder %s18, 0
      %p93 = por %p91, %p92
      %p94 = scmp.ne.s32.totalorder %s82, %s83
      %p95 = scmp.eq.s32.totalorder %s19, 5
      %p96 = por %p94, %p95
      %p98 = scmp.ne.s32.totalorder %s83, %s97
      %p99 = scmp.eq.s32.totalorder %s19, 0
      %p100 = por %p98, %p99
      %s101 = ssub.s32 %s21, %s28
      %p102 = scmp.eq.s32.totalorder %s101, 0
      %s104 = sadd.s32 %s103, 1
      %s105 = scalar_select %p102, %s103, %s104
      %p108 = pneg %p102
      %p109 = scmp.eq.s32.totalorder %s13, 5
      %p110 = por %p108, %p109
      %p111 = scmp.ne.s32.totalorder %s103, %s106
      %p112 = scmp.eq.s32.totalorder %s13, 0
      %p113 = por %p111, %p112
      %p114 = scmp.ne.s32.totalorder %s103, %s106
      %p115 = scmp.eq.s32.totalorder %s18, 5
      %p116 = por %p114, %p115
      %p117 = scmp.ne.s32.totalorder %s106, %s107
      %p118 = scmp.eq.s32.totalorder %s18, 0
      %p119 = por %p117, %p118
      %p120 = scmp.ne.s32.totalorder %s106, %s107
      %p121 = scmp.eq.s32.totalorder %s19, 5
      %p122 = por %p120, %p121
      %p124 = scmp.ne.s32.totalorder %s107, %s123
      %p125 = scmp.eq.s32.totalorder %s19, 0
      %p126 = por %p124, %p125
      %s127 = ssub.s32 %s20, %s32
      %s128 = ssub.s32 %s21, %s28
      %s129 = sor.u32 %s127, %s128
      %p130 = scmp.eq.s32.totalorder %s129, 0
      %s132 = sadd.s32 %s131, 1
      %s133 = scalar_select %p130, %s131, %s132
      %p136 = pneg %p130
      %p137 = scmp.eq.s32.totalorder %s13, 5
      %p138 = por %p136, %p137
      %p139 = scmp.ne.s32.totalorder %s131, %s134
      %p140 = scmp.eq.s32.totalorder %s13, 0
      %p141 = por %p139, %p140
      %p142 = scmp.ne.s32.totalorder %s131, %s134
      %p143 = scmp.eq.s32.totalorder %s18, 5
      %p144 = por %p142, %p143
      %p145 = scmp.ne.s32.totalorder %s134, %s135
      %p146 = scmp.eq.s32.totalorder %s18, 0
      %p147 = por %p145, %p146
      %p148 = scmp.ne.s32.totalorder %s134, %s135
      %p149 = scmp.eq.s32.totalorder %s19, 5
      %p150 = por %p148, %p149
      %p152 = scmp.ne.s32.totalorder %s135, %s151
      %p153 = scmp.eq.s32.totalorder %s19, 0
      %p154 = por %p152, %p153
      %p155 = scmp.le.s32.totalorder 1, %s13
      %p156 = scmp.lt.s32.totalorder %s13, 7
      %p157 = pnand %p155, %p156
      %p158 = pneg %p157
      // Predicated region
      $region9: #{transformer_encoder.14} parent=5 // pred_check
        _
      $region10: #{transformer_encoder.14} parent=5 // pred_check_branch
        %160 = sbr.rel (%p157) target = $region12
      $region11: #{transformer_encoder.14} parent=5 // pred_region
        %s161 = ssub.s32 %s13, 1
        // Predicated region
        $region13: #{transformer_encoder.14} parent=11 // pred_check
          %p162 = pneg %p51
        $region14: #{transformer_encoder.14} parent=11 // pred_check_branch
          %164 = sbr.rel (%p162) target = $region16
        $region15: #{transformer_encoder.14} parent=11 // pred_region
          %s165 = smul.u32 2, %s22
          %p166 = scmp.lt.s32.totalorder %s165, 1
          %s167 = scalar_select %p166, %s165, 1
          %s168 = smul.addr %s167, 8
          %s169 = scalar_lea.vmem %s0, %s168
          %s170 = smul.u32 2, %s22
        $region16: #{transformer_encoder.14} parent=11 // pred_fallthru
          _
        // Predicated region
        $region17: #{transformer_encoder.14} parent=11 // pred_check
          %p171 = pneg %p72
        $region18: #{transformer_encoder.14} parent=11 // pred_check_branch
          %173 = sbr.rel (%p171) target = $region20
        $region19: #{transformer_encoder.14} parent=11 // pred_region
          _
        $region20: #{transformer_encoder.14} parent=11 // pred_fallthru
          _
        // Predicated region
        $region21: #{transformer_encoder.14} parent=11 // pred_check
          %p174 = pneg %p93
        $region22: #{transformer_encoder.14} parent=11 // pred_check_branch
          %176 = sbr.rel (%p174) target = $region24
        $region23: #{transformer_encoder.14} parent=11 // pred_region
          _
        $region24: #{transformer_encoder.14} parent=11 // pred_fallthru
          _
      $region12: #{transformer_encoder.14} parent=5 // pred_fallthru
        _
      %p177 = scmp.lt.s32.totalorder %s13, 6
      // Predicated region
      $region25: #{transformer_encoder.14} parent=5 // pred_check
        %p178 = pneg %p177
      $region26: #{transformer_encoder.14} parent=5 // pred_check_branch
        %180 = sbr.rel (%p178) target = $region28
      $region27: #{transformer_encoder.14} parent=5 // pred_region
        // Predicated region
        $region29: #{transformer_encoder.14} parent=27 // pred_check
          %p181 = pneg %p113
        $region30: #{transformer_encoder.14} parent=27 // pred_check_branch
          %183 = sbr.rel (%p181) target = $region32
        $region31: #{transformer_encoder.14} parent=27 // pred_region
          %s184 = sand.u32 %s103, 1
          %s185 = scalar_lea.sflag [#allocation3], %s184
          %s186 = sand.u32 %s103, 1
          %s187 = smul.addr %s186, 64
          %s188 = scalar_lea.vmem [#allocation2], %s187
          %s189 = smul.u32 4, %s21
          %s191 = ssub.s32 1024, 1024
          %192 = vsyncadd %s185, %s191
          %s193 = smul.addr %s189, 64
          %s194 = scalar_lea.hbm %s3, %s193
          %s195 = sshll.u32 %s188, 4
          %s196 = int_to_ptr.vmem [resolvable:$true] %s195
          %201 = dma.hbm_to_vmem [thread:$0]  %s194, 1024, %s196, %s185, 1536, 256, 16
        $region32: #{transformer_encoder.14} parent=27 // pred_fallthru
          _
      $region28: #{transformer_encoder.14} parent=5 // pred_fallthru
        _
      %p202 = scmp.le.s32.totalorder 1, %s13
      %p203 = scmp.lt.s32.totalorder %s13, 7
      %p204 = pnand %p202, %p203
      %p205 = pneg %p204
      // Predicated region
      $region33: #{transformer_encoder.14} parent=5 // pred_check
        _
      $region34: #{transformer_encoder.14} parent=5 // pred_check_branch
        %207 = sbr.rel (%p204) target = $region36
      $region35: #{transformer_encoder.14} parent=5 // pred_region
        %s208 = ssub.s32 %s13, 1
        %s209 = sand.u32 %s106, 1
        %s210 = scalar_lea.sflag [#allocation3], %s209
        %s211 = sand.u32 %s106, 1
        %s212 = smul.addr %s211, 64
        %s213 = scalar_lea.vmem [#allocation2], %s212
        // Predicated region
        $region37: #{transformer_encoder.14} parent=35 // pred_check
          %p214 = pneg %p119
        $region38: #{transformer_encoder.14} parent=35 // pred_check_branch
          %216 = sbr.rel (%p214) target = $region40
        $region39: #{transformer_encoder.14} parent=35 // pred_region
          %217 = dma.done %s210, 1024
        $region40: #{transformer_encoder.14} parent=35 // pred_fallthru
          _
        %s218 = smul.u32 2, %s22
        %p219 = scmp.lt.s32.totalorder %s218, 1
        %s220 = scalar_select %p219, %s218, 1
        %s221 = smul.addr %s220, 8
        %s222 = scalar_lea.vmem %s0, %s221
        %p223 = pneg %p51
        %p224 = pneg %p48
        %p225 = pneg %p72
        %p226 = pneg %p69
        %p227 = pneg %p93
        %p228 = pneg %p90
        %s229 = sand.u32 %s106, 1
        %s230 = scalar_lea.sflag [#allocation3], %s229
        %s231 = sand.u32 %s106, 1
        %s232 = smul.addr %s231, 64
        %s233 = scalar_lea.vmem [#allocation2], %s232
        %p234 = pneg %p119
        %p235 = pneg %p116
        %p236 = pneg %p147
        %p237 = pneg %p144
        %s238 = sand.u32 %s134, 1
        %s239 = sand.u32 %s134, 1
        %s240 = smul.addr %s239, 64
        %s241 = scalar_lea.vmem [#allocation4], %s240
        %s242 = smul.u32 2, %s22
        %p243 = scmp.lt.s32.totalorder %s242, 1
        %s244 = scalar_select %p243, %s242, 1
        %s245 = smul.addr %s244, 8
        %s246 = scalar_lea.vmem %s0, %s245
        %s247 = smul.u32 2, %s22
        %s248 = smul.u32 4, %s23
        %s249 = smul.u32 2, %s22
        %s250 = smul.u32 4, %s23
        %v252 = vld [vmem:[%s246] sm:$0xff]
        %v253 = vld [vmem:[%s246 + $0x8] sm:$0xff]
        %vm254 = vcmask 261120
        %v255 = vsel %vm254, %v252, 0.0
        %256 = vadd.xlane.f32.xlu0 %v255
        %v257 = vpop.xlane.xlu0 %256
        %v258 = vsel %vm254, %v253, 0.0
        %259 = vadd.xlane.f32.xlu0 %v258
        %v260 = vpop.xlane.xlu0 %259
        %v261 = vrcp.pop 32.0
        %v262 = vmul.f32 %v257, %v261
        %v263 = vmul.f32 %v260, %v261
        %v264 = vsub.f32 %v252, %v262
        %v265 = vsub.f32 %v253, %v263
        %v266 = vmul.f32 %v264, %v264
        %v267 = vmul.f32 %v265, %v265
        %v268 = vsel %vm254, %v266, 0.0
        %269 = vadd.xlane.f32.xlu0 %v268
        %v270 = vpop.xlane.xlu0 %269
        %v271 = vsel %vm254, %v267, 0.0
        %272 = vadd.xlane.f32.xlu0 %v271
        %v273 = vpop.xlane.xlu0 %272
        %v274 = vmul.f32 %v270, %v261
        %v275 = vmul.f32 %v273, %v261
        %v276 = vadd.f32 %v274, 1e-05
        %v277 = vadd.f32 %v275, 1e-05
        %v278 = vrsqrt.pop %v276
        %v279 = vrsqrt.pop %v277
        %v280 = vmul.f32 %v264, %v278
        %v281 = vmul.f32 %v265, %v279
        %v282 = vld [vmem:[%s1] sm:$0x1]
        %v284 = vlaneseq
        %v285 = vshrl.u32 %v284, 7
        %v286 = vsub.s32 0, %v285
        %v287 = vrot.slane %v282, %v286
        %v289 = vmul.f32 %v280, %v287
        %v290 = vmul.f32 %v281, %v287
        %v291 = vld [vmem:[%s2] sm:$0x1]
        %v293 = vlaneseq
        %v294 = vshrl.u32 %v293, 7
        %v295 = vsub.s32 0, %v294
        %v296 = vrot.slane %v291, %v295
        %v298 = vadd.f32 %v289, %v296
        %v299 = vadd.f32 %v290, %v296
        %v300 = vpack.c.bf16 %v299, %v298
        %v301 = vld [vmem:[%s213] sm:$0xff]
        %v302 = vld [vmem:[%s213 + $0x8] sm:$0xff]
        %v303 = vld [vmem:[%s213 + $0x10] sm:$0xff]
        %v304 = vld [vmem:[%s213 + $0x18] sm:$0xff]
        %v305 = vld [vmem:[%s213 + $0x20] sm:$0xff]
        %v306 = vld [vmem:[%s213 + $0x28] sm:$0xff]
        %v307 = vld [vmem:[%s213 + $0x30] sm:$0xff]
        %v308 = vld [vmem:[%s213 + $0x38] sm:$0xff]
        %v317 = vunpack.c.l.b16 %v301
        %v318 = vunpack.c.h.b16 %v301
        %v319 = vunpack.c.l.b16 %v302
        %v320 = vunpack.c.h.b16 %v302
        %v321 = vunpack.c.l.b16 %v303
        %v322 = vunpack.c.h.b16 %v303
        %v323 = vunpack.c.l.b16 %v304
        %v324 = vunpack.c.h.b16 %v304
        %v325 = vunpack.c.l.b16 %v305
        %v326 = vunpack.c.h.b16 %v305
        %v327 = vunpack.c.l.b16 %v306
        %v328 = vunpack.c.h.b16 %v306
        %v329 = vunpack.c.l.b16 %v307
        %v330 = vunpack.c.h.b16 %v307
        %v331 = vunpack.c.l.b16 %v308
        %v332 = vunpack.c.h.b16 %v308
        %v333 = vpack.c.b16 %v321, %v317
        %v334 = vpack.c.b16 %v322, %v318
        %v335 = vpack.c.b16 %v323, %v319
        %v336 = vpack.c.b16 %v324, %v320
        %v337 = vpack.c.b16 %v329, %v325
        %v338 = vpack.c.b16 %v330, %v326
        %v339 = vpack.c.b16 %v331, %v327
        %v340 = vpack.c.b16 %v332, %v328
        %v350 = vsel %vm254, %v300, 0
        %352 = vmatprep.subr.bf16.mxu0 0
        %353 = vmatpush1.bf16.msra.mxu0 0
        %354 = vmatprep.subr.bf16.mxu0 0
        %355 = vmatpush1.bf16.msra.mxu0 0
        %356 = vmatprep.subr.bf16.mxu0 0
        %357 = vmatpush1.bf16.msra.mxu0 0
        %358 = vmatprep.subr.bf16.mxu0 0
        %359 = vmatpush1.bf16.msra.mxu0 0
        %360 = vmatprep.subr.bf16.mxu0 0
        %361 = vmatpush1.bf16.msra.mxu0 0
        %362 = vmatprep.subr.bf16.mxu0 0
        %363 = vmatpush1.bf16.msra.mxu0 0
        %364 = vmatprep.subr.bf16.mxu0 %v338
        %365 = vmatpush1.bf16.msra.mxu0 %v337
        %366 = vmatprep.subr.bf16.mxu0 %v334
        %367 = vmatpush1.bf16.msra.mxu0 %v333
        %368 = vmatprep.subr.bf16.mxu0 0
        %369 = vmatpush2.bf16.msra.mxu0 0
        %370 = vmatprep.subr.bf16.mxu0 0
        %371 = vmatpush2.bf16.msra.mxu0 0
        %372 = vmatprep.subr.bf16.mxu0 0
        %373 = vmatpush2.bf16.msra.mxu0 0
        %374 = vmatprep.subr.bf16.mxu0 0
        %375 = vmatpush2.bf16.msra.mxu0 0
        %376 = vmatprep.subr.bf16.mxu0 0
        %377 = vmatpush2.bf16.msra.mxu0 0
        %378 = vmatprep.subr.bf16.mxu0 0
        %379 = vmatpush2.bf16.msra.mxu0 0
        %380 = vmatprep.subr.bf16.mxu0 0
        %381 = vmatpush2.bf16.msra.mxu0 0
        %382 = vmatprep.subr.bf16.mxu0 0
        %383 = vmatpush2.bf16.msra.mxu0 0
        %384 = vmatprep.mubr.bf16.mxu0 0
        %385 = vmatmul.mubr.bf16.gmra.mxu0 %v350
        %v386 = vpop.f32.mrf.mxu0
        %v387 = vadd.f32 0.0, %v386
        %v388 = vpop.f32.mrf.mxu0
        %v389 = vadd.f32 0.0, %v388
        %v390 = vpop.f32.mrf.mxu0
        %v391 = vadd.f32 0.0, %v390
        %v392 = vpop.f32.mrf.mxu0
        %v393 = vadd.f32 0.0, %v392
        %394 = vdwg.mxu0
        %395 = vmatprep.subr.bf16.mxu0 0
        %396 = vmatpush1.bf16.msra.mxu0 0
        %397 = vmatprep.subr.bf16.mxu0 0
        %398 = vmatpush1.bf16.msra.mxu0 0
        %399 = vmatprep.subr.bf16.mxu0 0
        %400 = vmatpush1.bf16.msra.mxu0 0
        %401 = vmatprep.subr.bf16.mxu0 0
        %402 = vmatpush1.bf16.msra.mxu0 0
        %403 = vmatprep.subr.bf16.mxu0 0
        %404 = vmatpush1.bf16.msra.mxu0 0
        %405 = vmatprep.subr.bf16.mxu0 0
        %406 = vmatpush1.bf16.msra.mxu0 0
        %407 = vmatprep.subr.bf16.mxu0 %v340
        %408 = vmatpush1.bf16.msra.mxu0 %v339
        %409 = vmatprep.subr.bf16.mxu0 %v336
        %410 = vmatpush1.bf16.msra.mxu0 %v335
        %411 = vmatprep.subr.bf16.mxu0 0
        %412 = vmatpush2.bf16.msra.mxu0 0
        %413 = vmatprep.subr.bf16.mxu0 0
        %414 = vmatpush2.bf16.msra.mxu0 0
        %415 = vmatprep.subr.bf16.mxu0 0
        %416 = vmatpush2.bf16.msra.mxu0 0
        %417 = vmatprep.subr.bf16.mxu0 0
        %418 = vmatpush2.bf16.msra.mxu0 0
        %419 = vmatprep.subr.bf16.mxu0 0
        %420 = vmatpush2.bf16.msra.mxu0 0
        %421 = vmatprep.subr.bf16.mxu0 0
        %422 = vmatpush2.bf16.msra.mxu0 0
        %423 = vmatprep.subr.bf16.mxu0 0
        %424 = vmatpush2.bf16.msra.mxu0 0
        %425 = vmatprep.subr.bf16.mxu0 0
        %426 = vmatpush2.bf16.msra.mxu0 0
        %427 = vmatprep.mubr.bf16.mxu0 0
        %428 = vmatmul.mubr.bf16.gmra.mxu0 %v350
        %v429 = vpop.f32.mrf.mxu0
        %v430 = vadd.f32 0.0, %v429
        %v431 = vpop.f32.mrf.mxu0
        %v432 = vadd.f32 0.0, %v431
        %v433 = vpop.f32.mrf.mxu0
        %v434 = vadd.f32 0.0, %v433
        %v435 = vpop.f32.mrf.mxu0
        %v436 = vadd.f32 0.0, %v435
        %437 = vdwg.mxu0
        %438 = vst [vmem:[%s241] sm:$0xff] %v387
        %439 = vst [vmem:[%s241 + $0x8] sm:$0xff] %v389
        %440 = vst [vmem:[%s241 + $0x10] sm:$0xff] %v430
        %441 = vst [vmem:[%s241 + $0x18] sm:$0xff] %v432
        %442 = vst [vmem:[%s241 + $0x20] sm:$0xff] %v391
        %443 = vst [vmem:[%s241 + $0x28] sm:$0xff] %v393
        %444 = vst [vmem:[%s241 + $0x30] sm:$0xff] %v434
        %445 = vst [vmem:[%s241 + $0x38] sm:$0xff] %v436
        %s446 = sand.u32 %s134, 1
        %s447 = sand.u32 %s134, 1
        %s448 = smul.addr %s447, 64
        %s449 = scalar_lea.vmem [#allocation4], %s448
        // Predicated region
        $region41: #{transformer_encoder.14} parent=35 // pred_check
          %p450 = pneg %p144
        $region42: #{transformer_encoder.14} parent=35 // pred_check_branch
          %452 = sbr.rel (%p450) target = $region44
        $region43: #{transformer_encoder.14} parent=35 // pred_region
          %s453 = smul.u32 2, %s22
          %s454 = smul.u32 4, %s23
          %s455 = smul.addr %s453, 24
          %s456 = sadd.s32 %s454, %s455
          %s457 = smul.addr %s456, 8
          %s458 = scalar_lea.vmem %s4, %s457
          // Predicated region
          $region45: #{transformer_encoder.14} parent=43 // pred_check
            _
          $region46: #{transformer_encoder.14} parent=43 // pred_check_branch
            %460 = sbr.rel (0) target = $region48
          $region47: #{transformer_encoder.14} parent=43 // pred_region
            // Predicated region
            $region49: #{transformer_encoder.14} parent=47 // pred_check
              _
            $region50: #{transformer_encoder.14} parent=47 // pred_check_branch
              %462 = sbr.rel (0) target = $region52
            $region51: #{transformer_encoder.14} parent=47 // pred_region
              loop: start=0, step=1, limit=1
              $region53: #{transformer_encoder.14} parent=51 // loop_pre_header
                _
              $region54: #{transformer_encoder.14} parent=51 // loop_header
                %s464 = sphi 0, %s468
                %p465 = scmp.ge.s32.totalorder %s464, 1
                %s469 = sphi %s449, %s449
                %s470 = sphi %s458, %s458
              $region55: #{transformer_encoder.14} parent=51 // loop_header_branch
                %467 = sbr.rel (%p465) target = $region59
              $region56: #{transformer_encoder.14} parent=51 // loop_body
                %v471 = vld [vmem:[%s469] sm:$0xff]
                %472 = vst [vmem:[%s470] sm:$0xff] %v471
                %v473 = vld [vmem:[%s469 + $0x8] sm:$0xff]
                %474 = vst [vmem:[%s470 + $0x8] sm:$0xff] %v473
                %v475 = vld [vmem:[%s469 + $0x10] sm:$0xff]
                %476 = vst [vmem:[%s470 + $0x10] sm:$0xff] %v475
                %v477 = vld [vmem:[%s469 + $0x18] sm:$0xff]
                %478 = vst [vmem:[%s470 + $0x18] sm:$0xff] %v477
                %v479 = vld [vmem:[%s469 + $0x20] sm:$0xff]
                %480 = vst [vmem:[%s470 + $0xc0] sm:$0xff] %v479
                %v481 = vld [vmem:[%s469 + $0x28] sm:$0xff]
                %482 = vst [vmem:[%s470 + $0xc8] sm:$0xff] %v481
                %v483 = vld [vmem:[%s469 + $0x30] sm:$0xff]
                %484 = vst [vmem:[%s470 + $0xd0] sm:$0xff] %v483
                %v485 = vld [vmem:[%s469 + $0x38] sm:$0xff]
                %486 = vst [vmem:[%s470 + $0xd8] sm:$0xff] %v485
              $region57: #{transformer_encoder.14} parent=51 // loop_footer
                %s468 = sadd.s32 1, %s464
              $region58: #{transformer_encoder.14} parent=51 // loop_footer_branch
                %463 = sbr.rel target = $region54
              $region59: #{transformer_encoder.14} parent=51 // loop_exit
                _
            $region52: #{transformer_encoder.14} parent=47 // pred_fallthru
              _
            // Predicated region
            $region60: #{transformer_encoder.14} parent=47 // pred_check
              _
            $region61: #{transformer_encoder.14} parent=47 // pred_check_branch
              %488 = sbr.rel target = $region63
            $region62: #{transformer_encoder.14} parent=47 // pred_region
              _
            $region63: #{transformer_encoder.14} parent=47 // pred_fallthru
              _
          $region48: #{transformer_encoder.14} parent=43 // pred_fallthru
            _
          %489 = vnop
        $region44: #{transformer_encoder.14} parent=35 // pred_fallthru
          _
      $region36: #{transformer_encoder.14} parent=5 // pred_fallthru
        _
      %p490 = scmp.le.s32.totalorder 2, %s13
      // Predicated region
      $region64: #{transformer_encoder.14} parent=5 // pred_check
        %p491 = pneg %p490
      $region65: #{transformer_encoder.14} parent=5 // pred_check_branch
        %493 = sbr.rel (%p491) target = $region67
      $region66: #{transformer_encoder.14} parent=5 // pred_region
        %s494 = ssub.s32 %s13, 2
        // Predicated region
        $region68: #{transformer_encoder.14} parent=66 // pred_check
          %p495 = pneg %p150
        $region69: #{transformer_encoder.14} parent=66 // pred_check_branch
          %497 = sbr.rel (%p495) target = $region71
        $region70: #{transformer_encoder.14} parent=66 // pred_region
          %s498 = sand.u32 %s135, 1
          %s499 = sand.u32 %s135, 1
          %s500 = smul.addr %s499, 64
          %s501 = scalar_lea.vmem [#allocation4], %s500
        $region71: #{transformer_encoder.14} parent=66 // pred_fallthru
          _
      $region67: #{transformer_encoder.14} parent=5 // pred_fallthru
        _
    $region6: #{transformer_encoder.14} parent=1 // loop_footer
      %s17 = sadd.s32 1, %s13
    $region7: #{transformer_encoder.14} parent=1 // loop_footer_branch
      %12 = sbr.rel target = $region3
    $region8: #{transformer_encoder.14} parent=1 // loop_exit
      _
    %502 = vsyncpa [#allocation3], 1
    %s503 = scalar_lea.sflag [#allocation3], 1
    %504 = vsyncpa %s503, 1

// kernel: transformer_encoder.15
$region0: #{transformer_encoder.15}
  #allocation0 [shape = 'u32[]', space=smem, size = 0x4, offset = 0x4, fixed_abs, tag = 'smem constant byte address 0x4 - core index']
  #allocation1 [shape = 'u32[144,128]{1,0:T(1,128)}', space=vmem, size = 0x12000, scoped, tag = 'internal scratch']
  %s0 = inlined_call_operand.vmem [shape: f32[2,8,3072], index: 0, kind: input, shape index: {}]
  %s1 = inlined_call_operand.vmem [shape: bf16[2,8,512], index: 1, kind: output, shape index: {}]
  %s2 = sld [smem:[#allocation0]]
  $region37: #{transformer_encoder.15} parent=0
    _
  %s4 = ssub.s32 1, %s2
  %s5 = scalar_select 0, %s4, %s2
  loop: start=0, step=1, limit=4
  $region2: #{transformer_encoder.15} parent=0 // loop_pre_header
    _
  $region3: #{transformer_encoder.15} parent=0 // loop_header
    %s7 = sphi 0, %s11
    %p8 = scmp.ge.s32.totalorder %s7, 4
    %s14 = sphi 0, %s26
    %s15 = sphi 0, %s22
    %s16 = sphi 0, %s14
    %s17 = sphi 0, %s15
    %s18 = sphi 0, %s16
    %s19 = sphi 0, %s17
    %s29 = sphi 0, %s31
    %s32 = sphi 0, %s29
    %s33 = sphi 0, %s32
    %s49 = sphi 0, %s33
    %s57 = sphi 0, %s59
    %s60 = sphi 0, %s57
    %s61 = sphi 0, %s60
    %s77 = sphi 0, %s61
  $region4: #{transformer_encoder.15} parent=0 // loop_header_branch
    %10 = sbr.rel (%p8) target = $region8
  $region5: #{transformer_encoder.15} parent=0 // loop_body
    %s12 = ssub.s32 %s7, 1
    %s13 = ssub.s32 %s7, 2
    %s20 = sadd.s32 1, %s15
    %p21 = scmp.ge.s32.totalorder %s20, 1
    %s22 = scalar_select %p21, 0, %s20
    %s23 = sadd.s32 1, %s14
    %s24 = scalar_select %p21, %s23, %s14
    %p25 = scmp.ge.s32.totalorder %s24, 2
    %s26 = scalar_select %p25, 0, %s24
    %s27 = ssub.s32 %s14, %s26
    %p28 = scmp.eq.s32.totalorder %s27, 0
    %s30 = sadd.s32 %s29, 1
    %s31 = scalar_select %p28, %s29, %s30
    %p34 = pneg %p28
    %p35 = scmp.eq.s32.totalorder %s7, 1
    %p36 = por %p34, %p35
    %p37 = scmp.ne.s32.totalorder %s29, %s32
    %p38 = scmp.eq.s32.totalorder %s7, 0
    %p39 = por %p37, %p38
    %p40 = scmp.ne.s32.totalorder %s29, %s32
    %p41 = scmp.eq.s32.totalorder %s12, 1
    %p42 = por %p40, %p41
    %p43 = scmp.ne.s32.totalorder %s32, %s33
    %p44 = scmp.eq.s32.totalorder %s12, 0
    %p45 = por %p43, %p44
    %p46 = scmp.ne.s32.totalorder %s32, %s33
    %p47 = scmp.eq.s32.totalorder %s13, 1
    %p48 = por %p46, %p47
    %p50 = scmp.ne.s32.totalorder %s33, %s49
    %p51 = scmp.eq.s32.totalorder %s13, 0
    %p52 = por %p50, %p51
    %s53 = ssub.s32 %s14, %s26
    %s54 = ssub.s32 %s15, %s22
    %s55 = sor.u32 %s53, %s54
    %p56 = scmp.eq.s32.totalorder %s55, 0
    %s58 = sadd.s32 %s57, 1
    %s59 = scalar_select %p56, %s57, %s58
    %p62 = pneg %p56
    %p63 = scmp.eq.s32.totalorder %s7, 1
    %p64 = por %p62, %p63
    %p65 = scmp.ne.s32.totalorder %s57, %s60
    %p66 = scmp.eq.s32.totalorder %s7, 0
    %p67 = por %p65, %p66
    %p68 = scmp.ne.s32.totalorder %s57, %s60
    %p69 = scmp.eq.s32.totalorder %s12, 1
    %p70 = por %p68, %p69
    %p71 = scmp.ne.s32.totalorder %s60, %s61
    %p72 = scmp.eq.s32.totalorder %s12, 0
    %p73 = por %p71, %p72
    %p74 = scmp.ne.s32.totalorder %s60, %s61
    %p75 = scmp.eq.s32.totalorder %s13, 1
    %p76 = por %p74, %p75
    %p78 = scmp.ne.s32.totalorder %s61, %s77
    %p79 = scmp.eq.s32.totalorder %s13, 0
    %p80 = por %p78, %p79
    %p81 = scmp.le.s32.totalorder 1, %s7
    %p82 = scmp.lt.s32.totalorder %s7, 3
    %p83 = pnand %p81, %p82
    %p84 = pneg %p83
    // Predicated region
    $region9: #{transformer_encoder.15} parent=5 // pred_check
      _
    $region10: #{transformer_encoder.15} parent=5 // pred_check_branch
      %86 = sbr.rel (%p83) target = $region12
    $region11: #{transformer_encoder.15} parent=5 // pred_region
      %s87 = ssub.s32 %s7, 1
    $region12: #{transformer_encoder.15} parent=5 // pred_fallthru
      _
    %p88 = scmp.lt.s32.totalorder %s7, 2
    // Predicated region
    $region13: #{transformer_encoder.15} parent=5 // pred_check
      %p89 = pneg %p88
    $region14: #{transformer_encoder.15} parent=5 // pred_check_branch
      %91 = sbr.rel (%p89) target = $region16
    $region15: #{transformer_encoder.15} parent=5 // pred_region
      // Predicated region
      $region17: #{transformer_encoder.15} parent=15 // pred_check
        %p92 = pneg %p39
      $region18: #{transformer_encoder.15} parent=15 // pred_check_branch
        %94 = sbr.rel (%p92) target = $region20
      $region19: #{transformer_encoder.15} parent=15 // pred_region
        %p95 = scmp.lt.s32.totalorder %s14, 1
        %s96 = scalar_select %p95, %s14, 1
        %s97 = smul.addr %s96, 24
        %s98 = smul.addr %s97, 8
        %s99 = scalar_lea.vmem %s0, %s98
      $region20: #{transformer_encoder.15} parent=15 // pred_fallthru
        _
    $region16: #{transformer_encoder.15} parent=5 // pred_fallthru
      _
    %p100 = scmp.le.s32.totalorder 1, %s7
    %p101 = scmp.lt.s32.totalorder %s7, 3
    %p102 = pnand %p100, %p101
    %p103 = pneg %p102
    // Predicated region
    $region21: #{transformer_encoder.15} parent=5 // pred_check
      _
    $region22: #{transformer_encoder.15} parent=5 // pred_check_branch
      %105 = sbr.rel (%p102) target = $region24
    $region23: #{transformer_encoder.15} parent=5 // pred_region
      %s106 = ssub.s32 %s7, 1
      %p107 = scmp.lt.s32.totalorder %s16, 1
      %s108 = scalar_select %p107, %s16, 1
      %s109 = smul.addr %s108, 24
      %s110 = smul.addr %s109, 8
      %s111 = scalar_lea.vmem %s0, %s110
      %p112 = pneg %p45
      %p113 = pneg %p42
      %p114 = pneg %p73
      %p115 = pneg %p70
      %p116 = scmp.lt.s32.totalorder %s16, 1
      %s117 = scalar_select %p116, %s16, 1
      %p118 = scmp.lt.s32.totalorder %s17, 0
      %s119 = scalar_select %p118, %s17, 0
      %s120 = smul.addr %s119, 4
      %s121 = smul.addr %s117, 4
      %s122 = sadd.s32 %s120, %s121
      %s123 = smul.addr %s122, 4
      %s124 = scalar_lea.vmem %s1, %s123
      %p125 = scmp.lt.s32.totalorder %s16, 1
      %s126 = scalar_select %p125, %s16, 1
      %s127 = smul.addr %s126, 24
      %s128 = smul.addr %s127, 8
      %s129 = scalar_lea.vmem %s0, %s128
      %p130 = scmp.lt.s32.totalorder %s16, 1
      %s131 = scalar_select %p130, %s16, 1
      %p132 = scmp.lt.s32.totalorder %s17, 0
      %s133 = scalar_select %p132, %s17, 0
      %s134 = smul.addr %s133, 4
      %s135 = smul.addr %s131, 4
      %s136 = sadd.s32 %s134, %s135
      %s137 = smul.addr %s136, 4
      %s138 = scalar_lea.vmem %s1, %s137
      %s140 = smul.u32 %s17, 8
      %p141 = scmp.gt.s32.totalorder %s140, 0
      %s142 = scalar_select %p141, %s140, 0
      %p143 = scmp.lt.s32.totalorder %s142, 0
      %s144 = scalar_select %p143, %s142, 0
      %v145 = vlaneseq
      %v146 = vshrl.u32 %v145, 7
      %v147 = vstv %s140
      %v148 = vadd.s32 %v147, %v146
      %v149 = vlaneseq
      %v150 = vand.u32 %v149, 127
      %v151 = vstv %s144
      %v152 = vadd.s32 %v151, %v150
      %vm153 = vcmp.le.s32.totalorder %v152, %v148
      %v154 = vsub.s32 %v148, %v152
      %vm155 = vcmp.le.s32.totalorder %v154, 7
      %vm156 = vmand %vm153, %vm155
      %s157 = sshra.s32 %s140, 3
      %s158 = sand.u32 %s140, 7
      %s159 = smul.u32 %s157, 12
      %s160 = smul.addr %s159, 8
      %s161 = scalar_lea.vmem %s129, %s160
      %v162 = vld [vmem:[%s161] sm:$0xff]
      %s163 = sshra.s32 %s144, 3
      %s164 = sand.u32 %s144, 7
      %s165 = smul.u32 %s163, 12
      %s166 = smul.addr %s165, 8
      %s167 = scalar_lea.vmem %s129, %s166
      %v168 = vld [vmem:[%s167 + $0x20] sm:$0xff]
      %v169 = vld [vmem:[%s167 + $0x40] sm:$0xff]
      %v170 = vpack.c.bf16 %v162, %v162
      %v171 = vpack.c.bf16 %v168, %v168
      %vm172 = vcmask 523264
      %v174 = vsel %vm172, %v170, 0
      %v177 = vsel %vm172, %v171, 0
      %179 = vmatprep.subr.bf16.mxu0 0
      %180 = vmatpush1.bf16.xpose.msra.mxu0 0
      %181 = vmatprep.subr.bf16.mxu0 0
      %182 = vmatpush1.bf16.xpose.msra.mxu0 0
      %183 = vmatprep.subr.bf16.mxu0 0
      %184 = vmatpush1.bf16.xpose.msra.mxu0 0
      %185 = vmatprep.subr.bf16.mxu0 0
      %186 = vmatpush1.bf16.xpose.msra.mxu0 0
      %187 = vmatprep.subr.bf16.mxu0 0
      %188 = vmatpush1.bf16.xpose.msra.mxu0 0
      %189 = vmatprep.subr.bf16.mxu0 0
      %190 = vmatpush1.bf16.xpose.msra.mxu0 0
      %191 = vmatprep.subr.bf16.mxu0 0
      %192 = vmatpush1.bf16.xpose.msra.mxu0 0
      %193 = vmatprep.subr.bf16.mxu0 0
      %194 = vmatpush1.bf16.xpose.msra.mxu0 %v177
      %195 = vmatprep.subr.bf16.mxu0 0
      %196 = vmatpush2.bf16.xpose.msra.mxu0 0
      %197 = vmatprep.subr.bf16.mxu0 0
      %198 = vmatpush2.bf16.xpose.msra.mxu0 0
      %199 = vmatprep.subr.bf16.mxu0 0
      %200 = vmatpush2.bf16.xpose.msra.mxu0 0
      %201 = vmatprep.subr.bf16.mxu0 0
      %202 = vmatpush2.bf16.xpose.msra.mxu0 0
      %203 = vmatprep.subr.bf16.mxu0 0
      %204 = vmatpush2.bf16.xpose.msra.mxu0 0
      %205 = vmatprep.subr.bf16.mxu0 0
      %206 = vmatpush2.bf16.xpose.msra.mxu0 0
      %207 = vmatprep.subr.bf16.mxu0 0
      %208 = vmatpush2.bf16.xpose.msra.mxu0 0
      %209 = vmatprep.subr.bf16.mxu0 0
      %210 = vmatpush2.bf16.xpose.msra.mxu0 0
      %211 = vmatprep.mubr.bf16.mxu0 0
      %212 = vmatmul.mubr.bf16.gmra.mxu0 %v174
      %v213 = vpop.f32.mrf.mxu0
      %v214 = vadd.f32 0.0, %v213
      %v215 = vpop.f32.mrf.mxu0
      %v216 = vpop.f32.mrf.mxu0
      %v217 = vpop.f32.mrf.mxu0
      %218 = vdwg.mxu0
      %v219 = vmul.f32 %v214, 0.125
      %v220 = vsel %vm156, %v219, -1e+30
      %vm221 = vcmask 64512
      %v222 = vsel %vm221, %v220, -inf
      %223 = vmax.xlane.f32.xlu0 %v222
      %v224 = vpop.xlane.xlu0 %223
      %v225 = vsub.f32 %v220, %v224
      %v226 = vmul.f32 %v225, 1.442695
      %v227 = vpow.pop %v226
      %v228 = vsel %vm221, %v227, 0.0
      %229 = vadd.xlane.f32.xlu0 %v228
      %v230 = vpop.xlane.xlu0 %229
      %v231 = vrcp.pop %v230
      %v232 = vmul.f32 %v227, %v231
      %v233 = vpack.c.bf16 %v232, %v232
      %v234 = vpack.c.bf16 %v169, %v169
      %v236 = vsel %vm221, %v233, 0
      %vm238 = vcmask 1043456
      %v240 = vsel %vm238, %v234, 0
      %242 = vmatprep.subr.bf16.mxu0 0
      %243 = vmatpush1.bf16.msra.mxu0 0
      %244 = vmatprep.subr.bf16.mxu0 0
      %245 = vmatpush1.bf16.msra.mxu0 0
      %246 = vmatprep.subr.bf16.mxu0 0
      %247 = vmatpush1.bf16.msra.mxu0 0
      %248 = vmatprep.subr.bf16.mxu0 0
      %249 = vmatpush1.bf16.msra.mxu0 0
      %250 = vmatprep.subr.bf16.mxu0 0
      %251 = vmatpush1.bf16.msra.mxu0 0
      %252 = vmatprep.subr.bf16.mxu0 0
      %253 = vmatpush1.bf16.msra.mxu0 0
      %254 = vmatprep.subr.bf16.mxu0 0
      %255 = vmatpush1.bf16.msra.mxu0 0
      %256 = vmatprep.subr.bf16.mxu0 0
      %257 = vmatpush1.bf16.msra.mxu0 %v240
      %258 = vmatprep.subr.bf16.mxu0 0
      %259 = vmatpush2.bf16.msra.mxu0 0
      %260 = vmatprep.subr.bf16.mxu0 0
      %261 = vmatpush2.bf16.msra.mxu0 0
      %262 = vmatprep.subr.bf16.mxu0 0
      %263 = vmatpush2.bf16.msra.mxu0 0
      %264 = vmatprep.subr.bf16.mxu0 0
      %265 = vmatpush2.bf16.msra.mxu0 0
      %266 = vmatprep.subr.bf16.mxu0 0
      %267 = vmatpush2.bf16.msra.mxu0 0
      %268 = vmatprep.subr.bf16.mxu0 0
      %269 = vmatpush2.bf16.msra.mxu0 0
      %270 = vmatprep.subr.bf16.mxu0 0
      %271 = vmatpush2.bf16.msra.mxu0 0
      %272 = vmatprep.subr.bf16.mxu0 0
      %273 = vmatpush2.bf16.msra.mxu0 0
      %274 = vmatprep.mubr.bf16.mxu0 0
      %275 = vmatmul.mubr.bf16.gmra.mxu0 %v236
      %v276 = vpop.f32.mrf.mxu0
      %v277 = vadd.f32 0.0, %v276
      %v278 = vpop.f32.mrf.mxu0
      %v279 = vpop.f32.mrf.mxu0
      %v280 = vpop.f32.mrf.mxu0
      %281 = vdwg.mxu0
      %283 = vrot.lane.b32.xlu0 %v170, 64
      %v284 = vpop.permute.xlu0 %283
      %286 = vrot.lane.b32.xlu0 %v171, 64
      %v287 = vpop.permute.xlu0 %286
      %v289 = vsel %vm172, %v284, 0
      %v292 = vsel %vm172, %v287, 0
      %294 = vmatprep.subr.bf16.mxu0 0
      %295 = vmatpush1.bf16.xpose.msra.mxu0 0
      %296 = vmatprep.subr.bf16.mxu0 0
      %297 = vmatpush1.bf16.xpose.msra.mxu0 0
      %298 = vmatprep.subr.bf16.mxu0 0
      %299 = vmatpush1.bf16.xpose.msra.mxu0 0
      %300 = vmatprep.subr.bf16.mxu0 0
      %301 = vmatpush1.bf16.xpose.msra.mxu0 0
      %302 = vmatprep.subr.bf16.mxu0 0
      %303 = vmatpush1.bf16.xpose.msra.mxu0 0
      %304 = vmatprep.subr.bf16.mxu0 0
      %305 = vmatpush1.bf16.xpose.msra.mxu0 0
      %306 = vmatprep.subr.bf16.mxu0 0
      %307 = vmatpush1.bf16.xpose.msra.mxu0 0
      %308 = vmatprep.subr.bf16.mxu0 0
      %309 = vmatpush1.bf16.xpose.msra.mxu0 %v292
      %310 = vmatprep.subr.bf16.mxu0 0
      %311 = vmatpush2.bf16.xpose.msra.mxu0 0
      %312 = vmatprep.subr.bf16.mxu0 0
      %313 = vmatpush2.bf16.xpose.msra.mxu0 0
      %314 = vmatprep.subr.bf16.mxu0 0
      %315 = vmatpush2.bf16.xpose.msra.mxu0 0
      %316 = vmatprep.subr.bf16.mxu0 0
      %317 = vmatpush2.bf16.xpose.msra.mxu0 0
      %318 = vmatprep.subr.bf16.mxu0 0
      %319 = vmatpush2.bf16.xpose.msra.mxu0 0
      %320 = vmatprep.subr.bf16.mxu0 0
      %321 = vmatpush2.bf16.xpose.msra.mxu0 0
      %322 = vmatprep.subr.bf16.mxu0 0
      %323 = vmatpush2.bf16.xpose.msra.mxu0 0
      %324 = vmatprep.subr.bf16.mxu0 0
      %325 = vmatpush2.bf16.xpose.msra.mxu0 0
      %326 = vmatprep.mubr.bf16.mxu0 0
      %327 = vmatmul.mubr.bf16.gmra.mxu0 %v289
      %v328 = vpop.f32.mrf.mxu0
      %v329 = vadd.f32 0.0, %v328
      %v330 = vpop.f32.mrf.mxu0
      %v331 = vpop.f32.mrf.mxu0
      %v332 = vpop.f32.mrf.mxu0
      %333 = vdwg.mxu0
      %v334 = vmul.f32 %v329, 0.125
      %v335 = vsel %vm156, %v334, -1e+30
      %v336 = vsel %vm221, %v335, -inf
      %337 = vmax.xlane.f32.xlu0 %v336
      %v338 = vpop.xlane.xlu0 %337
      %v339 = vsub.f32 %v335, %v338
      %v340 = vmul.f32 %v339, 1.442695
      %v341 = vpow.pop %v340
      %v342 = vsel %vm221, %v341, 0.0
      %343 = vadd.xlane.f32.xlu0 %v342
      %v344 = vpop.xlane.xlu0 %343
      %v345 = vrcp.pop %v344
      %v346 = vmul.f32 %v341, %v345
      %v347 = vpack.c.bf16 %v346, %v346
      %349 = vrot.lane.b32.xlu0 %v234, 64
      %v350 = vpop.permute.xlu0 %349
      %v352 = vsel %vm221, %v347, 0
      %v355 = vsel %vm238, %v350, 0
      %357 = vmatprep.subr.bf16.mxu0 0
      %358 = vmatpush1.bf16.msra.mxu0 0
      %359 = vmatprep.subr.bf16.mxu0 0
      %360 = vmatpush1.bf16.msra.mxu0 0
      %361 = vmatprep.subr.bf16.mxu0 0
      %362 = vmatpush1.bf16.msra.mxu0 0
      %363 = vmatprep.subr.bf16.mxu0 0
      %364 = vmatpush1.bf16.msra.mxu0 0
      %365 = vmatprep.subr.bf16.mxu0 0
      %366 = vmatpush1.bf16.msra.mxu0 0
      %367 = vmatprep.subr.bf16.mxu0 0
      %368 = vmatpush1.bf16.msra.mxu0 0
      %369 = vmatprep.subr.bf16.mxu0 0
      %370 = vmatpush1.bf16.msra.mxu0 0
      %371 = vmatprep.subr.bf16.mxu0 0
      %372 = vmatpush1.bf16.msra.mxu0 %v355
      %373 = vmatprep.subr.bf16.mxu0 0
      %374 = vmatpush2.bf16.msra.mxu0 0
      %375 = vmatprep.subr.bf16.mxu0 0
      %376 = vmatpush2.bf16.msra.mxu0 0
      %377 = vmatprep.subr.bf16.mxu0 0
      %378 = vmatpush2.bf16.msra.mxu0 0
      %379 = vmatprep.subr.bf16.mxu0 0
      %380 = vmatpush2.bf16.msra.mxu0 0
      %381 = vmatprep.subr.bf16.mxu0 0
      %382 = vmatpush2.bf16.msra.mxu0 0
      %383 = vmatprep.subr.bf16.mxu0 0
      %384 = vmatpush2.bf16.msra.mxu0 0
      %385 = vmatprep.subr.bf16.mxu0 0
      %386 = vmatpush2.bf16.msra.mxu0 0
      %387 = vmatprep.subr.bf16.mxu0 0
      %388 = vmatpush2.bf16.msra.mxu0 0
      %389 = vmatprep.mubr.bf16.mxu0 0
      %390 = vmatmul.mubr.bf16.gmra.mxu0 %v352
      %v391 = vpop.f32.mrf.mxu0
      %v392 = vadd.f32 0.0, %v391
      %v393 = vpop.f32.mrf.mxu0
      %v394 = vpop.f32.mrf.mxu0
      %v395 = vpop.f32.mrf.mxu0
      %396 = vdwg.mxu0
      %v397 = vld [vmem:[%s161 + $0x8] sm:$0xff]
      %v398 = vld [vmem:[%s167 + $0x28] sm:$0xff]
      %v399 = vld [vmem:[%s167 + $0x48] sm:$0xff]
      %v400 = vpack.c.bf16 %v397, %v397
      %v401 = vpack.c.bf16 %v398, %v398
      %v403 = vsel %vm172, %v400, 0
      %v406 = vsel %vm172, %v401, 0
      %408 = vmatprep.subr.bf16.mxu0 0
      %409 = vmatpush1.bf16.xpose.msra.mxu0 0
      %410 = vmatprep.subr.bf16.mxu0 0
      %411 = vmatpush1.bf16.xpose.msra.mxu0 0
      %412 = vmatprep.subr.bf16.mxu0 0
      %413 = vmatpush1.bf16.xpose.msra.mxu0 0
      %414 = vmatprep.subr.bf16.mxu0 0
      %415 = vmatpush1.bf16.xpose.msra.mxu0 0
      %416 = vmatprep.subr.bf16.mxu0 0
      %417 = vmatpush1.bf16.xpose.msra.mxu0 0
      %418 = vmatprep.subr.bf16.mxu0 0
      %419 = vmatpush1.bf16.xpose.msra.mxu0 0
      %420 = vmatprep.subr.bf16.mxu0 0
      %421 = vmatpush1.bf16.xpose.msra.mxu0 0
      %422 = vmatprep.subr.bf16.mxu0 0
      %423 = vmatpush1.bf16.xpose.msra.mxu0 %v406
      %424 = vmatprep.subr.bf16.mxu0 0
      %425 = vmatpush2.bf16.xpose.msra.mxu0 0
      %426 = vmatprep.subr.bf16.mxu0 0
      %427 = vmatpush2.bf16.xpose.msra.mxu0 0
      %428 = vmatprep.subr.bf16.mxu0 0
      %429 = vmatpush2.bf16.xpose.msra.mxu0 0
      %430 = vmatprep.subr.bf16.mxu0 0
      %431 = vmatpush2.bf16.xpose.msra.mxu0 0
      %432 = vmatprep.subr.bf16.mxu0 0
      %433 = vmatpush2.bf16.xpose.msra.mxu0 0
      %434 = vmatprep.subr.bf16.mxu0 0
      %435 = vmatpush2.bf16.xpose.msra.mxu0 0
      %436 = vmatprep.subr.bf16.mxu0 0
      %437 = vmatpush2.bf16.xpose.msra.mxu0 0
      %438 = vmatprep.subr.bf16.mxu0 0
      %439 = vmatpush2.bf16.xpose.msra.mxu0 0
      %440 = vmatprep.mubr.bf16.mxu0 0
      %441 = vmatmul.mubr.bf16.gmra.mxu0 %v403
      %v442 = vpop.f32.mrf.mxu0
      %v443 = vadd.f32 0.0, %v442
      %v444 = vpop.f32.mrf.mxu0
      %v445 = vpop.f32.mrf.mxu0
      %v446 = vpop.f32.mrf.mxu0
      %447 = vdwg.mxu0
      %v448 = vmul.f32 %v443, 0.125
      %v449 = vsel %vm156, %v448, -1e+30
      %v450 = vsel %vm221, %v449, -inf
      %451 = vmax.xlane.f32.xlu0 %v450
      %v452 = vpop.xlane.xlu0 %451
      %v453 = vsub.f32 %v449, %v452
      %v454 = vmul.f32 %v453, 1.442695
      %v455 = vpow.pop %v454
      %v456 = vsel %vm221, %v455, 0.0
      %457 = vadd.xlane.f32.xlu0 %v456
      %v458 = vpop.xlane.xlu0 %457
      %v459 = vrcp.pop %v458
      %v460 = vmul.f32 %v455, %v459
      %v461 = vpack.c.bf16 %v460, %v460
      %v462 = vpack.c.bf16 %v399, %v399
      %v464 = vsel %vm221, %v461, 0
      %v467 = vsel %vm238, %v462, 0
      %469 = vmatprep.subr.bf16.mxu0 0
      %470 = vmatpush1.bf16.msra.mxu0 0
      %471 = vmatprep.subr.bf16.mxu0 0
      %472 = vmatpush1.bf16.msra.mxu0 0
      %473 = vmatprep.subr.bf16.mxu0 0
      %474 = vmatpush1.bf16.msra.mxu0 0
      %475 = vmatprep.subr.bf16.mxu0 0
      %476 = vmatpush1.bf16.msra.mxu0 0
      %477 = vmatprep.subr.bf16.mxu0 0
      %478 = vmatpush1.bf16.msra.mxu0 0
      %479 = vmatprep.subr.bf16.mxu0 0
      %480 = vmatpush1.bf16.msra.mxu0 0
      %481 = vmatprep.subr.bf16.mxu0 0
      %482 = vmatpush1.bf16.msra.mxu0 0
      %483 = vmatprep.subr.bf16.mxu0 0
      %484 = vmatpush1.bf16.msra.mxu0 %v467
      %485 = vmatprep.subr.bf16.mxu0 0
      %486 = vmatpush2.bf16.msra.mxu0 0
      %487 = vmatprep.subr.bf16.mxu0 0
      %488 = vmatpush2.bf16.msra.mxu0 0
      %489 = vmatprep.subr.bf16.mxu0 0
      %490 = vmatpush2.bf16.msra.mxu0 0
      %491 = vmatprep.subr.bf16.mxu0 0
      %492 = vmatpush2.bf16.msra.mxu0 0
      %493 = vmatprep.subr.bf16.mxu0 0
      %494 = vmatpush2.bf16.msra.mxu0 0
      %495 = vmatprep.subr.bf16.mxu0 0
      %496 = vmatpush2.bf16.msra.mxu0 0
      %497 = vmatprep.subr.bf16.mxu0 0
      %498 = vmatpush2.bf16.msra.mxu0 0
      %499 = vmatprep.subr.bf16.mxu0 0
      %500 = vmatpush2.bf16.msra.mxu0 0
      %501 = vmatprep.mubr.bf16.mxu0 0
      %502 = vmatmul.mubr.bf16.gmra.mxu0 %v464
      %v503 = vpop.f32.mrf.mxu0
      %v504 = vadd.f32 0.0, %v503
      %v505 = vpop.f32.mrf.mxu0
      %v506 = vpop.f32.mrf.mxu0
      %v507 = vpop.f32.mrf.mxu0
      %508 = vdwg.mxu0
      %510 = vrot.lane.b32.xlu0 %v400, 64
      %v511 = vpop.permute.xlu0 %510
      %513 = vrot.lane.b32.xlu0 %v401, 64
      %v514 = vpop.permute.xlu0 %513
      %v516 = vsel %vm172, %v511, 0
      %v519 = vsel %vm172, %v514, 0
      %521 = vmatprep.subr.bf16.mxu0 0
      %522 = vmatpush1.bf16.xpose.msra.mxu0 0
      %523 = vmatprep.subr.bf16.mxu0 0
      %524 = vmatpush1.bf16.xpose.msra.mxu0 0
      %525 = vmatprep.subr.bf16.mxu0 0
      %526 = vmatpush1.bf16.xpose.msra.mxu0 0
      %527 = vmatprep.subr.bf16.mxu0 0
      %528 = vmatpush1.bf16.xpose.msra.mxu0 0
      %529 = vmatprep.subr.bf16.mxu0 0
      %530 = vmatpush1.bf16.xpose.msra.mxu0 0
      %531 = vmatprep.subr.bf16.mxu0 0
      %532 = vmatpush1.bf16.xpose.msra.mxu0 0
      %533 = vmatprep.subr.bf16.mxu0 0
      %534 = vmatpush1.bf16.xpose.msra.mxu0 0
      %535 = vmatprep.subr.bf16.mxu0 0
      %536 = vmatpush1.bf16.xpose.msra.mxu0 %v519
      %537 = vmatprep.subr.bf16.mxu0 0
      %538 = vmatpush2.bf16.xpose.msra.mxu0 0
      %539 = vmatprep.subr.bf16.mxu0 0
      %540 = vmatpush2.bf16.xpose.msra.mxu0 0
      %541 = vmatprep.subr.bf16.mxu0 0
      %542 = vmatpush2.bf16.xpose.msra.mxu0 0
      %543 = vmatprep.subr.bf16.mxu0 0
      %544 = vmatpush2.bf16.xpose.msra.mxu0 0
      %545 = vmatprep.subr.bf16.mxu0 0
      %546 = vmatpush2.bf16.xpose.msra.mxu0 0
      %547 = vmatprep.subr.bf16.mxu0 0
      %548 = vmatpush2.bf16.xpose.msra.mxu0 0
      %549 = vmatprep.subr.bf16.mxu0 0
      %550 = vmatpush2.bf16.xpose.msra.mxu0 0
      %551 = vmatprep.subr.bf16.mxu0 0
      %552 = vmatpush2.bf16.xpose.msra.mxu0 0
      %553 = vmatprep.mubr.bf16.mxu0 0
      %554 = vmatmul.mubr.bf16.gmra.mxu0 %v516
      %v555 = vpop.f32.mrf.mxu0
      %v556 = vadd.f32 0.0, %v555
      %v557 = vpop.f32.mrf.mxu0
      %v558 = vpop.f32.mrf.mxu0
      %v559 = vpop.f32.mrf.mxu0
      %560 = vdwg.mxu0
      %v561 = vmul.f32 %v556, 0.125
      %v562 = vsel %vm156, %v561, -1e+30
      %v563 = vsel %vm221, %v562, -inf
      %564 = vmax.xlane.f32.xlu0 %v563
      %v565 = vpop.xlane.xlu0 %564
      %v566 = vsub.f32 %v562, %v565
      %v567 = vmul.f32 %v566, 1.442695
      %v568 = vpow.pop %v567
      %v569 = vsel %vm221, %v568, 0.0
      %570 = vadd.xlane.f32.xlu0 %v569
      %v571 = vpop.xlane.xlu0 %570
      %v572 = vrcp.pop %v571
      %v573 = vmul.f32 %v568, %v572
      %v574 = vpack.c.bf16 %v573, %v573
      %576 = vrot.lane.b32.xlu0 %v462, 64
      %v577 = vpop.permute.xlu0 %576
      %v579 = vsel %vm221, %v574, 0
      %v582 = vsel %vm238, %v577, 0
      %584 = vmatprep.subr.bf16.mxu0 0
      %585 = vmatpush1.bf16.msra.mxu0 0
      %586 = vmatprep.subr.bf16.mxu0 0
      %587 = vmatpush1.bf16.msra.mxu0 0
      %588 = vmatprep.subr.bf16.mxu0 0
      %589 = vmatpush1.bf16.msra.mxu0 0
      %590 = vmatprep.subr.bf16.mxu0 0
      %591 = vmatpush1.bf16.msra.mxu0 0
      %592 = vmatprep.subr.bf16.mxu0 0
      %593 = vmatpush1.bf16.msra.mxu0 0
      %594 = vmatprep.subr.bf16.mxu0 0
      %595 = vmatpush1.bf16.msra.mxu0 0
      %596 = vmatprep.subr.bf16.mxu0 0
      %597 = vmatpush1.bf16.msra.mxu0 0
      %598 = vmatprep.subr.bf16.mxu0 0
      %599 = vmatpush1.bf16.msra.mxu0 %v582
      %600 = vmatprep.subr.bf16.mxu0 0
      %601 = vmatpush2.bf16.msra.mxu0 0
      %602 = vmatprep.subr.bf16.mxu0 0
      %603 = vmatpush2.bf16.msra.mxu0 0
      %604 = vmatprep.subr.bf16.mxu0 0
      %605 = vmatpush2.bf16.msra.mxu0 0
      %606 = vmatprep.subr.bf16.mxu0 0
      %607 = vmatpush2.bf16.msra.mxu0 0
      %608 = vmatprep.subr.bf16.mxu0 0
      %609 = vmatpush2.bf16.msra.mxu0 0
      %610 = vmatprep.subr.bf16.mxu0 0
      %611 = vmatpush2.bf16.msra.mxu0 0
      %612 = vmatprep.subr.bf16.mxu0 0
      %613 = vmatpush2.bf16.msra.mxu0 0
      %614 = vmatprep.subr.bf16.mxu0 0
      %615 = vmatpush2.bf16.msra.mxu0 0
      %616 = vmatprep.mubr.bf16.mxu0 0
      %617 = vmatmul.mubr.bf16.gmra.mxu0 %v579
      %v618 = vpop.f32.mrf.mxu0
      %v619 = vadd.f32 0.0, %v618
      %v620 = vpop.f32.mrf.mxu0
      %v621 = vpop.f32.mrf.mxu0
      %v622 = vpop.f32.mrf.mxu0
      %623 = vdwg.mxu0
      %v624 = vld [vmem:[%s161 + $0x10] sm:$0xff]
      %v625 = vld [vmem:[%s167 + $0x30] sm:$0xff]
      %v626 = vld [vmem:[%s167 + $0x50] sm:$0xff]
      %v627 = vpack.c.bf16 %v624, %v624
      %v628 = vpack.c.bf16 %v625, %v625
      %v630 = vsel %vm172, %v627, 0
      %v633 = vsel %vm172, %v628, 0
      %635 = vmatprep.subr.bf16.mxu0 0
      %636 = vmatpush1.bf16.xpose.msra.mxu0 0
      %637 = vmatprep.subr.bf16.mxu0 0
      %638 = vmatpush1.bf16.xpose.msra.mxu0 0
      %639 = vmatprep.subr.bf16.mxu0 0
      %640 = vmatpush1.bf16.xpose.msra.mxu0 0
      %641 = vmatprep.subr.bf16.mxu0 0
      %642 = vmatpush1.bf16.xpose.msra.mxu0 0
      %643 = vmatprep.subr.bf16.mxu0 0
      %644 = vmatpush1.bf16.xpose.msra.mxu0 0
      %645 = vmatprep.subr.bf16.mxu0 0
      %646 = vmatpush1.bf16.xpose.msra.mxu0 0
      %647 = vmatprep.subr.bf16.mxu0 0
      %648 = vmatpush1.bf16.xpose.msra.mxu0 0
      %649 = vmatprep.subr.bf16.mxu0 0
      %650 = vmatpush1.bf16.xpose.msra.mxu0 %v633
      %651 = vmatprep.subr.bf16.mxu0 0
      %652 = vmatpush2.bf16.xpose.msra.mxu0 0
      %653 = vmatprep.subr.bf16.mxu0 0
      %654 = vmatpush2.bf16.xpose.msra.mxu0 0
      %655 = vmatprep.subr.bf16.mxu0 0
      %656 = vmatpush2.bf16.xpose.msra.mxu0 0
      %657 = vmatprep.subr.bf16.mxu0 0
      %658 = vmatpush2.bf16.xpose.msra.mxu0 0
      %659 = vmatprep.subr.bf16.mxu0 0
      %660 = vmatpush2.bf16.xpose.msra.mxu0 0
      %661 = vmatprep.subr.bf16.mxu0 0
      %662 = vmatpush2.bf16.xpose.msra.mxu0 0
      %663 = vmatprep.subr.bf16.mxu0 0
      %664 = vmatpush2.bf16.xpose.msra.mxu0 0
      %665 = vmatprep.subr.bf16.mxu0 0
      %666 = vmatpush2.bf16.xpose.msra.mxu0 0
      %667 = vmatprep.mubr.bf16.mxu0 0
      %668 = vmatmul.mubr.bf16.gmra.mxu0 %v630
      %v669 = vpop.f32.mrf.mxu0
      %v670 = vadd.f32 0.0, %v669
      %v671 = vpop.f32.mrf.mxu0
      %v672 = vpop.f32.mrf.mxu0
      %v673 = vpop.f32.mrf.mxu0
      %674 = vdwg.mxu0
      %v675 = vmul.f32 %v670, 0.125
      %v676 = vsel %vm156, %v675, -1e+30
      %v677 = vsel %vm221, %v676, -inf
      %678 = vmax.xlane.f32.xlu0 %v677
      %v679 = vpop.xlane.xlu0 %678
      %v680 = vsub.f32 %v676, %v679
      %v681 = vmul.f32 %v680, 1.442695
      %v682 = vpow.pop %v681
      %v683 = vsel %vm221, %v682, 0.0
      %684 = vadd.xlane.f32.xlu0 %v683
      %v685 = vpop.xlane.xlu0 %684
      %v686 = vrcp.pop %v685
      %v687 = vmul.f32 %v682, %v686
      %v688 = vpack.c.bf16 %v687, %v687
      %v689 = vpack.c.bf16 %v626, %v626
      %v691 = vsel %vm221, %v688, 0
      %v694 = vsel %vm238, %v689, 0
      %696 = vmatprep.subr.bf16.mxu0 0
      %697 = vmatpush1.bf16.msra.mxu0 0
      %698 = vmatprep.subr.bf16.mxu0 0
      %699 = vmatpush1.bf16.msra.mxu0 0
      %700 = vmatprep.subr.bf16.mxu0 0
      %701 = vmatpush1.bf16.msra.mxu0 0
      %702 = vmatprep.subr.bf16.mxu0 0
      %703 = vmatpush1.bf16.msra.mxu0 0
      %704 = vmatprep.subr.bf16.mxu0 0
      %705 = vmatpush1.bf16.msra.mxu0 0
      %706 = vmatprep.subr.bf16.mxu0 0
      %707 = vmatpush1.bf16.msra.mxu0 0
      %708 = vmatprep.subr.bf16.mxu0 0
      %709 = vmatpush1.bf16.msra.mxu0 0
      %710 = vmatprep.subr.bf16.mxu0 0
      %711 = vmatpush1.bf16.msra.mxu0 %v694
      %712 = vmatprep.subr.bf16.mxu0 0
      %713 = vmatpush2.bf16.msra.mxu0 0
      %714 = vmatprep.subr.bf16.mxu0 0
      %715 = vmatpush2.bf16.msra.mxu0 0
      %716 = vmatprep.subr.bf16.mxu0 0
      %717 = vmatpush2.bf16.msra.mxu0 0
      %718 = vmatprep.subr.bf16.mxu0 0
      %719 = vmatpush2.bf16.msra.mxu0 0
      %720 = vmatprep.subr.bf16.mxu0 0
      %721 = vmatpush2.bf16.msra.mxu0 0
      %722 = vmatprep.subr.bf16.mxu0 0
      %723 = vmatpush2.bf16.msra.mxu0 0
      %724 = vmatprep.subr.bf16.mxu0 0
      %725 = vmatpush2.bf16.msra.mxu0 0
      %726 = vmatprep.subr.bf16.mxu0 0
      %727 = vmatpush2.bf16.msra.mxu0 0
      %728 = vmatprep.mubr.bf16.mxu0 0
      %729 = vmatmul.mubr.bf16.gmra.mxu0 %v691
      %v730 = vpop.f32.mrf.mxu0
      %v731 = vadd.f32 0.0, %v730
      %v732 = vpop.f32.mrf.mxu0
      %v733 = vpop.f32.mrf.mxu0
      %v734 = vpop.f32.mrf.mxu0
      %735 = vdwg.mxu0
      %737 = vrot.lane.b32.xlu0 %v627, 64
      %v738 = vpop.permute.xlu0 %737
      %740 = vrot.lane.b32.xlu0 %v628, 64
      %v741 = vpop.permute.xlu0 %740
      %v743 = vsel %vm172, %v738, 0
      %v746 = vsel %vm172, %v741, 0
      %748 = vmatprep.subr.bf16.mxu0 0
      %749 = vmatpush1.bf16.xpose.msra.mxu0 0
      %750 = vmatprep.subr.bf16.mxu0 0
      %751 = vmatpush1.bf16.xpose.msra.mxu0 0
      %752 = vmatprep.subr.bf16.mxu0 0
      %753 = vmatpush1.bf16.xpose.msra.mxu0 0
      %754 = vmatprep.subr.bf16.mxu0 0
      %755 = vmatpush1.bf16.xpose.msra.mxu0 0
      %756 = vmatprep.subr.bf16.mxu0 0
      %757 = vmatpush1.bf16.xpose.msra.mxu0 0
      %758 = vmatprep.subr.bf16.mxu0 0
      %759 = vmatpush1.bf16.xpose.msra.mxu0 0
      %760 = vmatprep.subr.bf16.mxu0 0
      %761 = vmatpush1.bf16.xpose.msra.mxu0 0
      %762 = vmatprep.subr.bf16.mxu0 0
      %763 = vmatpush1.bf16.xpose.msra.mxu0 %v746
      %764 = vmatprep.subr.bf16.mxu0 0
      %765 = vmatpush2.bf16.xpose.msra.mxu0 0
      %766 = vmatprep.subr.bf16.mxu0 0
      %767 = vmatpush2.bf16.xpose.msra.mxu0 0
      %768 = vmatprep.subr.bf16.mxu0 0
      %769 = vmatpush2.bf16.xpose.msra.mxu0 0
      %770 = vmatprep.subr.bf16.mxu0 0
      %771 = vmatpush2.bf16.xpose.msra.mxu0 0
      %772 = vmatprep.subr.bf16.mxu0 0
      %773 = vmatpush2.bf16.xpose.msra.mxu0 0
      %774 = vmatprep.subr.bf16.mxu0 0
      %775 = vmatpush2.bf16.xpose.msra.mxu0 0
      %776 = vmatprep.subr.bf16.mxu0 0
      %777 = vmatpush2.bf16.xpose.msra.mxu0 0
      %778 = vmatprep.subr.bf16.mxu0 0
      %779 = vmatpush2.bf16.xpose.msra.mxu0 0
      %780 = vmatprep.mubr.bf16.mxu0 0
      %781 = vmatmul.mubr.bf16.gmra.mxu0 %v743
      %v782 = vpop.f32.mrf.mxu0
      %v783 = vadd.f32 0.0, %v782
      %v784 = vpop.f32.mrf.mxu0
      %v785 = vpop.f32.mrf.mxu0
      %v786 = vpop.f32.mrf.mxu0
      %787 = vdwg.mxu0
      %v788 = vmul.f32 %v783, 0.125
      %v789 = vsel %vm156, %v788, -1e+30
      %v790 = vsel %vm221, %v789, -inf
      %791 = vmax.xlane.f32.xlu0 %v790
      %v792 = vpop.xlane.xlu0 %791
      %v793 = vsub.f32 %v789, %v792
      %v794 = vmul.f32 %v793, 1.442695
      %v795 = vpow.pop %v794
      %v796 = vsel %vm221, %v795, 0.0
      %797 = vadd.xlane.f32.xlu0 %v796
      %v798 = vpop.xlane.xlu0 %797
      %v799 = vrcp.pop %v798
      %v800 = vmul.f32 %v795, %v799
      %v801 = vpack.c.bf16 %v800, %v800
      %803 = vrot.lane.b32.xlu0 %v689, 64
      %v804 = vpop.permute.xlu0 %803
      %v806 = vsel %vm221, %v801, 0
      %v809 = vsel %vm238, %v804, 0
      %811 = vmatprep.subr.bf16.mxu0 0
      %812 = vmatpush1.bf16.msra.mxu0 0
      %813 = vmatprep.subr.bf16.mxu0 0
      %814 = vmatpush1.bf16.msra.mxu0 0
      %815 = vmatprep.subr.bf16.mxu0 0
      %816 = vmatpush1.bf16.msra.mxu0 0
      %817 = vmatprep.subr.bf16.mxu0 0
      %818 = vmatpush1.bf16.msra.mxu0 0
      %819 = vmatprep.subr.bf16.mxu0 0
      %820 = vmatpush1.bf16.msra.mxu0 0
      %821 = vmatprep.subr.bf16.mxu0 0
      %822 = vmatpush1.bf16.msra.mxu0 0
      %823 = vmatprep.subr.bf16.mxu0 0
      %824 = vmatpush1.bf16.msra.mxu0 0
      %825 = vmatprep.subr.bf16.mxu0 0
      %826 = vmatpush1.bf16.msra.mxu0 %v809
      %827 = vmatprep.subr.bf16.mxu0 0
      %828 = vmatpush2.bf16.msra.mxu0 0
      %829 = vmatprep.subr.bf16.mxu0 0
      %830 = vmatpush2.bf16.msra.mxu0 0
      %831 = vmatprep.subr.bf16.mxu0 0
      %832 = vmatpush2.bf16.msra.mxu0 0
      %833 = vmatprep.subr.bf16.mxu0 0
      %834 = vmatpush2.bf16.msra.mxu0 0
      %835 = vmatprep.subr.bf16.mxu0 0
      %836 = vmatpush2.bf16.msra.mxu0 0
      %837 = vmatprep.subr.bf16.mxu0 0
      %838 = vmatpush2.bf16.msra.mxu0 0
      %839 = vmatprep.subr.bf16.mxu0 0
      %840 = vmatpush2.bf16.msra.mxu0 0
      %841 = vmatprep.subr.bf16.mxu0 0
      %842 = vmatpush2.bf16.msra.mxu0 0
      %843 = vmatprep.mubr.bf16.mxu0 0
      %844 = vmatmul.mubr.bf16.gmra.mxu0 %v806
      %v845 = vpop.f32.mrf.mxu0
      %v846 = vadd.f32 0.0, %v845
      %v847 = vpop.f32.mrf.mxu0
      %v848 = vpop.f32.mrf.mxu0
      %v849 = vpop.f32.mrf.mxu0
      %850 = vdwg.mxu0
      %v851 = vld [vmem:[%s161 + $0x18] sm:$0xff]
      %v852 = vld [vmem:[%s167 + $0x38] sm:$0xff]
      %v853 = vld [vmem:[%s167 + $0x58] sm:$0xff]
      %v854 = vpack.c.bf16 %v851, %v851
      %v855 = vpack.c.bf16 %v852, %v852
      %v857 = vsel %vm172, %v854, 0
      %v860 = vsel %vm172, %v855, 0
      %862 = vmatprep.subr.bf16.mxu0 0
      %863 = vmatpush1.bf16.xpose.msra.mxu0 0
      %864 = vmatprep.subr.bf16.mxu0 0
      %865 = vmatpush1.bf16.xpose.msra.mxu0 0
      %866 = vmatprep.subr.bf16.mxu0 0
      %867 = vmatpush1.bf16.xpose.msra.mxu0 0
      %868 = vmatprep.subr.bf16.mxu0 0
      %869 = vmatpush1.bf16.xpose.msra.mxu0 0
      %870 = vmatprep.subr.bf16.mxu0 0
      %871 = vmatpush1.bf16.xpose.msra.mxu0 0
      %872 = vmatprep.subr.bf16.mxu0 0
      %873 = vmatpush1.bf16.xpose.msra.mxu0 0
      %874 = vmatprep.subr.bf16.mxu0 0
      %875 = vmatpush1.bf16.xpose.msra.mxu0 0
      %876 = vmatprep.subr.bf16.mxu0 0
      %877 = vmatpush1.bf16.xpose.msra.mxu0 %v860
      %878 = vmatprep.subr.bf16.mxu0 0
      %879 = vmatpush2.bf16.xpose.msra.mxu0 0
      %880 = vmatprep.subr.bf16.mxu0 0
      %881 = vmatpush2.bf16.xpose.msra.mxu0 0
      %882 = vmatprep.subr.bf16.mxu0 0
      %883 = vmatpush2.bf16.xpose.msra.mxu0 0
      %884 = vmatprep.subr.bf16.mxu0 0
      %885 = vmatpush2.bf16.xpose.msra.mxu0 0
      %886 = vmatprep.subr.bf16.mxu0 0
      %887 = vmatpush2.bf16.xpose.msra.mxu0 0
      %888 = vmatprep.subr.bf16.mxu0 0
      %889 = vmatpush2.bf16.xpose.msra.mxu0 0
      %890 = vmatprep.subr.bf16.mxu0 0
      %891 = vmatpush2.bf16.xpose.msra.mxu0 0
      %892 = vmatprep.subr.bf16.mxu0 0
      %893 = vmatpush2.bf16.xpose.msra.mxu0 0
      %894 = vmatprep.mubr.bf16.mxu0 0
      %895 = vmatmul.mubr.bf16.gmra.mxu0 %v857
      %v896 = vpop.f32.mrf.mxu0
      %v897 = vadd.f32 0.0, %v896
      %v898 = vpop.f32.mrf.mxu0
      %v899 = vpop.f32.mrf.mxu0
      %v900 = vpop.f32.mrf.mxu0
      %901 = vdwg.mxu0
      %v902 = vmul.f32 %v897, 0.125
      %v903 = vsel %vm156, %v902, -1e+30
      %v904 = vsel %vm221, %v903, -inf
      %905 = vmax.xlane.f32.xlu0 %v904
      %v906 = vpop.xlane.xlu0 %905
      %v907 = vsub.f32 %v903, %v906
      %v908 = vmul.f32 %v907, 1.442695
      %v909 = vpow.pop %v908
      %v910 = vsel %vm221, %v909, 0.0
      %911 = vadd.xlane.f32.xlu0 %v910
      %v912 = vpop.xlane.xlu0 %911
      %v913 = vrcp.pop %v912
      %v914 = vmul.f32 %v909, %v913
      %v915 = vpack.c.bf16 %v914, %v914
      %v916 = vpack.c.bf16 %v853, %v853
      %v918 = vsel %vm221, %v915, 0
      %v921 = vsel %vm238, %v916, 0
      %923 = vmatprep.subr.bf16.mxu0 0
      %924 = vmatpush1.bf16.msra.mxu0 0
      %925 = vmatprep.subr.bf16.mxu0 0
      %926 = vmatpush1.bf16.msra.mxu0 0
      %927 = vmatprep.subr.bf16.mxu0 0
      %928 = vmatpush1.bf16.msra.mxu0 0
      %929 = vmatprep.subr.bf16.mxu0 0
      %930 = vmatpush1.bf16.msra.mxu0 0
      %931 = vmatprep.subr.bf16.mxu0 0
      %932 = vmatpush1.bf16.msra.mxu0 0
      %933 = vmatprep.subr.bf16.mxu0 0
      %934 = vmatpush1.bf16.msra.mxu0 0
      %935 = vmatprep.subr.bf16.mxu0 0
      %936 = vmatpush1.bf16.msra.mxu0 0
      %937 = vmatprep.subr.bf16.mxu0 0
      %938 = vmatpush1.bf16.msra.mxu0 %v921
      %939 = vmatprep.subr.bf16.mxu0 0
      %940 = vmatpush2.bf16.msra.mxu0 0
      %941 = vmatprep.subr.bf16.mxu0 0
      %942 = vmatpush2.bf16.msra.mxu0 0
      %943 = vmatprep.subr.bf16.mxu0 0
      %944 = vmatpush2.bf16.msra.mxu0 0
      %945 = vmatprep.subr.bf16.mxu0 0
      %946 = vmatpush2.bf16.msra.mxu0 0
      %947 = vmatprep.subr.bf16.mxu0 0
      %948 = vmatpush2.bf16.msra.mxu0 0
      %949 = vmatprep.subr.bf16.mxu0 0
      %950 = vmatpush2.bf16.msra.mxu0 0
      %951 = vmatprep.subr.bf16.mxu0 0
      %952 = vmatpush2.bf16.msra.mxu0 0
      %953 = vmatprep.subr.bf16.mxu0 0
      %954 = vmatpush2.bf16.msra.mxu0 0
      %955 = vmatprep.mubr.bf16.mxu0 0
      %956 = vmatmul.mubr.bf16.gmra.mxu0 %v918
      %v957 = vpop.f32.mrf.mxu0
      %v958 = vadd.f32 0.0, %v957
      %v959 = vpop.f32.mrf.mxu0
      %v960 = vpop.f32.mrf.mxu0
      %v961 = vpop.f32.mrf.mxu0
      %962 = vdwg.mxu0
      %964 = vrot.lane.b32.xlu0 %v854, 64
      %v965 = vpop.permute.xlu0 %964
      %967 = vrot.lane.b32.xlu0 %v855, 64
      %v968 = vpop.permute.xlu0 %967
      %v970 = vsel %vm172, %v965, 0
      %v973 = vsel %vm172, %v968, 0
      %975 = vmatprep.subr.bf16.mxu0 0
      %976 = vmatpush1.bf16.xpose.msra.mxu0 0
      %977 = vmatprep.subr.bf16.mxu0 0
      %978 = vmatpush1.bf16.xpose.msra.mxu0 0
      %979 = vmatprep.subr.bf16.mxu0 0
      %980 = vmatpush1.bf16.xpose.msra.mxu0 0
      %981 = vmatprep.subr.bf16.mxu0 0
      %982 = vmatpush1.bf16.xpose.msra.mxu0 0
      %983 = vmatprep.subr.bf16.mxu0 0
      %984 = vmatpush1.bf16.xpose.msra.mxu0 0
      %985 = vmatprep.subr.bf16.mxu0 0
      %986 = vmatpush1.bf16.xpose.msra.mxu0 0
      %987 = vmatprep.subr.bf16.mxu0 0
      %988 = vmatpush1.bf16.xpose.msra.mxu0 0
      %989 = vmatprep.subr.bf16.mxu0 0
      %990 = vmatpush1.bf16.xpose.msra.mxu0 %v973
      %991 = vmatprep.subr.bf16.mxu0 0
      %992 = vmatpush2.bf16.xpose.msra.mxu0 0
      %993 = vmatprep.subr.bf16.mxu0 0
      %994 = vmatpush2.bf16.xpose.msra.mxu0 0
      %995 = vmatprep.subr.bf16.mxu0 0
      %996 = vmatpush2.bf16.xpose.msra.mxu0 0
      %997 = vmatprep.subr.bf16.mxu0 0
      %998 = vmatpush2.bf16.xpose.msra.mxu0 0
      %999 = vmatprep.subr.bf16.mxu0 0
      %1000 = vmatpush2.bf16.xpose.msra.mxu0 0
      %1001 = vmatprep.subr.bf16.mxu0 0
      %1002 = vmatpush2.bf16.xpose.msra.mxu0 0
      %1003 = vmatprep.subr.bf16.mxu0 0
      %1004 = vmatpush2.bf16.xpose.msra.mxu0 0
      %1005 = vmatprep.subr.bf16.mxu0 0
      %1006 = vmatpush2.bf16.xpose.msra.mxu0 0
      %1007 = vmatprep.mubr.bf16.mxu0 0
      %1008 = vmatmul.mubr.bf16.gmra.mxu0 %v970
      %v1009 = vpop.f32.mrf.mxu0
      %v1010 = vadd.f32 0.0, %v1009
      %v1011 = vpop.f32.mrf.mxu0
      %v1012 = vpop.f32.mrf.mxu0
      %v1013 = vpop.f32.mrf.mxu0
      %1014 = vdwg.mxu0
      %v1015 = vmul.f32 %v1010, 0.125
      %v1016 = vsel %vm156, %v1015, -1e+30
      %v1017 = vsel %vm221, %v1016, -inf
      %1018 = vmax.xlane.f32.xlu0 %v1017
      %v1019 = vpop.xlane.xlu0 %1018
      %v1020 = vsub.f32 %v1016, %v1019
      %v1021 = vmul.f32 %v1020, 1.442695
      %v1022 = vpow.pop %v1021
      %v1023 = vsel %vm221, %v1022, 0.0
      %1024 = vadd.xlane.f32.xlu0 %v1023
      %v1025 = vpop.xlane.xlu0 %1024
      %v1026 = vrcp.pop %v1025
      %v1027 = vmul.f32 %v1022, %v1026
      %v1028 = vpack.c.bf16 %v1027, %v1027
      %1030 = vrot.lane.b32.xlu0 %v916, 64
      %v1031 = vpop.permute.xlu0 %1030
      %v1033 = vsel %vm221, %v1028, 0
      %v1036 = vsel %vm238, %v1031, 0
      %1038 = vmatprep.subr.bf16.mxu0 0
      %1039 = vmatpush1.bf16.msra.mxu0 0
      %1040 = vmatprep.subr.bf16.mxu0 0
      %1041 = vmatpush1.bf16.msra.mxu0 0
      %1042 = vmatprep.subr.bf16.mxu0 0
      %1043 = vmatpush1.bf16.msra.mxu0 0
      %1044 = vmatprep.subr.bf16.mxu0 0
      %1045 = vmatpush1.bf16.msra.mxu0 0
      %1046 = vmatprep.subr.bf16.mxu0 0
      %1047 = vmatpush1.bf16.msra.mxu0 0
      %1048 = vmatprep.subr.bf16.mxu0 0
      %1049 = vmatpush1.bf16.msra.mxu0 0
      %1050 = vmatprep.subr.bf16.mxu0 0
      %1051 = vmatpush1.bf16.msra.mxu0 0
      %1052 = vmatprep.subr.bf16.mxu0 0
      %1053 = vmatpush1.bf16.msra.mxu0 %v1036
      %1054 = vmatprep.subr.bf16.mxu0 0
      %1055 = vmatpush2.bf16.msra.mxu0 0
      %1056 = vmatprep.subr.bf16.mxu0 0
      %1057 = vmatpush2.bf16.msra.mxu0 0
      %1058 = vmatprep.subr.bf16.mxu0 0
      %1059 = vmatpush2.bf16.msra.mxu0 0
      %1060 = vmatprep.subr.bf16.mxu0 0
      %1061 = vmatpush2.bf16.msra.mxu0 0
      %1062 = vmatprep.subr.bf16.mxu0 0
      %1063 = vmatpush2.bf16.msra.mxu0 0
      %1064 = vmatprep.subr.bf16.mxu0 0
      %1065 = vmatpush2.bf16.msra.mxu0 0
      %1066 = vmatprep.subr.bf16.mxu0 0
      %1067 = vmatpush2.bf16.msra.mxu0 0
      %1068 = vmatprep.subr.bf16.mxu0 0
      %1069 = vmatpush2.bf16.msra.mxu0 0
      %1070 = vmatprep.mubr.bf16.mxu0 0
      %1071 = vmatmul.mubr.bf16.gmra.mxu0 %v1033
      %v1072 = vpop.f32.mrf.mxu0
      %v1073 = vadd.f32 0.0, %v1072
      %v1074 = vpop.f32.mrf.mxu0
      %v1075 = vpop.f32.mrf.mxu0
      %v1076 = vpop.f32.mrf.mxu0
      %1077 = vdwg.mxu0
      %1079 = vrot.lane.b32.xlu0 %v392, 64
      %v1080 = vpop.permute.xlu0 %1079
      %1083 = vrot.lane.b32.xlu0 %v619, 64
      %v1084 = vpop.permute.xlu0 %1083
      %1087 = vrot.lane.b32.xlu0 %v846, 64
      %v1088 = vpop.permute.xlu0 %1087
      %1091 = vrot.lane.b32.xlu0 %v1073, 64
      %v1092 = vpop.permute.xlu0 %1091
      %v1094 = vsel %vm172, %v277, %v1080
      %v1095 = vsel %vm172, %v504, %v1084
      %v1096 = vsel %vm172, %v731, %v1088
      %v1097 = vsel %vm172, %v958, %v1092
      %v1098 = vpack.c.bf16 %v1094, %v1094
      %v1099 = vpack.c.bf16 %v1095, %v1095
      %v1100 = vpack.c.bf16 %v1096, %v1096
      %v1101 = vpack.c.bf16 %v1097, %v1097
      %v1106 = vunpack.c.l.b16 %v1098
      %v1107 = vunpack.c.l.b16 %v1099
      %v1108 = vunpack.c.l.b16 %v1100
      %v1109 = vunpack.c.l.b16 %v1101
      %v1110 = vpack.c.b16 %v1107, %v1106
      %v1111 = vpack.c.b16 %v1109, %v1108
      %1114 = vst [vmem:[%s138] sm:$0xff] %v1110
      %1115 = vst [vmem:[%s138 + $0x8] sm:$0xff] %v1111
      %p1116 = scmp.lt.s32.totalorder %s16, 1
      %s1117 = scalar_select %p1116, %s16, 1
      %p1118 = scmp.lt.s32.totalorder %s17, 0
      %s1119 = scalar_select %p1118, %s17, 0
      %s1120 = smul.addr %s1119, 4
      %s1121 = smul.addr %s1117, 4
      %s1122 = sadd.s32 %s1120, %s1121
      %s1123 = smul.addr %s1122, 4
      %s1124 = scalar_lea.vmem %s1, %s1123
      // Predicated region
      $region25: #{transformer_encoder.15} parent=23 // pred_check
        %p1125 = pneg %p70
      $region26: #{transformer_encoder.15} parent=23 // pred_check_branch
        %1127 = sbr.rel (%p1125) target = $region28
      $region27: #{transformer_encoder.15} parent=23 // pred_region
        _
      $region28: #{transformer_encoder.15} parent=23 // pred_fallthru
        _
    $region24: #{transformer_encoder.15} parent=5 // pred_fallthru
      _
    %p1128 = scmp.le.s32.totalorder 2, %s7
    // Predicated region
    $region29: #{transformer_encoder.15} parent=5 // pred_check
      %p1129 = pneg %p1128
    $region30: #{transformer_encoder.15} parent=5 // pred_check_branch
      %1131 = sbr.rel (%p1129) target = $region32
    $region31: #{transformer_encoder.15} parent=5 // pred_region
      %s1132 = ssub.s32 %s7, 2
      // Predicated region
      $region33: #{transformer_encoder.15} parent=31 // pred_check
        %p1133 = pneg %p76
      $region34: #{transformer_encoder.15} parent=31 // pred_check_branch
        %1135 = sbr.rel (%p1133) target = $region36
      $region35: #{transformer_encoder.15} parent=31 // pred_region
        %p1136 = scmp.lt.s32.totalorder %s18, 1
        %s1137 = scalar_select %p1136, %s18, 1
        %p1138 = scmp.lt.s32.totalorder %s19, 0
        %s1139 = scalar_select %p1138, %s19, 0
        %s1140 = smul.addr %s1139, 4
        %s1141 = smul.addr %s1137, 4
        %s1142 = sadd.s32 %s1140, %s1141
        %s1143 = smul.addr %s1142, 4
        %s1144 = scalar_lea.vmem %s1, %s1143
      $region36: #{transformer_encoder.15} parent=31 // pred_fallthru
        _
    $region32: #{transformer_encoder.15} parent=5 // pred_fallthru
      _
  $region6: #{transformer_encoder.15} parent=0 // loop_footer
    %s11 = sadd.s32 1, %s7
  $region7: #{transformer_encoder.15} parent=0 // loop_footer_branch
    %6 = sbr.rel target = $region3
  $region8: #{transformer_encoder.15} parent=0 // loop_exit
    _

// kernel: transformer_encoder.17
$region0: #{transformer_encoder.17}
  #allocation0 [shape = 'u32[]', space=smem, size = 0x4, offset = 0x4, fixed_abs, tag = 'smem constant byte address 0x4 - core index']
  #allocation1 [shape = 'u32[144,128]{1,0:T(1,128)}', space=vmem, size = 0x12000, scoped, tag = 'internal scratch']
  %s0 = inlined_call_operand.vmem [shape: bf16[16,512], index: 0, kind: input, shape index: {}]
  %s1 = inlined_call_operand.vmem [shape: bf16[512,32], index: 1, kind: input, shape index: {}]
  %s2 = inlined_call_operand.vmem [shape: f32[16,32], index: 2, kind: output, shape index: {}]
  %s3 = sld [smem:[#allocation0]]
  $region18: #{transformer_encoder.17} parent=0
    _
  %s5 = ssub.s32 1, %s3
  %s6 = scalar_select 0, %s5, %s3
  // Predicated region
  $region2: #{transformer_encoder.17} parent=0 // pred_check
    _
  $region3: #{transformer_encoder.17} parent=0 // pred_check_branch
    %8 = sbr.rel (0) target = $region5
  $region4: #{transformer_encoder.17} parent=0 // pred_region
    _
  $region5: #{transformer_encoder.17} parent=0 // pred_fallthru
    _
  // Predicated region
  $region6: #{transformer_encoder.17} parent=0 // pred_check
    _
  $region7: #{transformer_encoder.17} parent=0 // pred_check_branch
    %10 = sbr.rel (0) target = $region9
  $region8: #{transformer_encoder.17} parent=0 // pred_region
    _
  $region9: #{transformer_encoder.17} parent=0 // pred_fallthru
    _
  %v12 = vld [vmem:[%s0] sm:$0xff]
  %v13 = vld [vmem:[%s0 + $0x8] sm:$0xff]
  %v14 = vld [vmem:[%s0 + $0x10] sm:$0xff]
  %v15 = vld [vmem:[%s0 + $0x18] sm:$0xff]
  %v16 = vld [vmem:[%s1] sm:$0xf]
  %v17 = vld [vmem:[%s1 + $0x4] sm:$0xf]
  %v18 = vld [vmem:[%s1 + $0x8] sm:$0xf]
  %v19 = vld [vmem:[%s1 + $0xc] sm:$0xf]
  %v20 = vld [vmem:[%s1 + $0x10] sm:$0xf]
  %v21 = vld [vmem:[%s1 + $0x14] sm:$0xf]
  %v22 = vld [vmem:[%s1 + $0x18] sm:$0xf]
  %v23 = vld [vmem:[%s1 + $0x1c] sm:$0xf]
  %v24 = vld [vmem:[%s1 + $0x20] sm:$0xf]
  %v25 = vld [vmem:[%s1 + $0x24] sm:$0xf]
  %v26 = vld [vmem:[%s1 + $0x28] sm:$0xf]
  %v27 = vld [vmem:[%s1 + $0x2c] sm:$0xf]
  %v28 = vld [vmem:[%s1 + $0x30] sm:$0xf]
  %v29 = vld [vmem:[%s1 + $0x34] sm:$0xf]
  %v30 = vld [vmem:[%s1 + $0x38] sm:$0xf]
  %v31 = vld [vmem:[%s1 + $0x3c] sm:$0xf]
  %v32 = vld [vmem:[%s1 + $0x40] sm:$0xf]
  %v33 = vld [vmem:[%s1 + $0x44] sm:$0xf]
  %v34 = vld [vmem:[%s1 + $0x48] sm:$0xf]
  %v35 = vld [vmem:[%s1 + $0x4c] sm:$0xf]
  %v36 = vld [vmem:[%s1 + $0x50] sm:$0xf]
  %v37 = vld [vmem:[%s1 + $0x54] sm:$0xf]
  %v38 = vld [vmem:[%s1 + $0x58] sm:$0xf]
  %v39 = vld [vmem:[%s1 + $0x5c] sm:$0xf]
  %v40 = vld [vmem:[%s1 + $0x60] sm:$0xf]
  %v41 = vld [vmem:[%s1 + $0x64] sm:$0xf]
  %v42 = vld [vmem:[%s1 + $0x68] sm:$0xf]
  %v43 = vld [vmem:[%s1 + $0x6c] sm:$0xf]
  %v44 = vld [vmem:[%s1 + $0x70] sm:$0xf]
  %v45 = vld [vmem:[%s1 + $0x74] sm:$0xf]
  %v46 = vld [vmem:[%s1 + $0x78] sm:$0xf]
  %v47 = vld [vmem:[%s1 + $0x7c] sm:$0xf]
  %v48 = vld [vmem:[%s1 + $0x80] sm:$0xf]
  %v49 = vld [vmem:[%s1 + $0x84] sm:$0xf]
  %v50 = vld [vmem:[%s1 + $0x88] sm:$0xf]
  %v51 = vld [vmem:[%s1 + $0x8c] sm:$0xf]
  %v52 = vld [vmem:[%s1 + $0x90] sm:$0xf]
  %v53 = vld [vmem:[%s1 + $0x94] sm:$0xf]
  %v54 = vld [vmem:[%s1 + $0x98] sm:$0xf]
  %v55 = vld [vmem:[%s1 + $0x9c] sm:$0xf]
  %v56 = vld [vmem:[%s1 + $0xa0] sm:$0xf]
  %v57 = vld [vmem:[%s1 + $0xa4] sm:$0xf]
  %v58 = vld [vmem:[%s1 + $0xa8] sm:$0xf]
  %v59 = vld [vmem:[%s1 + $0xac] sm:$0xf]
  %v60 = vld [vmem:[%s1 + $0xb0] sm:$0xf]
  %v61 = vld [vmem:[%s1 + $0xb4] sm:$0xf]
  %v62 = vld [vmem:[%s1 + $0xb8] sm:$0xf]
  %v63 = vld [vmem:[%s1 + $0xbc] sm:$0xf]
  %v64 = vld [vmem:[%s1 + $0xc0] sm:$0xf]
  %v65 = vld [vmem:[%s1 + $0xc4] sm:$0xf]
  %v66 = vld [vmem:[%s1 + $0xc8] sm:$0xf]
  %v67 = vld [vmem:[%s1 + $0xcc] sm:$0xf]
  %v68 = vld [vmem:[%s1 + $0xd0] sm:$0xf]
  %v69 = vld [vmem:[%s1 + $0xd4] sm:$0xf]
  %v70 = vld [vmem:[%s1 + $0xd8] sm:$0xf]
  %v71 = vld [vmem:[%s1 + $0xdc] sm:$0xf]
  %v72 = vld [vmem:[%s1 + $0xe0] sm:$0xf]
  %v73 = vld [vmem:[%s1 + $0xe4] sm:$0xf]
  %v74 = vld [vmem:[%s1 + $0xe8] sm:$0xf]
  %v75 = vld [vmem:[%s1 + $0xec] sm:$0xf]
  %v76 = vld [vmem:[%s1 + $0xf0] sm:$0xf]
  %v77 = vld [vmem:[%s1 + $0xf4] sm:$0xf]
  %v78 = vld [vmem:[%s1 + $0xf8] sm:$0xf]
  %v79 = vld [vmem:[%s1 + $0xfc] sm:$0xf]
  %v84 = vunpack.c.l.b16 %v12
  %v85 = vunpack.c.h.b16 %v12
  %v86 = vunpack.c.l.b16 %v13
  %v87 = vunpack.c.h.b16 %v13
  %v88 = vunpack.c.l.b16 %v14
  %v89 = vunpack.c.h.b16 %v14
  %v90 = vunpack.c.l.b16 %v15
  %v91 = vunpack.c.h.b16 %v15
  %v92 = vpack.c.b16 %v88, %v84
  %v93 = vpack.c.b16 %v89, %v85
  %v94 = vpack.c.b16 %v90, %v86
  %v95 = vpack.c.b16 %v91, %v87
  %v164 = vunpack.c.l.b16 %v16
  %v165 = vunpack.c.l.b16 %v17
  %v166 = vunpack.c.l.b16 %v18
  %v167 = vunpack.c.l.b16 %v19
  %v168 = vunpack.c.l.b16 %v20
  %v169 = vunpack.c.l.b16 %v21
  %v170 = vunpack.c.l.b16 %v22
  %v171 = vunpack.c.l.b16 %v23
  %v172 = vunpack.c.l.b16 %v24
  %v173 = vunpack.c.l.b16 %v25
  %v174 = vunpack.c.l.b16 %v26
  %v175 = vunpack.c.l.b16 %v27
  %v176 = vunpack.c.l.b16 %v28
  %v177 = vunpack.c.l.b16 %v29
  %v178 = vunpack.c.l.b16 %v30
  %v179 = vunpack.c.l.b16 %v31
  %v180 = vunpack.c.l.b16 %v32
  %v181 = vunpack.c.l.b16 %v33
  %v182 = vunpack.c.l.b16 %v34
  %v183 = vunpack.c.l.b16 %v35
  %v184 = vunpack.c.l.b16 %v36
  %v185 = vunpack.c.l.b16 %v37
  %v186 = vunpack.c.l.b16 %v38
  %v187 = vunpack.c.l.b16 %v39
  %v188 = vunpack.c.l.b16 %v40
  %v189 = vunpack.c.l.b16 %v41
  %v190 = vunpack.c.l.b16 %v42
  %v191 = vunpack.c.l.b16 %v43
  %v192 = vunpack.c.l.b16 %v44
  %v193 = vunpack.c.l.b16 %v45
  %v194 = vunpack.c.l.b16 %v46
  %v195 = vunpack.c.l.b16 %v47
  %v196 = vunpack.c.l.b16 %v48
  %v197 = vunpack.c.l.b16 %v49
  %v198 = vunpack.c.l.b16 %v50
  %v199 = vunpack.c.l.b16 %v51
  %v200 = vunpack.c.l.b16 %v52
  %v201 = vunpack.c.l.b16 %v53
  %v202 = vunpack.c.l.b16 %v54
  %v203 = vunpack.c.l.b16 %v55
  %v204 = vunpack.c.l.b16 %v56
  %v205 = vunpack.c.l.b16 %v57
  %v206 = vunpack.c.l.b16 %v58
  %v207 = vunpack.c.l.b16 %v59
  %v208 = vunpack.c.l.b16 %v60
  %v209 = vunpack.c.l.b16 %v61
  %v210 = vunpack.c.l.b16 %v62
  %v211 = vunpack.c.l.b16 %v63
  %v212 = vunpack.c.l.b16 %v64
  %v213 = vunpack.c.l.b16 %v65
  %v214 = vunpack.c.l.b16 %v66
  %v215 = vunpack.c.l.b16 %v67
  %v216 = vunpack.c.l.b16 %v68
  %v217 = vunpack.c.l.b16 %v69
  %v218 = vunpack.c.l.b16 %v70
  %v219 = vunpack.c.l.b16 %v71
  %v220 = vunpack.c.l.b16 %v72
  %v221 = vunpack.c.l.b16 %v73
  %v222 = vunpack.c.l.b16 %v74
  %v223 = vunpack.c.l.b16 %v75
  %v224 = vunpack.c.l.b16 %v76
  %v225 = vunpack.c.l.b16 %v77
  %v226 = vunpack.c.l.b16 %v78
  %v227 = vunpack.c.l.b16 %v79
  %v228 = vpack.c.b16 %v165, %v164
  %v229 = vpack.c.b16 %v167, %v166
  %v230 = vpack.c.b16 %v169, %v168
  %v231 = vpack.c.b16 %v171, %v170
  %v232 = vpack.c.b16 %v173, %v172
  %v233 = vpack.c.b16 %v175, %v174
  %v234 = vpack.c.b16 %v177, %v176
  %v235 = vpack.c.b16 %v179, %v178
  %v236 = vpack.c.b16 %v181, %v180
  %v237 = vpack.c.b16 %v183, %v182
  %v238 = vpack.c.b16 %v185, %v184
  %v239 = vpack.c.b16 %v187, %v186
  %v240 = vpack.c.b16 %v189, %v188
  %v241 = vpack.c.b16 %v191, %v190
  %v242 = vpack.c.b16 %v193, %v192
  %v243 = vpack.c.b16 %v195, %v194
  %v244 = vpack.c.b16 %v197, %v196
  %v245 = vpack.c.b16 %v199, %v198
  %v246 = vpack.c.b16 %v201, %v200
  %v247 = vpack.c.b16 %v203, %v202
  %v248 = vpack.c.b16 %v205, %v204
  %v249 = vpack.c.b16 %v207, %v206
  %v250 = vpack.c.b16 %v209, %v208
  %v251 = vpack.c.b16 %v211, %v210
  %v252 = vpack.c.b16 %v213, %v212
  %v253 = vpack.c.b16 %v215, %v214
  %v254 = vpack.c.b16 %v217, %v216
  %v255 = vpack.c.b16 %v219, %v218
  %v256 = vpack.c.b16 %v221, %v220
  %v257 = vpack.c.b16 %v223, %v222
  %v258 = vpack.c.b16 %v225, %v224
  %v259 = vpack.c.b16 %v227, %v226
  %292 = vmatprep.subr.bf16.mxu0 0
  %293 = vmatpush1.bf16.msra.mxu0 %v235
  %294 = vmatprep.subr.bf16.mxu0 0
  %295 = vmatpush1.bf16.msra.mxu0 %v234
  %296 = vmatprep.subr.bf16.mxu0 0
  %297 = vmatpush1.bf16.msra.mxu0 %v233
  %298 = vmatprep.subr.bf16.mxu0 0
  %299 = vmatpush1.bf16.msra.mxu0 %v232
  %300 = vmatprep.subr.bf16.mxu0 0
  %301 = vmatpush1.bf16.msra.mxu0 %v231
  %302 = vmatprep.subr.bf16.mxu0 0
  %303 = vmatpush1.bf16.msra.mxu0 %v230
  %304 = vmatprep.subr.bf16.mxu0 0
  %305 = vmatpush1.bf16.msra.mxu0 %v229
  %306 = vmatprep.subr.bf16.mxu0 0
  %307 = vmatpush1.bf16.msra.mxu0 %v228
  %308 = vmatprep.subr.bf16.mxu0 0
  %309 = vmatpush2.bf16.msra.mxu0 %v243
  %310 = vmatprep.subr.bf16.mxu0 0
  %311 = vmatpush2.bf16.msra.mxu0 %v242
  %312 = vmatprep.subr.bf16.mxu0 0
  %313 = vmatpush2.bf16.msra.mxu0 %v241
  %314 = vmatprep.subr.bf16.mxu0 0
  %315 = vmatpush2.bf16.msra.mxu0 %v240
  %316 = vmatprep.subr.bf16.mxu0 0
  %317 = vmatpush2.bf16.msra.mxu0 %v239
  %318 = vmatprep.subr.bf16.mxu0 0
  %319 = vmatpush2.bf16.msra.mxu0 %v238
  %320 = vmatprep.subr.bf16.mxu0 0
  %321 = vmatpush2.bf16.msra.mxu0 %v237
  %322 = vmatprep.subr.bf16.mxu0 0
  %323 = vmatpush2.bf16.msra.mxu0 %v236
  %324 = vmatprep.mubr.bf16.mxu0 %v93
  %325 = vmatmul.mubr.bf16.gmra.mxu0 %v92
  %v326 = vpop.f32.mrf.mxu0
  %v327 = vadd.f32 0.0, %v326
  %v328 = vpop.f32.mrf.mxu0
  %v329 = vpop.f32.mrf.mxu0
  %v330 = vadd.f32 0.0, %v329
  %v331 = vpop.f32.mrf.mxu0
  %332 = vdwg.mxu0
  %333 = vmatprep.subr.bf16.mxu0 0
  %334 = vmatpush1.bf16.msra.mxu0 %v251
  %335 = vmatprep.subr.bf16.mxu0 0
  %336 = vmatpush1.bf16.msra.mxu0 %v250
  %337 = vmatprep.subr.bf16.mxu0 0
  %338 = vmatpush1.bf16.msra.mxu0 %v249
  %339 = vmatprep.subr.bf16.mxu0 0
  %340 = vmatpush1.bf16.msra.mxu0 %v248
  %341 = vmatprep.subr.bf16.mxu0 0
  %342 = vmatpush1.bf16.msra.mxu0 %v247
  %343 = vmatprep.subr.bf16.mxu0 0
  %344 = vmatpush1.bf16.msra.mxu0 %v246
  %345 = vmatprep.subr.bf16.mxu0 0
  %346 = vmatpush1.bf16.msra.mxu0 %v245
  %347 = vmatprep.subr.bf16.mxu0 0
  %348 = vmatpush1.bf16.msra.mxu0 %v244
  %349 = vmatprep.subr.bf16.mxu0 0
  %350 = vmatpush2.bf16.msra.mxu0 %v259
  %351 = vmatprep.subr.bf16.mxu0 0
  %352 = vmatpush2.bf16.msra.mxu0 %v258
  %353 = vmatprep.subr.bf16.mxu0 0
  %354 = vmatpush2.bf16.msra.mxu0 %v257
  %355 = vmatprep.subr.bf16.mxu0 0
  %356 = vmatpush2.bf16.msra.mxu0 %v256
  %357 = vmatprep.subr.bf16.mxu0 0
  %358 = vmatpush2.bf16.msra.mxu0 %v255
  %359 = vmatprep.subr.bf16.mxu0 0
  %360 = vmatpush2.bf16.msra.mxu0 %v254
  %361 = vmatprep.subr.bf16.mxu0 0
  %362 = vmatpush2.bf16.msra.mxu0 %v253
  %363 = vmatprep.subr.bf16.mxu0 0
  %364 = vmatpush2.bf16.msra.mxu0 %v252
  %365 = vmatprep.mubr.bf16.mxu0 %v95
  %366 = vmatmul.mubr.bf16.gmra.mxu0 %v94
  %v367 = vpop.f32.mrf.mxu0
  %v368 = vadd.f32 %v327, %v367
  %v369 = vpop.f32.mrf.mxu0
  %v370 = vpop.f32.mrf.mxu0
  %v371 = vadd.f32 %v330, %v370
  %v372 = vpop.f32.mrf.mxu0
  %373 = vdwg.mxu0
  %vm374 = vcmask 261120
  %375 = vst.msk [vmem:[%s2] sm:$0xff] %vm374, %v368
  %376 = vst.msk [vmem:[%s2 + $0x8] sm:$0xff] %vm374, %v371
  // Predicated region
  $region10: #{transformer_encoder.17} parent=0 // pred_check
    _
  $region11: #{transformer_encoder.17} parent=0 // pred_check_branch
    %378 = sbr.rel (0) target = $region13
  $region12: #{transformer_encoder.17} parent=0 // pred_region
    _
  $region13: #{transformer_encoder.17} parent=0 // pred_fallthru
    _
  // Predicated region
  $region14: #{transformer_encoder.17} parent=0 // pred_check
    _
  $region15: #{transformer_encoder.17} parent=0 // pred_check_branch
    %380 = sbr.rel (0) target = $region17
  $region16: #{transformer_encoder.17} parent=0 // pred_region
    _
  $region17: #{transformer_encoder.17} parent=0 // pred_fallthru
    _

// kernel: transformer_encoder.18
$region0: #{transformer_encoder.18}
  #allocation0 [shape = 'u32[]', space=smem, size = 0x4, offset = 0x4, fixed_abs, tag = 'smem constant byte address 0x4 - core index']
  #allocation1 [shape = 'u32[144,128]{1,0:T(1,128)}', space=vmem, size = 0x12000, scoped, tag = 'internal scratch']
  #allocation2 [shape = 'f32[1]{0:T(128)S(6)}', space=smem, size = 0x200, scoped, tag = 'scoped memory for transformer_encoder.18']
  %s0 = inlined_call_operand.vmem [shape: bf16[16,512], index: 0, kind: input, shape index: {}]
  %s1 = inlined_call_operand.vmem [shape: bf16[512,32], index: 1, kind: input, shape index: {}]
  %s2 = inlined_call_operand.vmem [shape: f32[1,32], index: 2, kind: input, shape index: {}]
  %s3 = inlined_call_operand.vmem [shape: f32[16,32], index: 3, kind: input, shape index: {}]
  %s4 = inlined_call_operand.vmem [shape: f32[16,32], index: 4, kind: input, shape index: {}]
  %s5 = inlined_call_operand.<no memory space> [shape: f32[1], index: 5, kind: input, shape index: {}]
  %s6 = inlined_call_operand.vmem [shape: f32[16,32], index: 6, kind: output, shape index: {}]
  %s7 = sld [smem:[#allocation0]]
  $region34: #{transformer_encoder.18} parent=0
    _
  %s9 = ssub.s32 1, %s7
  %s10 = scalar_select 0, %s9, %s7
  %11 = sst [smem:[#allocation2]] %s5
  // Predicated region
  $region2: #{transformer_encoder.18} parent=0 // pred_check
    _
  $region3: #{transformer_encoder.18} parent=0 // pred_check_branch
    %13 = sbr.rel (0) target = $region5
  $region4: #{transformer_encoder.18} parent=0 // pred_region
    _
  $region5: #{transformer_encoder.18} parent=0 // pred_fallthru
    _
  // Predicated region
  $region6: #{transformer_encoder.18} parent=0 // pred_check
    _
  $region7: #{transformer_encoder.18} parent=0 // pred_check_branch
    %15 = sbr.rel (0) target = $region9
  $region8: #{transformer_encoder.18} parent=0 // pred_region
    _
  $region9: #{transformer_encoder.18} parent=0 // pred_fallthru
    _
  // Predicated region
  $region10: #{transformer_encoder.18} parent=0 // pred_check
    _
  $region11: #{transformer_encoder.18} parent=0 // pred_check_branch
    %17 = sbr.rel (0) target = $region13
  $region12: #{transformer_encoder.18} parent=0 // pred_region
    _
  $region13: #{transformer_encoder.18} parent=0 // pred_fallthru
    _
  // Predicated region
  $region14: #{transformer_encoder.18} parent=0 // pred_check
    _
  $region15: #{transformer_encoder.18} parent=0 // pred_check_branch
    %19 = sbr.rel (0) target = $region17
  $region16: #{transformer_encoder.18} parent=0 // pred_region
    _
  $region17: #{transformer_encoder.18} parent=0 // pred_fallthru
    _
  // Predicated region
  $region18: #{transformer_encoder.18} parent=0 // pred_check
    _
  $region19: #{transformer_encoder.18} parent=0 // pred_check_branch
    %21 = sbr.rel (0) target = $region21
  $region20: #{transformer_encoder.18} parent=0 // pred_region
    _
  $region21: #{transformer_encoder.18} parent=0 // pred_fallthru
    _
  // Predicated region
  $region22: #{transformer_encoder.18} parent=0 // pred_check
    _
  $region23: #{transformer_encoder.18} parent=0 // pred_check_branch
    %23 = sbr.rel (0) target = $region25
  $region24: #{transformer_encoder.18} parent=0 // pred_region
    _
  $region25: #{transformer_encoder.18} parent=0 // pred_fallthru
    _
  %v25 = vld [vmem:[%s0] sm:$0xff]
  %v26 = vld [vmem:[%s0 + $0x8] sm:$0xff]
  %v27 = vld [vmem:[%s0 + $0x10] sm:$0xff]
  %v28 = vld [vmem:[%s0 + $0x18] sm:$0xff]
  %v29 = vld [vmem:[%s1] sm:$0xf]
  %v30 = vld [vmem:[%s1 + $0x4] sm:$0xf]
  %v31 = vld [vmem:[%s1 + $0x8] sm:$0xf]
  %v32 = vld [vmem:[%s1 + $0xc] sm:$0xf]
  %v33 = vld [vmem:[%s1 + $0x10] sm:$0xf]
  %v34 = vld [vmem:[%s1 + $0x14] sm:$0xf]
  %v35 = vld [vmem:[%s1 + $0x18] sm:$0xf]
  %v36 = vld [vmem:[%s1 + $0x1c] sm:$0xf]
  %v37 = vld [vmem:[%s1 + $0x20] sm:$0xf]
  %v38 = vld [vmem:[%s1 + $0x24] sm:$0xf]
  %v39 = vld [vmem:[%s1 + $0x28] sm:$0xf]
  %v40 = vld [vmem:[%s1 + $0x2c] sm:$0xf]
  %v41 = vld [vmem:[%s1 + $0x30] sm:$0xf]
  %v42 = vld [vmem:[%s1 + $0x34] sm:$0xf]
  %v43 = vld [vmem:[%s1 + $0x38] sm:$0xf]
  %v44 = vld [vmem:[%s1 + $0x3c] sm:$0xf]
  %v45 = vld [vmem:[%s1 + $0x40] sm:$0xf]
  %v46 = vld [vmem:[%s1 + $0x44] sm:$0xf]
  %v47 = vld [vmem:[%s1 + $0x48] sm:$0xf]
  %v48 = vld [vmem:[%s1 + $0x4c] sm:$0xf]
  %v49 = vld [vmem:[%s1 + $0x50] sm:$0xf]
  %v50 = vld [vmem:[%s1 + $0x54] sm:$0xf]
  %v51 = vld [vmem:[%s1 + $0x58] sm:$0xf]
  %v52 = vld [vmem:[%s1 + $0x5c] sm:$0xf]
  %v53 = vld [vmem:[%s1 + $0x60] sm:$0xf]
  %v54 = vld [vmem:[%s1 + $0x64] sm:$0xf]
  %v55 = vld [vmem:[%s1 + $0x68] sm:$0xf]
  %v56 = vld [vmem:[%s1 + $0x6c] sm:$0xf]
  %v57 = vld [vmem:[%s1 + $0x70] sm:$0xf]
  %v58 = vld [vmem:[%s1 + $0x74] sm:$0xf]
  %v59 = vld [vmem:[%s1 + $0x78] sm:$0xf]
  %v60 = vld [vmem:[%s1 + $0x7c] sm:$0xf]
  %v61 = vld [vmem:[%s1 + $0x80] sm:$0xf]
  %v62 = vld [vmem:[%s1 + $0x84] sm:$0xf]
  %v63 = vld [vmem:[%s1 + $0x88] sm:$0xf]
  %v64 = vld [vmem:[%s1 + $0x8c] sm:$0xf]
  %v65 = vld [vmem:[%s1 + $0x90] sm:$0xf]
  %v66 = vld [vmem:[%s1 + $0x94] sm:$0xf]
  %v67 = vld [vmem:[%s1 + $0x98] sm:$0xf]
  %v68 = vld [vmem:[%s1 + $0x9c] sm:$0xf]
  %v69 = vld [vmem:[%s1 + $0xa0] sm:$0xf]
  %v70 = vld [vmem:[%s1 + $0xa4] sm:$0xf]
  %v71 = vld [vmem:[%s1 + $0xa8] sm:$0xf]
  %v72 = vld [vmem:[%s1 + $0xac] sm:$0xf]
  %v73 = vld [vmem:[%s1 + $0xb0] sm:$0xf]
  %v74 = vld [vmem:[%s1 + $0xb4] sm:$0xf]
  %v75 = vld [vmem:[%s1 + $0xb8] sm:$0xf]
  %v76 = vld [vmem:[%s1 + $0xbc] sm:$0xf]
  %v77 = vld [vmem:[%s1 + $0xc0] sm:$0xf]
  %v78 = vld [vmem:[%s1 + $0xc4] sm:$0xf]
  %v79 = vld [vmem:[%s1 + $0xc8] sm:$0xf]
  %v80 = vld [vmem:[%s1 + $0xcc] sm:$0xf]
  %v81 = vld [vmem:[%s1 + $0xd0] sm:$0xf]
  %v82 = vld [vmem:[%s1 + $0xd4] sm:$0xf]
  %v83 = vld [vmem:[%s1 + $0xd8] sm:$0xf]
  %v84 = vld [vmem:[%s1 + $0xdc] sm:$0xf]
  %v85 = vld [vmem:[%s1 + $0xe0] sm:$0xf]
  %v86 = vld [vmem:[%s1 + $0xe4] sm:$0xf]
  %v87 = vld [vmem:[%s1 + $0xe8] sm:$0xf]
  %v88 = vld [vmem:[%s1 + $0xec] sm:$0xf]
  %v89 = vld [vmem:[%s1 + $0xf0] sm:$0xf]
  %v90 = vld [vmem:[%s1 + $0xf4] sm:$0xf]
  %v91 = vld [vmem:[%s1 + $0xf8] sm:$0xf]
  %v92 = vld [vmem:[%s1 + $0xfc] sm:$0xf]
  %v93 = vld [vmem:[%s2] sm:$0x1]
  %v95 = vlaneseq
  %v96 = vshrl.u32 %v95, 7
  %v97 = vsub.s32 0, %v96
  %v98 = vrot.slane %v93, %v97
  %v104 = vunpack.c.l.b16 %v25
  %v105 = vunpack.c.h.b16 %v25
  %v106 = vunpack.c.l.b16 %v26
  %v107 = vunpack.c.h.b16 %v26
  %v108 = vunpack.c.l.b16 %v27
  %v109 = vunpack.c.h.b16 %v27
  %v110 = vunpack.c.l.b16 %v28
  %v111 = vunpack.c.h.b16 %v28
  %v112 = vpack.c.b16 %v108, %v104
  %v113 = vpack.c.b16 %v109, %v105
  %v114 = vpack.c.b16 %v110, %v106
  %v115 = vpack.c.b16 %v111, %v107
  %v184 = vunpack.c.l.b16 %v29
  %v185 = vunpack.c.l.b16 %v30
  %v186 = vunpack.c.l.b16 %v31
  %v187 = vunpack.c.l.b16 %v32
  %v188 = vunpack.c.l.b16 %v33
  %v189 = vunpack.c.l.b16 %v34
  %v190 = vunpack.c.l.b16 %v35
  %v191 = vunpack.c.l.b16 %v36
  %v192 = vunpack.c.l.b16 %v37
  %v193 = vunpack.c.l.b16 %v38
  %v194 = vunpack.c.l.b16 %v39
  %v195 = vunpack.c.l.b16 %v40
  %v196 = vunpack.c.l.b16 %v41
  %v197 = vunpack.c.l.b16 %v42
  %v198 = vunpack.c.l.b16 %v43
  %v199 = vunpack.c.l.b16 %v44
  %v200 = vunpack.c.l.b16 %v45
  %v201 = vunpack.c.l.b16 %v46
  %v202 = vunpack.c.l.b16 %v47
  %v203 = vunpack.c.l.b16 %v48
  %v204 = vunpack.c.l.b16 %v49
  %v205 = vunpack.c.l.b16 %v50
  %v206 = vunpack.c.l.b16 %v51
  %v207 = vunpack.c.l.b16 %v52
  %v208 = vunpack.c.l.b16 %v53
  %v209 = vunpack.c.l.b16 %v54
  %v210 = vunpack.c.l.b16 %v55
  %v211 = vunpack.c.l.b16 %v56
  %v212 = vunpack.c.l.b16 %v57
  %v213 = vunpack.c.l.b16 %v58
  %v214 = vunpack.c.l.b16 %v59
  %v215 = vunpack.c.l.b16 %v60
  %v216 = vunpack.c.l.b16 %v61
  %v217 = vunpack.c.l.b16 %v62
  %v218 = vunpack.c.l.b16 %v63
  %v219 = vunpack.c.l.b16 %v64
  %v220 = vunpack.c.l.b16 %v65
  %v221 = vunpack.c.l.b16 %v66
  %v222 = vunpack.c.l.b16 %v67
  %v223 = vunpack.c.l.b16 %v68
  %v224 = vunpack.c.l.b16 %v69
  %v225 = vunpack.c.l.b16 %v70
  %v226 = vunpack.c.l.b16 %v71
  %v227 = vunpack.c.l.b16 %v72
  %v228 = vunpack.c.l.b16 %v73
  %v229 = vunpack.c.l.b16 %v74
  %v230 = vunpack.c.l.b16 %v75
  %v231 = vunpack.c.l.b16 %v76
  %v232 = vunpack.c.l.b16 %v77
  %v233 = vunpack.c.l.b16 %v78
  %v234 = vunpack.c.l.b16 %v79
  %v235 = vunpack.c.l.b16 %v80
  %v236 = vunpack.c.l.b16 %v81
  %v237 = vunpack.c.l.b16 %v82
  %v238 = vunpack.c.l.b16 %v83
  %v239 = vunpack.c.l.b16 %v84
  %v240 = vunpack.c.l.b16 %v85
  %v241 = vunpack.c.l.b16 %v86
  %v242 = vunpack.c.l.b16 %v87
  %v243 = vunpack.c.l.b16 %v88
  %v244 = vunpack.c.l.b16 %v89
  %v245 = vunpack.c.l.b16 %v90
  %v246 = vunpack.c.l.b16 %v91
  %v247 = vunpack.c.l.b16 %v92
  %v248 = vpack.c.b16 %v185, %v184
  %v249 = vpack.c.b16 %v187, %v186
  %v250 = vpack.c.b16 %v189, %v188
  %v251 = vpack.c.b16 %v191, %v190
  %v252 = vpack.c.b16 %v193, %v192
  %v253 = vpack.c.b16 %v195, %v194
  %v254 = vpack.c.b16 %v197, %v196
  %v255 = vpack.c.b16 %v199, %v198
  %v256 = vpack.c.b16 %v201, %v200
  %v257 = vpack.c.b16 %v203, %v202
  %v258 = vpack.c.b16 %v205, %v204
  %v259 = vpack.c.b16 %v207, %v206
  %v260 = vpack.c.b16 %v209, %v208
  %v261 = vpack.c.b16 %v211, %v210
  %v262 = vpack.c.b16 %v213, %v212
  %v263 = vpack.c.b16 %v215, %v214
  %v264 = vpack.c.b16 %v217, %v216
  %v265 = vpack.c.b16 %v219, %v218
  %v266 = vpack.c.b16 %v221, %v220
  %v267 = vpack.c.b16 %v223, %v222
  %v268 = vpack.c.b16 %v225, %v224
  %v269 = vpack.c.b16 %v227, %v226
  %v270 = vpack.c.b16 %v229, %v228
  %v271 = vpack.c.b16 %v231, %v230
  %v272 = vpack.c.b16 %v233, %v232
  %v273 = vpack.c.b16 %v235, %v234
  %v274 = vpack.c.b16 %v237, %v236
  %v275 = vpack.c.b16 %v239, %v238
  %v276 = vpack.c.b16 %v241, %v240
  %v277 = vpack.c.b16 %v243, %v242
  %v278 = vpack.c.b16 %v245, %v244
  %v279 = vpack.c.b16 %v247, %v246
  %312 = vmatprep.subr.bf16.mxu0 0
  %313 = vmatpush1.bf16.msra.mxu0 %v255
  %314 = vmatprep.subr.bf16.mxu0 0
  %315 = vmatpush1.bf16.msra.mxu0 %v254
  %316 = vmatprep.subr.bf16.mxu0 0
  %317 = vmatpush1.bf16.msra.mxu0 %v253
  %318 = vmatprep.subr.bf16.mxu0 0
  %319 = vmatpush1.bf16.msra.mxu0 %v252
  %320 = vmatprep.subr.bf16.mxu0 0
  %321 = vmatpush1.bf16.msra.mxu0 %v251
  %322 = vmatprep.subr.bf16.mxu0 0
  %323 = vmatpush1.bf16.msra.mxu0 %v250
  %324 = vmatprep.subr.bf16.mxu0 0
  %325 = vmatpush1.bf16.msra.mxu0 %v249
  %326 = vmatprep.subr.bf16.mxu0 0
  %327 = vmatpush1.bf16.msra.mxu0 %v248
  %328 = vmatprep.subr.bf16.mxu0 0
  %329 = vmatpush2.bf16.msra.mxu0 %v263
  %330 = vmatprep.subr.bf16.mxu0 0
  %331 = vmatpush2.bf16.msra.mxu0 %v262
  %332 = vmatprep.subr.bf16.mxu0 0
  %333 = vmatpush2.bf16.msra.mxu0 %v261
  %334 = vmatprep.subr.bf16.mxu0 0
  %335 = vmatpush2.bf16.msra.mxu0 %v260
  %336 = vmatprep.subr.bf16.mxu0 0
  %337 = vmatpush2.bf16.msra.mxu0 %v259
  %338 = vmatprep.subr.bf16.mxu0 0
  %339 = vmatpush2.bf16.msra.mxu0 %v258
  %340 = vmatprep.subr.bf16.mxu0 0
  %341 = vmatpush2.bf16.msra.mxu0 %v257
  %342 = vmatprep.subr.bf16.mxu0 0
  %343 = vmatpush2.bf16.msra.mxu0 %v256
  %344 = vmatprep.mubr.bf16.mxu0 %v113
  %345 = vmatmul.mubr.bf16.gmra.mxu0 %v112
  %v346 = vpop.f32.mrf.mxu0
  %v347 = vadd.f32 %v98, %v346
  %v348 = vpop.f32.mrf.mxu0
  %v349 = vpop.f32.mrf.mxu0
  %v350 = vadd.f32 %v98, %v349
  %v351 = vpop.f32.mrf.mxu0
  %352 = vdwg.mxu0
  %353 = vmatprep.subr.bf16.mxu0 0
  %354 = vmatpush1.bf16.msra.mxu0 %v271
  %355 = vmatprep.subr.bf16.mxu0 0
  %356 = vmatpush1.bf16.msra.mxu0 %v270
  %357 = vmatprep.subr.bf16.mxu0 0
  %358 = vmatpush1.bf16.msra.mxu0 %v269
  %359 = vmatprep.subr.bf16.mxu0 0
  %360 = vmatpush1.bf16.msra.mxu0 %v268
  %361 = vmatprep.subr.bf16.mxu0 0
  %362 = vmatpush1.bf16.msra.mxu0 %v267
  %363 = vmatprep.subr.bf16.mxu0 0
  %364 = vmatpush1.bf16.msra.mxu0 %v266
  %365 = vmatprep.subr.bf16.mxu0 0
  %366 = vmatpush1.bf16.msra.mxu0 %v265
  %367 = vmatprep.subr.bf16.mxu0 0
  %368 = vmatpush1.bf16.msra.mxu0 %v264
  %369 = vmatprep.subr.bf16.mxu0 0
  %370 = vmatpush2.bf16.msra.mxu0 %v279
  %371 = vmatprep.subr.bf16.mxu0 0
  %372 = vmatpush2.bf16.msra.mxu0 %v278
  %373 = vmatprep.subr.bf16.mxu0 0
  %374 = vmatpush2.bf16.msra.mxu0 %v277
  %375 = vmatprep.subr.bf16.mxu0 0
  %376 = vmatpush2.bf16.msra.mxu0 %v276
  %377 = vmatprep.subr.bf16.mxu0 0
  %378 = vmatpush2.bf16.msra.mxu0 %v275
  %379 = vmatprep.subr.bf16.mxu0 0
  %380 = vmatpush2.bf16.msra.mxu0 %v274
  %381 = vmatprep.subr.bf16.mxu0 0
  %382 = vmatpush2.bf16.msra.mxu0 %v273
  %383 = vmatprep.subr.bf16.mxu0 0
  %384 = vmatpush2.bf16.msra.mxu0 %v272
  %385 = vmatprep.mubr.bf16.mxu0 %v115
  %386 = vmatmul.mubr.bf16.gmra.mxu0 %v114
  %v387 = vpop.f32.mrf.mxu0
  %v388 = vadd.f32 %v347, %v387
  %v389 = vpop.f32.mrf.mxu0
  %v390 = vpop.f32.mrf.mxu0
  %v391 = vadd.f32 %v350, %v390
  %v392 = vpop.f32.mrf.mxu0
  %393 = vdwg.mxu0
  %v394 = vld [vmem:[%s3] sm:$0xff]
  %v395 = vld [vmem:[%s3 + $0x8] sm:$0xff]
  %v396 = vadd.f32 %v388, %v394
  %v397 = vadd.f32 %v391, %v395
  %v398 = vld [vmem:[%s4] sm:$0xff]
  %v399 = vld [vmem:[%s4 + $0x8] sm:$0xff]
  %s400 = sld [smem:[#allocation2]]
  %v401 = vstv %s400
  %v402 = vmul.f32 %v401, %v396
  %v403 = vmul.f32 %v401, %v397
  %v404 = vadd.f32 %v398, %v402
  %v405 = vadd.f32 %v399, %v403
  %vm406 = vcmask 261120
  %407 = vst.msk [vmem:[%s6] sm:$0xff] %vm406, %v404
  %408 = vst.msk [vmem:[%s6 + $0x8] sm:$0xff] %vm406, %v405
  // Predicated region
  $region26: #{transformer_encoder.18} parent=0 // pred_check
    _
  $region27: #{transformer_encoder.18} parent=0 // pred_check_branch
    %410 = sbr.rel (0) target = $region29
  $region28: #{transformer_encoder.18} parent=0 // pred_region
    _
  $region29: #{transformer_encoder.18} parent=0 // pred_fallthru
    _
  // Predicated region
  $region30: #{transformer_encoder.18} parent=0 // pred_check
    _
  $region31: #{transformer_encoder.18} parent=0 // pred_check_branch
    %412 = sbr.rel (0) target = $region33
  $region32: #{transformer_encoder.18} parent=0 // pred_region
    _
  $region33: #{transformer_encoder.18} parent=0 // pred_fallthru
    _

// kernel: transformer_encoder.20
$region0: #{transformer_encoder.20}
  #allocation0 [shape = 'u32[]', space=smem, size = 0x4, offset = 0x4, fixed_abs, tag = 'smem constant byte address 0x4 - core index']
  #allocation1 [shape = 'u32[144,128]{1,0:T(1,128)}', space=vmem, size = 0x12000, scoped, tag = 'internal scratch']
  #allocation2 [shape = 'f32[1]{0:T(128)S(6)}', space=smem, size = 0x200, scoped, tag = 'scoped memory for transformer_encoder.20']
  %s0 = inlined_call_operand.vmem [shape: bf16[16,64], index: 0, kind: input, shape index: {}]
  %s1 = inlined_call_operand.vmem [shape: bf16[64,32], index: 1, kind: input, shape index: {}]
  %s2 = inlined_call_operand.vmem [shape: f32[1,32], index: 2, kind: input, shape index: {}]
  %s3 = inlined_call_operand.vmem [shape: f32[16,32], index: 3, kind: input, shape index: {}]
  %s4 = inlined_call_operand.<no memory space> [shape: f32[1], index: 4, kind: input, shape index: {}]
  %s5 = inlined_call_operand.vmem [shape: f32[16,32], index: 5, kind: output, shape index: {}]
  %s6 = sld [smem:[#allocation0]]
  $region30: #{transformer_encoder.20} parent=0
    _
  %s8 = ssub.s32 1, %s6
  %s9 = scalar_select 0, %s8, %s6
  %10 = sst [smem:[#allocation2]] %s4
  // Predicated region
  $region2: #{transformer_encoder.20} parent=0 // pred_check
    _
  $region3: #{transformer_encoder.20} parent=0 // pred_check_branch
    %12 = sbr.rel (0) target = $region5
  $region4: #{transformer_encoder.20} parent=0 // pred_region
    _
  $region5: #{transformer_encoder.20} parent=0 // pred_fallthru
    _
  // Predicated region
  $region6: #{transformer_encoder.20} parent=0 // pred_check
    _
  $region7: #{transformer_encoder.20} parent=0 // pred_check_branch
    %14 = sbr.rel (0) target = $region9
  $region8: #{transformer_encoder.20} parent=0 // pred_region
    _
  $region9: #{transformer_encoder.20} parent=0 // pred_fallthru
    _
  // Predicated region
  $region10: #{transformer_encoder.20} parent=0 // pred_check
    _
  $region11: #{transformer_encoder.20} parent=0 // pred_check_branch
    %16 = sbr.rel (0) target = $region13
  $region12: #{transformer_encoder.20} parent=0 // pred_region
    _
  $region13: #{transformer_encoder.20} parent=0 // pred_fallthru
    _
  // Predicated region
  $region14: #{transformer_encoder.20} parent=0 // pred_check
    _
  $region15: #{transformer_encoder.20} parent=0 // pred_check_branch
    %18 = sbr.rel (0) target = $region17
  $region16: #{transformer_encoder.20} parent=0 // pred_region
    _
  $region17: #{transformer_encoder.20} parent=0 // pred_fallthru
    _
  // Predicated region
  $region18: #{transformer_encoder.20} parent=0 // pred_check
    _
  $region19: #{transformer_encoder.20} parent=0 // pred_check_branch
    %20 = sbr.rel (0) target = $region21
  $region20: #{transformer_encoder.20} parent=0 // pred_region
    _
  $region21: #{transformer_encoder.20} parent=0 // pred_fallthru
    _
  %v22 = vld [vmem:[%s0] sm:$0xf]
  %v23 = vld [vmem:[%s0 + $0x4] sm:$0xf]
  %v24 = vld [vmem:[%s1] sm:$0xf]
  %v25 = vld [vmem:[%s1 + $0x4] sm:$0xf]
  %v26 = vld [vmem:[%s1 + $0x8] sm:$0xf]
  %v27 = vld [vmem:[%s1 + $0xc] sm:$0xf]
  %v28 = vld [vmem:[%s1 + $0x10] sm:$0xf]
  %v29 = vld [vmem:[%s1 + $0x14] sm:$0xf]
  %v30 = vld [vmem:[%s1 + $0x18] sm:$0xf]
  %v31 = vld [vmem:[%s1 + $0x1c] sm:$0xf]
  %v32 = vld [vmem:[%s2] sm:$0x1]
  %v34 = vlaneseq
  %v35 = vshrl.u32 %v34, 7
  %v36 = vsub.s32 0, %v35
  %v37 = vrot.slane %v32, %v36
  %v41 = vunpack.c.l.b16 %v22
  %v42 = vunpack.c.l.b16 %v23
  %v43 = vpack.c.b16 %v42, %v41
  %v52 = vunpack.c.l.b16 %v24
  %v53 = vunpack.c.l.b16 %v25
  %v54 = vunpack.c.l.b16 %v26
  %v55 = vunpack.c.l.b16 %v27
  %v56 = vunpack.c.l.b16 %v28
  %v57 = vunpack.c.l.b16 %v29
  %v58 = vunpack.c.l.b16 %v30
  %v59 = vunpack.c.l.b16 %v31
  %v60 = vpack.c.b16 %v53, %v52
  %v61 = vpack.c.b16 %v55, %v54
  %v62 = vpack.c.b16 %v57, %v56
  %v63 = vpack.c.b16 %v59, %v58
  %vm68 = vcmask 523264
  %v70 = vsel %vm68, %v43, 0
  %72 = vmatprep.subr.bf16.mxu0 0
  %73 = vmatpush1.bf16.msra.mxu0 0
  %74 = vmatprep.subr.bf16.mxu0 0
  %75 = vmatpush1.bf16.msra.mxu0 0
  %76 = vmatprep.subr.bf16.mxu0 0
  %77 = vmatpush1.bf16.msra.mxu0 0
  %78 = vmatprep.subr.bf16.mxu0 0
  %79 = vmatpush1.bf16.msra.mxu0 0
  %80 = vmatprep.subr.bf16.mxu0 0
  %81 = vmatpush1.bf16.msra.mxu0 %v63
  %82 = vmatprep.subr.bf16.mxu0 0
  %83 = vmatpush1.bf16.msra.mxu0 %v62
  %84 = vmatprep.subr.bf16.mxu0 0
  %85 = vmatpush1.bf16.msra.mxu0 %v61
  %86 = vmatprep.subr.bf16.mxu0 0
  %87 = vmatpush1.bf16.msra.mxu0 %v60
  %88 = vmatprep.subr.bf16.mxu0 0
  %89 = vmatpush2.bf16.msra.mxu0 0
  %90 = vmatprep.subr.bf16.mxu0 0
  %91 = vmatpush2.bf16.msra.mxu0 0
  %92 = vmatprep.subr.bf16.mxu0 0
  %93 = vmatpush2.bf16.msra.mxu0 0
  %94 = vmatprep.subr.bf16.mxu0 0
  %95 = vmatpush2.bf16.msra.mxu0 0
  %96 = vmatprep.subr.bf16.mxu0 0
  %97 = vmatpush2.bf16.msra.mxu0 0
  %98 = vmatprep.subr.bf16.mxu0 0
  %99 = vmatpush2.bf16.msra.mxu0 0
  %100 = vmatprep.subr.bf16.mxu0 0
  %101 = vmatpush2.bf16.msra.mxu0 0
  %102 = vmatprep.subr.bf16.mxu0 0
  %103 = vmatpush2.bf16.msra.mxu0 0
  %104 = vmatprep.mubr.bf16.mxu0 0
  %105 = vmatmul.mubr.bf16.gmra.mxu0 %v70
  %v106 = vpop.f32.mrf.mxu0
  %v107 = vadd.f32 %v37, %v106
  %v108 = vpop.f32.mrf.mxu0
  %v109 = vpop.f32.mrf.mxu0
  %v110 = vadd.f32 %v37, %v109
  %v111 = vpop.f32.mrf.mxu0
  %112 = vdwg.mxu0
  %v113 = vld [vmem:[%s3] sm:$0xff]
  %v114 = vld [vmem:[%s3 + $0x8] sm:$0xff]
  %s115 = sld [smem:[#allocation2]]
  %v116 = vstv %s115
  %v117 = vmul.f32 %v116, %v107
  %v118 = vmul.f32 %v116, %v110
  %v119 = vadd.f32 %v113, %v117
  %v120 = vadd.f32 %v114, %v118
  %vm121 = vcmask 261120
  %122 = vst.msk [vmem:[%s5] sm:$0xff] %vm121, %v119
  %123 = vst.msk [vmem:[%s5 + $0x8] sm:$0xff] %vm121, %v120
  // Predicated region
  $region22: #{transformer_encoder.20} parent=0 // pred_check
    _
  $region23: #{transformer_encoder.20} parent=0 // pred_check_branch
    %125 = sbr.rel (0) target = $region25
  $region24: #{transformer_encoder.20} parent=0 // pred_region
    _
  $region25: #{transformer_encoder.20} parent=0 // pred_fallthru
    _
  // Predicated region
  $region26: #{transformer_encoder.20} parent=0 // pred_check
    _
  $region27: #{transformer_encoder.20} parent=0 // pred_check_branch
    %127 = sbr.rel (0) target = $region29
  $region28: #{transformer_encoder.20} parent=0 // pred_region
    _
  $region29: #{transformer_encoder.20} parent=0 // pred_fallthru
    _

// kernel: transformer_encoder.19
$region0: #{transformer_encoder.19}
  #allocation0 [shape = 'u32[]', space=smem, size = 0x4, offset = 0x4, fixed_abs, tag = 'smem constant byte address 0x4 - core index']
  #allocation1 [shape = 'u32[144,128]{1,0:T(1,128)}', space=vmem, size = 0x12000, scoped, tag = 'internal scratch']
  %s0 = inlined_call_operand.vmem [shape: f32[16,32], index: 0, kind: input, shape index: {}]
  %s1 = inlined_call_operand.vmem [shape: f32[1,32], index: 1, kind: input, shape index: {}]
  %s2 = inlined_call_operand.vmem [shape: f32[1,32], index: 2, kind: input, shape index: {}]
  %s3 = inlined_call_operand.vmem [shape: bf16[32,64], index: 3, kind: input, shape index: {}]
  %s4 = inlined_call_operand.vmem [shape: f32[1,64], index: 4, kind: input, shape index: {}]
  %s5 = inlined_call_operand.vmem [shape: bf16[16,64], index: 5, kind: output, shape index: {}]
  %s6 = sld [smem:[#allocation0]]
  $region30: #{transformer_encoder.19} parent=0
    _
  %s8 = ssub.s32 1, %s6
  %s9 = scalar_select 0, %s8, %s6
  // Predicated region
  $region2: #{transformer_encoder.19} parent=0 // pred_check
    _
  $region3: #{transformer_encoder.19} parent=0 // pred_check_branch
    %11 = sbr.rel (0) target = $region5
  $region4: #{transformer_encoder.19} parent=0 // pred_region
    _
  $region5: #{transformer_encoder.19} parent=0 // pred_fallthru
    _
  // Predicated region
  $region6: #{transformer_encoder.19} parent=0 // pred_check
    _
  $region7: #{transformer_encoder.19} parent=0 // pred_check_branch
    %13 = sbr.rel (0) target = $region9
  $region8: #{transformer_encoder.19} parent=0 // pred_region
    _
  $region9: #{transformer_encoder.19} parent=0 // pred_fallthru
    _
  // Predicated region
  $region10: #{transformer_encoder.19} parent=0 // pred_check
    _
  $region11: #{transformer_encoder.19} parent=0 // pred_check_branch
    %15 = sbr.rel (0) target = $region13
  $region12: #{transformer_encoder.19} parent=0 // pred_region
    _
  $region13: #{transformer_encoder.19} parent=0 // pred_fallthru
    _
  // Predicated region
  $region14: #{transformer_encoder.19} parent=0 // pred_check
    _
  $region15: #{transformer_encoder.19} parent=0 // pred_check_branch
    %17 = sbr.rel (0) target = $region17
  $region16: #{transformer_encoder.19} parent=0 // pred_region
    _
  $region17: #{transformer_encoder.19} parent=0 // pred_fallthru
    _
  // Predicated region
  $region18: #{transformer_encoder.19} parent=0 // pred_check
    _
  $region19: #{transformer_encoder.19} parent=0 // pred_check_branch
    %19 = sbr.rel (0) target = $region21
  $region20: #{transformer_encoder.19} parent=0 // pred_region
    _
  $region21: #{transformer_encoder.19} parent=0 // pred_fallthru
    _
  %v21 = vld [vmem:[%s0] sm:$0xff]
  %v22 = vld [vmem:[%s0 + $0x8] sm:$0xff]
  %vm23 = vcmask 261120
  %v24 = vsel %vm23, %v21, 0.0
  %25 = vadd.xlane.f32.xlu0 %v24
  %v26 = vpop.xlane.xlu0 %25
  %v27 = vsel %vm23, %v22, 0.0
  %28 = vadd.xlane.f32.xlu0 %v27
  %v29 = vpop.xlane.xlu0 %28
  %v30 = vrcp.pop 32.0
  %v31 = vmul.f32 %v26, %v30
  %v32 = vmul.f32 %v29, %v30
  %v33 = vsub.f32 %v21, %v31
  %v34 = vsub.f32 %v22, %v32
  %v35 = vmul.f32 %v33, %v33
  %v36 = vmul.f32 %v34, %v34
  %v37 = vsel %vm23, %v35, 0.0
  %38 = vadd.xlane.f32.xlu0 %v37
  %v39 = vpop.xlane.xlu0 %38
  %v40 = vsel %vm23, %v36, 0.0
  %41 = vadd.xlane.f32.xlu0 %v40
  %v42 = vpop.xlane.xlu0 %41
  %v43 = vmul.f32 %v39, %v30
  %v44 = vmul.f32 %v42, %v30
  %v45 = vadd.f32 %v43, 1e-05
  %v46 = vadd.f32 %v44, 1e-05
  %v47 = vrsqrt.pop %v45
  %v48 = vrsqrt.pop %v46
  %v49 = vmul.f32 %v33, %v47
  %v50 = vmul.f32 %v34, %v48
  %v51 = vld [vmem:[%s1] sm:$0x1]
  %v53 = vlaneseq
  %v54 = vshrl.u32 %v53, 7
  %v55 = vsub.s32 0, %v54
  %v56 = vrot.slane %v51, %v55
  %v58 = vmul.f32 %v49, %v56
  %v59 = vmul.f32 %v50, %v56
  %v60 = vld [vmem:[%s2] sm:$0x1]
  %v62 = vlaneseq
  %v63 = vshrl.u32 %v62, 7
  %v64 = vsub.s32 0, %v63
  %v65 = vrot.slane %v60, %v64
  %v67 = vadd.f32 %v58, %v65
  %v68 = vadd.f32 %v59, %v65
  %v69 = vpack.c.bf16 %v68, %v67
  %v70 = vld [vmem:[%s3] sm:$0xf]
  %v71 = vld [vmem:[%s3 + $0x4] sm:$0xf]
  %v72 = vld [vmem:[%s3 + $0x8] sm:$0xf]
  %v73 = vld [vmem:[%s3 + $0xc] sm:$0xf]
  %v74 = vld [vmem:[%s4] sm:$0x1]
  %v76 = vlaneseq
  %v77 = vshrl.u32 %v76, 7
  %v78 = vsub.s32 0, %v77
  %v79 = vrot.slane %v74, %v78
  %v85 = vunpack.c.l.b16 %v70
  %v86 = vunpack.c.l.b16 %v71
  %v87 = vunpack.c.l.b16 %v72
  %v88 = vunpack.c.l.b16 %v73
  %v89 = vpack.c.b16 %v86, %v85
  %v90 = vpack.c.b16 %v88, %v87
  %v94 = vsel %vm23, %v69, 0
  %96 = vmatprep.subr.bf16.mxu0 0
  %97 = vmatpush1.bf16.msra.mxu0 0
  %98 = vmatprep.subr.bf16.mxu0 0
  %99 = vmatpush1.bf16.msra.mxu0 0
  %100 = vmatprep.subr.bf16.mxu0 0
  %101 = vmatpush1.bf16.msra.mxu0 0
  %102 = vmatprep.subr.bf16.mxu0 0
  %103 = vmatpush1.bf16.msra.mxu0 0
  %104 = vmatprep.subr.bf16.mxu0 0
  %105 = vmatpush1.bf16.msra.mxu0 0
  %106 = vmatprep.subr.bf16.mxu0 0
  %107 = vmatpush1.bf16.msra.mxu0 0
  %108 = vmatprep.subr.bf16.mxu0 0
  %109 = vmatpush1.bf16.msra.mxu0 %v90
  %110 = vmatprep.subr.bf16.mxu0 0
  %111 = vmatpush1.bf16.msra.mxu0 %v89
  %112 = vmatprep.subr.bf16.mxu0 0
  %113 = vmatpush2.bf16.msra.mxu0 0
  %114 = vmatprep.subr.bf16.mxu0 0
  %115 = vmatpush2.bf16.msra.mxu0 0
  %116 = vmatprep.subr.bf16.mxu0 0
  %117 = vmatpush2.bf16.msra.mxu0 0
  %118 = vmatprep.subr.bf16.mxu0 0
  %119 = vmatpush2.bf16.msra.mxu0 0
  %120 = vmatprep.subr.bf16.mxu0 0
  %121 = vmatpush2.bf16.msra.mxu0 0
  %122 = vmatprep.subr.bf16.mxu0 0
  %123 = vmatpush2.bf16.msra.mxu0 0
  %124 = vmatprep.subr.bf16.mxu0 0
  %125 = vmatpush2.bf16.msra.mxu0 0
  %126 = vmatprep.subr.bf16.mxu0 0
  %127 = vmatpush2.bf16.msra.mxu0 0
  %128 = vmatprep.mubr.bf16.mxu0 0
  %129 = vmatmul.mubr.bf16.gmra.mxu0 %v94
  %v130 = vpop.f32.mrf.mxu0
  %v131 = vadd.f32 %v79, %v130
  %v132 = vpop.f32.mrf.mxu0
  %v133 = vpop.f32.mrf.mxu0
  %v134 = vadd.f32 %v79, %v133
  %v135 = vpop.f32.mrf.mxu0
  %136 = vdwg.mxu0
  %v137 = vmul.f32 %v131, 0.5
  %v138 = vmul.f32 %v134, 0.5
  %v139 = vmul.f32 %v131, 0.70710677
  %v140 = vmul.f32 %v134, 0.70710677
  %v141 = verf.f32.pop %v139
  %v142 = verf.f32.pop %v140
  %v143 = vadd.f32 %v141, 1.0
  %v144 = vadd.f32 %v142, 1.0
  %v145 = vmul.f32 %v137, %v143
  %v146 = vmul.f32 %v138, %v144
  %v147 = vpack.c.bf16 %v146, %v145
  %v149 = vunpack.c.l.b16 %v147
  %v150 = vunpack.c.h.b16 %v147
  %v151 = vpack.c.b16 %v149, %v149
  %v152 = vpack.c.b16 %v150, %v150
  %vm155 = vcmask 519168
  %156 = vst.msk [vmem:[%s5] sm:$0xf] %vm155, %v151
  %157 = vst.msk [vmem:[%s5 + $0x4] sm:$0xf] %vm155, %v152
  // Predicated region
  $region22: #{transformer_encoder.19} parent=0 // pred_check
    _
  $region23: #{transformer_encoder.19} parent=0 // pred_check_branch
    %159 = sbr.rel (0) target = $region25
  $region24: #{transformer_encoder.19} parent=0 // pred_region
    _
  $region25: #{transformer_encoder.19} parent=0 // pred_fallthru
    _
  // Predicated region
  $region26: #{transformer_encoder.19} parent=0 // pred_check
    _
  $region27: #{transformer_encoder.19} parent=0 // pred_check_branch
    %161 = sbr.rel (0) target = $region29
  $region28: #{transformer_encoder.19} parent=0 // pred_region
    _
  $region29: #{transformer_encoder.19} parent=0 // pred_fallthru
    _

// kernel: transformer_encoder.16
$region0: #{transformer_encoder.16}
  #allocation0 [shape = 'u32[]', space=smem, size = 0x4, offset = 0x4, fixed_abs, tag = 'smem constant byte address 0x4 - core index']
  #allocation1 [shape = 'u32[144,128]{1,0:T(1,128)}', space=vmem, size = 0x12000, scoped, tag = 'internal scratch']
  %s0 = inlined_call_operand.vmem [shape: f32[2,8,3072], index: 0, kind: input, shape index: {}]
  %s1 = inlined_call_operand.vmem [shape: f32[8,8], index: 1, kind: input, shape index: {}]
  %s2 = inlined_call_operand.vmem [shape: f32[8], index: 2, kind: input, shape index: {}]
  %s3 = inlined_call_operand.vmem [shape: f32[8], index: 3, kind: input, shape index: {}]
  %s4 = inlined_call_operand.vmem [shape: bf16[2,8,512], index: 4, kind: output, shape index: {}]
  %s5 = sld [smem:[#allocation0]]
  $region61: #{transformer_encoder.16} parent=0
    _
  %s7 = ssub.s32 1, %s5
  %s8 = scalar_select 0, %s7, %s5
  $region1: #{transformer_encoder.16} parent=0
    #allocation2 [shape = 'u8[4096]{0}', space=smem, size = 0x1000, scoped, tag = 'input window, operand 1, single buffered']
    #allocation3 [shape = 's32[2]{0}', space=sflag, size = 0x8, scoped, tag = 'scoped memory for transformer_encoder.16']
    #allocation4 [shape = 'u8[512]{0}', space=smem, size = 0x200, scoped, tag = 'input window, operand 2, single buffered']
    #allocation5 [shape = 's32[1]{0}', space=sflag, size = 0x4, scoped, tag = 'scoped memory for transformer_encoder.16']
    #allocation6 [shape = 'u8[512]{0}', space=smem, size = 0x200, scoped, tag = 'input window, operand 3, single buffered']
    %9 = vsyncpa [#allocation3], 0
    %10 = vsyncpa [#allocation5], 0
    loop: start=0, step=1, limit=4
    $region2: #{transformer_encoder.16} parent=1 // loop_pre_header
      _
    $region3: #{transformer_encoder.16} parent=1 // loop_header
      %s12 = sphi 0, %s16
      %p13 = scmp.ge.s32.totalorder %s12, 4
      %s19 = sphi 0, %s31
      %s20 = sphi 0, %s27
      %s21 = sphi 0, %s19
      %s22 = sphi 0, %s20
      %s23 = sphi 0, %s21
      %s24 = sphi 0, %s22
      %s34 = sphi 0, %s36
      %s37 = sphi 0, %s34
      %s38 = sphi 0, %s37
      %s54 = sphi 0, %s38
      %s58 = sphi 0, %s58
      %s60 = sphi 0, %s58
      %s61 = sphi 0, %s60
      %s75 = sphi 0, %s61
      %s79 = sphi 0, %s79
      %s81 = sphi 0, %s79
      %s82 = sphi 0, %s81
      %s96 = sphi 0, %s82
      %s100 = sphi 0, %s100
      %s102 = sphi 0, %s100
      %s103 = sphi 0, %s102
      %s117 = sphi 0, %s103
      %s125 = sphi 0, %s127
      %s128 = sphi 0, %s125
      %s129 = sphi 0, %s128
      %s145 = sphi 0, %s129
    $region4: #{transformer_encoder.16} parent=1 // loop_header_branch
      %15 = sbr.rel (%p13) target = $region8
    $region5: #{transformer_encoder.16} parent=1 // loop_body
      %s17 = ssub.s32 %s12, 1
      %s18 = ssub.s32 %s12, 2
      %s25 = sadd.s32 1, %s20
      %p26 = scmp.ge.s32.totalorder %s25, 1
      %s27 = scalar_select %p26, 0, %s25
      %s28 = sadd.s32 1, %s19
      %s29 = scalar_select %p26, %s28, %s19
      %p30 = scmp.ge.s32.totalorder %s29, 2
      %s31 = scalar_select %p30, 0, %s29
      %s32 = ssub.s32 %s19, %s31
      %p33 = scmp.eq.s32.totalorder %s32, 0
      %s35 = sadd.s32 %s34, 1
      %s36 = scalar_select %p33, %s34, %s35
      %p39 = pneg %p33
      %p40 = scmp.eq.s32.totalorder %s12, 1
      %p41 = por %p39, %p40
      %p42 = scmp.ne.s32.totalorder %s34, %s37
      %p43 = scmp.eq.s32.totalorder %s12, 0
      %p44 = por %p42, %p43
      %p45 = scmp.ne.s32.totalorder %s34, %s37
      %p46 = scmp.eq.s32.totalorder %s17, 1
      %p47 = por %p45, %p46
      %p48 = scmp.ne.s32.totalorder %s37, %s38
      %p49 = scmp.eq.s32.totalorder %s17, 0
      %p50 = por %p48, %p49
      %p51 = scmp.ne.s32.totalorder %s37, %s38
      %p52 = scmp.eq.s32.totalorder %s18, 1
      %p53 = por %p51, %p52
      %p55 = scmp.ne.s32.totalorder %s38, %s54
      %p56 = scmp.eq.s32.totalorder %s18, 0
      %p57 = por %p55, %p56
      %s59 = sadd.s32 %s58, 1
      %p62 = scmp.eq.s32.totalorder %s12, 1
      %p63 = scmp.ne.s32.totalorder %s58, %s60
      %p64 = scmp.eq.s32.totalorder %s12, 0
      %p65 = por %p63, %p64
      %p66 = scmp.ne.s32.totalorder %s58, %s60
      %p67 = scmp.eq.s32.totalorder %s17, 1
      %p68 = por %p66, %p67
      %p69 = scmp.ne.s32.totalorder %s60, %s61
      %p70 = scmp.eq.s32.totalorder %s17, 0
      %p71 = por %p69, %p70
      %p72 = scmp.ne.s32.totalorder %s60, %s61
      %p73 = scmp.eq.s32.totalorder %s18, 1
      %p74 = por %p72, %p73
      %p76 = scmp.ne.s32.totalorder %s61, %s75
      %p77 = scmp.eq.s32.totalorder %s18, 0
      %p78 = por %p76, %p77
      %s80 = sadd.s32 %s79, 1
      %p83 = scmp.eq.s32.totalorder %s12, 1
      %p84 = scmp.ne.s32.totalorder %s79, %s81
      %p85 = scmp.eq.s32.totalorder %s12, 0
      %p86 = por %p84, %p85
      %p87 = scmp.ne.s32.totalorder %s79, %s81
      %p88 = scmp.eq.s32.totalorder %s17, 1
      %p89 = por %p87, %p88
      %p90 = scmp.ne.s32.totalorder %s81, %s82
      %p91 = scmp.eq.s32.totalorder %s17, 0
      %p92 = por %p90, %p91
      %p93 = scmp.ne.s32.totalorder %s81, %s82
      %p94 = scmp.eq.s32.totalorder %s18, 1
      %p95 = por %p93, %p94
      %p97 = scmp.ne.s32.totalorder %s82, %s96
      %p98 = scmp.eq.s32.totalorder %s18, 0
      %p99 = por %p97, %p98
      %s101 = sadd.s32 %s100, 1
      %p104 = scmp.eq.s32.totalorder %s12, 1
      %p105 = scmp.ne.s32.totalorder %s100, %s102
      %p106 = scmp.eq.s32.totalorder %s12, 0
      %p107 = por %p105, %p106
      %p108 = scmp.ne.s32.totalorder %s100, %s102
      %p109 = scmp.eq.s32.totalorder %s17, 1
      %p110 = por %p108, %p109
      %p111 = scmp.ne.s32.totalorder %s102, %s103
      %p112 = scmp.eq.s32.totalorder %s17, 0
      %p113 = por %p111, %p112
      %p114 = scmp.ne.s32.totalorder %s102, %s103
      %p115 = scmp.eq.s32.totalorder %s18, 1
      %p116 = por %p114, %p115
      %p118 = scmp.ne.s32.totalorder %s103, %s117
      %p119 = scmp.eq.s32.totalorder %s18, 0
      %p120 = por %p118, %p119
      %s121 = ssub.s32 %s19, %s31
      %s122 = ssub.s32 %s20, %s27
      %s123 = sor.u32 %s121, %s122
      %p124 = scmp.eq.s32.totalorder %s123, 0
      %s126 = sadd.s32 %s125, 1
      %s127 = scalar_select %p124, %s125, %s126
      %p130 = pneg %p124
      %p131 = scmp.eq.s32.totalorder %s12, 1
      %p132 = por %p130, %p131
      %p133 = scmp.ne.s32.totalorder %s125, %s128
      %p134 = scmp.eq.s32.totalorder %s12, 0
      %p135 = por %p133, %p134
      %p136 = scmp.ne.s32.totalorder %s125, %s128
      %p137 = scmp.eq.s32.totalorder %s17, 1
      %p138 = por %p136, %p137
      %p139 = scmp.ne.s32.totalorder %s128, %s129
      %p140 = scmp.eq.s32.totalorder %s17, 0
      %p141 = por %p139, %p140
      %p142 = scmp.ne.s32.totalorder %s128, %s129
      %p143 = scmp.eq.s32.totalorder %s18, 1
      %p144 = por %p142, %p143
      %p146 = scmp.ne.s32.totalorder %s129, %s145
      %p147 = scmp.eq.s32.totalorder %s18, 0
      %p148 = por %p146, %p147
      %p149 = scmp.le.s32.totalorder 1, %s12
      %p150 = scmp.lt.s32.totalorder %s12, 3
      %p151 = pnand %p149, %p150
      %p152 = pneg %p151
      // Predicated region
      $region9: #{transformer_encoder.16} parent=5 // pred_check
        _
      $region10: #{transformer_encoder.16} parent=5 // pred_check_branch
        %154 = sbr.rel (%p151) target = $region12
      $region11: #{transformer_encoder.16} parent=5 // pred_region
        %s155 = ssub.s32 %s12, 1
        // Predicated region
        $region13: #{transformer_encoder.16} parent=11 // pred_check
          %p156 = pneg %p71
        $region14: #{transformer_encoder.16} parent=11 // pred_check_branch
          %158 = sbr.rel (%p156) target = $region16
        $region15: #{transformer_encoder.16} parent=11 // pred_region
          %s160 = ssub.s32 128, 128
          %161 = vsyncadd [#allocation3], %s160
          %s163 = sshll.u32 %s1, 4
          %s164 = int_to_ptr.vmem [resolvable:$true] %s163
          %166 = dma.vmem_to_smem %s164, 128, [#allocation2], [#allocation3]
        $region16: #{transformer_encoder.16} parent=11 // pred_fallthru
          _
        // Predicated region
        $region17: #{transformer_encoder.16} parent=11 // pred_check
          %p167 = pneg %p92
        $region18: #{transformer_encoder.16} parent=11 // pred_check_branch
          %169 = sbr.rel (%p167) target = $region20
        $region19: #{transformer_encoder.16} parent=11 // pred_region
          %s171 = ssub.s32 16, 16
          %172 = vsyncadd [#allocation5], %s171
          %s174 = sshll.u32 %s2, 4
          %s175 = int_to_ptr.vmem [resolvable:$true] %s174
          %177 = dma.vmem_to_smem %s175, 16, [#allocation4], [#allocation5]
        $region20: #{transformer_encoder.16} parent=11 // pred_fallthru
          _
        // Predicated region
        $region21: #{transformer_encoder.16} parent=11 // pred_check
          %p178 = pneg %p113
        $region22: #{transformer_encoder.16} parent=11 // pred_check_branch
          %180 = sbr.rel (%p178) target = $region24
        $region23: #{transformer_encoder.16} parent=11 // pred_region
          %s182 = ssub.s32 16, 16
          %183 = vsyncadd [#allocation5], %s182
          %s185 = sshll.u32 %s3, 4
          %s186 = int_to_ptr.vmem [resolvable:$true] %s185
          %188 = dma.vmem_to_smem %s186, 16, [#allocation6], [#allocation5]
        $region24: #{transformer_encoder.16} parent=11 // pred_fallthru
          _
      $region12: #{transformer_encoder.16} parent=5 // pred_fallthru
        _
      %p189 = scmp.lt.s32.totalorder %s12, 2
      // Predicated region
      $region25: #{transformer_encoder.16} parent=5 // pred_check
        %p190 = pneg %p189
      $region26: #{transformer_encoder.16} parent=5 // pred_check_branch
        %192 = sbr.rel (%p190) target = $region28
      $region27: #{transformer_encoder.16} parent=5 // pred_region
        // Predicated region
        $region29: #{transformer_encoder.16} parent=27 // pred_check
          %p193 = pneg %p44
        $region30: #{transformer_encoder.16} parent=27 // pred_check_branch
          %195 = sbr.rel (%p193) target = $region32
        $region31: #{transformer_encoder.16} parent=27 // pred_region
          %p196 = scmp.lt.s32.totalorder %s19, 1
          %s197 = scalar_select %p196, %s19, 1
          %s198 = smul.addr %s197, 24
          %s199 = sadd.s32 12, %s198
          %s200 = smul.addr %s199, 8
          %s201 = scalar_lea.vmem %s0, %s200
        $region32: #{transformer_encoder.16} parent=27 // pred_fallthru
          _
      $region28: #{transformer_encoder.16} parent=5 // pred_fallthru
        _
      %p202 = scmp.le.s32.totalorder 1, %s12
      %p203 = scmp.lt.s32.totalorder %s12, 3
      %p204 = pnand %p202, %p203
      %p205 = pneg %p204
      // Predicated region
      $region33: #{transformer_encoder.16} parent=5 // pred_check
        _
      $region34: #{transformer_encoder.16} parent=5 // pred_check_branch
        %207 = sbr.rel (%p204) target = $region36
      $region35: #{transformer_encoder.16} parent=5 // pred_region
        %s208 = ssub.s32 %s12, 1
        // Predicated region
        $region37: #{transformer_encoder.16} parent=35 // pred_check
          %p209 = pneg %p71
        $region38: #{transformer_encoder.16} parent=35 // pred_check_branch
          %211 = sbr.rel (%p209) target = $region40
        $region39: #{transformer_encoder.16} parent=35 // pred_region
          %212 = dma.done [#allocation3], 128
        $region40: #{transformer_encoder.16} parent=35 // pred_fallthru
          _
        // Predicated region
        $region41: #{transformer_encoder.16} parent=35 // pred_check
          %p213 = pneg %p92
        $region42: #{transformer_encoder.16} parent=35 // pred_check_branch
          %215 = sbr.rel (%p213) target = $region44
        $region43: #{transformer_encoder.16} parent=35 // pred_region
          %216 = dma.done [#allocation5], 16
        $region44: #{transformer_encoder.16} parent=35 // pred_fallthru
          _
        // Predicated region
        $region45: #{transformer_encoder.16} parent=35 // pred_check
          %p217 = pneg %p113
        $region46: #{transformer_encoder.16} parent=35 // pred_check_branch
          %219 = sbr.rel (%p217) target = $region48
        $region47: #{transformer_encoder.16} parent=35 // pred_region
          %220 = dma.done [#allocation5], 16
        $region48: #{transformer_encoder.16} parent=35 // pred_fallthru
          _
        %221 = sfence
        %p222 = scmp.lt.s32.totalorder %s21, 1
        %s223 = scalar_select %p222, %s21, 1
        %s224 = smul.addr %s223, 24
        %s225 = sadd.s32 12, %s224
        %s226 = smul.addr %s225, 8
        %s227 = scalar_lea.vmem %s0, %s226
        %p228 = pneg %p50
        %p229 = pneg %p47
        %p230 = pneg %p71
        %p231 = pneg %p68
        %p232 = pneg %p92
        %p233 = pneg %p89
        %p234 = pneg %p113
        %p235 = pneg %p110
        %p236 = pneg %p141
        %p237 = pneg %p138
        %p238 = scmp.lt.s32.totalorder %s21, 1
        %s239 = scalar_select %p238, %s21, 1
        %p240 = scmp.lt.s32.totalorder %s22, 0
        %s241 = scalar_select %p240, %s22, 0
        %s242 = smul.addr %s241, 4
        %s243 = smul.addr %s239, 4
        %s244 = sadd.s32 %s242, %s243
        %s245 = smul.addr %s244, 4
        %s246 = scalar_lea.vmem %s4, %s245
        %p247 = scmp.lt.s32.totalorder %s21, 1
        %s248 = scalar_select %p247, %s21, 1
        %s249 = smul.addr %s248, 24
        %s250 = sadd.s32 12, %s249
        %s251 = smul.addr %s250, 8
        %s252 = scalar_lea.vmem %s0, %s251
        %p253 = scmp.lt.s32.totalorder %s21, 1
        %s254 = scalar_select %p253, %s21, 1
        %p255 = scmp.lt.s32.totalorder %s22, 0
        %s256 = scalar_select %p255, %s22, 0
        %s257 = smul.addr %s256, 4
        %s258 = smul.addr %s254, 4
        %s259 = sadd.s32 %s257, %s258
        %s260 = smul.addr %s259, 4
        %s261 = scalar_lea.vmem %s4, %s260
        %s263 = smul.u32 %s22, 8
        %s264 = sshra.s32 %s263, 3
        %s265 = sand.u32 %s263, 7
        %s266 = smul.u32 %s264, 12
        %s267 = smul.addr %s266, 8
        %s268 = scalar_lea.vmem %s252, %s267
        %v269 = vld [vmem:[%s268] sm:$0xff]
        %v270 = vld [vmem:[%s252 + $0x20] sm:$0xff]
        %v271 = vld [vmem:[%s252 + $0x40] sm:$0xff]
        %v272 = vpack.c.bf16 %v269, %v269
        %v273 = vpack.c.bf16 %v270, %v270
        %vm274 = vcmask 523264
        %v276 = vsel %vm274, %v272, 0
        %v279 = vsel %vm274, %v273, 0
        %281 = vmatprep.subr.bf16.mxu0 0
        %282 = vmatpush1.bf16.xpose.msra.mxu0 0
        %283 = vmatprep.subr.bf16.mxu0 0
        %284 = vmatpush1.bf16.xpose.msra.mxu0 0
        %285 = vmatprep.subr.bf16.mxu0 0
        %286 = vmatpush1.bf16.xpose.msra.mxu0 0
        %287 = vmatprep.subr.bf16.mxu0 0
        %288 = vmatpush1.bf16.xpose.msra.mxu0 0
        %289 = vmatprep.subr.bf16.mxu0 0
        %290 = vmatpush1.bf16.xpose.msra.mxu0 0
        %291 = vmatprep.subr.bf16.mxu0 0
        %292 = vmatpush1.bf16.xpose.msra.mxu0 0
        %293 = vmatprep.subr.bf16.mxu0 0
        %294 = vmatpush1.bf16.xpose.msra.mxu0 0
        %295 = vmatprep.subr.bf16.mxu0 0
        %296 = vmatpush1.bf16.xpose.msra.mxu0 %v279
        %297 = vmatprep.subr.bf16.mxu0 0
        %298 = vmatpush2.bf16.xpose.msra.mxu0 0
        %299 = vmatprep.subr.bf16.mxu0 0
        %300 = vmatpush2.bf16.xpose.msra.mxu0 0
        %301 = vmatprep.subr.bf16.mxu0 0
        %302 = vmatpush2.bf16.xpose.msra.mxu0 0
        %303 = vmatprep.subr.bf16.mxu0 0
        %304 = vmatpush2.bf16.xpose.msra.mxu0 0
        %305 = vmatprep.subr.bf16.mxu0 0
        %306 = vmatpush2.bf16.xpose.msra.mxu0 0
        %307 = vmatprep.subr.bf16.mxu0 0
        %308 = vmatpush2.bf16.xpose.msra.mxu0 0
        %309 = vmatprep.subr.bf16.mxu0 0
        %310 = vmatpush2.bf16.xpose.msra.mxu0 0
        %311 = vmatprep.subr.bf16.mxu0 0
        %312 = vmatpush2.bf16.xpose.msra.mxu0 0
        %313 = vmatprep.mubr.bf16.mxu0 0
        %314 = vmatmul.mubr.bf16.gmra.mxu0 %v276
        %v315 = vpop.f32.mrf.mxu0
        %v316 = vadd.f32 0.0, %v315
        %v317 = vpop.f32.mrf.mxu0
        %v318 = vpop.f32.mrf.mxu0
        %v319 = vpop.f32.mrf.mxu0
        %320 = vdwg.mxu0
        %v321 = vmul.f32 %v316, 0.125
        %vm322 = vcmask 64512
        %v323 = vsel %vm322, %v321, -inf
        %324 = vmax.xlane.f32.xlu0 %v323
        %v325 = vpop.xlane.xlu0 %324
        %v326 = vsub.f32 %v321, %v325
        %v327 = vmul.f32 %v326, 1.442695
        %v328 = vpow.pop %v327
        %v329 = vsel %vm322, %v328, 0.0
        %330 = vadd.xlane.f32.xlu0 %v329
        %v331 = vpop.xlane.xlu0 %330
        %v332 = vrcp.pop %v331
        %v333 = vmul.f32 %v328, %v332
        %335 = vrot.lane.b32.xlu0 %v272, 64
        %v336 = vpop.permute.xlu0 %335
        %338 = vrot.lane.b32.xlu0 %v273, 64
        %v339 = vpop.permute.xlu0 %338
        %v341 = vsel %vm274, %v336, 0
        %v344 = vsel %vm274, %v339, 0
        %346 = vmatprep.subr.bf16.mxu0 0
        %347 = vmatpush1.bf16.xpose.msra.mxu0 0
        %348 = vmatprep.subr.bf16.mxu0 0
        %349 = vmatpush1.bf16.xpose.msra.mxu0 0
        %350 = vmatprep.subr.bf16.mxu0 0
        %351 = vmatpush1.bf16.xpose.msra.mxu0 0
        %352 = vmatprep.subr.bf16.mxu0 0
        %353 = vmatpush1.bf16.xpose.msra.mxu0 0
        %354 = vmatprep.subr.bf16.mxu0 0
        %355 = vmatpush1.bf16.xpose.msra.mxu0 0
        %356 = vmatprep.subr.bf16.mxu0 0
        %357 = vmatpush1.bf16.xpose.msra.mxu0 0
        %358 = vmatprep.subr.bf16.mxu0 0
        %359 = vmatpush1.bf16.xpose.msra.mxu0 0
        %360 = vmatprep.subr.bf16.mxu0 0
        %361 = vmatpush1.bf16.xpose.msra.mxu0 %v344
        %362 = vmatprep.subr.bf16.mxu0 0
        %363 = vmatpush2.bf16.xpose.msra.mxu0 0
        %364 = vmatprep.subr.bf16.mxu0 0
        %365 = vmatpush2.bf16.xpose.msra.mxu0 0
        %366 = vmatprep.subr.bf16.mxu0 0
        %367 = vmatpush2.bf16.xpose.msra.mxu0 0
        %368 = vmatprep.subr.bf16.mxu0 0
        %369 = vmatpush2.bf16.xpose.msra.mxu0 0
        %370 = vmatprep.subr.bf16.mxu0 0
        %371 = vmatpush2.bf16.xpose.msra.mxu0 0
        %372 = vmatprep.subr.bf16.mxu0 0
        %373 = vmatpush2.bf16.xpose.msra.mxu0 0
        %374 = vmatprep.subr.bf16.mxu0 0
        %375 = vmatpush2.bf16.xpose.msra.mxu0 0
        %376 = vmatprep.subr.bf16.mxu0 0
        %377 = vmatpush2.bf16.xpose.msra.mxu0 0
        %378 = vmatprep.mubr.bf16.mxu0 0
        %379 = vmatmul.mubr.bf16.gmra.mxu0 %v341
        %v380 = vpop.f32.mrf.mxu0
        %v381 = vadd.f32 0.0, %v380
        %v382 = vpop.f32.mrf.mxu0
        %v383 = vpop.f32.mrf.mxu0
        %v384 = vpop.f32.mrf.mxu0
        %385 = vdwg.mxu0
        %v386 = vmul.f32 %v381, 0.125
        %v387 = vsel %vm322, %v386, -inf
        %388 = vmax.xlane.f32.xlu0 %v387
        %v389 = vpop.xlane.xlu0 %388
        %v390 = vsub.f32 %v386, %v389
        %v391 = vmul.f32 %v390, 1.442695
        %v392 = vpow.pop %v391
        %v393 = vsel %vm322, %v392, 0.0
        %394 = vadd.xlane.f32.xlu0 %v393
        %v395 = vpop.xlane.xlu0 %394
        %v396 = vrcp.pop %v395
        %v397 = vmul.f32 %v392, %v396
        %v398 = vld [vmem:[%s268 + $0x8] sm:$0xff]
        %v399 = vld [vmem:[%s252 + $0x28] sm:$0xff]
        %v400 = vld [vmem:[%s252 + $0x48] sm:$0xff]
        %v401 = vpack.c.bf16 %v398, %v398
        %v402 = vpack.c.bf16 %v399, %v399
        %v404 = vsel %vm274, %v401, 0
        %v407 = vsel %vm274, %v402, 0
        %409 = vmatprep.subr.bf16.mxu0 0
        %410 = vmatpush1.bf16.xpose.msra.mxu0 0
        %411 = vmatprep.subr.bf16.mxu0 0
        %412 = vmatpush1.bf16.xpose.msra.mxu0 0
        %413 = vmatprep.subr.bf16.mxu0 0
        %414 = vmatpush1.bf16.xpose.msra.mxu0 0
        %415 = vmatprep.subr.bf16.mxu0 0
        %416 = vmatpush1.bf16.xpose.msra.mxu0 0
        %417 = vmatprep.subr.bf16.mxu0 0
        %418 = vmatpush1.bf16.xpose.msra.mxu0 0
        %419 = vmatprep.subr.bf16.mxu0 0
        %420 = vmatpush1.bf16.xpose.msra.mxu0 0
        %421 = vmatprep.subr.bf16.mxu0 0
        %422 = vmatpush1.bf16.xpose.msra.mxu0 0
        %423 = vmatprep.subr.bf16.mxu0 0
        %424 = vmatpush1.bf16.xpose.msra.mxu0 %v407
        %425 = vmatprep.subr.bf16.mxu0 0
        %426 = vmatpush2.bf16.xpose.msra.mxu0 0
        %427 = vmatprep.subr.bf16.mxu0 0
        %428 = vmatpush2.bf16.xpose.msra.mxu0 0
        %429 = vmatprep.subr.bf16.mxu0 0
        %430 = vmatpush2.bf16.xpose.msra.mxu0 0
        %431 = vmatprep.subr.bf16.mxu0 0
        %432 = vmatpush2.bf16.xpose.msra.mxu0 0
        %433 = vmatprep.subr.bf16.mxu0 0
        %434 = vmatpush2.bf16.xpose.msra.mxu0 0
        %435 = vmatprep.subr.bf16.mxu0 0
        %436 = vmatpush2.bf16.xpose.msra.mxu0 0
        %437 = vmatprep.subr.bf16.mxu0 0
        %438 = vmatpush2.bf16.xpose.msra.mxu0 0
        %439 = vmatprep.subr.bf16.mxu0 0
        %440 = vmatpush2.bf16.xpose.msra.mxu0 0
        %441 = vmatprep.mubr.bf16.mxu0 0
        %442 = vmatmul.mubr.bf16.gmra.mxu0 %v404
        %v443 = vpop.f32.mrf.mxu0
        %v444 = vadd.f32 0.0, %v443
        %v445 = vpop.f32.mrf.mxu0
        %v446 = vpop.f32.mrf.mxu0
        %v447 = vpop.f32.mrf.mxu0
        %448 = vdwg.mxu0
        %v449 = vmul.f32 %v444, 0.125
        %v450 = vsel %vm322, %v449, -inf
        %451 = vmax.xlane.f32.xlu0 %v450
        %v452 = vpop.xlane.xlu0 %451
        %v453 = vsub.f32 %v449, %v452
        %v454 = vmul.f32 %v453, 1.442695
        %v455 = vpow.pop %v454
        %v456 = vsel %vm322, %v455, 0.0
        %457 = vadd.xlane.f32.xlu0 %v456
        %v458 = vpop.xlane.xlu0 %457
        %v459 = vrcp.pop %v458
        %v460 = vmul.f32 %v455, %v459
        %462 = vrot.lane.b32.xlu0 %v401, 64
        %v463 = vpop.permute.xlu0 %462
        %465 = vrot.lane.b32.xlu0 %v402, 64
        %v466 = vpop.permute.xlu0 %465
        %v468 = vsel %vm274, %v463, 0
        %v471 = vsel %vm274, %v466, 0
        %473 = vmatprep.subr.bf16.mxu0 0
        %474 = vmatpush1.bf16.xpose.msra.mxu0 0
        %475 = vmatprep.subr.bf16.mxu0 0
        %476 = vmatpush1.bf16.xpose.msra.mxu0 0
        %477 = vmatprep.subr.bf16.mxu0 0
        %478 = vmatpush1.bf16.xpose.msra.mxu0 0
        %479 = vmatprep.subr.bf16.mxu0 0
        %480 = vmatpush1.bf16.xpose.msra.mxu0 0
        %481 = vmatprep.subr.bf16.mxu0 0
        %482 = vmatpush1.bf16.xpose.msra.mxu0 0
        %483 = vmatprep.subr.bf16.mxu0 0
        %484 = vmatpush1.bf16.xpose.msra.mxu0 0
        %485 = vmatprep.subr.bf16.mxu0 0
        %486 = vmatpush1.bf16.xpose.msra.mxu0 0
        %487 = vmatprep.subr.bf16.mxu0 0
        %488 = vmatpush1.bf16.xpose.msra.mxu0 %v471
        %489 = vmatprep.subr.bf16.mxu0 0
        %490 = vmatpush2.bf16.xpose.msra.mxu0 0
        %491 = vmatprep.subr.bf16.mxu0 0
        %492 = vmatpush2.bf16.xpose.msra.mxu0 0
        %493 = vmatprep.subr.bf16.mxu0 0
        %494 = vmatpush2.bf16.xpose.msra.mxu0 0
        %495 = vmatprep.subr.bf16.mxu0 0
        %496 = vmatpush2.bf16.xpose.msra.mxu0 0
        %497 = vmatprep.subr.bf16.mxu0 0
        %498 = vmatpush2.bf16.xpose.msra.mxu0 0
        %499 = vmatprep.subr.bf16.mxu0 0
        %500 = vmatpush2.bf16.xpose.msra.mxu0 0
        %501 = vmatprep.subr.bf16.mxu0 0
        %502 = vmatpush2.bf16.xpose.msra.mxu0 0
        %503 = vmatprep.subr.bf16.mxu0 0
        %504 = vmatpush2.bf16.xpose.msra.mxu0 0
        %505 = vmatprep.mubr.bf16.mxu0 0
        %506 = vmatmul.mubr.bf16.gmra.mxu0 %v468
        %v507 = vpop.f32.mrf.mxu0
        %v508 = vadd.f32 0.0, %v507
        %v509 = vpop.f32.mrf.mxu0
        %v510 = vpop.f32.mrf.mxu0
        %v511 = vpop.f32.mrf.mxu0
        %512 = vdwg.mxu0
        %v513 = vmul.f32 %v508, 0.125
        %v514 = vsel %vm322, %v513, -inf
        %515 = vmax.xlane.f32.xlu0 %v514
        %v516 = vpop.xlane.xlu0 %515
        %v517 = vsub.f32 %v513, %v516
        %v518 = vmul.f32 %v517, 1.442695
        %v519 = vpow.pop %v518
        %v520 = vsel %vm322, %v519, 0.0
        %521 = vadd.xlane.f32.xlu0 %v520
        %v522 = vpop.xlane.xlu0 %521
        %v523 = vrcp.pop %v522
        %v524 = vmul.f32 %v519, %v523
        %v525 = vld [vmem:[%s268 + $0x10] sm:$0xff]
        %v526 = vld [vmem:[%s252 + $0x30] sm:$0xff]
        %v527 = vld [vmem:[%s252 + $0x50] sm:$0xff]
        %v528 = vpack.c.bf16 %v525, %v525
        %v529 = vpack.c.bf16 %v526, %v526
        %v531 = vsel %vm274, %v528, 0
        %v534 = vsel %vm274, %v529, 0
        %536 = vmatprep.subr.bf16.mxu0 0
        %537 = vmatpush1.bf16.xpose.msra.mxu0 0
        %538 = vmatprep.subr.bf16.mxu0 0
        %539 = vmatpush1.bf16.xpose.msra.mxu0 0
        %540 = vmatprep.subr.bf16.mxu0 0
        %541 = vmatpush1.bf16.xpose.msra.mxu0 0
        %542 = vmatprep.subr.bf16.mxu0 0
        %543 = vmatpush1.bf16.xpose.msra.mxu0 0
        %544 = vmatprep.subr.bf16.mxu0 0
        %545 = vmatpush1.bf16.xpose.msra.mxu0 0
        %546 = vmatprep.subr.bf16.mxu0 0
        %547 = vmatpush1.bf16.xpose.msra.mxu0 0
        %548 = vmatprep.subr.bf16.mxu0 0
        %549 = vmatpush1.bf16.xpose.msra.mxu0 0
        %550 = vmatprep.subr.bf16.mxu0 0
        %551 = vmatpush1.bf16.xpose.msra.mxu0 %v534
        %552 = vmatprep.subr.bf16.mxu0 0
        %553 = vmatpush2.bf16.xpose.msra.mxu0 0
        %554 = vmatprep.subr.bf16.mxu0 0
        %555 = vmatpush2.bf16.xpose.msra.mxu0 0
        %556 = vmatprep.subr.bf16.mxu0 0
        %557 = vmatpush2.bf16.xpose.msra.mxu0 0
        %558 = vmatprep.subr.bf16.mxu0 0
        %559 = vmatpush2.bf16.xpose.msra.mxu0 0
        %560 = vmatprep.subr.bf16.mxu0 0
        %561 = vmatpush2.bf16.xpose.msra.mxu0 0
        %562 = vmatprep.subr.bf16.mxu0 0
        %563 = vmatpush2.bf16.xpose.msra.mxu0 0
        %564 = vmatprep.subr.bf16.mxu0 0
        %565 = vmatpush2.bf16.xpose.msra.mxu0 0
        %566 = vmatprep.subr.bf16.mxu0 0
        %567 = vmatpush2.bf16.xpose.msra.mxu0 0
        %568 = vmatprep.mubr.bf16.mxu0 0
        %569 = vmatmul.mubr.bf16.gmra.mxu0 %v531
        %v570 = vpop.f32.mrf.mxu0
        %v571 = vadd.f32 0.0, %v570
        %v572 = vpop.f32.mrf.mxu0
        %v573 = vpop.f32.mrf.mxu0
        %v574 = vpop.f32.mrf.mxu0
        %575 = vdwg.mxu0
        %v576 = vmul.f32 %v571, 0.125
        %v577 = vsel %vm322, %v576, -inf
        %578 = vmax.xlane.f32.xlu0 %v577
        %v579 = vpop.xlane.xlu0 %578
        %v580 = vsub.f32 %v576, %v579
        %v581 = vmul.f32 %v580, 1.442695
        %v582 = vpow.pop %v581
        %v583 = vsel %vm322, %v582, 0.0
        %584 = vadd.xlane.f32.xlu0 %v583
        %v585 = vpop.xlane.xlu0 %584
        %v586 = vrcp.pop %v585
        %v587 = vmul.f32 %v582, %v586
        %589 = vrot.lane.b32.xlu0 %v528, 64
        %v590 = vpop.permute.xlu0 %589
        %592 = vrot.lane.b32.xlu0 %v529, 64
        %v593 = vpop.permute.xlu0 %592
        %v595 = vsel %vm274, %v590, 0
        %v598 = vsel %vm274, %v593, 0
        %600 = vmatprep.subr.bf16.mxu0 0
        %601 = vmatpush1.bf16.xpose.msra.mxu0 0
        %602 = vmatprep.subr.bf16.mxu0 0
        %603 = vmatpush1.bf16.xpose.msra.mxu0 0
        %604 = vmatprep.subr.bf16.mxu0 0
        %605 = vmatpush1.bf16.xpose.msra.mxu0 0
        %606 = vmatprep.subr.bf16.mxu0 0
        %607 = vmatpush1.bf16.xpose.msra.mxu0 0
        %608 = vmatprep.subr.bf16.mxu0 0
        %609 = vmatpush1.bf16.xpose.msra.mxu0 0
        %610 = vmatprep.subr.bf16.mxu0 0
        %611 = vmatpush1.bf16.xpose.msra.mxu0 0
        %612 = vmatprep.subr.bf16.mxu0 0
        %613 = vmatpush1.bf16.xpose.msra.mxu0 0
        %614 = vmatprep.subr.bf16.mxu0 0
        %615 = vmatpush1.bf16.xpose.msra.mxu0 %v598
        %616 = vmatprep.subr.bf16.mxu0 0
        %617 = vmatpush2.bf16.xpose.msra.mxu0 0
        %618 = vmatprep.subr.bf16.mxu0 0
        %619 = vmatpush2.bf16.xpose.msra.mxu0 0
        %620 = vmatprep.subr.bf16.mxu0 0
        %621 = vmatpush2.bf16.xpose.msra.mxu0 0
        %622 = vmatprep.subr.bf16.mxu0 0
        %623 = vmatpush2.bf16.xpose.msra.mxu0 0
        %624 = vmatprep.subr.bf16.mxu0 0
        %625 = vmatpush2.bf16.xpose.msra.mxu0 0
        %626 = vmatprep.subr.bf16.mxu0 0
        %627 = vmatpush2.bf16.xpose.msra.mxu0 0
        %628 = vmatprep.subr.bf16.mxu0 0
        %629 = vmatpush2.bf16.xpose.msra.mxu0 0
        %630 = vmatprep.subr.bf16.mxu0 0
        %631 = vmatpush2.bf16.xpose.msra.mxu0 0
        %632 = vmatprep.mubr.bf16.mxu0 0
        %633 = vmatmul.mubr.bf16.gmra.mxu0 %v595
        %v634 = vpop.f32.mrf.mxu0
        %v635 = vadd.f32 0.0, %v634
        %v636 = vpop.f32.mrf.mxu0
        %v637 = vpop.f32.mrf.mxu0
        %v638 = vpop.f32.mrf.mxu0
        %639 = vdwg.mxu0
        %v640 = vmul.f32 %v635, 0.125
        %v641 = vsel %vm322, %v640, -inf
        %642 = vmax.xlane.f32.xlu0 %v641
        %v643 = vpop.xlane.xlu0 %642
        %v644 = vsub.f32 %v640, %v643
        %v645 = vmul.f32 %v644, 1.442695
        %v646 = vpow.pop %v645
        %v647 = vsel %vm322, %v646, 0.0
        %648 = vadd.xlane.f32.xlu0 %v647
        %v649 = vpop.xlane.xlu0 %648
        %v650 = vrcp.pop %v649
        %v651 = vmul.f32 %v646, %v650
        %v652 = vld [vmem:[%s268 + $0x18] sm:$0xff]
        %v653 = vld [vmem:[%s252 + $0x38] sm:$0xff]
        %v654 = vld [vmem:[%s252 + $0x58] sm:$0xff]
        %v655 = vpack.c.bf16 %v652, %v652
        %v656 = vpack.c.bf16 %v653, %v653
        %v658 = vsel %vm274, %v655, 0
        %v661 = vsel %vm274, %v656, 0
        %663 = vmatprep.subr.bf16.mxu0 0
        %664 = vmatpush1.bf16.xpose.msra.mxu0 0
        %665 = vmatprep.subr.bf16.mxu0 0
        %666 = vmatpush1.bf16.xpose.msra.mxu0 0
        %667 = vmatprep.subr.bf16.mxu0 0
        %668 = vmatpush1.bf16.xpose.msra.mxu0 0
        %669 = vmatprep.subr.bf16.mxu0 0
        %670 = vmatpush1.bf16.xpose.msra.mxu0 0
        %671 = vmatprep.subr.bf16.mxu0 0
        %672 = vmatpush1.bf16.xpose.msra.mxu0 0
        %673 = vmatprep.subr.bf16.mxu0 0
        %674 = vmatpush1.bf16.xpose.msra.mxu0 0
        %675 = vmatprep.subr.bf16.mxu0 0
        %676 = vmatpush1.bf16.xpose.msra.mxu0 0
        %677 = vmatprep.subr.bf16.mxu0 0
        %678 = vmatpush1.bf16.xpose.msra.mxu0 %v661
        %679 = vmatprep.subr.bf16.mxu0 0
        %680 = vmatpush2.bf16.xpose.msra.mxu0 0
        %681 = vmatprep.subr.bf16.mxu0 0
        %682 = vmatpush2.bf16.xpose.msra.mxu0 0
        %683 = vmatprep.subr.bf16.mxu0 0
        %684 = vmatpush2.bf16.xpose.msra.mxu0 0
        %685 = vmatprep.subr.bf16.mxu0 0
        %686 = vmatpush2.bf16.xpose.msra.mxu0 0
        %687 = vmatprep.subr.bf16.mxu0 0
        %688 = vmatpush2.bf16.xpose.msra.mxu0 0
        %689 = vmatprep.subr.bf16.mxu0 0
        %690 = vmatpush2.bf16.xpose.msra.mxu0 0
        %691 = vmatprep.subr.bf16.mxu0 0
        %692 = vmatpush2.bf16.xpose.msra.mxu0 0
        %693 = vmatprep.subr.bf16.mxu0 0
        %694 = vmatpush2.bf16.xpose.msra.mxu0 0
        %695 = vmatprep.mubr.bf16.mxu0 0
        %696 = vmatmul.mubr.bf16.gmra.mxu0 %v658
        %v697 = vpop.f32.mrf.mxu0
        %v698 = vadd.f32 0.0, %v697
        %v699 = vpop.f32.mrf.mxu0
        %v700 = vpop.f32.mrf.mxu0
        %v701 = vpop.f32.mrf.mxu0
        %702 = vdwg.mxu0
        %v703 = vmul.f32 %v698, 0.125
        %v704 = vsel %vm322, %v703, -inf
        %705 = vmax.xlane.f32.xlu0 %v704
        %v706 = vpop.xlane.xlu0 %705
        %v707 = vsub.f32 %v703, %v706
        %v708 = vmul.f32 %v707, 1.442695
        %v709 = vpow.pop %v708
        %v710 = vsel %vm322, %v709, 0.0
        %711 = vadd.xlane.f32.xlu0 %v710
        %v712 = vpop.xlane.xlu0 %711
        %v713 = vrcp.pop %v712
        %v714 = vmul.f32 %v709, %v713
        %716 = vrot.lane.b32.xlu0 %v655, 64
        %v717 = vpop.permute.xlu0 %716
        %719 = vrot.lane.b32.xlu0 %v656, 64
        %v720 = vpop.permute.xlu0 %719
        %v722 = vsel %vm274, %v717, 0
        %v725 = vsel %vm274, %v720, 0
        %727 = vmatprep.subr.bf16.mxu0 0
        %728 = vmatpush1.bf16.xpose.msra.mxu0 0
        %729 = vmatprep.subr.bf16.mxu0 0
        %730 = vmatpush1.bf16.xpose.msra.mxu0 0
        %731 = vmatprep.subr.bf16.mxu0 0
        %732 = vmatpush1.bf16.xpose.msra.mxu0 0
        %733 = vmatprep.subr.bf16.mxu0 0
        %734 = vmatpush1.bf16.xpose.msra.mxu0 0
        %735 = vmatprep.subr.bf16.mxu0 0
        %736 = vmatpush1.bf16.xpose.msra.mxu0 0
        %737 = vmatprep.subr.bf16.mxu0 0
        %738 = vmatpush1.bf16.xpose.msra.mxu0 0
        %739 = vmatprep.subr.bf16.mxu0 0
        %740 = vmatpush1.bf16.xpose.msra.mxu0 0
        %741 = vmatprep.subr.bf16.mxu0 0
        %742 = vmatpush1.bf16.xpose.msra.mxu0 %v725
        %743 = vmatprep.subr.bf16.mxu0 0
        %744 = vmatpush2.bf16.xpose.msra.mxu0 0
        %745 = vmatprep.subr.bf16.mxu0 0
        %746 = vmatpush2.bf16.xpose.msra.mxu0 0
        %747 = vmatprep.subr.bf16.mxu0 0
        %748 = vmatpush2.bf16.xpose.msra.mxu0 0
        %749 = vmatprep.subr.bf16.mxu0 0
        %750 = vmatpush2.bf16.xpose.msra.mxu0 0
        %751 = vmatprep.subr.bf16.mxu0 0
        %752 = vmatpush2.bf16.xpose.msra.mxu0 0
        %753 = vmatprep.subr.bf16.mxu0 0
        %754 = vmatpush2.bf16.xpose.msra.mxu0 0
        %755 = vmatprep.subr.bf16.mxu0 0
        %756 = vmatpush2.bf16.xpose.msra.mxu0 0
        %757 = vmatprep.subr.bf16.mxu0 0
        %758 = vmatpush2.bf16.xpose.msra.mxu0 0
        %759 = vmatprep.mubr.bf16.mxu0 0
        %760 = vmatmul.mubr.bf16.gmra.mxu0 %v722
        %v761 = vpop.f32.mrf.mxu0
        %v762 = vadd.f32 0.0, %v761
        %v763 = vpop.f32.mrf.mxu0
        %v764 = vpop.f32.mrf.mxu0
        %v765 = vpop.f32.mrf.mxu0
        %766 = vdwg.mxu0
        %v767 = vmul.f32 %v762, 0.125
        %v768 = vsel %vm322, %v767, -inf
        %769 = vmax.xlane.f32.xlu0 %v768
        %v770 = vpop.xlane.xlu0 %769
        %v771 = vsub.f32 %v767, %v770
        %v772 = vmul.f32 %v771, 1.442695
        %v773 = vpow.pop %v772
        %v774 = vsel %vm322, %v773, 0.0
        %775 = vadd.xlane.f32.xlu0 %v774
        %v776 = vpop.xlane.xlu0 %775
        %v777 = vrcp.pop %v776
        %v778 = vmul.f32 %v773, %v777
        %s779 = sld [smem:[#allocation2]]
        %v780 = vstv %s779
        %v781 = vmul.f32 %v333, %v780
        %s782 = sld [smem:[#allocation2 + $0x80]]
        %v783 = vstv %s782
        %v784 = vmul.f32 %v397, %v783
        %v785 = vadd.f32 %v781, %v784
        %s786 = sld [smem:[#allocation2 + $0x100]]
        %v787 = vstv %s786
        %v788 = vmul.f32 %v460, %v787
        %v789 = vadd.f32 %v785, %v788
        %s790 = sld [smem:[#allocation2 + $0x180]]
        %v791 = vstv %s790
        %v792 = vmul.f32 %v524, %v791
        %v793 = vadd.f32 %v789, %v792
        %s794 = sld [smem:[#allocation2 + $0x200]]
        %v795 = vstv %s794
        %v796 = vmul.f32 %v587, %v795
        %v797 = vadd.f32 %v793, %v796
        %s798 = sld [smem:[#allocation2 + $0x280]]
        %v799 = vstv %s798
        %v800 = vmul.f32 %v651, %v799
        %v801 = vadd.f32 %v797, %v800
        %s802 = sld [smem:[#allocation2 + $0x300]]
        %v803 = vstv %s802
        %v804 = vmul.f32 %v714, %v803
        %v805 = vadd.f32 %v801, %v804
        %s806 = sld [smem:[#allocation2 + $0x380]]
        %v807 = vstv %s806
        %v808 = vmul.f32 %v778, %v807
        %v809 = vadd.f32 %v805, %v808
        %s810 = sld [smem:[#allocation2 + $0x1]]
        %v811 = vstv %s810
        %v812 = vmul.f32 %v333, %v811
        %s813 = sld [smem:[#allocation2 + $0x81]]
        %v814 = vstv %s813
        %v815 = vmul.f32 %v397, %v814
        %v816 = vadd.f32 %v812, %v815
        %s817 = sld [smem:[#allocation2 + $0x101]]
        %v818 = vstv %s817
        %v819 = vmul.f32 %v460, %v818
        %v820 = vadd.f32 %v816, %v819
        %s821 = sld [smem:[#allocation2 + $0x181]]
        %v822 = vstv %s821
        %v823 = vmul.f32 %v524, %v822
        %v824 = vadd.f32 %v820, %v823
        %s825 = sld [smem:[#allocation2 + $0x201]]
        %v826 = vstv %s825
        %v827 = vmul.f32 %v587, %v826
        %v828 = vadd.f32 %v824, %v827
        %s829 = sld [smem:[#allocation2 + $0x281]]
        %v830 = vstv %s829
        %v831 = vmul.f32 %v651, %v830
        %v832 = vadd.f32 %v828, %v831
        %s833 = sld [smem:[#allocation2 + $0x301]]
        %v834 = vstv %s833
        %v835 = vmul.f32 %v714, %v834
        %v836 = vadd.f32 %v832, %v835
        %s837 = sld [smem:[#allocation2 + $0x381]]
        %v838 = vstv %s837
        %v839 = vmul.f32 %v778, %v838
        %v840 = vadd.f32 %v836, %v839
        %s841 = sld [smem:[#allocation2 + $0x2]]
        %v842 = vstv %s841
        %v843 = vmul.f32 %v333, %v842
        %s844 = sld [smem:[#allocation2 + $0x82]]
        %v845 = vstv %s844
        %v846 = vmul.f32 %v397, %v845
        %v847 = vadd.f32 %v843, %v846
        %s848 = sld [smem:[#allocation2 + $0x102]]
        %v849 = vstv %s848
        %v850 = vmul.f32 %v460, %v849
        %v851 = vadd.f32 %v847, %v850
        %s852 = sld [smem:[#allocation2 + $0x182]]
        %v853 = vstv %s852
        %v854 = vmul.f32 %v524, %v853
        %v855 = vadd.f32 %v851, %v854
        %s856 = sld [smem:[#allocation2 + $0x202]]
        %v857 = vstv %s856
        %v858 = vmul.f32 %v587, %v857
        %v859 = vadd.f32 %v855, %v858
        %s860 = sld [smem:[#allocation2 + $0x282]]
        %v861 = vstv %s860
        %v862 = vmul.f32 %v651, %v861
        %v863 = vadd.f32 %v859, %v862
        %s864 = sld [smem:[#allocation2 + $0x302]]
        %v865 = vstv %s864
        %v866 = vmul.f32 %v714, %v865
        %v867 = vadd.f32 %v863, %v866
        %s868 = sld [smem:[#allocation2 + $0x382]]
        %v869 = vstv %s868
        %v870 = vmul.f32 %v778, %v869
        %v871 = vadd.f32 %v867, %v870
        %s872 = sld [smem:[#allocation2 + $0x3]]
        %v873 = vstv %s872
        %v874 = vmul.f32 %v333, %v873
        %s875 = sld [smem:[#allocation2 + $0x83]]
        %v876 = vstv %s875
        %v877 = vmul.f32 %v397, %v876
        %v878 = vadd.f32 %v874, %v877
        %s879 = sld [smem:[#allocation2 + $0x103]]
        %v880 = vstv %s879
        %v881 = vmul.f32 %v460, %v880
        %v882 = vadd.f32 %v878, %v881
        %s883 = sld [smem:[#allocation2 + $0x183]]
        %v884 = vstv %s883
        %v885 = vmul.f32 %v524, %v884
        %v886 = vadd.f32 %v882, %v885
        %s887 = sld [smem:[#allocation2 + $0x203]]
        %v888 = vstv %s887
        %v889 = vmul.f32 %v587, %v888
        %v890 = vadd.f32 %v886, %v889
        %s891 = sld [smem:[#allocation2 + $0x283]]
        %v892 = vstv %s891
        %v893 = vmul.f32 %v651, %v892
        %v894 = vadd.f32 %v890, %v893
        %s895 = sld [smem:[#allocation2 + $0x303]]
        %v896 = vstv %s895
        %v897 = vmul.f32 %v714, %v896
        %v898 = vadd.f32 %v894, %v897
        %s899 = sld [smem:[#allocation2 + $0x383]]
        %v900 = vstv %s899
        %v901 = vmul.f32 %v778, %v900
        %v902 = vadd.f32 %v898, %v901
        %s903 = sld [smem:[#allocation2 + $0x4]]
        %v904 = vstv %s903
        %v905 = vmul.f32 %v333, %v904
        %s906 = sld [smem:[#allocation2 + $0x84]]
        %v907 = vstv %s906
        %v908 = vmul.f32 %v397, %v907
        %v909 = vadd.f32 %v905, %v908
        %s910 = sld [smem:[#allocation2 + $0x104]]
        %v911 = vstv %s910
        %v912 = vmul.f32 %v460, %v911
        %v913 = vadd.f32 %v909, %v912
        %s914 = sld [smem:[#allocation2 + $0x184]]
        %v915 = vstv %s914
        %v916 = vmul.f32 %v524, %v915
        %v917 = vadd.f32 %v913, %v916
        %s918 = sld [smem:[#allocation2 + $0x204]]
        %v919 = vstv %s918
        %v920 = vmul.f32 %v587, %v919
        %v921 = vadd.f32 %v917, %v920
        %s922 = sld [smem:[#allocation2 + $0x284]]
        %v923 = vstv %s922
        %v924 = vmul.f32 %v651, %v923
        %v925 = vadd.f32 %v921, %v924
        %s926 = sld [smem:[#allocation2 + $0x304]]
        %v927 = vstv %s926
        %v928 = vmul.f32 %v714, %v927
        %v929 = vadd.f32 %v925, %v928
        %s930 = sld [smem:[#allocation2 + $0x384]]
        %v931 = vstv %s930
        %v932 = vmul.f32 %v778, %v931
        %v933 = vadd.f32 %v929, %v932
        %s934 = sld [smem:[#allocation2 + $0x5]]
        %v935 = vstv %s934
        %v936 = vmul.f32 %v333, %v935
        %s937 = sld [smem:[#allocation2 + $0x85]]
        %v938 = vstv %s937
        %v939 = vmul.f32 %v397, %v938
        %v940 = vadd.f32 %v936, %v939
        %s941 = sld [smem:[#allocation2 + $0x105]]
        %v942 = vstv %s941
        %v943 = vmul.f32 %v460, %v942
        %v944 = vadd.f32 %v940, %v943
        %s945 = sld [smem:[#allocation2 + $0x185]]
        %v946 = vstv %s945
        %v947 = vmul.f32 %v524, %v946
        %v948 = vadd.f32 %v944, %v947
        %s949 = sld [smem:[#allocation2 + $0x205]]
        %v950 = vstv %s949
        %v951 = vmul.f32 %v587, %v950
        %v952 = vadd.f32 %v948, %v951
        %s953 = sld [smem:[#allocation2 + $0x285]]
        %v954 = vstv %s953
        %v955 = vmul.f32 %v651, %v954
        %v956 = vadd.f32 %v952, %v955
        %s957 = sld [smem:[#allocation2 + $0x305]]
        %v958 = vstv %s957
        %v959 = vmul.f32 %v714, %v958
        %v960 = vadd.f32 %v956, %v959
        %s961 = sld [smem:[#allocation2 + $0x385]]
        %v962 = vstv %s961
        %v963 = vmul.f32 %v778, %v962
        %v964 = vadd.f32 %v960, %v963
        %s965 = sld [smem:[#allocation2 + $0x6]]
        %v966 = vstv %s965
        %v967 = vmul.f32 %v333, %v966
        %s968 = sld [smem:[#allocation2 + $0x86]]
        %v969 = vstv %s968
        %v970 = vmul.f32 %v397, %v969
        %v971 = vadd.f32 %v967, %v970
        %s972 = sld [smem:[#allocation2 + $0x106]]
        %v973 = vstv %s972
        %v974 = vmul.f32 %v460, %v973
        %v975 = vadd.f32 %v971, %v974
        %s976 = sld [smem:[#allocation2 + $0x186]]
        %v977 = vstv %s976
        %v978 = vmul.f32 %v524, %v977
        %v979 = vadd.f32 %v975, %v978
        %s980 = sld [smem:[#allocation2 + $0x206]]
        %v981 = vstv %s980
        %v982 = vmul.f32 %v587, %v981
        %v983 = vadd.f32 %v979, %v982
        %s984 = sld [smem:[#allocation2 + $0x286]]
        %v985 = vstv %s984
        %v986 = vmul.f32 %v651, %v985
        %v987 = vadd.f32 %v983, %v986
        %s988 = sld [smem:[#allocation2 + $0x306]]
        %v989 = vstv %s988
        %v990 = vmul.f32 %v714, %v989
        %v991 = vadd.f32 %v987, %v990
        %s992 = sld [smem:[#allocation2 + $0x386]]
        %v993 = vstv %s992
        %v994 = vmul.f32 %v778, %v993
        %v995 = vadd.f32 %v991, %v994
        %s996 = sld [smem:[#allocation2 + $0x7]]
        %v997 = vstv %s996
        %v998 = vmul.f32 %v333, %v997
        %s999 = sld [smem:[#allocation2 + $0x87]]
        %v1000 = vstv %s999
        %v1001 = vmul.f32 %v397, %v1000
        %v1002 = vadd.f32 %v998, %v1001
        %s1003 = sld [smem:[#allocation2 + $0x107]]
        %v1004 = vstv %s1003
        %v1005 = vmul.f32 %v460, %v1004
        %v1006 = vadd.f32 %v1002, %v1005
        %s1007 = sld [smem:[#allocation2 + $0x187]]
        %v1008 = vstv %s1007
        %v1009 = vmul.f32 %v524, %v1008
        %v1010 = vadd.f32 %v1006, %v1009
        %s1011 = sld [smem:[#allocation2 + $0x207]]
        %v1012 = vstv %s1011
        %v1013 = vmul.f32 %v587, %v1012
        %v1014 = vadd.f32 %v1010, %v1013
        %s1015 = sld [smem:[#allocation2 + $0x287]]
        %v1016 = vstv %s1015
        %v1017 = vmul.f32 %v651, %v1016
        %v1018 = vadd.f32 %v1014, %v1017
        %s1019 = sld [smem:[#allocation2 + $0x307]]
        %v1020 = vstv %s1019
        %v1021 = vmul.f32 %v714, %v1020
        %v1022 = vadd.f32 %v1018, %v1021
        %s1023 = sld [smem:[#allocation2 + $0x387]]
        %v1024 = vstv %s1023
        %v1025 = vmul.f32 %v778, %v1024
        %v1026 = vadd.f32 %v1022, %v1025
        %v1027 = vadd.f32 %v809, %v840
        %v1028 = vadd.f32 %v1027, %v871
        %v1029 = vadd.f32 %v1028, %v902
        %v1030 = vadd.f32 %v1029, %v933
        %v1031 = vadd.f32 %v1030, %v964
        %v1032 = vadd.f32 %v1031, %v995
        %v1033 = vadd.f32 %v1032, %v1026
        %v1034 = vmul.f32 %v1033, 0.125
        %v1035 = vsub.f32 %v809, %v1034
        %v1036 = vmul.f32 %v1035, %v1035
        %v1037 = vsub.f32 %v840, %v1034
        %v1038 = vmul.f32 %v1037, %v1037
        %v1039 = vadd.f32 %v1036, %v1038
        %v1040 = vsub.f32 %v871, %v1034
        %v1041 = vmul.f32 %v1040, %v1040
        %v1042 = vadd.f32 %v1039, %v1041
        %v1043 = vsub.f32 %v902, %v1034
        %v1044 = vmul.f32 %v1043, %v1043
        %v1045 = vadd.f32 %v1042, %v1044
        %v1046 = vsub.f32 %v933, %v1034
        %v1047 = vmul.f32 %v1046, %v1046
        %v1048 = vadd.f32 %v1045, %v1047
        %v1049 = vsub.f32 %v964, %v1034
        %v1050 = vmul.f32 %v1049, %v1049
        %v1051 = vadd.f32 %v1048, %v1050
        %v1052 = vsub.f32 %v995, %v1034
        %v1053 = vmul.f32 %v1052, %v1052
        %v1054 = vadd.f32 %v1051, %v1053
        %v1055 = vsub.f32 %v1026, %v1034
        %v1056 = vmul.f32 %v1055, %v1055
        %v1057 = vadd.f32 %v1054, %v1056
        %v1058 = vmul.f32 %v1057, 0.125
        %v1059 = vadd.f32 %v1058, 1e-05
        %v1060 = vrsqrt.pop %v1059
        %v1061 = vmul.f32 %v1035, %v1060
        %s1062 = sld [smem:[#allocation4]]
        %v1063 = vstv %s1062
        %v1064 = vmul.f32 %v1061, %v1063
        %s1065 = sld [smem:[#allocation6]]
        %v1066 = vstv %s1065
        %v1067 = vadd.f32 %v1064, %v1066
        %v1068 = vpack.c.bf16 %v1067, %v1067
        %v1069 = vpack.c.bf16 %v271, %v271
        %v1071 = vsel %vm322, %v1068, 0
        %vm1073 = vcmask 1043456
        %v1075 = vsel %vm1073, %v1069, 0
        %1077 = vmatprep.subr.bf16.mxu0 0
        %1078 = vmatpush1.bf16.msra.mxu0 0
        %1079 = vmatprep.subr.bf16.mxu0 0
        %1080 = vmatpush1.bf16.msra.mxu0 0
        %1081 = vmatprep.subr.bf16.mxu0 0
        %1082 = vmatpush1.bf16.msra.mxu0 0
        %1083 = vmatprep.subr.bf16.mxu0 0
        %1084 = vmatpush1.bf16.msra.mxu0 0
        %1085 = vmatprep.subr.bf16.mxu0 0
        %1086 = vmatpush1.bf16.msra.mxu0 0
        %1087 = vmatprep.subr.bf16.mxu0 0
        %1088 = vmatpush1.bf16.msra.mxu0 0
        %1089 = vmatprep.subr.bf16.mxu0 0
        %1090 = vmatpush1.bf16.msra.mxu0 0
        %1091 = vmatprep.subr.bf16.mxu0 0
        %1092 = vmatpush1.bf16.msra.mxu0 %v1075
        %1093 = vmatprep.subr.bf16.mxu0 0
        %1094 = vmatpush2.bf16.msra.mxu0 0
        %1095 = vmatprep.subr.bf16.mxu0 0
        %1096 = vmatpush2.bf16.msra.mxu0 0
        %1097 = vmatprep.subr.bf16.mxu0 0
        %1098 = vmatpush2.bf16.msra.mxu0 0
        %1099 = vmatprep.subr.bf16.mxu0 0
        %1100 = vmatpush2.bf16.msra.mxu0 0
        %1101 = vmatprep.subr.bf16.mxu0 0
        %1102 = vmatpush2.bf16.msra.mxu0 0
        %1103 = vmatprep.subr.bf16.mxu0 0
        %1104 = vmatpush2.bf16.msra.mxu0 0
        %1105 = vmatprep.subr.bf16.mxu0 0
        %1106 = vmatpush2.bf16.msra.mxu0 0
        %1107 = vmatprep.subr.bf16.mxu0 0
        %1108 = vmatpush2.bf16.msra.mxu0 0
        %1109 = vmatprep.mubr.bf16.mxu0 0
        %1110 = vmatmul.mubr.bf16.gmra.mxu0 %v1071
        %v1111 = vpop.f32.mrf.mxu0
        %v1112 = vadd.f32 0.0, %v1111
        %v1113 = vpop.f32.mrf.mxu0
        %v1114 = vpop.f32.mrf.mxu0
        %v1115 = vpop.f32.mrf.mxu0
        %1116 = vdwg.mxu0
        %v1117 = vmul.f32 %v1037, %v1060
        %s1118 = sld [smem:[#allocation4 + $0x1]]
        %v1119 = vstv %s1118
        %v1120 = vmul.f32 %v1117, %v1119
        %s1121 = sld [smem:[#allocation6 + $0x1]]
        %v1122 = vstv %s1121
        %v1123 = vadd.f32 %v1120, %v1122
        %v1124 = vpack.c.bf16 %v1123, %v1123
        %1126 = vrot.lane.b32.xlu0 %v1069, 64
        %v1127 = vpop.permute.xlu0 %1126
        %v1129 = vsel %vm322, %v1124, 0
        %v1132 = vsel %vm1073, %v1127, 0
        %1134 = vmatprep.subr.bf16.mxu0 0
        %1135 = vmatpush1.bf16.msra.mxu0 0
        %1136 = vmatprep.subr.bf16.mxu0 0
        %1137 = vmatpush1.bf16.msra.mxu0 0
        %1138 = vmatprep.subr.bf16.mxu0 0
        %1139 = vmatpush1.bf16.msra.mxu0 0
        %1140 = vmatprep.subr.bf16.mxu0 0
        %1141 = vmatpush1.bf16.msra.mxu0 0
        %1142 = vmatprep.subr.bf16.mxu0 0
        %1143 = vmatpush1.bf16.msra.mxu0 0
        %1144 = vmatprep.subr.bf16.mxu0 0
        %1145 = vmatpush1.bf16.msra.mxu0 0
        %1146 = vmatprep.subr.bf16.mxu0 0
        %1147 = vmatpush1.bf16.msra.mxu0 0
        %1148 = vmatprep.subr.bf16.mxu0 0
        %1149 = vmatpush1.bf16.msra.mxu0 %v1132
        %1150 = vmatprep.subr.bf16.mxu0 0
        %1151 = vmatpush2.bf16.msra.mxu0 0
        %1152 = vmatprep.subr.bf16.mxu0 0
        %1153 = vmatpush2.bf16.msra.mxu0 0
        %1154 = vmatprep.subr.bf16.mxu0 0
        %1155 = vmatpush2.bf16.msra.mxu0 0
        %1156 = vmatprep.subr.bf16.mxu0 0
        %1157 = vmatpush2.bf16.msra.mxu0 0
        %1158 = vmatprep.subr.bf16.mxu0 0
        %1159 = vmatpush2.bf16.msra.mxu0 0
        %1160 = vmatprep.subr.bf16.mxu0 0
        %1161 = vmatpush2.bf16.msra.mxu0 0
        %1162 = vmatprep.subr.bf16.mxu0 0
        %1163 = vmatpush2.bf16.msra.mxu0 0
        %1164 = vmatprep.subr.bf16.mxu0 0
        %1165 = vmatpush2.bf16.msra.mxu0 0
        %1166 = vmatprep.mubr.bf16.mxu0 0
        %1167 = vmatmul.mubr.bf16.gmra.mxu0 %v1129
        %v1168 = vpop.f32.mrf.mxu0
        %v1169 = vadd.f32 0.0, %v1168
        %v1170 = vpop.f32.mrf.mxu0
        %v1171 = vpop.f32.mrf.mxu0
        %v1172 = vpop.f32.mrf.mxu0
        %1173 = vdwg.mxu0
        %v1174 = vmul.f32 %v1040, %v1060
        %s1175 = sld [smem:[#allocation4 + $0x2]]
        %v1176 = vstv %s1175
        %v1177 = vmul.f32 %v1174, %v1176
        %s1178 = sld [smem:[#allocation6 + $0x2]]
        %v1179 = vstv %s1178
        %v1180 = vadd.f32 %v1177, %v1179
        %v1181 = vpack.c.bf16 %v1180, %v1180
        %v1182 = vpack.c.bf16 %v400, %v400
        %v1184 = vsel %vm322, %v1181, 0
        %v1187 = vsel %vm1073, %v1182, 0
        %1189 = vmatprep.subr.bf16.mxu0 0
        %1190 = vmatpush1.bf16.msra.mxu0 0
        %1191 = vmatprep.subr.bf16.mxu0 0
        %1192 = vmatpush1.bf16.msra.mxu0 0
        %1193 = vmatprep.subr.bf16.mxu0 0
        %1194 = vmatpush1.bf16.msra.mxu0 0
        %1195 = vmatprep.subr.bf16.mxu0 0
        %1196 = vmatpush1.bf16.msra.mxu0 0
        %1197 = vmatprep.subr.bf16.mxu0 0
        %1198 = vmatpush1.bf16.msra.mxu0 0
        %1199 = vmatprep.subr.bf16.mxu0 0
        %1200 = vmatpush1.bf16.msra.mxu0 0
        %1201 = vmatprep.subr.bf16.mxu0 0
        %1202 = vmatpush1.bf16.msra.mxu0 0
        %1203 = vmatprep.subr.bf16.mxu0 0
        %1204 = vmatpush1.bf16.msra.mxu0 %v1187
        %1205 = vmatprep.subr.bf16.mxu0 0
        %1206 = vmatpush2.bf16.msra.mxu0 0
        %1207 = vmatprep.subr.bf16.mxu0 0
        %1208 = vmatpush2.bf16.msra.mxu0 0
        %1209 = vmatprep.subr.bf16.mxu0 0
        %1210 = vmatpush2.bf16.msra.mxu0 0
        %1211 = vmatprep.subr.bf16.mxu0 0
        %1212 = vmatpush2.bf16.msra.mxu0 0
        %1213 = vmatprep.subr.bf16.mxu0 0
        %1214 = vmatpush2.bf16.msra.mxu0 0
        %1215 = vmatprep.subr.bf16.mxu0 0
        %1216 = vmatpush2.bf16.msra.mxu0 0
        %1217 = vmatprep.subr.bf16.mxu0 0
        %1218 = vmatpush2.bf16.msra.mxu0 0
        %1219 = vmatprep.subr.bf16.mxu0 0
        %1220 = vmatpush2.bf16.msra.mxu0 0
        %1221 = vmatprep.mubr.bf16.mxu0 0
        %1222 = vmatmul.mubr.bf16.gmra.mxu0 %v1184
        %v1223 = vpop.f32.mrf.mxu0
        %v1224 = vadd.f32 0.0, %v1223
        %v1225 = vpop.f32.mrf.mxu0
        %v1226 = vpop.f32.mrf.mxu0
        %v1227 = vpop.f32.mrf.mxu0
        %1228 = vdwg.mxu0
        %v1229 = vmul.f32 %v1043, %v1060
        %s1230 = sld [smem:[#allocation4 + $0x3]]
        %v1231 = vstv %s1230
        %v1232 = vmul.f32 %v1229, %v1231
        %s1233 = sld [smem:[#allocation6 + $0x3]]
        %v1234 = vstv %s1233
        %v1235 = vadd.f32 %v1232, %v1234
        %v1236 = vpack.c.bf16 %v1235, %v1235
        %1238 = vrot.lane.b32.xlu0 %v1182, 64
        %v1239 = vpop.permute.xlu0 %1238
        %v1241 = vsel %vm322, %v1236, 0
        %v1244 = vsel %vm1073, %v1239, 0
        %1246 = vmatprep.subr.bf16.mxu0 0
        %1247 = vmatpush1.bf16.msra.mxu0 0
        %1248 = vmatprep.subr.bf16.mxu0 0
        %1249 = vmatpush1.bf16.msra.mxu0 0
        %1250 = vmatprep.subr.bf16.mxu0 0
        %1251 = vmatpush1.bf16.msra.mxu0 0
        %1252 = vmatprep.subr.bf16.mxu0 0
        %1253 = vmatpush1.bf16.msra.mxu0 0
        %1254 = vmatprep.subr.bf16.mxu0 0
        %1255 = vmatpush1.bf16.msra.mxu0 0
        %1256 = vmatprep.subr.bf16.mxu0 0
        %1257 = vmatpush1.bf16.msra.mxu0 0
        %1258 = vmatprep.subr.bf16.mxu0 0
        %1259 = vmatpush1.bf16.msra.mxu0 0
        %1260 = vmatprep.subr.bf16.mxu0 0
        %1261 = vmatpush1.bf16.msra.mxu0 %v1244
        %1262 = vmatprep.subr.bf16.mxu0 0
        %1263 = vmatpush2.bf16.msra.mxu0 0
        %1264 = vmatprep.subr.bf16.mxu0 0
        %1265 = vmatpush2.bf16.msra.mxu0 0
        %1266 = vmatprep.subr.bf16.mxu0 0
        %1267 = vmatpush2.bf16.msra.mxu0 0
        %1268 = vmatprep.subr.bf16.mxu0 0
        %1269 = vmatpush2.bf16.msra.mxu0 0
        %1270 = vmatprep.subr.bf16.mxu0 0
        %1271 = vmatpush2.bf16.msra.mxu0 0
        %1272 = vmatprep.subr.bf16.mxu0 0
        %1273 = vmatpush2.bf16.msra.mxu0 0
        %1274 = vmatprep.subr.bf16.mxu0 0
        %1275 = vmatpush2.bf16.msra.mxu0 0
        %1276 = vmatprep.subr.bf16.mxu0 0
        %1277 = vmatpush2.bf16.msra.mxu0 0
        %1278 = vmatprep.mubr.bf16.mxu0 0
        %1279 = vmatmul.mubr.bf16.gmra.mxu0 %v1241
        %v1280 = vpop.f32.mrf.mxu0
        %v1281 = vadd.f32 0.0, %v1280
        %v1282 = vpop.f32.mrf.mxu0
        %v1283 = vpop.f32.mrf.mxu0
        %v1284 = vpop.f32.mrf.mxu0
        %1285 = vdwg.mxu0
        %v1286 = vmul.f32 %v1046, %v1060
        %s1287 = sld [smem:[#allocation4 + $0x4]]
        %v1288 = vstv %s1287
        %v1289 = vmul.f32 %v1286, %v1288
        %s1290 = sld [smem:[#allocation6 + $0x4]]
        %v1291 = vstv %s1290
        %v1292 = vadd.f32 %v1289, %v1291
        %v1293 = vpack.c.bf16 %v1292, %v1292
        %v1294 = vpack.c.bf16 %v527, %v527
        %v1296 = vsel %vm322, %v1293, 0
        %v1299 = vsel %vm1073, %v1294, 0
        %1301 = vmatprep.subr.bf16.mxu0 0
        %1302 = vmatpush1.bf16.msra.mxu0 0
        %1303 = vmatprep.subr.bf16.mxu0 0
        %1304 = vmatpush1.bf16.msra.mxu0 0
        %1305 = vmatprep.subr.bf16.mxu0 0
        %1306 = vmatpush1.bf16.msra.mxu0 0
        %1307 = vmatprep.subr.bf16.mxu0 0
        %1308 = vmatpush1.bf16.msra.mxu0 0
        %1309 = vmatprep.subr.bf16.mxu0 0
        %1310 = vmatpush1.bf16.msra.mxu0 0
        %1311 = vmatprep.subr.bf16.mxu0 0
        %1312 = vmatpush1.bf16.msra.mxu0 0
        %1313 = vmatprep.subr.bf16.mxu0 0
        %1314 = vmatpush1.bf16.msra.mxu0 0
        %1315 = vmatprep.subr.bf16.mxu0 0
        %1316 = vmatpush1.bf16.msra.mxu0 %v1299
        %1317 = vmatprep.subr.bf16.mxu0 0
        %1318 = vmatpush2.bf16.msra.mxu0 0
        %1319 = vmatprep.subr.bf16.mxu0 0
        %1320 = vmatpush2.bf16.msra.mxu0 0
        %1321 = vmatprep.subr.bf16.mxu0 0
        %1322 = vmatpush2.bf16.msra.mxu0 0
        %1323 = vmatprep.subr.bf16.mxu0 0
        %1324 = vmatpush2.bf16.msra.mxu0 0
        %1325 = vmatprep.subr.bf16.mxu0 0
        %1326 = vmatpush2.bf16.msra.mxu0 0
        %1327 = vmatprep.subr.bf16.mxu0 0
        %1328 = vmatpush2.bf16.msra.mxu0 0
        %1329 = vmatprep.subr.bf16.mxu0 0
        %1330 = vmatpush2.bf16.msra.mxu0 0
        %1331 = vmatprep.subr.bf16.mxu0 0
        %1332 = vmatpush2.bf16.msra.mxu0 0
        %1333 = vmatprep.mubr.bf16.mxu0 0
        %1334 = vmatmul.mubr.bf16.gmra.mxu0 %v1296
        %v1335 = vpop.f32.mrf.mxu0
        %v1336 = vadd.f32 0.0, %v1335
        %v1337 = vpop.f32.mrf.mxu0
        %v1338 = vpop.f32.mrf.mxu0
        %v1339 = vpop.f32.mrf.mxu0
        %1340 = vdwg.mxu0
        %v1341 = vmul.f32 %v1049, %v1060
        %s1342 = sld [smem:[#allocation4 + $0x5]]
        %v1343 = vstv %s1342
        %v1344 = vmul.f32 %v1341, %v1343
        %s1345 = sld [smem:[#allocation6 + $0x5]]
        %v1346 = vstv %s1345
        %v1347 = vadd.f32 %v1344, %v1346
        %v1348 = vpack.c.bf16 %v1347, %v1347
        %1350 = vrot.lane.b32.xlu0 %v1294, 64
        %v1351 = vpop.permute.xlu0 %1350
        %v1353 = vsel %vm322, %v1348, 0
        %v1356 = vsel %vm1073, %v1351, 0
        %1358 = vmatprep.subr.bf16.mxu0 0
        %1359 = vmatpush1.bf16.msra.mxu0 0
        %1360 = vmatprep.subr.bf16.mxu0 0
        %1361 = vmatpush1.bf16.msra.mxu0 0
        %1362 = vmatprep.subr.bf16.mxu0 0
        %1363 = vmatpush1.bf16.msra.mxu0 0
        %1364 = vmatprep.subr.bf16.mxu0 0
        %1365 = vmatpush1.bf16.msra.mxu0 0
        %1366 = vmatprep.subr.bf16.mxu0 0
        %1367 = vmatpush1.bf16.msra.mxu0 0
        %1368 = vmatprep.subr.bf16.mxu0 0
        %1369 = vmatpush1.bf16.msra.mxu0 0
        %1370 = vmatprep.subr.bf16.mxu0 0
        %1371 = vmatpush1.bf16.msra.mxu0 0
        %1372 = vmatprep.subr.bf16.mxu0 0
        %1373 = vmatpush1.bf16.msra.mxu0 %v1356
        %1374 = vmatprep.subr.bf16.mxu0 0
        %1375 = vmatpush2.bf16.msra.mxu0 0
        %1376 = vmatprep.subr.bf16.mxu0 0
        %1377 = vmatpush2.bf16.msra.mxu0 0
        %1378 = vmatprep.subr.bf16.mxu0 0
        %1379 = vmatpush2.bf16.msra.mxu0 0
        %1380 = vmatprep.subr.bf16.mxu0 0
        %1381 = vmatpush2.bf16.msra.mxu0 0
        %1382 = vmatprep.subr.bf16.mxu0 0
        %1383 = vmatpush2.bf16.msra.mxu0 0
        %1384 = vmatprep.subr.bf16.mxu0 0
        %1385 = vmatpush2.bf16.msra.mxu0 0
        %1386 = vmatprep.subr.bf16.mxu0 0
        %1387 = vmatpush2.bf16.msra.mxu0 0
        %1388 = vmatprep.subr.bf16.mxu0 0
        %1389 = vmatpush2.bf16.msra.mxu0 0
        %1390 = vmatprep.mubr.bf16.mxu0 0
        %1391 = vmatmul.mubr.bf16.gmra.mxu0 %v1353
        %v1392 = vpop.f32.mrf.mxu0
        %v1393 = vadd.f32 0.0, %v1392
        %v1394 = vpop.f32.mrf.mxu0
        %v1395 = vpop.f32.mrf.mxu0
        %v1396 = vpop.f32.mrf.mxu0
        %1397 = vdwg.mxu0
        %v1398 = vmul.f32 %v1052, %v1060
        %s1399 = sld [smem:[#allocation4 + $0x6]]
        %v1400 = vstv %s1399
        %v1401 = vmul.f32 %v1398, %v1400
        %s1402 = sld [smem:[#allocation6 + $0x6]]
        %v1403 = vstv %s1402
        %v1404 = vadd.f32 %v1401, %v1403
        %v1405 = vpack.c.bf16 %v1404, %v1404
        %v1406 = vpack.c.bf16 %v654, %v654
        %v1408 = vsel %vm322, %v1405, 0
        %v1411 = vsel %vm1073, %v1406, 0
        %1413 = vmatprep.subr.bf16.mxu0 0
        %1414 = vmatpush1.bf16.msra.mxu0 0
        %1415 = vmatprep.subr.bf16.mxu0 0
        %1416 = vmatpush1.bf16.msra.mxu0 0
        %1417 = vmatprep.subr.bf16.mxu0 0
        %1418 = vmatpush1.bf16.msra.mxu0 0
        %1419 = vmatprep.subr.bf16.mxu0 0
        %1420 = vmatpush1.bf16.msra.mxu0 0
        %1421 = vmatprep.subr.bf16.mxu0 0
        %1422 = vmatpush1.bf16.msra.mxu0 0
        %1423 = vmatprep.subr.bf16.mxu0 0
        %1424 = vmatpush1.bf16.msra.mxu0 0
        %1425 = vmatprep.subr.bf16.mxu0 0
        %1426 = vmatpush1.bf16.msra.mxu0 0
        %1427 = vmatprep.subr.bf16.mxu0 0
        %1428 = vmatpush1.bf16.msra.mxu0 %v1411
        %1429 = vmatprep.subr.bf16.mxu0 0
        %1430 = vmatpush2.bf16.msra.mxu0 0
        %1431 = vmatprep.subr.bf16.mxu0 0
        %1432 = vmatpush2.bf16.msra.mxu0 0
        %1433 = vmatprep.subr.bf16.mxu0 0
        %1434 = vmatpush2.bf16.msra.mxu0 0
        %1435 = vmatprep.subr.bf16.mxu0 0
        %1436 = vmatpush2.bf16.msra.mxu0 0
        %1437 = vmatprep.subr.bf16.mxu0 0
        %1438 = vmatpush2.bf16.msra.mxu0 0
        %1439 = vmatprep.subr.bf16.mxu0 0
        %1440 = vmatpush2.bf16.msra.mxu0 0
        %1441 = vmatprep.subr.bf16.mxu0 0
        %1442 = vmatpush2.bf16.msra.mxu0 0
        %1443 = vmatprep.subr.bf16.mxu0 0
        %1444 = vmatpush2.bf16.msra.mxu0 0
        %1445 = vmatprep.mubr.bf16.mxu0 0
        %1446 = vmatmul.mubr.bf16.gmra.mxu0 %v1408
        %v1447 = vpop.f32.mrf.mxu0
        %v1448 = vadd.f32 0.0, %v1447
        %v1449 = vpop.f32.mrf.mxu0
        %v1450 = vpop.f32.mrf.mxu0
        %v1451 = vpop.f32.mrf.mxu0
        %1452 = vdwg.mxu0
        %v1453 = vmul.f32 %v1055, %v1060
        %s1454 = sld [smem:[#allocation4 + $0x7]]
        %v1455 = vstv %s1454
        %v1456 = vmul.f32 %v1453, %v1455
        %s1457 = sld [smem:[#allocation6 + $0x7]]
        %v1458 = vstv %s1457
        %v1459 = vadd.f32 %v1456, %v1458
        %v1460 = vpack.c.bf16 %v1459, %v1459
        %1462 = vrot.lane.b32.xlu0 %v1406, 64
        %v1463 = vpop.permute.xlu0 %1462
        %v1465 = vsel %vm322, %v1460, 0
        %v1468 = vsel %vm1073, %v1463, 0
        %1470 = vmatprep.subr.bf16.mxu0 0
        %1471 = vmatpush1.bf16.msra.mxu0 0
        %1472 = vmatprep.subr.bf16.mxu0 0
        %1473 = vmatpush1.bf16.msra.mxu0 0
        %1474 = vmatprep.subr.bf16.mxu0 0
        %1475 = vmatpush1.bf16.msra.mxu0 0
        %1476 = vmatprep.subr.bf16.mxu0 0
        %1477 = vmatpush1.bf16.msra.mxu0 0
        %1478 = vmatprep.subr.bf16.mxu0 0
        %1479 = vmatpush1.bf16.msra.mxu0 0
        %1480 = vmatprep.subr.bf16.mxu0 0
        %1481 = vmatpush1.bf16.msra.mxu0 0
        %1482 = vmatprep.subr.bf16.mxu0 0
        %1483 = vmatpush1.bf16.msra.mxu0 0
        %1484 = vmatprep.subr.bf16.mxu0 0
        %1485 = vmatpush1.bf16.msra.mxu0 %v1468
        %1486 = vmatprep.subr.bf16.mxu0 0
        %1487 = vmatpush2.bf16.msra.mxu0 0
        %1488 = vmatprep.subr.bf16.mxu0 0
        %1489 = vmatpush2.bf16.msra.mxu0 0
        %1490 = vmatprep.subr.bf16.mxu0 0
        %1491 = vmatpush2.bf16.msra.mxu0 0
        %1492 = vmatprep.subr.bf16.mxu0 0
        %1493 = vmatpush2.bf16.msra.mxu0 0
        %1494 = vmatprep.subr.bf16.mxu0 0
        %1495 = vmatpush2.bf16.msra.mxu0 0
        %1496 = vmatprep.subr.bf16.mxu0 0
        %1497 = vmatpush2.bf16.msra.mxu0 0
        %1498 = vmatprep.subr.bf16.mxu0 0
        %1499 = vmatpush2.bf16.msra.mxu0 0
        %1500 = vmatprep.subr.bf16.mxu0 0
        %1501 = vmatpush2.bf16.msra.mxu0 0
        %1502 = vmatprep.mubr.bf16.mxu0 0
        %1503 = vmatmul.mubr.bf16.gmra.mxu0 %v1465
        %v1504 = vpop.f32.mrf.mxu0
        %v1505 = vadd.f32 0.0, %v1504
        %v1506 = vpop.f32.mrf.mxu0
        %v1507 = vpop.f32.mrf.mxu0
        %v1508 = vpop.f32.mrf.mxu0
        %1509 = vdwg.mxu0
        %1511 = vrot.lane.b32.xlu0 %v1169, 64
        %v1512 = vpop.permute.xlu0 %1511
        %1515 = vrot.lane.b32.xlu0 %v1281, 64
        %v1516 = vpop.permute.xlu0 %1515
        %1519 = vrot.lane.b32.xlu0 %v1393, 64
        %v1520 = vpop.permute.xlu0 %1519
        %1523 = vrot.lane.b32.xlu0 %v1505, 64
        %v1524 = vpop.permute.xlu0 %1523
        %v1526 = vsel %vm274, %v1112, %v1512
        %v1527 = vsel %vm274, %v1224, %v1516
        %v1528 = vsel %vm274, %v1336, %v1520
        %v1529 = vsel %vm274, %v1448, %v1524
        %v1530 = vpack.c.bf16 %v1526, %v1526
        %v1531 = vpack.c.bf16 %v1527, %v1527
        %v1532 = vpack.c.bf16 %v1528, %v1528
        %v1533 = vpack.c.bf16 %v1529, %v1529
        %v1538 = vunpack.c.l.b16 %v1530
        %v1539 = vunpack.c.l.b16 %v1531
        %v1540 = vunpack.c.l.b16 %v1532
        %v1541 = vunpack.c.l.b16 %v1533
        %v1542 = vpack.c.b16 %v1539, %v1538
        %v1543 = vpack.c.b16 %v1541, %v1540
        %1546 = vst [vmem:[%s261] sm:$0xff] %v1542
        %1547 = vst [vmem:[%s261 + $0x8] sm:$0xff] %v1543
        %p1548 = scmp.lt.s32.totalorder %s21, 1
        %s1549 = scalar_select %p1548, %s21, 1
        %p1550 = scmp.lt.s32.totalorder %s22, 0
        %s1551 = scalar_select %p1550, %s22, 0
        %s1552 = smul.addr %s1551, 4
        %s1553 = smul.addr %s1549, 4
        %s1554 = sadd.s32 %s1552, %s1553
        %s1555 = smul.addr %s1554, 4
        %s1556 = scalar_lea.vmem %s4, %s1555
        // Predicated region
        $region49: #{transformer_encoder.16} parent=35 // pred_check
          %p1557 = pneg %p138
        $region50: #{transformer_encoder.16} parent=35 // pred_check_branch
          %1559 = sbr.rel (%p1557) target = $region52
        $region51: #{transformer_encoder.16} parent=35 // pred_region
          _
        $region52: #{transformer_encoder.16} parent=35 // pred_fallthru
          _
      $region36: #{transformer_encoder.16} parent=5 // pred_fallthru
        _
      %p1560 = scmp.le.s32.totalorder 2, %s12
      // Predicated region
      $region53: #{transformer_encoder.16} parent=5 // pred_check
        %p1561 = pneg %p1560
      $region54: #{transformer_encoder.16} parent=5 // pred_check_branch
        %1563 = sbr.rel (%p1561) target = $region56
      $region55: #{transformer_encoder.16} parent=5 // pred_region
        %s1564 = ssub.s32 %s12, 2
        // Predicated region
        $region57: #{transformer_encoder.16} parent=55 // pred_check
          %p1565 = pneg %p144
        $region58: #{transformer_encoder.16} parent=55 // pred_check_branch
          %1567 = sbr.rel (%p1565) target = $region60
        $region59: #{transformer_encoder.16} parent=55 // pred_region
          %p1568 = scmp.lt.s32.totalorder %s23, 1
          %s1569 = scalar_select %p1568, %s23, 1
          %p1570 = scmp.lt.s32.totalorder %s24, 0
          %s1571 = scalar_select %p1570, %s24, 0
          %s1572 = smul.addr %s1571, 4
          %s1573 = smul.addr %s1569, 4
          %s1574 = sadd.s32 %s1572, %s1573
          %s1575 = smul.addr %s1574, 4
          %s1576 = scalar_lea.vmem %s4, %s1575
        $region60: #{transformer_encoder.16} parent=55 // pred_fallthru
          _
      $region56: #{transformer_encoder.16} parent=5 // pred_fallthru
        _
    $region6: #{transformer_encoder.16} parent=1 // loop_footer
      %s16 = sadd.s32 1, %s12
    $region7: #{transformer_encoder.16} parent=1 // loop_footer_branch
      %11 = sbr.rel target = $region3
    $region8: #{transformer_encoder.16} parent=1 // loop_exit
      _
    %1577 = vsyncpa [#allocation3], 1
    %s1578 = scalar_lea.sflag [#allocation3], 1
    %1579 = vsyncpa %s1578, 1
    %1580 = vsyncpa [#allocation5], 1

// kernel: transformer_encoder.21
$region0: #{transformer_encoder.21}
  #allocation0 [shape = 'u32[]', space=smem, size = 0x4, offset = 0x4, fixed_abs, tag = 'smem constant byte address 0x4 - core index']
  #allocation1 [shape = 'u32[144,128]{1,0:T(1,128)}', space=vmem, size = 0x12000, scoped, tag = 'internal scratch']
  %s0 = inlined_call_operand.vmem [shape: f32[16,32], index: 0, kind: input, shape index: {}]
  %s1 = inlined_call_operand.vmem [shape: f32[1,32], index: 1, kind: input, shape index: {}]
  %s2 = inlined_call_operand.vmem [shape: f32[1,32], index: 2, kind: input, shape index: {}]
  %s3 = inlined_call_operand.vmem [shape: bf16[32,3072], index: 3, kind: input, shape index: {}]
  %s4 = inlined_call_operand.vmem [shape: f32[16,3072], index: 4, kind: output, shape index: {}]
  %s5 = sld [smem:[#allocation0]]
  $region91: #{transformer_encoder.21} parent=0
    _
  %s7 = ssub.s32 1, %s5
  %s8 = scalar_select 0, %s7, %s5
  $region1: #{transformer_encoder.21} parent=0
    #allocation2 [shape = 'u8[65536]{0}', space=vmem, size = 0x10000, scoped, tag = 'input window, operand 3']
    #allocation3 [shape = 'u8[65536]{0}', space=vmem, size = 0x10000, scoped, tag = 'output window, operand 0']
    loop: start=0, step=1, limit=8
    $region2: #{transformer_encoder.21} parent=1 // loop_pre_header
      _
    $region3: #{transformer_encoder.21} parent=1 // loop_header
      %s10 = sphi 0, %s14
      %p11 = scmp.ge.s32.totalorder %s10, 8
      %s17 = sphi 0, %s29
      %s18 = sphi 0, %s25
      %s19 = sphi 0, %s17
      %s20 = sphi 0, %s18
      %s21 = sphi 0, %s19
      %s22 = sphi 0, %s20
      %s32 = sphi 0, %s34
      %s35 = sphi 0, %s32
      %s36 = sphi 0, %s35
      %s52 = sphi 0, %s36
      %s56 = sphi 0, %s56
      %s58 = sphi 0, %s56
      %s59 = sphi 0, %s58
      %s73 = sphi 0, %s59
      %s77 = sphi 0, %s77
      %s79 = sphi 0, %s77
      %s80 = sphi 0, %s79
      %s94 = sphi 0, %s80
      %s100 = sphi 0, %s102
      %s103 = sphi 0, %s100
      %s104 = sphi 0, %s103
      %s120 = sphi 0, %s104
      %s128 = sphi 0, %s130
      %s131 = sphi 0, %s128
      %s132 = sphi 0, %s131
      %s148 = sphi 0, %s132
    $region4: #{transformer_encoder.21} parent=1 // loop_header_branch
      %13 = sbr.rel (%p11) target = $region8
    $region5: #{transformer_encoder.21} parent=1 // loop_body
      %s15 = ssub.s32 %s10, 1
      %s16 = ssub.s32 %s10, 2
      %s23 = sadd.s32 1, %s18
      %p24 = scmp.ge.s32.totalorder %s23, 6
      %s25 = scalar_select %p24, 0, %s23
      %s26 = sadd.s32 1, %s17
      %s27 = scalar_select %p24, %s26, %s17
      %p28 = scmp.ge.s32.totalorder %s27, 1
      %s29 = scalar_select %p28, 0, %s27
      %s30 = ssub.s32 %s17, %s29
      %p31 = scmp.eq.s32.totalorder %s30, 0
      %s33 = sadd.s32 %s32, 1
      %s34 = scalar_select %p31, %s32, %s33
      %p37 = pneg %p31
      %p38 = scmp.eq.s32.totalorder %s10, 5
      %p39 = por %p37, %p38
      %p40 = scmp.ne.s32.totalorder %s32, %s35
      %p41 = scmp.eq.s32.totalorder %s10, 0
      %p42 = por %p40, %p41
      %p43 = scmp.ne.s32.totalorder %s32, %s35
      %p44 = scmp.eq.s32.totalorder %s15, 5
      %p45 = por %p43, %p44
      %p46 = scmp.ne.s32.totalorder %s35, %s36
      %p47 = scmp.eq.s32.totalorder %s15, 0
      %p48 = por %p46, %p47
      %p49 = scmp.ne.s32.totalorder %s35, %s36
      %p50 = scmp.eq.s32.totalorder %s16, 5
      %p51 = por %p49, %p50
      %p53 = scmp.ne.s32.totalorder %s36, %s52
      %p54 = scmp.eq.s32.totalorder %s16, 0
      %p55 = por %p53, %p54
      %s57 = sadd.s32 %s56, 1
      %p60 = scmp.eq.s32.totalorder %s10, 5
      %p61 = scmp.ne.s32.totalorder %s56, %s58
      %p62 = scmp.eq.s32.totalorder %s10, 0
      %p63 = por %p61, %p62
      %p64 = scmp.ne.s32.totalorder %s56, %s58
      %p65 = scmp.eq.s32.totalorder %s15, 5
      %p66 = por %p64, %p65
      %p67 = scmp.ne.s32.totalorder %s58, %s59
      %p68 = scmp.eq.s32.totalorder %s15, 0
      %p69 = por %p67, %p68
      %p70 = scmp.ne.s32.totalorder %s58, %s59
      %p71 = scmp.eq.s32.totalorder %s16, 5
      %p72 = por %p70, %p71
      %p74 = scmp.ne.s32.totalorder %s59, %s73
      %p75 = scmp.eq.s32.totalorder %s16, 0
      %p76 = por %p74, %p75
      %s78 = sadd.s32 %s77, 1
      %p81 = scmp.eq.s32.totalorder %s10, 5
      %p82 = scmp.ne.s32.totalorder %s77, %s79
      %p83 = scmp.eq.s32.totalorder %s10, 0
      %p84 = por %p82, %p83
      %p85 = scmp.ne.s32.totalorder %s77, %s79
      %p86 = scmp.eq.s32.totalorder %s15, 5
      %p87 = por %p85, %p86
      %p88 = scmp.ne.s32.totalorder %s79, %s80
      %p89 = scmp.eq.s32.totalorder %s15, 0
      %p90 = por %p88, %p89
      %p91 = scmp.ne.s32.totalorder %s79, %s80
      %p92 = scmp.eq.s32.totalorder %s16, 5
      %p93 = por %p91, %p92
      %p95 = scmp.ne.s32.totalorder %s80, %s94
      %p96 = scmp.eq.s32.totalorder %s16, 0
      %p97 = por %p95, %p96
      %s98 = ssub.s32 %s18, %s25
      %p99 = scmp.eq.s32.totalorder %s98, 0
      %s101 = sadd.s32 %s100, 1
      %s102 = scalar_select %p99, %s100, %s101
      %p105 = pneg %p99
      %p106 = scmp.eq.s32.totalorder %s10, 5
      %p107 = por %p105, %p106
      %p108 = scmp.ne.s32.totalorder %s100, %s103
      %p109 = scmp.eq.s32.totalorder %s10, 0
      %p110 = por %p108, %p109
      %p111 = scmp.ne.s32.totalorder %s100, %s103
      %p112 = scmp.eq.s32.totalorder %s15, 5
      %p113 = por %p111, %p112
      %p114 = scmp.ne.s32.totalorder %s103, %s104
      %p115 = scmp.eq.s32.totalorder %s15, 0
      %p116 = por %p114, %p115
      %p117 = scmp.ne.s32.totalorder %s103, %s104
      %p118 = scmp.eq.s32.totalorder %s16, 5
      %p119 = por %p117, %p118
      %p121 = scmp.ne.s32.totalorder %s104, %s120
      %p122 = scmp.eq.s32.totalorder %s16, 0
      %p123 = por %p121, %p122
      %s124 = ssub.s32 %s17, %s29
      %s125 = ssub.s32 %s18, %s25
      %s126 = sor.u32 %s124, %s125
      %p127 = scmp.eq.s32.totalorder %s126, 0
      %s129 = sadd.s32 %s128, 1
      %s130 = scalar_select %p127, %s128, %s129
      %p133 = pneg %p127
      %p134 = scmp.eq.s32.totalorder %s10, 5
      %p135 = por %p133, %p134
      %p136 = scmp.ne.s32.totalorder %s128, %s131
      %p137 = scmp.eq.s32.totalorder %s10, 0
      %p138 = por %p136, %p137
      %p139 = scmp.ne.s32.totalorder %s128, %s131
      %p140 = scmp.eq.s32.totalorder %s15, 5
      %p141 = por %p139, %p140
      %p142 = scmp.ne.s32.totalorder %s131, %s132
      %p143 = scmp.eq.s32.totalorder %s15, 0
      %p144 = por %p142, %p143
      %p145 = scmp.ne.s32.totalorder %s131, %s132
      %p146 = scmp.eq.s32.totalorder %s16, 5
      %p147 = por %p145, %p146
      %p149 = scmp.ne.s32.totalorder %s132, %s148
      %p150 = scmp.eq.s32.totalorder %s16, 0
      %p151 = por %p149, %p150
      %p152 = scmp.le.s32.totalorder 1, %s10
      %p153 = scmp.lt.s32.totalorder %s10, 7
      %p154 = pnand %p152, %p153
      %p155 = pneg %p154
      // Predicated region
      $region9: #{transformer_encoder.21} parent=5 // pred_check
        _
      $region10: #{transformer_encoder.21} parent=5 // pred_check_branch
        %157 = sbr.rel (%p154) target = $region12
      $region11: #{transformer_encoder.21} parent=5 // pred_region
        %s158 = ssub.s32 %s10, 1
        // Predicated region
        $region13: #{transformer_encoder.21} parent=11 // pred_check
          %p159 = pneg %p48
        $region14: #{transformer_encoder.21} parent=11 // pred_check_branch
          %161 = sbr.rel (%p159) target = $region16
        $region15: #{transformer_encoder.21} parent=11 // pred_region
          %s162 = smul.u32 2, %s19
          %p163 = scmp.lt.s32.totalorder %s162, 1
          %s164 = scalar_select %p163, %s162, 1
          %s165 = smul.addr %s164, 8
          %s166 = scalar_lea.vmem %s0, %s165
          %s167 = smul.u32 2, %s19
        $region16: #{transformer_encoder.21} parent=11 // pred_fallthru
          _
        // Predicated region
        $region17: #{transformer_encoder.21} parent=11 // pred_check
          %p168 = pneg %p69
        $region18: #{transformer_encoder.21} parent=11 // pred_check_branch
          %170 = sbr.rel (%p168) target = $region20
        $region19: #{transformer_encoder.21} parent=11 // pred_region
          _
        $region20: #{transformer_encoder.21} parent=11 // pred_fallthru
          _
        // Predicated region
        $region21: #{transformer_encoder.21} parent=11 // pred_check
          %p171 = pneg %p90
        $region22: #{transformer_encoder.21} parent=11 // pred_check_branch
          %173 = sbr.rel (%p171) target = $region24
        $region23: #{transformer_encoder.21} parent=11 // pred_region
          _
        $region24: #{transformer_encoder.21} parent=11 // pred_fallthru
          _
      $region12: #{transformer_encoder.21} parent=5 // pred_fallthru
        _
      %p174 = scmp.lt.s32.totalorder %s10, 6
      // Predicated region
      $region25: #{transformer_encoder.21} parent=5 // pred_check
        %p175 = pneg %p174
      $region26: #{transformer_encoder.21} parent=5 // pred_check_branch
        %177 = sbr.rel (%p175) target = $region28
      $region27: #{transformer_encoder.21} parent=5 // pred_region
        // Predicated region
        $region29: #{transformer_encoder.21} parent=27 // pred_check
          %p178 = pneg %p110
        $region30: #{transformer_encoder.21} parent=27 // pred_check_branch
          %180 = sbr.rel (%p178) target = $region32
        $region31: #{transformer_encoder.21} parent=27 // pred_region
          %s181 = sand.u32 %s100, 1
          %s182 = sand.u32 %s100, 1
          %s183 = smul.addr %s182, 64
          %s184 = scalar_lea.vmem [#allocation2], %s183
          %s185 = smul.u32 4, %s18
          %s186 = smul.addr %s185, 4
          %s187 = scalar_lea.vmem %s3, %s186
          // Predicated region
          $region33: #{transformer_encoder.21} parent=31 // pred_check
            _
          $region34: #{transformer_encoder.21} parent=31 // pred_check_branch
            %189 = sbr.rel (0) target = $region36
          $region35: #{transformer_encoder.21} parent=31 // pred_region
            // Predicated region
            $region37: #{transformer_encoder.21} parent=35 // pred_check
              _
            $region38: #{transformer_encoder.21} parent=35 // pred_check_branch
              %191 = sbr.rel (0) target = $region40
            $region39: #{transformer_encoder.21} parent=35 // pred_region
              loop: start=0, step=1, limit=1
              $region41: #{transformer_encoder.21} parent=39 // loop_pre_header
                _
              $region42: #{transformer_encoder.21} parent=39 // loop_header
                %s193 = sphi 0, %s197
                %p194 = scmp.ge.s32.totalorder %s193, 1
                %s198 = sphi %s187, %s187
                %s199 = sphi %s184, %s184
              $region43: #{transformer_encoder.21} parent=39 // loop_header_branch
                %196 = sbr.rel (%p194) target = $region47
              $region44: #{transformer_encoder.21} parent=39 // loop_body
                %v200 = vld [vmem:[%s198] sm:$0xff]
                %201 = vst [vmem:[%s199] sm:$0xff] %v200
                %v202 = vld [vmem:[%s198 + $0x8] sm:$0xff]
                %203 = vst [vmem:[%s199 + $0x8] sm:$0xff] %v202
                %v204 = vld [vmem:[%s198 + $0x60] sm:$0xff]
                %205 = vst [vmem:[%s199 + $0x10] sm:$0xff] %v204
                %v206 = vld [vmem:[%s198 + $0x68] sm:$0xff]
                %207 = vst [vmem:[%s199 + $0x18] sm:$0xff] %v206
                %v208 = vld [vmem:[%s198 + $0xc0] sm:$0xff]
                %209 = vst [vmem:[%s199 + $0x20] sm:$0xff] %v208
                %v210 = vld [vmem:[%s198 + $0xc8] sm:$0xff]
                %211 = vst [vmem:[%s199 + $0x28] sm:$0xff] %v210
                %v212 = vld [vmem:[%s198 + $0x120] sm:$0xff]
                %213 = vst [vmem:[%s199 + $0x30] sm:$0xff] %v212
                %v214 = vld [vmem:[%s198 + $0x128] sm:$0xff]
                %215 = vst [vmem:[%s199 + $0x38] sm:$0xff] %v214
              $region45: #{transformer_encoder.21} parent=39 // loop_footer
                %s197 = sadd.s32 1, %s193
              $region46: #{transformer_encoder.21} parent=39 // loop_footer_branch
                %192 = sbr.rel target = $region42
              $region47: #{transformer_encoder.21} parent=39 // loop_exit
                _
            $region40: #{transformer_encoder.21} parent=35 // pred_fallthru
              _
            // Predicated region
            $region48: #{transformer_encoder.21} parent=35 // pred_check
              _
            $region49: #{transformer_encoder.21} parent=35 // pred_check_branch
              %217 = sbr.rel target = $region51
            $region50: #{transformer_encoder.21} parent=35 // pred_region
              _
            $region51: #{transformer_encoder.21} parent=35 // pred_fallthru
              _
          $region36: #{transformer_encoder.21} parent=31 // pred_fallthru
            _
          %218 = vnop
        $region32: #{transformer_encoder.21} parent=27 // pred_fallthru
          _
      $region28: #{transformer_encoder.21} parent=5 // pred_fallthru
        _
      %p219 = scmp.le.s32.totalorder 1, %s10
      %p220 = scmp.lt.s32.totalorder %s10, 7
      %p221 = pnand %p219, %p220
      %p222 = pneg %p221
      // Predicated region
      $region52: #{transformer_encoder.21} parent=5 // pred_check
        _
      $region53: #{transformer_encoder.21} parent=5 // pred_check_branch
        %224 = sbr.rel (%p221) target = $region55
      $region54: #{transformer_encoder.21} parent=5 // pred_region
        %s225 = ssub.s32 %s10, 1
        %s226 = sand.u32 %s103, 1
        %s227 = sand.u32 %s103, 1
        %s228 = smul.addr %s227, 64
        %s229 = scalar_lea.vmem [#allocation2], %s228
        // Predicated region
        $region56: #{transformer_encoder.21} parent=54 // pred_check
          %p230 = pneg %p116
        $region57: #{transformer_encoder.21} parent=54 // pred_check_branch
          %232 = sbr.rel (%p230) target = $region59
        $region58: #{transformer_encoder.21} parent=54 // pred_region
          _
        $region59: #{transformer_encoder.21} parent=54 // pred_fallthru
          _
        %s233 = smul.u32 2, %s19
        %p234 = scmp.lt.s32.totalorder %s233, 1
        %s235 = scalar_select %p234, %s233, 1
        %s236 = smul.addr %s235, 8
        %s237 = scalar_lea.vmem %s0, %s236
        %p238 = pneg %p48
        %p239 = pneg %p45
        %p240 = pneg %p69
        %p241 = pneg %p66
        %p242 = pneg %p90
        %p243 = pneg %p87
        %s244 = sand.u32 %s103, 1
        %s245 = sand.u32 %s103, 1
        %s246 = smul.addr %s245, 64
        %s247 = scalar_lea.vmem [#allocation2], %s246
        %p248 = pneg %p116
        %p249 = pneg %p113
        %p250 = pneg %p144
        %p251 = pneg %p141
        %s252 = sand.u32 %s131, 1
        %s253 = sand.u32 %s131, 1
        %s254 = smul.addr %s253, 64
        %s255 = scalar_lea.vmem [#allocation3], %s254
        %s256 = smul.u32 2, %s19
        %p257 = scmp.lt.s32.totalorder %s256, 1
        %s258 = scalar_select %p257, %s256, 1
        %s259 = smul.addr %s258, 8
        %s260 = scalar_lea.vmem %s0, %s259
        %s261 = smul.u32 2, %s19
        %s262 = smul.u32 4, %s20
        %s263 = smul.u32 2, %s19
        %s264 = smul.u32 4, %s20
        %v266 = vld [vmem:[%s260] sm:$0xff]
        %v267 = vld [vmem:[%s260 + $0x8] sm:$0xff]
        %vm268 = vcmask 261120
        %v269 = vsel %vm268, %v266, 0.0
        %270 = vadd.xlane.f32.xlu0 %v269
        %v271 = vpop.xlane.xlu0 %270
        %v272 = vsel %vm268, %v267, 0.0
        %273 = vadd.xlane.f32.xlu0 %v272
        %v274 = vpop.xlane.xlu0 %273
        %v275 = vrcp.pop 32.0
        %v276 = vmul.f32 %v271, %v275
        %v277 = vmul.f32 %v274, %v275
        %v278 = vsub.f32 %v266, %v276
        %v279 = vsub.f32 %v267, %v277
        %v280 = vmul.f32 %v278, %v278
        %v281 = vmul.f32 %v279, %v279
        %v282 = vsel %vm268, %v280, 0.0
        %283 = vadd.xlane.f32.xlu0 %v282
        %v284 = vpop.xlane.xlu0 %283
        %v285 = vsel %vm268, %v281, 0.0
        %286 = vadd.xlane.f32.xlu0 %v285
        %v287 = vpop.xlane.xlu0 %286
        %v288 = vmul.f32 %v284, %v275
        %v289 = vmul.f32 %v287, %v275
        %v290 = vadd.f32 %v288, 1e-05
        %v291 = vadd.f32 %v289, 1e-05
        %v292 = vrsqrt.pop %v290
        %v293 = vrsqrt.pop %v291
        %v294 = vmul.f32 %v278, %v292
        %v295 = vmul.f32 %v279, %v293
        %v296 = vld [vmem:[%s1] sm:$0x1]
        %v298 = vlaneseq
        %v299 = vshrl.u32 %v298, 7
        %v300 = vsub.s32 0, %v299
        %v301 = vrot.slane %v296, %v300
        %v303 = vmul.f32 %v294, %v301
        %v304 = vmul.f32 %v295, %v301
        %v305 = vld [vmem:[%s2] sm:$0x1]
        %v307 = vlaneseq
        %v308 = vshrl.u32 %v307, 7
        %v309 = vsub.s32 0, %v308
        %v310 = vrot.slane %v305, %v309
        %v312 = vadd.f32 %v303, %v310
        %v313 = vadd.f32 %v304, %v310
        %v314 = vpack.c.bf16 %v313, %v312
        %v315 = vld [vmem:[%s229] sm:$0xff]
        %v316 = vld [vmem:[%s229 + $0x8] sm:$0xff]
        %v317 = vld [vmem:[%s229 + $0x10] sm:$0xff]
        %v318 = vld [vmem:[%s229 + $0x18] sm:$0xff]
        %v319 = vld [vmem:[%s229 + $0x20] sm:$0xff]
        %v320 = vld [vmem:[%s229 + $0x28] sm:$0xff]
        %v321 = vld [vmem:[%s229 + $0x30] sm:$0xff]
        %v322 = vld [vmem:[%s229 + $0x38] sm:$0xff]
        %v331 = vunpack.c.l.b16 %v315
        %v332 = vunpack.c.h.b16 %v315
        %v333 = vunpack.c.l.b16 %v316
        %v334 = vunpack.c.h.b16 %v316
        %v335 = vunpack.c.l.b16 %v317
        %v336 = vunpack.c.h.b16 %v317
        %v337 = vunpack.c.l.b16 %v318
        %v338 = vunpack.c.h.b16 %v318
        %v339 = vunpack.c.l.b16 %v319
        %v340 = vunpack.c.h.b16 %v319
        %v341 = vunpack.c.l.b16 %v320
        %v342 = vunpack.c.h.b16 %v320
        %v343 = vunpack.c.l.b16 %v321
        %v344 = vunpack.c.h.b16 %v321
        %v345 = vunpack.c.l.b16 %v322
        %v346 = vunpack.c.h.b16 %v322
        %v347 = vpack.c.b16 %v335, %v331
        %v348 = vpack.c.b16 %v336, %v332
        %v349 = vpack.c.b16 %v337, %v333
        %v350 = vpack.c.b16 %v338, %v334
        %v351 = vpack.c.b16 %v343, %v339
        %v352 = vpack.c.b16 %v344, %v340
        %v353 = vpack.c.b16 %v345, %v341
        %v354 = vpack.c.b16 %v346, %v342
        %v364 = vsel %vm268, %v314, 0
        %366 = vmatprep.subr.bf16.mxu0 0
        %367 = vmatpush1.bf16.msra.mxu0 0
        %368 = vmatprep.subr.bf16.mxu0 0
        %369 = vmatpush1.bf16.msra.mxu0 0
        %370 = vmatprep.subr.bf16.mxu0 0
        %371 = vmatpush1.bf16.msra.mxu0 0
        %372 = vmatprep.subr.bf16.mxu0 0
        %373 = vmatpush1.bf16.msra.mxu0 0
        %374 = vmatprep.subr.bf16.mxu0 0
        %375 = vmatpush1.bf16.msra.mxu0 0
        %376 = vmatprep.subr.bf16.mxu0 0
        %377 = vmatpush1.bf16.msra.mxu0 0
        %378 = vmatprep.subr.bf16.mxu0 %v352
        %379 = vmatpush1.bf16.msra.mxu0 %v351
        %380 = vmatprep.subr.bf16.mxu0 %v348
        %381 = vmatpush1.bf16.msra.mxu0 %v347
        %382 = vmatprep.subr.bf16.mxu0 0
        %383 = vmatpush2.bf16.msra.mxu0 0
        %384 = vmatprep.subr.bf16.mxu0 0
        %385 = vmatpush2.bf16.msra.mxu0 0
        %386 = vmatprep.subr.bf16.mxu0 0
        %387 = vmatpush2.bf16.msra.mxu0 0
        %388 = vmatprep.subr.bf16.mxu0 0
        %389 = vmatpush2.bf16.msra.mxu0 0
        %390 = vmatprep.subr.bf16.mxu0 0
        %391 = vmatpush2.bf16.msra.mxu0 0
        %392 = vmatprep.subr.bf16.mxu0 0
        %393 = vmatpush2.bf16.msra.mxu0 0
        %394 = vmatprep.subr.bf16.mxu0 0
        %395 = vmatpush2.bf16.msra.mxu0 0
        %396 = vmatprep.subr.bf16.mxu0 0
        %397 = vmatpush2.bf16.msra.mxu0 0
        %398 = vmatprep.mubr.bf16.mxu0 0
        %399 = vmatmul.mubr.bf16.gmra.mxu0 %v364
        %v400 = vpop.f32.mrf.mxu0
        %v401 = vadd.f32 0.0, %v400
        %v402 = vpop.f32.mrf.mxu0
        %v403 = vadd.f32 0.0, %v402
        %v404 = vpop.f32.mrf.mxu0
        %v405 = vadd.f32 0.0, %v404
        %v406 = vpop.f32.mrf.mxu0
        %v407 = vadd.f32 0.0, %v406
        %408 = vdwg.mxu0
        %409 = vmatprep.subr.bf16.mxu0 0
        %410 = vmatpush1.bf16.msra.mxu0 0
        %411 = vmatprep.subr.bf16.mxu0 0
        %412 = vmatpush1.bf16.msra.mxu0 0
        %413 = vmatprep.subr.bf16.mxu0 0
        %414 = vmatpush1.bf16.msra.mxu0 0
        %415 = vmatprep.subr.bf16.mxu0 0
        %416 = vmatpush1.bf16.msra.mxu0 0
        %417 = vmatprep.subr.bf16.mxu0 0
        %418 = vmatpush1.bf16.msra.mxu0 0
        %419 = vmatprep.subr.bf16.mxu0 0
        %420 = vmatpush1.bf16.msra.mxu0 0
        %421 = vmatprep.subr.bf16.mxu0 %v354
        %422 = vmatpush1.bf16.msra.mxu0 %v353
        %423 = vmatprep.subr.bf16.mxu0 %v350
        %424 = vmatpush1.bf16.msra.mxu0 %v349
        %425 = vmatprep.subr.bf16.mxu0 0
        %426 = vmatpush2.bf16.msra.mxu0 0
        %427 = vmatprep.subr.bf16.mxu0 0
        %428 = vmatpush2.bf16.msra.mxu0 0
        %429 = vmatprep.subr.bf16.mxu0 0
        %430 = vmatpush2.bf16.msra.mxu0 0
        %431 = vmatprep.subr.bf16.mxu0 0
        %432 = vmatpush2.bf16.msra.mxu0 0
        %433 = vmatprep.subr.bf16.mxu0 0
        %434 = vmatpush2.bf16.msra.mxu0 0
        %435 = vmatprep.subr.bf16.mxu0 0
        %436 = vmatpush2.bf16.msra.mxu0 0
        %437 = vmatprep.subr.bf16.mxu0 0
        %438 = vmatpush2.bf16.msra.mxu0 0
        %439 = vmatprep.subr.bf16.mxu0 0
        %440 = vmatpush2.bf16.msra.mxu0 0
        %441 = vmatprep.mubr.bf16.mxu0 0
        %442 = vmatmul.mubr.bf16.gmra.mxu0 %v364
        %v443 = vpop.f32.mrf.mxu0
        %v444 = vadd.f32 0.0, %v443
        %v445 = vpop.f32.mrf.mxu0
        %v446 = vadd.f32 0.0, %v445
        %v447 = vpop.f32.mrf.mxu0
        %v448 = vadd.f32 0.0, %v447
        %v449 = vpop.f32.mrf.mxu0
        %v450 = vadd.f32 0.0, %v449
        %451 = vdwg.mxu0
        %452 = vst [vmem:[%s255] sm:$0xff] %v401
        %453 = vst [vmem:[%s255 + $0x8] sm:$0xff] %v403
        %454 = vst [vmem:[%s255 + $0x10] sm:$0xff] %v444
        %455 = vst [vmem:[%s255 + $0x18] sm:$0xff] %v446
        %456 = vst [vmem:[%s255 + $0x20] sm:$0xff] %v405
        %457 = vst [vmem:[%s255 + $0x28] sm:$0xff] %v407
        %458 = vst [vmem:[%s255 + $0x30] sm:$0xff] %v448
        %459 = vst [vmem:[%s255 + $0x38] sm:$0xff] %v450
        %s460 = sand.u32 %s131, 1
        %s461 = sand.u32 %s131, 1
        %s462 = smul.addr %s461, 64
        %s463 = scalar_lea.vmem [#allocation3], %s462
        // Predicated region
        $region60: #{transformer_encoder.21} parent=54 // pred_check
          %p464 = pneg %p141
        $region61: #{transformer_encoder.21} parent=54 // pred_check_branch
          %466 = sbr.rel (%p464) target = $region63
        $region62: #{transformer_encoder.21} parent=54 // pred_region
          %s467 = smul.u32 2, %s19
          %s468 = smul.u32 4, %s20
          %s469 = smul.addr %s467, 24
          %s470 = sadd.s32 %s468, %s469
          %s471 = smul.addr %s470, 8
          %s472 = scalar_lea.vmem %s4, %s471
          // Predicated region
          $region64: #{transformer_encoder.21} parent=62 // pred_check
            _
          $region65: #{transformer_encoder.21} parent=62 // pred_check_branch
            %474 = sbr.rel (0) target = $region67
          $region66: #{transformer_encoder.21} parent=62 // pred_region
            // Predicated region
            $region68: #{transformer_encoder.21} parent=66 // pred_check
              _
            $region69: #{transformer_encoder.21} parent=66 // pred_check_branch
              %476 = sbr.rel (0) target = $region71
            $region70: #{transformer_encoder.21} parent=66 // pred_region
              loop: start=0, step=1, limit=1
              $region72: #{transformer_encoder.21} parent=70 // loop_pre_header
                _
              $region73: #{transformer_encoder.21} parent=70 // loop_header
                %s478 = sphi 0, %s482
                %p479 = scmp.ge.s32.totalorder %s478, 1
                %s483 = sphi %s463, %s463
                %s484 = sphi %s472, %s472
              $region74: #{transformer_encoder.21} parent=70 // loop_header_branch
                %481 = sbr.rel (%p479) target = $region78
              $region75: #{transformer_encoder.21} parent=70 // loop_body
                %v485 = vld [vmem:[%s483] sm:$0xff]
                %486 = vst [vmem:[%s484] sm:$0xff] %v485
                %v487 = vld [vmem:[%s483 + $0x8] sm:$0xff]
                %488 = vst [vmem:[%s484 + $0x8] sm:$0xff] %v487
                %v489 = vld [vmem:[%s483 + $0x10] sm:$0xff]
                %490 = vst [vmem:[%s484 + $0x10] sm:$0xff] %v489
                %v491 = vld [vmem:[%s483 + $0x18] sm:$0xff]
                %492 = vst [vmem:[%s484 + $0x18] sm:$0xff] %v491
                %v493 = vld [vmem:[%s483 + $0x20] sm:$0xff]
                %494 = vst [vmem:[%s484 + $0xc0] sm:$0xff] %v493
                %v495 = vld [vmem:[%s483 + $0x28] sm:$0xff]
                %496 = vst [vmem:[%s484 + $0xc8] sm:$0xff] %v495
                %v497 = vld [vmem:[%s483 + $0x30] sm:$0xff]
                %498 = vst [vmem:[%s484 + $0xd0] sm:$0xff] %v497
                %v499 = vld [vmem:[%s483 + $0x38] sm:$0xff]
                %500 = vst [vmem:[%s484 + $0xd8] sm:$0xff] %v499
              $region76: #{transformer_encoder.21} parent=70 // loop_footer
                %s482 = sadd.s32 1, %s478
              $region77: #{transformer_encoder.21} parent=70 // loop_footer_branch
                %477 = sbr.rel target = $region73
              $region78: #{transformer_encoder.21} parent=70 // loop_exit
                _
            $region71: #{transformer_encoder.21} parent=66 // pred_fallthru
              _
            // Predicated region
            $region79: #{transformer_encoder.21} parent=66 // pred_check
              _
            $region80: #{transformer_encoder.21} parent=66 // pred_check_branch
              %502 = sbr.rel target = $region82
            $region81: #{transformer_encoder.21} parent=66 // pred_region
              _
            $region82: #{transformer_encoder.21} parent=66 // pred_fallthru
              _
          $region67: #{transformer_encoder.21} parent=62 // pred_fallthru
            _
          %503 = vnop
        $region63: #{transformer_encoder.21} parent=54 // pred_fallthru
          _
      $region55: #{transformer_encoder.21} parent=5 // pred_fallthru
        _
      %p504 = scmp.le.s32.totalorder 2, %s10
      // Predicated region
      $region83: #{transformer_encoder.21} parent=5 // pred_check
        %p505 = pneg %p504
      $region84: #{transformer_encoder.21} parent=5 // pred_check_branch
        %507 = sbr.rel (%p505) target = $region86
      $region85: #{transformer_encoder.21} parent=5 // pred_region
        %s508 = ssub.s32 %s10, 2
        // Predicated region
        $region87: #{transformer_encoder.21} parent=85 // pred_check
          %p509 = pneg %p147
        $region88: #{transformer_encoder.21} parent=85 // pred_check_branch
          %511 = sbr.rel (%p509) target = $region90
        $region89: #{transformer_encoder.21} parent=85 // pred_region
          %s512 = sand.u32 %s132, 1
          %s513 = sand.u32 %s132, 1
          %s514 = smul.addr %s513, 64
          %s515 = scalar_lea.vmem [#allocation3], %s514
        $region90: #{transformer_encoder.21} parent=85 // pred_fallthru
          _
      $region86: #{transformer_encoder.21} parent=5 // pred_fallthru
        _
    $region6: #{transformer_encoder.21} parent=1 // loop_footer
      %s14 = sadd.s32 1, %s10
    $region7: #{transformer_encoder.21} parent=1 // loop_footer_branch
      %9 = sbr.rel target = $region3
    $region8: #{transformer_encoder.21} parent=1 // loop_exit
      _

</llo_original>
